<compile_context>
chip_gen: v7x
topology: tpu7x:2x2x1
jax: 0.10.0
libtpu: 0.0.40
codegen_flags: <defaults>
</compile_context>

<pallas_src>
import math
import functools

import jax
import jax.numpy as jnp
from jax.experimental import pallas as pl
from jax.experimental.pallas import tpu as pltpu

VMEM = pltpu.MemorySpace.VMEM

PRELU_SLOPE = 0.25          # PyTorch nn.PReLU() default, baked as a constant
LN_EPS = 1e-5               # nn.LayerNorm default


# --------------------------------------------------------------------------
# Kernel 1 / 3 : fused transformer encoder block (+ optional classify head)
# --------------------------------------------------------------------------

def _encoder_kernel(*refs, has_mask, classify, B, T, D, scale):
    idx = 0
    x_ref = refs[idx]; idx += 1                      # (B*T, D)
    if has_mask:
        mrow_ref = refs[idx]                         # (B, T)
        mcol_ref = refs[idx + 1]                     # (B*T, 1)
        idx += 2
    (wqkv_ref, bqkv_ref, wo_ref, bo_ref,
     ln1g_ref, ln1b_ref, w1_ref, b1_ref, w2_ref, b2_ref,
     ln2g_ref, ln2b_ref, lnfg_ref, lnfb_ref) = refs[idx:idx + 14]
    idx += 14
    if classify:
        mw1_ref, mb1_ref, mw2_ref, mb2_ref = refs[idx:idx + 4]
        idx += 4
    z_ref = refs[idx]; idx += 1                      # (B*T, D) output
    if classify:
        pred_ref = refs[idx]; idx += 1               # (B, n_classes) output

    def layer_norm(v, g, b):
        mu = jnp.mean(v, axis=-1, keepdims=True)
        vc = v - mu
        var = jnp.mean(vc * vc, axis=-1, keepdims=True)
        return vc * jax.lax.rsqrt(var + LN_EPS) * g + b

    x = x_ref[...]                                   # (B*T, D)
    # fused QKV projection: one MXU matmul instead of three
    qkv = jnp.dot(x, wqkv_ref[...], preferred_element_type=jnp.float32) \
        + bqkv_ref[...]                              # (B*T, 3D)

    wo = wo_ref[...]; bo = bo_ref[...]
    w1 = w1_ref[...]; b1 = b1_ref[...]
    w2 = w2_ref[...]; b2 = b2_ref[...]
    ln1g = ln1g_ref[...]; ln1b = ln1b_ref[...]
    ln2g = ln2g_ref[...]; ln2b = ln2b_ref[...]
    lnfg = lnfg_ref[...]; lnfb = lnfb_ref[...]

    for b_i in range(B):                             # B is tiny and static
        lo = b_i * T
        xb = x[lo:lo + T, :]
        qb = qkv[lo:lo + T, 0:D]
        kb = qkv[lo:lo + T, D:2 * D]
        vb = qkv[lo:lo + T, 2 * D:3 * D]

        s = jax.lax.dot_general(qb, kb, (((1,), (1,)), ((), ())),
                                preferred_element_type=jnp.float32) * scale
        if has_mask:
            # attention mask built inline from the (T,) keep-mask
            # (outer-product semantics: score kept iff both positions kept)
            mrow = mrow_ref[b_i:b_i + 1, :]          # (1, T)
            mcol = mcol_ref[lo:lo + T, :]            # (T, 1)
            s = jnp.where(mrow > 0.5, s, -1e9)
            s = jnp.where(mcol > 0.5, s, -1e9)

        s = s - jnp.max(s, axis=-1, keepdims=True)
        pr = jnp.exp(s)
        pr = pr / jnp.sum(pr, axis=-1, keepdims=True)
        ab = jnp.dot(pr, vb, preferred_element_type=jnp.float32)       # (T, D)

        a_out = jnp.dot(ab, wo, preferred_element_type=jnp.float32) + bo
        h = layer_norm(xb + a_out, ln1g, ln1b)                          # post-norm
        ff = jnp.maximum(jnp.dot(h, w1, preferred_element_type=jnp.float32) + b1, 0.0)
        ff = jnp.dot(ff, w2, preferred_element_type=jnp.float32) + b2
        h2 = layer_norm(h + ff, ln2g, ln2b)
        zb = layer_norm(h2, lnfg, lnfb)              # norm_embedding=True final LN
        z_ref[lo:lo + T, :] = zb

        if classify:
            # TODO(synk): txai uses a length-masked mean; plain mean over time here.
            zm = jnp.mean(zb, axis=0, keepdims=True)                    # (1, D)
            hm = jnp.maximum(
                jnp.dot(zm, mw1_ref[...], preferred_element_type=jnp.float32)
                + mb1_ref[...], 0.0)
            pred_ref[b_i:b_i + 1, :] = (
                jnp.dot(hm, mw2_ref[...], preferred_element_type=jnp.float32)
                + mb2_ref[...])


def encoder_block(ep, x_bt, mask_row=None, mask_col=None, *,
                  B, T, D, n_classes, classify):
    has_mask = mask_row is not None
    inputs = [x_bt]
    if has_mask:
        inputs += [mask_row, mask_col]
    inputs += [ep["wqkv"], ep["bqkv"], ep["wo"], ep["bo"],
               ep["ln1_g"], ep["ln1_b"], ep["w1"], ep["b1"],
               ep["w2"], ep["b2"],
               ep["ln2_g"], ep["ln2_b"], ep["lnf_g"], ep["lnf_b"]]
    if classify:
        inputs += [ep["mlp_w1"], ep["mlp_b1"], ep["mlp_w2"], ep["mlp_b2"]]

    if classify:
        out_shape = (jax.ShapeDtypeStruct((B * T, D), jnp.float32),
                     jax.ShapeDtypeStruct((B, n_classes), jnp.float32))
        out_specs = (pl.BlockSpec(memory_space=VMEM),
                     pl.BlockSpec(memory_space=VMEM))
    else:
        out_shape = jax.ShapeDtypeStruct((B * T, D), jnp.float32)
        out_specs = pl.BlockSpec(memory_space=VMEM)

    return pl.pallas_call(
        functools.partial(_encoder_kernel, has_mask=has_mask, classify=classify,
                          B=B, T=T, D=D, scale=1.0 / math.sqrt(D)),
        out_shape=out_shape,
        in_specs=[pl.BlockSpec(memory_space=VMEM)] * len(inputs),
        out_specs=out_specs,
    )(*inputs)


# --------------------------------------------------------------------------
# Kernel 2 : fused MaskGenStochastic forward (eval mode) + trend smoother
# --------------------------------------------------------------------------

def _maskgen_kernel(*refs, B, T, max_len):
    z_ref, tcol_ref, trow_ref, src_ref = refs[0:4]
    pw0, pb0, pw1, pb1 = refs[4:8]
    tws = refs[8:18]          # time_prob_net: 5 (w, b) pairs
    cws = refs[18:30]         # cycle_net:     6 (w, b) pairs
    trw0, trb0, trw1, trb1 = refs[30:34]
    smooth_ref, ptime_ref, ste_ref, stats_ref = refs[34:38]
    agg_scr = refs[38]        # (B, 32) VMEM scratch

    def prelu(v):
        return jnp.where(v >= 0.0, v, PRELU_SLOPE * v)

    def dense(v, w_ref, b_ref):
        return jnp.dot(v, w_ref[...], preferred_element_type=jnp.float32) + b_ref[...]

    z = z_ref[...]                                   # (B*T, D)

    # ---- pre_agg_net, then max over time per batch -------------------------
    h = prelu(dense(z, pw0, pb0))
    h = prelu(dense(h, pw1, pb1))                    # (B*T, 32)
    for b_i in range(B):
        lo = b_i * T
        agg_scr[b_i:b_i + 1, :] = jnp.max(h[lo:lo + T, :], axis=0, keepdims=True)
    agg = agg_scr[...]                               # (B, 32)

    # ---- time_prob_net (batched over all rows) -----------------------------
    tp = z
    for i in range(4):
        tp = prelu(dense(tp, tws[2 * i], tws[2 * i + 1]))
    p_time = jax.nn.sigmoid(dense(tp, tws[8], tws[9]))   # (B*T, 1)
    ptime_ref[...] = p_time

    # ---- cycle_net (batched over B) ----------------------------------------
    c = agg
    for i in range(5):
        c = prelu(dense(c, cws[2 * i], cws[2 * i + 1]))
    cyc = dense(c, cws[10], cws[11])                 # (B, 3)
    alpha = jnp.maximum(cyc[:, 0:1], 0.0) + 2.0 * math.pi / max_len
    beta = jnp.tanh(cyc[:, 1:2]) * math.pi
    thresh = jnp.tanh(cyc[:, 2:3])

    # ---- trend_net -> smoothing bandwidth p --------------------------------
    tr = prelu(dense(agg, trw0, trb0))
    p_tr = jax.nn.sigmoid(dense(tr, trw1, trb1)) * max_len   # (B, 1)

    # ---- packed stats output (B, 4) = [alpha, beta, thresh, p] -------------
    col = jax.lax.broadcasted_iota(jnp.int32, (B, 4), 1)
    stats_ref[...] = jnp.where(col == 0, alpha,
                     jnp.where(col == 1, beta,
                     jnp.where(col == 2, thresh, p_tr)))

    # ---- per-batch sine-curve mask, eval reparameterize, trend smoother ----
    for b_i in range(B):
        lo = b_i * T
        t_col = tcol_ref[lo:lo + T, :]               # (T, 1)
        t_row = trow_ref[b_i:b_i + 1, :]             # (1, T)
        a_b = alpha[b_i:b_i + 1, :]
        be_b = beta[b_i:b_i + 1, :]
        th_b = thresh[b_i:b_i + 1, :]
        p_b = p_tr[b_i:b_i + 1, :]

        p_cycle = (jnp.sin(a_b * t_col + be_b) - th_b) * 0.25 + 0.5     # (T, 1)
        pt_b = p_time[lo:lo + T, :]
        # TODO(synk): training-mode F.gumbel_softmax reparameterization not implemented.
        ste = jnp.where(jnp.logical_and(p_cycle > 0.5, pt_b > 0.5), 1.0, 0.0)
        ste_ref[lo:lo + T, :] = ste

        # TODO(synk): exact txai.smoother source not provided; Gaussian-kernel
        # smoother over time with bandwidth p, masked over key positions.
        dmat = t_col - t_row                         # (T, T)
        w = jnp.exp(-(dmat * dmat) / (p_b + 1e-9))
        src_b = src_ref[lo:lo + T, :]                # (T, d_inp)
        num = jnp.dot(w, ste * src_b, preferred_element_type=jnp.float32)
        den = jnp.dot(w, ste, preferred_element_type=jnp.float32) + 1e-9
        smooth_ref[lo:lo + T, :] = num / den


def mask_generator(mp, z_bt, times_col, times_row, src_bt, *, B, T, d_inp, max_len):
    inputs = [z_bt, times_col, times_row, src_bt,
              mp["pre_w0"], mp["pre_b0"], mp["pre_w1"], mp["pre_b1"]]
    for i in range(5):
        inputs += [mp[f"time_w{i}"], mp[f"time_b{i}"]]
    for i in range(6):
        inputs += [mp[f"cyc_w{i}"], mp[f"cyc_b{i}"]]
    inputs += [mp["tr_w0"], mp["tr_b0"], mp["tr_w1"], mp["tr_b1"]]

    out_shape = (jax.ShapeDtypeStruct((B * T, d_inp), jnp.float32),  # smooth_src
                 jax.ShapeDtypeStruct((B * T, 1), jnp.float32),      # p_time (mask_in)
                 jax.ShapeDtypeStruct((B * T, 1), jnp.float32),      # ste mask
                 jax.ShapeDtypeStruct((B, 4), jnp.float32))          # alpha,beta,thresh,p

    return pl.pallas_call(
        functools.partial(_maskgen_kernel, B=B, T=T, max_len=float(max_len)),
        out_shape=out_shape,
        in_specs=[pl.BlockSpec(memory_space=VMEM)] * len(inputs),
        out_specs=tuple([pl.BlockSpec(memory_space=VMEM)] * 4),
        scratch_shapes=[pltpu.VMEM((B, 32), jnp.float32)],
    )(*inputs)


# --------------------------------------------------------------------------
# Plain-JAX glue (positional encoding + layout plumbing)
# --------------------------------------------------------------------------

def positional_encoding(times, d_pe, max_len):
    # PositionalEncodingTF-style: timescales = max_len ** linspace(0,1,d_pe//2)
    n = d_pe // 2
    timescales = jnp.asarray(max_len, jnp.float32) ** jnp.linspace(0.0, 1.0, n)
    scaled = times[:, :, None] / timescales[None, None, :]          # (T, B, n)
    return jnp.concatenate([jnp.sin(scaled), jnp.cos(scaled)], axis=-1)


def modelv2_forward(params, src, times, cfg):
    T, B, d_inp = src.shape
    d_pe = cfg["d_pe"]
    D = d_inp + d_pe
    max_len = cfg["max_len"]
    ncls = cfg["n_classes"]
    ep, mp = params["enc"], params["mask"]

    pe = positional_encoding(times, d_pe, max_len)                   # (T, B, d_pe)
    x1 = jnp.concatenate([pe, src], axis=-1)                         # (T, B, D)
    x1_bt = jnp.transpose(x1, (1, 0, 2)).reshape(B * T, D)           # batch-major rows
    times_bt = jnp.transpose(times)                                  # (B, T)
    times_col = times_bt.reshape(B * T, 1)
    src_bt = jnp.transpose(src, (1, 0, 2)).reshape(B * T, d_inp)

    # 1) encoder embed (no attention mask, no classify head)
    z_bt = encoder_block(ep, x1_bt, B=B, T=T, D=D, n_classes=ncls, classify=False)

    # 2) mask generator + trend smoother
    smooth_bt, ptime_col, ste_col, stats = mask_generator(
        mp, z_bt, times_col, times_bt, src_bt, B=B, T=T, d_inp=d_inp, max_len=max_len)

    ste_bt = ste_col.reshape(B, T)
    # TODO(synk): txai transform_to_attn_mask source not provided; outer product
    # (B,T) -> (B,T,T) so only kept<->kept positions attend (returned value only;
    # the attention kernel rebuilds it inline from the (B,T) mask).
    attn_mask = ste_bt[:, :, None] * ste_bt[:, None, :]              # (B, T, T)
    mask_in = ptime_col.reshape(B, T, 1)
    smooth_src = jnp.transpose(smooth_bt.reshape(B, T, d_inp), (1, 0, 2))  # (T,B,d_inp)

    # 3) encoder on smoothed input with mask + classify head
    x2 = jnp.concatenate([pe, smooth_src], axis=-1)
    x2_bt = jnp.transpose(x2, (1, 0, 2)).reshape(B * T, D)
    _, pred = encoder_block(ep, x2_bt, mask_row=ste_bt, mask_col=ste_col,
                            B=B, T=T, D=D, n_classes=ncls, classify=True)

    alpha = stats[:, 0:1]
    beta = stats[:, 1:2]
    thresh = stats[:, 2:3]
    p = stats[:, 3:4]
    return pred, mask_in, attn_mask, (alpha, beta, thresh, p), smooth_src


# --------------------------------------------------------------------------
# Deterministic parameter init (PyTorch nn.Linear-style uniform)
# --------------------------------------------------------------------------

def _init_linear(key, n_in, n_out):
    kw, kb = jax.random.split(key)
    lim = 1.0 / math.sqrt(n_in)
    w = jax.random.uniform(kw, (n_in, n_out), jnp.float32, -lim, lim)
    b = jax.random.uniform(kb, (1, n_out), jnp.float32, -lim, lim)
    return w, b


def init_params(key, cfg):
    d_inp, d_pe = cfg["d_inp"], cfg["d_pe"]
    d = d_inp + d_pe
    dff, n_classes = cfg["dff"], cfg["n_classes"]
    keys = iter(jax.random.split(key, 64))

    def lin(n_in, n_out):
        return _init_linear(next(keys), n_in, n_out)

    enc = {}
    wq, bq = lin(d, d)
    wk, bk = lin(d, d)
    wv, bv = lin(d, d)
    enc["wqkv"] = jnp.concatenate([wq, wk, wv], axis=1)      # fused (d, 3d)
    enc["bqkv"] = jnp.concatenate([bq, bk, bv], axis=1)      # (1, 3d)
    enc["wo"], enc["bo"] = lin(d, d)
    enc["w1"], enc["b1"] = lin(d, dff)
    enc["w2"], enc["b2"] = lin(dff, d)
    for nm in ("ln1", "ln2", "lnf"):
        enc[f"{nm}_g"] = jnp.ones((1, d), jnp.float32)
        enc[f"{nm}_b"] = jnp.zeros((1, d), jnp.float32)
    enc["mlp_w1"], enc["mlp_b1"] = lin(d, d)
    enc["mlp_w2"], enc["mlp_b2"] = lin(d, n_classes)

    mg = {}
    # pre_agg_net: d_z -> 32 -> 32
    mg["pre_w0"], mg["pre_b0"] = lin(d, 32)
    mg["pre_w1"], mg["pre_b1"] = lin(32, 32)
    # time_prob_net: d_z -> 64 (x4 hidden) -> 1
    dims = [d, 64, 64, 64, 64, 1]
    for i in range(5):
        mg[f"time_w{i}"], mg[f"time_b{i}"] = lin(dims[i], dims[i + 1])
    # cycle_net: 32 -> 64 (x5 hidden) -> 3
    dims = [32, 64, 64, 64, 64, 64, 3]
    for i in range(6):
        mg[f"cyc_w{i}"], mg[f"cyc_b{i}"] = lin(dims[i], dims[i + 1])
    # trend_net: 32 -> 32 -> 1
    mg["tr_w0"], mg["tr_b0"] = lin(32, 32)
    mg["tr_w1"], mg["tr_b1"] = lin(32, 1)

    return {"enc": enc, "mask": mg}


# --------------------------------------------------------------------------
# main
# --------------------------------------------------------------------------

if __name__ == "__main__":
    cfg = dict(d_inp=4, d_pe=16, max_len=8, n_classes=2, dff=32)
    T, B = cfg["max_len"], 2

    key = jax.random.PRNGKey(0)
    k_param, k_src = jax.random.split(key)
    params = init_params(k_param, cfg)

    src = jax.random.normal(k_src, (T, B, cfg["d_inp"]), jnp.float32)
    times = jnp.tile(jnp.arange(1, T + 1, dtype=jnp.float32)[:, None], (1, B))

    fwd = jax.jit(functools.partial(modelv2_forward, cfg=cfg))
    pred, mask_in, attn_mask, stats, smooth_src = fwd(params, src, times)

    jax.block_until_ready(pred)
    jax.block_until_ready(smooth_src)

    assert pred.shape == (B, cfg["n_classes"])
    assert mask_in.shape == (B, T, 1)
    assert attn_mask.shape == (B, T, T)
    assert smooth_src.shape == (T, B, cfg["d_inp"])
    print("KERNEL_OK")
</pallas_src>

<mosaic_0001>
module attributes {stable_mosaic.version = 11 : i64} {
  func.func @_encoder_kernel(%arg0: memref<16x20xf32, #tpu.memory_space<vmem>>, %arg1: memref<20x60xf32, #tpu.memory_space<vmem>>, %arg2: memref<1x60xf32, #tpu.memory_space<vmem>>, %arg3: memref<20x20xf32, #tpu.memory_space<vmem>>, %arg4: memref<1x20xf32, #tpu.memory_space<vmem>>, %arg5: memref<1x20xf32, #tpu.memory_space<vmem>>, %arg6: memref<1x20xf32, #tpu.memory_space<vmem>>, %arg7: memref<20x32xf32, #tpu.memory_space<vmem>>, %arg8: memref<1x32xf32, #tpu.memory_space<vmem>>, %arg9: memref<32x20xf32, #tpu.memory_space<vmem>>, %arg10: memref<1x20xf32, #tpu.memory_space<vmem>>, %arg11: memref<1x20xf32, #tpu.memory_space<vmem>>, %arg12: memref<1x20xf32, #tpu.memory_space<vmem>>, %arg13: memref<1x20xf32, #tpu.memory_space<vmem>>, %arg14: memref<1x20xf32, #tpu.memory_space<vmem>>, %arg15: memref<16x20xf32, #tpu.memory_space<vmem>>) attributes {dimension_semantics = [], scalar_prefetch = 0 : i64, scratch_operands = 0 : i64, tpu.core_type = #tpu.core_type<tc>} {
    %c0 = arith.constant 0 : index
    %c0_0 = arith.constant 0 : index
    %0 = vector.load %arg0[%c0, %c0_0] : memref<16x20xf32, #tpu.memory_space<vmem>>, vector<16x20xf32>
    %c0_1 = arith.constant 0 : index
    %c0_2 = arith.constant 0 : index
    %1 = vector.load %arg1[%c0_1, %c0_2] : memref<20x60xf32, #tpu.memory_space<vmem>>, vector<20x60xf32>
    %cst = arith.constant dense<0.000000e+00> : vector<16x60xf32>
    %2 = tpu.matmul %0, %1, %cst {dimension_numbers = #tpu.dot_dimension_numbers<[1], [0], [0], [1], [0, 0, 1, 1], [], []>} : vector<16x20xf32>, vector<20x60xf32>, vector<16x60xf32> -> vector<16x60xf32>
    %c0_3 = arith.constant 0 : index
    %c0_4 = arith.constant 0 : index
    %3 = vector.load %arg2[%c0_3, %c0_4] : memref<1x60xf32, #tpu.memory_space<vmem>>, vector<1x60xf32>
    %4 = vector.broadcast %3 : vector<1x60xf32> to vector<16x60xf32>
    %5 = arith.addf %2, %4 : vector<16x60xf32>
    %c0_5 = arith.constant 0 : index
    %c0_6 = arith.constant 0 : index
    %6 = vector.load %arg3[%c0_5, %c0_6] : memref<20x20xf32, #tpu.memory_space<vmem>>, vector<20x20xf32>
    %c0_7 = arith.constant 0 : index
    %c0_8 = arith.constant 0 : index
    %7 = vector.load %arg4[%c0_7, %c0_8] : memref<1x20xf32, #tpu.memory_space<vmem>>, vector<1x20xf32>
    %c0_9 = arith.constant 0 : index
    %c0_10 = arith.constant 0 : index
    %8 = vector.load %arg7[%c0_9, %c0_10] : memref<20x32xf32, #tpu.memory_space<vmem>>, vector<20x32xf32>
    %c0_11 = arith.constant 0 : index
    %c0_12 = arith.constant 0 : index
    %9 = vector.load %arg8[%c0_11, %c0_12] : memref<1x32xf32, #tpu.memory_space<vmem>>, vector<1x32xf32>
    %c0_13 = arith.constant 0 : index
    %c0_14 = arith.constant 0 : index
    %10 = vector.load %arg9[%c0_13, %c0_14] : memref<32x20xf32, #tpu.memory_space<vmem>>, vector<32x20xf32>
    %c0_15 = arith.constant 0 : index
    %c0_16 = arith.constant 0 : index
    %11 = vector.load %arg10[%c0_15, %c0_16] : memref<1x20xf32, #tpu.memory_space<vmem>>, vector<1x20xf32>
    %c0_17 = arith.constant 0 : index
    %c0_18 = arith.constant 0 : index
    %12 = vector.load %arg5[%c0_17, %c0_18] : memref<1x20xf32, #tpu.memory_space<vmem>>, vector<1x20xf32>
    %c0_19 = arith.constant 0 : index
    %c0_20 = arith.constant 0 : index
    %13 = vector.load %arg6[%c0_19, %c0_20] : memref<1x20xf32, #tpu.memory_space<vmem>>, vector<1x20xf32>
    %c0_21 = arith.constant 0 : index
    %c0_22 = arith.constant 0 : index
    %14 = vector.load %arg11[%c0_21, %c0_22] : memref<1x20xf32, #tpu.memory_space<vmem>>, vector<1x20xf32>
    %c0_23 = arith.constant 0 : index
    %c0_24 = arith.constant 0 : index
    %15 = vector.load %arg12[%c0_23, %c0_24] : memref<1x20xf32, #tpu.memory_space<vmem>>, vector<1x20xf32>
    %c0_25 = arith.constant 0 : index
    %c0_26 = arith.constant 0 : index
    %16 = vector.load %arg13[%c0_25, %c0_26] : memref<1x20xf32, #tpu.memory_space<vmem>>, vector<1x20xf32>
    %c0_27 = arith.constant 0 : index
    %c0_28 = arith.constant 0 : index
    %17 = vector.load %arg14[%c0_27, %c0_28] : memref<1x20xf32, #tpu.memory_space<vmem>>, vector<1x20xf32>
    %18 = vector.extract_strided_slice %0 {offsets = [0, 0], sizes = [8, 20], strides = [1, 1]} : vector<16x20xf32> to vector<8x20xf32>
    %19 = vector.extract_strided_slice %5 {offsets = [0, 0], sizes = [8, 20], strides = [1, 1]} : vector<16x60xf32> to vector<8x20xf32>
    %20 = vector.extract_strided_slice %5 {offsets = [0, 20], sizes = [8, 20], strides = [1, 1]} : vector<16x60xf32> to vector<8x20xf32>
    %21 = vector.extract_strided_slice %5 {offsets = [0, 40], sizes = [8, 20], strides = [1, 1]} : vector<16x60xf32> to vector<8x20xf32>
    %cst_29 = arith.constant dense<0.000000e+00> : vector<8x8xf32>
    %22 = tpu.matmul %19, %20, %cst_29 {dimension_numbers = #tpu.dot_dimension_numbers<[1], [1], [0], [0], [0, 0, 1, 0], [], []>} : vector<8x20xf32>, vector<8x20xf32>, vector<8x8xf32> -> vector<8x8xf32>
    %cst_30 = arith.constant 0.223606795 : f32
    %23 = vector.broadcast %cst_30 : f32 to vector<8x8xf32>
    %24 = arith.mulf %22, %23 : vector<8x8xf32>
    %cst_31 = arith.constant dense<0xFF800000> : vector<8xf32>
    %25 = vector.multi_reduction <maximumf>, %24, %cst_31 [1] : vector<8x8xf32> to vector<8xf32>
    %26 = vector.shape_cast %25 : vector<8xf32> to vector<8x1xf32>
    %27 = vector.broadcast %26 : vector<8x1xf32> to vector<8x8xf32>
    %28 = arith.subf %24, %27 : vector<8x8xf32>
    %29 = math.exp %28 : vector<8x8xf32>
    %cst_32 = arith.constant dense<0.000000e+00> : vector<8xf32>
    %30 = vector.multi_reduction <add>, %29, %cst_32 [1] : vector<8x8xf32> to vector<8xf32>
    %31 = vector.shape_cast %30 : vector<8xf32> to vector<8x1xf32>
    %32 = vector.broadcast %31 : vector<8x1xf32> to vector<8x8xf32>
    %33 = arith.divf %29, %32 : vector<8x8xf32>
    %cst_33 = arith.constant dense<0.000000e+00> : vector<8x20xf32>
    %34 = tpu.matmul %33, %21, %cst_33 {dimension_numbers = #tpu.dot_dimension_numbers<[1], [0], [0], [1], [0, 0, 1, 1], [], []>} : vector<8x8xf32>, vector<8x20xf32>, vector<8x20xf32> -> vector<8x20xf32>
    %cst_34 = arith.constant dense<0.000000e+00> : vector<8x20xf32>
    %35 = tpu.matmul %34, %6, %cst_34 {dimension_numbers = #tpu.dot_dimension_numbers<[1], [0], [0], [1], [0, 0, 1, 1], [], []>} : vector<8x20xf32>, vector<20x20xf32>, vector<8x20xf32> -> vector<8x20xf32>
    %36 = vector.broadcast %7 : vector<1x20xf32> to vector<8x20xf32>
    %37 = arith.addf %35, %36 : vector<8x20xf32>
    %38 = arith.addf %18, %37 : vector<8x20xf32>
    %cst_35 = arith.constant dense<0.000000e+00> : vector<8xf32>
    %39 = vector.multi_reduction <add>, %38, %cst_35 [1] : vector<8x20xf32> to vector<8xf32>
    %40 = vector.shape_cast %39 : vector<8xf32> to vector<8x1xf32>
    %cst_36 = arith.constant 2.000000e+01 : f32
    %41 = vector.broadcast %cst_36 : f32 to vector<8x1xf32>
    %42 = arith.divf %40, %41 : vector<8x1xf32>
    %43 = vector.broadcast %42 : vector<8x1xf32> to vector<8x20xf32>
    %44 = arith.subf %38, %43 : vector<8x20xf32>
    %45 = arith.mulf %44, %44 : vector<8x20xf32>
    %cst_37 = arith.constant dense<0.000000e+00> : vector<8xf32>
    %46 = vector.multi_reduction <add>, %45, %cst_37 [1] : vector<8x20xf32> to vector<8xf32>
    %47 = vector.shape_cast %46 : vector<8xf32> to vector<8x1xf32>
    %cst_38 = arith.constant 2.000000e+01 : f32
    %48 = vector.broadcast %cst_38 : f32 to vector<8x1xf32>
    %49 = arith.divf %47, %48 : vector<8x1xf32>
    %cst_39 = arith.constant 9.99999974E-6 : f32
    %50 = vector.broadcast %cst_39 : f32 to vector<8x1xf32>
    %51 = arith.addf %49, %50 : vector<8x1xf32>
    %52 = math.rsqrt %51 : vector<8x1xf32>
    %53 = vector.broadcast %52 : vector<8x1xf32> to vector<8x20xf32>
    %54 = arith.mulf %44, %53 : vector<8x20xf32>
    %55 = vector.broadcast %12 : vector<1x20xf32> to vector<8x20xf32>
    %56 = arith.mulf %54, %55 : vector<8x20xf32>
    %57 = vector.broadcast %13 : vector<1x20xf32> to vector<8x20xf32>
    %58 = arith.addf %56, %57 : vector<8x20xf32>
    %cst_40 = arith.constant dense<0.000000e+00> : vector<8x32xf32>
    %59 = tpu.matmul %58, %8, %cst_40 {dimension_numbers = #tpu.dot_dimension_numbers<[1], [0], [0], [1], [0, 0, 1, 1], [], []>} : vector<8x20xf32>, vector<20x32xf32>, vector<8x32xf32> -> vector<8x32xf32>
    %60 = vector.broadcast %9 : vector<1x32xf32> to vector<8x32xf32>
    %61 = arith.addf %59, %60 : vector<8x32xf32>
    %cst_41 = arith.constant 0.000000e+00 : f32
    %62 = vector.broadcast %cst_41 : f32 to vector<8x32xf32>
    %63 = arith.maximumf %61, %62 : vector<8x32xf32>
    %cst_42 = arith.constant dense<0.000000e+00> : vector<8x20xf32>
    %64 = tpu.matmul %63, %10, %cst_42 {dimension_numbers = #tpu.dot_dimension_numbers<[1], [0], [0], [1], [0, 0, 1, 1], [], []>} : vector<8x32xf32>, vector<32x20xf32>, vector<8x20xf32> -> vector<8x20xf32>
    %65 = vector.broadcast %11 : vector<1x20xf32> to vector<8x20xf32>
    %66 = arith.addf %64, %65 : vector<8x20xf32>
    %67 = arith.addf %58, %66 : vector<8x20xf32>
    %cst_43 = arith.constant dense<0.000000e+00> : vector<8xf32>
    %68 = vector.multi_reduction <add>, %67, %cst_43 [1] : vector<8x20xf32> to vector<8xf32>
    %69 = vector.shape_cast %68 : vector<8xf32> to vector<8x1xf32>
    %cst_44 = arith.constant 2.000000e+01 : f32
    %70 = vector.broadcast %cst_44 : f32 to vector<8x1xf32>
    %71 = arith.divf %69, %70 : vector<8x1xf32>
    %72 = vector.broadcast %71 : vector<8x1xf32> to vector<8x20xf32>
    %73 = arith.subf %67, %72 : vector<8x20xf32>
    %74 = arith.mulf %73, %73 : vector<8x20xf32>
    %cst_45 = arith.constant dense<0.000000e+00> : vector<8xf32>
    %75 = vector.multi_reduction <add>, %74, %cst_45 [1] : vector<8x20xf32> to vector<8xf32>
    %76 = vector.shape_cast %75 : vector<8xf32> to vector<8x1xf32>
    %cst_46 = arith.constant 2.000000e+01 : f32
    %77 = vector.broadcast %cst_46 : f32 to vector<8x1xf32>
    %78 = arith.divf %76, %77 : vector<8x1xf32>
    %cst_47 = arith.constant 9.99999974E-6 : f32
    %79 = vector.broadcast %cst_47 : f32 to vector<8x1xf32>
    %80 = arith.addf %78, %79 : vector<8x1xf32>
    %81 = math.rsqrt %80 : vector<8x1xf32>
    %82 = vector.broadcast %81 : vector<8x1xf32> to vector<8x20xf32>
    %83 = arith.mulf %73, %82 : vector<8x20xf32>
    %84 = vector.broadcast %14 : vector<1x20xf32> to vector<8x20xf32>
    %85 = arith.mulf %83, %84 : vector<8x20xf32>
    %86 = vector.broadcast %15 : vector<1x20xf32> to vector<8x20xf32>
    %87 = arith.addf %85, %86 : vector<8x20xf32>
    %cst_48 = arith.constant dense<0.000000e+00> : vector<8xf32>
    %88 = vector.multi_reduction <add>, %87, %cst_48 [1] : vector<8x20xf32> to vector<8xf32>
    %89 = vector.shape_cast %88 : vector<8xf32> to vector<8x1xf32>
    %cst_49 = arith.constant 2.000000e+01 : f32
    %90 = vector.broadcast %cst_49 : f32 to vector<8x1xf32>
    %91 = arith.divf %89, %90 : vector<8x1xf32>
    %92 = vector.broadcast %91 : vector<8x1xf32> to vector<8x20xf32>
    %93 = arith.subf %87, %92 : vector<8x20xf32>
    %94 = arith.mulf %93, %93 : vector<8x20xf32>
    %cst_50 = arith.constant dense<0.000000e+00> : vector<8xf32>
    %95 = vector.multi_reduction <add>, %94, %cst_50 [1] : vector<8x20xf32> to vector<8xf32>
    %96 = vector.shape_cast %95 : vector<8xf32> to vector<8x1xf32>
    %cst_51 = arith.constant 2.000000e+01 : f32
    %97 = vector.broadcast %cst_51 : f32 to vector<8x1xf32>
    %98 = arith.divf %96, %97 : vector<8x1xf32>
    %cst_52 = arith.constant 9.99999974E-6 : f32
    %99 = vector.broadcast %cst_52 : f32 to vector<8x1xf32>
    %100 = arith.addf %98, %99 : vector<8x1xf32>
    %101 = math.rsqrt %100 : vector<8x1xf32>
    %102 = vector.broadcast %101 : vector<8x1xf32> to vector<8x20xf32>
    %103 = arith.mulf %93, %102 : vector<8x20xf32>
    %104 = vector.broadcast %16 : vector<1x20xf32> to vector<8x20xf32>
    %105 = arith.mulf %103, %104 : vector<8x20xf32>
    %106 = vector.broadcast %17 : vector<1x20xf32> to vector<8x20xf32>
    %107 = arith.addf %105, %106 : vector<8x20xf32>
    %c0_53 = arith.constant 0 : index
    %c0_54 = arith.constant 0 : index
    %108 = vector.load %arg15[%c0_53, %c0_54] : memref<16x20xf32, #tpu.memory_space<vmem>>, vector<8x20xf32>
    tpu.vector_store %arg15[%c0_53, %c0_54], %107 {strides = array<i32>} : memref<16x20xf32, #tpu.memory_space<vmem>>, vector<8x20xf32>,
    %109 = vector.extract_strided_slice %0 {offsets = [8, 0], sizes = [8, 20], strides = [1, 1]} : vector<16x20xf32> to vector<8x20xf32>
    %110 = vector.extract_strided_slice %5 {offsets = [8, 0], sizes = [8, 20], strides = [1, 1]} : vector<16x60xf32> to vector<8x20xf32>
    %111 = vector.extract_strided_slice %5 {offsets = [8, 20], sizes = [8, 20], strides = [1, 1]} : vector<16x60xf32> to vector<8x20xf32>
    %112 = vector.extract_strided_slice %5 {offsets = [8, 40], sizes = [8, 20], strides = [1, 1]} : vector<16x60xf32> to vector<8x20xf32>
    %cst_55 = arith.constant dense<0.000000e+00> : vector<8x8xf32>
    %113 = tpu.matmul %110, %111, %cst_55 {dimension_numbers = #tpu.dot_dimension_numbers<[1], [1], [0], [0], [0, 0, 1, 0], [], []>} : vector<8x20xf32>, vector<8x20xf32>, vector<8x8xf32> -> vector<8x8xf32>
    %cst_56 = arith.constant 0.223606795 : f32
    %114 = vector.broadcast %cst_56 : f32 to vector<8x8xf32>
    %115 = arith.mulf %113, %114 : vector<8x8xf32>
    %cst_57 = arith.constant dense<0xFF800000> : vector<8xf32>
    %116 = vector.multi_reduction <maximumf>, %115, %cst_57 [1] : vector<8x8xf32> to vector<8xf32>
    %117 = vector.shape_cast %116 : vector<8xf32> to vector<8x1xf32>
    %118 = vector.broadcast %117 : vector<8x1xf32> to vector<8x8xf32>
    %119 = arith.subf %115, %118 : vector<8x8xf32>
    %120 = math.exp %119 : vector<8x8xf32>
    %cst_58 = arith.constant dense<0.000000e+00> : vector<8xf32>
    %121 = vector.multi_reduction <add>, %120, %cst_58 [1] : vector<8x8xf32> to vector<8xf32>
    %122 = vector.shape_cast %121 : vector<8xf32> to vector<8x1xf32>
    %123 = vector.broadcast %122 : vector<8x1xf32> to vector<8x8xf32>
    %124 = arith.divf %120, %123 : vector<8x8xf32>
    %cst_59 = arith.constant dense<0.000000e+00> : vector<8x20xf32>
    %125 = tpu.matmul %124, %112, %cst_59 {dimension_numbers = #tpu.dot_dimension_numbers<[1], [0], [0], [1], [0, 0, 1, 1], [], []>} : vector<8x8xf32>, vector<8x20xf32>, vector<8x20xf32> -> vector<8x20xf32>
    %cst_60 = arith.constant dense<0.000000e+00> : vector<8x20xf32>
    %126 = tpu.matmul %125, %6, %cst_60 {dimension_numbers = #tpu.dot_dimension_numbers<[1], [0], [0], [1], [0, 0, 1, 1], [], []>} : vector<8x20xf32>, vector<20x20xf32>, vector<8x20xf32> -> vector<8x20xf32>
    %127 = vector.broadcast %7 : vector<1x20xf32> to vector<8x20xf32>
    %128 = arith.addf %126, %127 : vector<8x20xf32>
    %129 = arith.addf %109, %128 : vector<8x20xf32>
    %cst_61 = arith.constant dense<0.000000e+00> : vector<8xf32>
    %130 = vector.multi_reduction <add>, %129, %cst_61 [1] : vector<8x20xf32> to vector<8xf32>
    %131 = vector.shape_cast %130 : vector<8xf32> to vector<8x1xf32>
    %cst_62 = arith.constant 2.000000e+01 : f32
    %132 = vector.broadcast %cst_62 : f32 to vector<8x1xf32>
    %133 = arith.divf %131, %132 : vector<8x1xf32>
    %134 = vector.broadcast %133 : vector<8x1xf32> to vector<8x20xf32>
    %135 = arith.subf %129, %134 : vector<8x20xf32>
    %136 = arith.mulf %135, %135 : vector<8x20xf32>
    %cst_63 = arith.constant dense<0.000000e+00> : vector<8xf32>
    %137 = vector.multi_reduction <add>, %136, %cst_63 [1] : vector<8x20xf32> to vector<8xf32>
    %138 = vector.shape_cast %137 : vector<8xf32> to vector<8x1xf32>
    %cst_64 = arith.constant 2.000000e+01 : f32
    %139 = vector.broadcast %cst_64 : f32 to vector<8x1xf32>
    %140 = arith.divf %138, %139 : vector<8x1xf32>
    %cst_65 = arith.constant 9.99999974E-6 : f32
    %141 = vector.broadcast %cst_65 : f32 to vector<8x1xf32>
    %142 = arith.addf %140, %141 : vector<8x1xf32>
    %143 = math.rsqrt %142 : vector<8x1xf32>
    %144 = vector.broadcast %143 : vector<8x1xf32> to vector<8x20xf32>
    %145 = arith.mulf %135, %144 : vector<8x20xf32>
    %146 = vector.broadcast %12 : vector<1x20xf32> to vector<8x20xf32>
    %147 = arith.mulf %145, %146 : vector<8x20xf32>
    %148 = vector.broadcast %13 : vector<1x20xf32> to vector<8x20xf32>
    %149 = arith.addf %147, %148 : vector<8x20xf32>
    %cst_66 = arith.constant dense<0.000000e+00> : vector<8x32xf32>
    %150 = tpu.matmul %149, %8, %cst_66 {dimension_numbers = #tpu.dot_dimension_numbers<[1], [0], [0], [1], [0, 0, 1, 1], [], []>} : vector<8x20xf32>, vector<20x32xf32>, vector<8x32xf32> -> vector<8x32xf32>
    %151 = vector.broadcast %9 : vector<1x32xf32> to vector<8x32xf32>
    %152 = arith.addf %150, %151 : vector<8x32xf32>
    %cst_67 = arith.constant 0.000000e+00 : f32
    %153 = vector.broadcast %cst_67 : f32 to vector<8x32xf32>
    %154 = arith.maximumf %152, %153 : vector<8x32xf32>
    %cst_68 = arith.constant dense<0.000000e+00> : vector<8x20xf32>
    %155 = tpu.matmul %154, %10, %cst_68 {dimension_numbers = #tpu.dot_dimension_numbers<[1], [0], [0], [1], [0, 0, 1, 1], [], []>} : vector<8x32xf32>, vector<32x20xf32>, vector<8x20xf32> -> vector<8x20xf32>
    %156 = vector.broadcast %11 : vector<1x20xf32> to vector<8x20xf32>
    %157 = arith.addf %155, %156 : vector<8x20xf32>
    %158 = arith.addf %149, %157 : vector<8x20xf32>
    %cst_69 = arith.constant dense<0.000000e+00> : vector<8xf32>
    %159 = vector.multi_reduction <add>, %158, %cst_69 [1] : vector<8x20xf32> to vector<8xf32>
    %160 = vector.shape_cast %159 : vector<8xf32> to vector<8x1xf32>
    %cst_70 = arith.constant 2.000000e+01 : f32
    %161 = vector.broadcast %cst_70 : f32 to vector<8x1xf32>
    %162 = arith.divf %160, %161 : vector<8x1xf32>
    %163 = vector.broadcast %162 : vector<8x1xf32> to vector<8x20xf32>
    %164 = arith.subf %158, %163 : vector<8x20xf32>
    %165 = arith.mulf %164, %164 : vector<8x20xf32>
    %cst_71 = arith.constant dense<0.000000e+00> : vector<8xf32>
    %166 = vector.multi_reduction <add>, %165, %cst_71 [1] : vector<8x20xf32> to vector<8xf32>
    %167 = vector.shape_cast %166 : vector<8xf32> to vector<8x1xf32>
    %cst_72 = arith.constant 2.000000e+01 : f32
    %168 = vector.broadcast %cst_72 : f32 to vector<8x1xf32>
    %169 = arith.divf %167, %168 : vector<8x1xf32>
    %cst_73 = arith.constant 9.99999974E-6 : f32
    %170 = vector.broadcast %cst_73 : f32 to vector<8x1xf32>
    %171 = arith.addf %169, %170 : vector<8x1xf32>
    %172 = math.rsqrt %171 : vector<8x1xf32>
    %173 = vector.broadcast %172 : vector<8x1xf32> to vector<8x20xf32>
    %174 = arith.mulf %164, %173 : vector<8x20xf32>
    %175 = vector.broadcast %14 : vector<1x20xf32> to vector<8x20xf32>
    %176 = arith.mulf %174, %175 : vector<8x20xf32>
    %177 = vector.broadcast %15 : vector<1x20xf32> to vector<8x20xf32>
    %178 = arith.addf %176, %177 : vector<8x20xf32>
    %cst_74 = arith.constant dense<0.000000e+00> : vector<8xf32>
    %179 = vector.multi_reduction <add>, %178, %cst_74 [1] : vector<8x20xf32> to vector<8xf32>
    %180 = vector.shape_cast %179 : vector<8xf32> to vector<8x1xf32>
    %cst_75 = arith.constant 2.000000e+01 : f32
    %181 = vector.broadcast %cst_75 : f32 to vector<8x1xf32>
    %182 = arith.divf %180, %181 : vector<8x1xf32>
    %183 = vector.broadcast %182 : vector<8x1xf32> to vector<8x20xf32>
    %184 = arith.subf %178, %183 : vector<8x20xf32>
    %185 = arith.mulf %184, %184 : vector<8x20xf32>
    %cst_76 = arith.constant dense<0.000000e+00> : vector<8xf32>
    %186 = vector.multi_reduction <add>, %185, %cst_76 [1] : vector<8x20xf32> to vector<8xf32>
    %187 = vector.shape_cast %186 : vector<8xf32> to vector<8x1xf32>
    %cst_77 = arith.constant 2.000000e+01 : f32
    %188 = vector.broadcast %cst_77 : f32 to vector<8x1xf32>
    %189 = arith.divf %187, %188 : vector<8x1xf32>
    %cst_78 = arith.constant 9.99999974E-6 : f32
    %190 = vector.broadcast %cst_78 : f32 to vector<8x1xf32>
    %191 = arith.addf %189, %190 : vector<8x1xf32>
    %192 = math.rsqrt %191 : vector<8x1xf32>
    %193 = vector.broadcast %192 : vector<8x1xf32> to vector<8x20xf32>
    %194 = arith.mulf %184, %193 : vector<8x20xf32>
    %195 = vector.broadcast %16 : vector<1x20xf32> to vector<8x20xf32>
    %196 = arith.mulf %194, %195 : vector<8x20xf32>
    %197 = vector.broadcast %17 : vector<1x20xf32> to vector<8x20xf32>
    %198 = arith.addf %196, %197 : vector<8x20xf32>
    %c8 = arith.constant 8 : index
    %c0_79 = arith.constant 0 : index
    %199 = vector.load %arg15[%c8, %c0_79] : memref<16x20xf32, #tpu.memory_space<vmem>>, vector<8x20xf32>
    tpu.vector_store %arg15[%c8, %c0_79], %198 {strides = array<i32>} : memref<16x20xf32, #tpu.memory_space<vmem>>, vector<8x20xf32>,
    return
  }
}

module attributes {stable_mosaic.version = 11 : i64} {
  func.func @_maskgen_kernel(%arg0: memref<16x20xf32, #tpu.memory_space<vmem>>, %arg1: memref<16x1xf32, #tpu.memory_space<vmem>>, %arg2: memref<2x8xf32, #tpu.memory_space<vmem>>, %arg3: memref<16x4xf32, #tpu.memory_space<vmem>>, %arg4: memref<20x32xf32, #tpu.memory_space<vmem>>, %arg5: memref<1x32xf32, #tpu.memory_space<vmem>>, %arg6: memref<32x32xf32, #tpu.memory_space<vmem>>, %arg7: memref<1x32xf32, #tpu.memory_space<vmem>>, %arg8: memref<20x64xf32, #tpu.memory_space<vmem>>, %arg9: memref<1x64xf32, #tpu.memory_space<vmem>>, %arg10: memref<64x64xf32, #tpu.memory_space<vmem>>, %arg11: memref<1x64xf32, #tpu.memory_space<vmem>>, %arg12: memref<64x64xf32, #tpu.memory_space<vmem>>, %arg13: memref<1x64xf32, #tpu.memory_space<vmem>>, %arg14: memref<64x64xf32, #tpu.memory_space<vmem>>, %arg15: memref<1x64xf32, #tpu.memory_space<vmem>>, %arg16: memref<64x1xf32, #tpu.memory_space<vmem>>, %arg17: memref<1x1xf32, #tpu.memory_space<vmem>>, %arg18: memref<32x64xf32, #tpu.memory_space<vmem>>, %arg19: memref<1x64xf32, #tpu.memory_space<vmem>>, %arg20: memref<64x64xf32, #tpu.memory_space<vmem>>, %arg21: memref<1x64xf32, #tpu.memory_space<vmem>>, %arg22: memref<64x64xf32, #tpu.memory_space<vmem>>, %arg23: memref<1x64xf32, #tpu.memory_space<vmem>>, %arg24: memref<64x64xf32, #tpu.memory_space<vmem>>, %arg25: memref<1x64xf32, #tpu.memory_space<vmem>>, %arg26: memref<64x64xf32, #tpu.memory_space<vmem>>, %arg27: memref<1x64xf32, #tpu.memory_space<vmem>>, %arg28: memref<64x3xf32, #tpu.memory_space<vmem>>, %arg29: memref<1x3xf32, #tpu.memory_space<vmem>>, %arg30: memref<32x32xf32, #tpu.memory_space<vmem>>, %arg31: memref<1x32xf32, #tpu.memory_space<vmem>>, %arg32: memref<32x1xf32, #tpu.memory_space<vmem>>, %arg33: memref<1x1xf32, #tpu.memory_space<vmem>>, %arg34: memref<16x4xf32, #tpu.memory_space<vmem>>, %arg35: memref<16x1xf32, #tpu.memory_space<vmem>>, %arg36: memref<16x1xf32, #tpu.memory_space<vmem>>, %arg37: memref<2x4xf32, #tpu.memory_space<vmem>>, %arg38: memref<2x32xf32, #tpu.memory_space<vmem>>) attributes {dimension_semantics = [], scalar_prefetch = 0 : i64, scratch_operands = 1 : i64, tpu.core_type = #tpu.core_type<tc>} {
    %c0 = arith.constant 0 : index
    %c0_0 = arith.constant 0 : index
    %0 = vector.load %arg0[%c0, %c0_0] : memref<16x20xf32, #tpu.memory_space<vmem>>, vector<16x20xf32>
    %c0_1 = arith.constant 0 : index
    %c0_2 = arith.constant 0 : index
    %1 = vector.load %arg4[%c0_1, %c0_2] : memref<20x32xf32, #tpu.memory_space<vmem>>, vector<20x32xf32>
    %cst = arith.constant dense<0.000000e+00> : vector<16x32xf32>
    %2 = tpu.matmul %0, %1, %cst {dimension_numbers = #tpu.dot_dimension_numbers<[1], [0], [0], [1], [0, 0, 1, 1], [], []>} : vector<16x20xf32>, vector<20x32xf32>, vector<16x32xf32> -> vector<16x32xf32>
    %c0_3 = arith.constant 0 : index
    %c0_4 = arith.constant 0 : index
    %3 = vector.load %arg5[%c0_3, %c0_4] : memref<1x32xf32, #tpu.memory_space<vmem>>, vector<1x32xf32>
    %4 = vector.broadcast %3 : vector<1x32xf32> to vector<16x32xf32>
    %5 = arith.addf %2, %4 : vector<16x32xf32>
    %cst_5 = arith.constant 0.000000e+00 : f32
    %6 = vector.broadcast %cst_5 : f32 to vector<16x32xf32>
    %7 = arith.cmpf oge, %5, %6 : vector<16x32xf32>
    %cst_6 = arith.constant 2.500000e-01 : f32
    %8 = vector.broadcast %cst_6 : f32 to vector<16x32xf32>
    %9 = arith.mulf %8, %5 : vector<16x32xf32>
    %10 = arith.select %7, %5, %9 : vector<16x32xi1>, vector<16x32xf32>
    %c0_7 = arith.constant 0 : index
    %c0_8 = arith.constant 0 : index
    %11 = vector.load %arg6[%c0_7, %c0_8] : memref<32x32xf32, #tpu.memory_space<vmem>>, vector<32x32xf32>
    %cst_9 = arith.constant dense<0.000000e+00> : vector<16x32xf32>
    %12 = tpu.matmul %10, %11, %cst_9 {dimension_numbers = #tpu.dot_dimension_numbers<[1], [0], [0], [1], [0, 0, 1, 1], [], []>} : vector<16x32xf32>, vector<32x32xf32>, vector<16x32xf32> -> vector<16x32xf32>
    %c0_10 = arith.constant 0 : index
    %c0_11 = arith.constant 0 : index
    %13 = vector.load %arg7[%c0_10, %c0_11] : memref<1x32xf32, #tpu.memory_space<vmem>>, vector<1x32xf32>
    %14 = vector.broadcast %13 : vector<1x32xf32> to vector<16x32xf32>
    %15 = arith.addf %12, %14 : vector<16x32xf32>
    %cst_12 = arith.constant 0.000000e+00 : f32
    %16 = vector.broadcast %cst_12 : f32 to vector<16x32xf32>
    %17 = arith.cmpf oge, %15, %16 : vector<16x32xf32>
    %cst_13 = arith.constant 2.500000e-01 : f32
    %18 = vector.broadcast %cst_13 : f32 to vector<16x32xf32>
    %19 = arith.mulf %18, %15 : vector<16x32xf32>
    %20 = arith.select %17, %15, %19 : vector<16x32xi1>, vector<16x32xf32>
    %21 = vector.extract_strided_slice %20 {offsets = [0, 0], sizes = [8, 32], strides = [1, 1]} : vector<16x32xf32> to vector<8x32xf32>
    %cst_14 = arith.constant dense<0xFF800000> : vector<32xf32>
    %22 = vector.multi_reduction <maximumf>, %21, %cst_14 [0] : vector<8x32xf32> to vector<32xf32>
    %23 = vector.shape_cast %22 : vector<32xf32> to vector<1x32xf32>
    %c0_15 = arith.constant 0 : index
    %c0_16 = arith.constant 0 : index
    %24 = vector.load %arg38[%c0_15, %c0_16] : memref<2x32xf32, #tpu.memory_space<vmem>>, vector<1x32xf32>
    tpu.vector_store %arg38[%c0_15, %c0_16], %23 {strides = array<i32>} : memref<2x32xf32, #tpu.memory_space<vmem>>, vector<1x32xf32>,
    %25 = vector.extract_strided_slice %20 {offsets = [8, 0], sizes = [8, 32], strides = [1, 1]} : vector<16x32xf32> to vector<8x32xf32>
    %cst_17 = arith.constant dense<0xFF800000> : vector<32xf32>
    %26 = vector.multi_reduction <maximumf>, %25, %cst_17 [0] : vector<8x32xf32> to vector<32xf32>
    %27 = vector.shape_cast %26 : vector<32xf32> to vector<1x32xf32>
    %c1 = arith.constant 1 : index
    %c0_18 = arith.constant 0 : index
    %28 = vector.load %arg38[%c1, %c0_18] : memref<2x32xf32, #tpu.memory_space<vmem>>, vector<1x32xf32>
    tpu.vector_store %arg38[%c1, %c0_18], %27 {strides = array<i32>} : memref<2x32xf32, #tpu.memory_space<vmem>>, vector<1x32xf32>,
    %c0_19 = arith.constant 0 : index
    %c0_20 = arith.constant 0 : index
    %29 = vector.load %arg38[%c0_19, %c0_20] : memref<2x32xf32, #tpu.memory_space<vmem>>, vector<2x32xf32>
    %c0_21 = arith.constant 0 : index
    %c0_22 = arith.constant 0 : index
    %30 = vector.load %arg8[%c0_21, %c0_22] : memref<20x64xf32, #tpu.memory_space<vmem>>, vector<20x64xf32>
    %cst_23 = arith.constant dense<0.000000e+00> : vector<16x64xf32>
    %31 = tpu.matmul %0, %30, %cst_23 {dimension_numbers = #tpu.dot_dimension_numbers<[1], [0], [0], [1], [0, 0, 1, 1], [], []>} : vector<16x20xf32>, vector<20x64xf32>, vector<16x64xf32> -> vector<16x64xf32>
    %c0_24 = arith.constant 0 : index
    %c0_25 = arith.constant 0 : index
    %32 = vector.load %arg9[%c0_24, %c0_25] : memref<1x64xf32, #tpu.memory_space<vmem>>, vector<1x64xf32>
    %33 = vector.broadcast %32 : vector<1x64xf32> to vector<16x64xf32>
    %34 = arith.addf %31, %33 : vector<16x64xf32>
    %cst_26 = arith.constant 0.000000e+00 : f32
    %35 = vector.broadcast %cst_26 : f32 to vector<16x64xf32>
    %36 = arith.cmpf oge, %34, %35 : vector<16x64xf32>
    %cst_27 = arith.constant 2.500000e-01 : f32
    %37 = vector.broadcast %cst_27 : f32 to vector<16x64xf32>
    %38 = arith.mulf %37, %34 : vector<16x64xf32>
    %39 = arith.select %36, %34, %38 : vector<16x64xi1>, vector<16x64xf32>
    %c0_28 = arith.constant 0 : index
    %c0_29 = arith.constant 0 : index
    %40 = vector.load %arg10[%c0_28, %c0_29] : memref<64x64xf32, #tpu.memory_space<vmem>>, vector<64x64xf32>
    %cst_30 = arith.constant dense<0.000000e+00> : vector<16x64xf32>
    %41 = tpu.matmul %39, %40, %cst_30 {dimension_numbers = #tpu.dot_dimension_numbers<[1], [0], [0], [1], [0, 0, 1, 1], [], []>} : vector<16x64xf32>, vector<64x64xf32>, vector<16x64xf32> -> vector<16x64xf32>
    %c0_31 = arith.constant 0 : index
    %c0_32 = arith.constant 0 : index
    %42 = vector.load %arg11[%c0_31, %c0_32] : memref<1x64xf32, #tpu.memory_space<vmem>>, vector<1x64xf32>
    %43 = vector.broadcast %42 : vector<1x64xf32> to vector<16x64xf32>
    %44 = arith.addf %41, %43 : vector<16x64xf32>
    %cst_33 = arith.constant 0.000000e+00 : f32
    %45 = vector.broadcast %cst_33 : f32 to vector<16x64xf32>
    %46 = arith.cmpf oge, %44, %45 : vector<16x64xf32>
    %cst_34 = arith.constant 2.500000e-01 : f32
    %47 = vector.broadcast %cst_34 : f32 to vector<16x64xf32>
    %48 = arith.mulf %47, %44 : vector<16x64xf32>
    %49 = arith.select %46, %44, %48 : vector<16x64xi1>, vector<16x64xf32>
    %c0_35 = arith.constant 0 : index
    %c0_36 = arith.constant 0 : index
    %50 = vector.load %arg12[%c0_35, %c0_36] : memref<64x64xf32, #tpu.memory_space<vmem>>, vector<64x64xf32>
    %cst_37 = arith.constant dense<0.000000e+00> : vector<16x64xf32>
    %51 = tpu.matmul %49, %50, %cst_37 {dimension_numbers = #tpu.dot_dimension_numbers<[1], [0], [0], [1], [0, 0, 1, 1], [], []>} : vector<16x64xf32>, vector<64x64xf32>, vector<16x64xf32> -> vector<16x64xf32>
    %c0_38 = arith.constant 0 : index
    %c0_39 = arith.constant 0 : index
    %52 = vector.load %arg13[%c0_38, %c0_39] : memref<1x64xf32, #tpu.memory_space<vmem>>, vector<1x64xf32>
    %53 = vector.broadcast %52 : vector<1x64xf32> to vector<16x64xf32>
    %54 = arith.addf %51, %53 : vector<16x64xf32>
    %cst_40 = arith.constant 0.000000e+00 : f32
    %55 = vector.broadcast %cst_40 : f32 to vector<16x64xf32>
    %56 = arith.cmpf oge, %54, %55 : vector<16x64xf32>
    %cst_41 = arith.constant 2.500000e-01 : f32
    %57 = vector.broadcast %cst_41 : f32 to vector<16x64xf32>
    %58 = arith.mulf %57, %54 : vector<16x64xf32>
    %59 = arith.select %56, %54, %58 : vector<16x64xi1>, vector<16x64xf32>
    %c0_42 = arith.constant 0 : index
    %c0_43 = arith.constant 0 : index
    %60 = vector.load %arg14[%c0_42, %c0_43] : memref<64x64xf32, #tpu.memory_space<vmem>>, vector<64x64xf32>
    %cst_44 = arith.constant dense<0.000000e+00> : vector<16x64xf32>
    %61 = tpu.matmul %59, %60, %cst_44 {dimension_numbers = #tpu.dot_dimension_numbers<[1], [0], [0], [1], [0, 0, 1, 1], [], []>} : vector<16x64xf32>, vector<64x64xf32>, vector<16x64xf32> -> vector<16x64xf32>
    %c0_45 = arith.constant 0 : index
    %c0_46 = arith.constant 0 : index
    %62 = vector.load %arg15[%c0_45, %c0_46] : memref<1x64xf32, #tpu.memory_space<vmem>>, vector<1x64xf32>
    %63 = vector.broadcast %62 : vector<1x64xf32> to vector<16x64xf32>
    %64 = arith.addf %61, %63 : vector<16x64xf32>
    %cst_47 = arith.constant 0.000000e+00 : f32
    %65 = vector.broadcast %cst_47 : f32 to vector<16x64xf32>
    %66 = arith.cmpf oge, %64, %65 : vector<16x64xf32>
    %cst_48 = arith.constant 2.500000e-01 : f32
    %67 = vector.broadcast %cst_48 : f32 to vector<16x64xf32>
    %68 = arith.mulf %67, %64 : vector<16x64xf32>
    %69 = arith.select %66, %64, %68 : vector<16x64xi1>, vector<16x64xf32>
    %c0_49 = arith.constant 0 : index
    %c0_50 = arith.constant 0 : index
    %70 = vector.load %arg16[%c0_49, %c0_50] : memref<64x1xf32, #tpu.memory_space<vmem>>, vector<64x1xf32>
    %cst_51 = arith.constant dense<0.000000e+00> : vector<16x1xf32>
    %71 = tpu.matmul %69, %70, %cst_51 {dimension_numbers = #tpu.dot_dimension_numbers<[1], [0], [0], [1], [0, 0, 1, 1], [], []>} : vector<16x64xf32>, vector<64x1xf32>, vector<16x1xf32> -> vector<16x1xf32>
    %c0_52 = arith.constant 0 : index
    %c0_53 = arith.constant 0 : index
    %72 = vector.load %arg17[%c0_52, %c0_53] : memref<1x1xf32, #tpu.memory_space<vmem>>, vector<1x1xf32>
    %73 = vector.broadcast %72 : vector<1x1xf32> to vector<16x1xf32>
    %74 = arith.addf %71, %73 : vector<16x1xf32>
    %75 = arith.negf %74 : vector<16x1xf32>
    %76 = math.exp %75 : vector<16x1xf32>
    %cst_54 = arith.constant 1.000000e+00 : f32
    %77 = vector.broadcast %cst_54 : f32 to vector<16x1xf32>
    %78 = arith.addf %77, %76 : vector<16x1xf32>
    %79 = arith.divf %77, %78 : vector<16x1xf32>
    %c0_55 = arith.constant 0 : index
    %c0_56 = arith.constant 0 : index
    %80 = vector.load %arg35[%c0_55, %c0_56] : memref<16x1xf32, #tpu.memory_space<vmem>>, vector<16x1xf32>
    tpu.vector_store %arg35[%c0_55, %c0_56], %79 {strides = array<i32>} : memref<16x1xf32, #tpu.memory_space<vmem>>, vector<16x1xf32>,
    %c0_57 = arith.constant 0 : index
    %c0_58 = arith.constant 0 : index
    %81 = vector.load %arg18[%c0_57, %c0_58] : memref<32x64xf32, #tpu.memory_space<vmem>>, vector<32x64xf32>
    %cst_59 = arith.constant dense<0.000000e+00> : vector<2x64xf32>
    %82 = tpu.matmul %29, %81, %cst_59 {dimension_numbers = #tpu.dot_dimension_numbers<[1], [0], [0], [1], [0, 0, 1, 1], [], []>} : vector<2x32xf32>, vector<32x64xf32>, vector<2x64xf32> -> vector<2x64xf32>
    %c0_60 = arith.constant 0 : index
    %c0_61 = arith.constant 0 : index
    %83 = vector.load %arg19[%c0_60, %c0_61] : memref<1x64xf32, #tpu.memory_space<vmem>>, vector<1x64xf32>
    %84 = vector.broadcast %83 : vector<1x64xf32> to vector<2x64xf32>
    %85 = arith.addf %82, %84 : vector<2x64xf32>
    %cst_62 = arith.constant 0.000000e+00 : f32
    %86 = vector.broadcast %cst_62 : f32 to vector<2x64xf32>
    %87 = arith.cmpf oge, %85, %86 : vector<2x64xf32>
    %cst_63 = arith.constant 2.500000e-01 : f32
    %88 = vector.broadcast %cst_63 : f32 to vector<2x64xf32>
    %89 = arith.mulf %88, %85 : vector<2x64xf32>
    %90 = arith.select %87, %85, %89 : vector<2x64xi1>, vector<2x64xf32>
    %c0_64 = arith.constant 0 : index
    %c0_65 = arith.constant 0 : index
    %91 = vector.load %arg20[%c0_64, %c0_65] : memref<64x64xf32, #tpu.memory_space<vmem>>, vector<64x64xf32>
    %cst_66 = arith.constant dense<0.000000e+00> : vector<2x64xf32>
    %92 = tpu.matmul %90, %91, %cst_66 {dimension_numbers = #tpu.dot_dimension_numbers<[1], [0], [0], [1], [0, 0, 1, 1], [], []>} : vector<2x64xf32>, vector<64x64xf32>, vector<2x64xf32> -> vector<2x64xf32>
    %c0_67 = arith.constant 0 : index
    %c0_68 = arith.constant 0 : index
    %93 = vector.load %arg21[%c0_67, %c0_68] : memref<1x64xf32, #tpu.memory_space<vmem>>, vector<1x64xf32>
    %94 = vector.broadcast %93 : vector<1x64xf32> to vector<2x64xf32>
    %95 = arith.addf %92, %94 : vector<2x64xf32>
    %cst_69 = arith.constant 0.000000e+00 : f32
    %96 = vector.broadcast %cst_69 : f32 to vector<2x64xf32>
    %97 = arith.cmpf oge, %95, %96 : vector<2x64xf32>
    %cst_70 = arith.constant 2.500000e-01 : f32
    %98 = vector.broadcast %cst_70 : f32 to vector<2x64xf32>
    %99 = arith.mulf %98, %95 : vector<2x64xf32>
    %100 = arith.select %97, %95, %99 : vector<2x64xi1>, vector<2x64xf32>
    %c0_71 = arith.constant 0 : index
    %c0_72 = arith.constant 0 : index
    %101 = vector.load %arg22[%c0_71, %c0_72] : memref<64x64xf32, #tpu.memory_space<vmem>>, vector<64x64xf32>
    %cst_73 = arith.constant dense<0.000000e+00> : vector<2x64xf32>
    %102 = tpu.matmul %100, %101, %cst_73 {dimension_numbers = #tpu.dot_dimension_numbers<[1], [0], [0], [1], [0, 0, 1, 1], [], []>} : vector<2x64xf32>, vector<64x64xf32>, vector<2x64xf32> -> vector<2x64xf32>
    %c0_74 = arith.constant 0 : index
    %c0_75 = arith.constant 0 : index
    %103 = vector.load %arg23[%c0_74, %c0_75] : memref<1x64xf32, #tpu.memory_space<vmem>>, vector<1x64xf32>
    %104 = vector.broadcast %103 : vector<1x64xf32> to vector<2x64xf32>
    %105 = arith.addf %102, %104 : vector<2x64xf32>
    %cst_76 = arith.constant 0.000000e+00 : f32
    %106 = vector.broadcast %cst_76 : f32 to vector<2x64xf32>
    %107 = arith.cmpf oge, %105, %106 : vector<2x64xf32>
    %cst_77 = arith.constant 2.500000e-01 : f32
    %108 = vector.broadcast %cst_77 : f32 to vector<2x64xf32>
    %109 = arith.mulf %108, %105 : vector<2x64xf32>
    %110 = arith.select %107, %105, %109 : vector<2x64xi1>, vector<2x64xf32>
    %c0_78 = arith.constant 0 : index
    %c0_79 = arith.constant 0 : index
    %111 = vector.load %arg24[%c0_78, %c0_79] : memref<64x64xf32, #tpu.memory_space<vmem>>, vector<64x64xf32>
    %cst_80 = arith.constant dense<0.000000e+00> : vector<2x64xf32>
    %112 = tpu.matmul %110, %111, %cst_80 {dimension_numbers = #tpu.dot_dimension_numbers<[1], [0], [0], [1], [0, 0, 1, 1], [], []>} : vector<2x64xf32>, vector<64x64xf32>, vector<2x64xf32> -> vector<2x64xf32>
    %c0_81 = arith.constant 0 : index
    %c0_82 = arith.constant 0 : index
    %113 = vector.load %arg25[%c0_81, %c0_82] : memref<1x64xf32, #tpu.memory_space<vmem>>, vector<1x64xf32>
    %114 = vector.broadcast %113 : vector<1x64xf32> to vector<2x64xf32>
    %115 = arith.addf %112, %114 : vector<2x64xf32>
    %cst_83 = arith.constant 0.000000e+00 : f32
    %116 = vector.broadcast %cst_83 : f32 to vector<2x64xf32>
    %117 = arith.cmpf oge, %115, %116 : vector<2x64xf32>
    %cst_84 = arith.constant 2.500000e-01 : f32
    %118 = vector.broadcast %cst_84 : f32 to vector<2x64xf32>
    %119 = arith.mulf %118, %115 : vector<2x64xf32>
    %120 = arith.select %117, %115, %119 : vector<2x64xi1>, vector<2x64xf32>
    %c0_85 = arith.constant 0 : index
    %c0_86 = arith.constant 0 : index
    %121 = vector.load %arg26[%c0_85, %c0_86] : memref<64x64xf32, #tpu.memory_space<vmem>>, vector<64x64xf32>
    %cst_87 = arith.constant dense<0.000000e+00> : vector<2x64xf32>
    %122 = tpu.matmul %120, %121, %cst_87 {dimension_numbers = #tpu.dot_dimension_numbers<[1], [0], [0], [1], [0, 0, 1, 1], [], []>} : vector<2x64xf32>, vector<64x64xf32>, vector<2x64xf32> -> vector<2x64xf32>
    %c0_88 = arith.constant 0 : index
    %c0_89 = arith.constant 0 : index
    %123 = vector.load %arg27[%c0_88, %c0_89] : memref<1x64xf32, #tpu.memory_space<vmem>>, vector<1x64xf32>
    %124 = vector.broadcast %123 : vector<1x64xf32> to vector<2x64xf32>
    %125 = arith.addf %122, %124 : vector<2x64xf32>
    %cst_90 = arith.constant 0.000000e+00 : f32
    %126 = vector.broadcast %cst_90 : f32 to vector<2x64xf32>
    %127 = arith.cmpf oge, %125, %126 : vector<2x64xf32>
    %cst_91 = arith.constant 2.500000e-01 : f32
    %128 = vector.broadcast %cst_91 : f32 to vector<2x64xf32>
    %129 = arith.mulf %128, %125 : vector<2x64xf32>
    %130 = arith.select %127, %125, %129 : vector<2x64xi1>, vector<2x64xf32>
    %c0_92 = arith.constant 0 : index
    %c0_93 = arith.constant 0 : index
    %131 = vector.load %arg28[%c0_92, %c0_93] : memref<64x3xf32, #tpu.memory_space<vmem>>, vector<64x3xf32>
    %cst_94 = arith.constant dense<0.000000e+00> : vector<2x3xf32>
    %132 = tpu.matmul %130, %131, %cst_94 {dimension_numbers = #tpu.dot_dimension_numbers<[1], [0], [0], [1], [0, 0, 1, 1], [], []>} : vector<2x64xf32>, vector<64x3xf32>, vector<2x3xf32> -> vector<2x3xf32>
    %c0_95 = arith.constant 0 : index
    %c0_96 = arith.constant 0 : index
    %133 = vector.load %arg29[%c0_95, %c0_96] : memref<1x3xf32, #tpu.memory_space<vmem>>, vector<1x3xf32>
    %134 = vector.broadcast %133 : vector<1x3xf32> to vector<2x3xf32>
    %135 = arith.addf %132, %134 : vector<2x3xf32>
    %136 = vector.extract_strided_slice %135 {offsets = [0, 0], sizes = [2, 1], strides = [1, 1]} : vector<2x3xf32> to vector<2x1xf32>
    %cst_97 = arith.constant 0.000000e+00 : f32
    %137 = vector.broadcast %cst_97 : f32 to vector<2x1xf32>
    %138 = arith.maximumf %136, %137 : vector<2x1xf32>
    %cst_98 = arith.constant 0.785398185 : f32
    %139 = vector.broadcast %cst_98 : f32 to vector<2x1xf32>
    %140 = arith.addf %138, %139 : vector<2x1xf32>
    %141 = vector.extract_strided_slice %135 {offsets = [0, 1], sizes = [2, 1], strides = [1, 1]} : vector<2x3xf32> to vector<2x1xf32>
    %142 = math.tanh %141 : vector<2x1xf32>
    %cst_99 = arith.constant 3.14159274 : f32
    %143 = vector.broadcast %cst_99 : f32 to vector<2x1xf32>
    %144 = arith.mulf %142, %143 : vector<2x1xf32>
    %145 = vector.extract_strided_slice %135 {offsets = [0, 2], sizes = [2, 1], strides = [1, 1]} : vector<2x3xf32> to vector<2x1xf32>
    %146 = math.tanh %145 : vector<2x1xf32>
    %c0_100 = arith.constant 0 : index
    %c0_101 = arith.constant 0 : index
    %147 = vector.load %arg30[%c0_100, %c0_101] : memref<32x32xf32, #tpu.memory_space<vmem>>, vector<32x32xf32>
    %cst_102 = arith.constant dense<0.000000e+00> : vector<2x32xf32>
    %148 = tpu.matmul %29, %147, %cst_102 {dimension_numbers = #tpu.dot_dimension_numbers<[1], [0], [0], [1], [0, 0, 1, 1], [], []>} : vector<2x32xf32>, vector<32x32xf32>, vector<2x32xf32> -> vector<2x32xf32>
    %c0_103 = arith.constant 0 : index
    %c0_104 = arith.constant 0 : index
    %149 = vector.load %arg31[%c0_103, %c0_104] : memref<1x32xf32, #tpu.memory_space<vmem>>, vector<1x32xf32>
    %150 = vector.broadcast %149 : vector<1x32xf32> to vector<2x32xf32>
    %151 = arith.addf %148, %150 : vector<2x32xf32>
    %cst_105 = arith.constant 0.000000e+00 : f32
    %152 = vector.broadcast %cst_105 : f32 to vector<2x32xf32>
    %153 = arith.cmpf oge, %151, %152 : vector<2x32xf32>
    %cst_106 = arith.constant 2.500000e-01 : f32
    %154 = vector.broadcast %cst_106 : f32 to vector<2x32xf32>
    %155 = arith.mulf %154, %151 : vector<2x32xf32>
    %156 = arith.select %153, %151, %155 : vector<2x32xi1>, vector<2x32xf32>
    %c0_107 = arith.constant 0 : index
    %c0_108 = arith.constant 0 : index
    %157 = vector.load %arg32[%c0_107, %c0_108] : memref<32x1xf32, #tpu.memory_space<vmem>>, vector<32x1xf32>
    %cst_109 = arith.constant dense<0.000000e+00> : vector<2x1xf32>
    %158 = tpu.matmul %156, %157, %cst_109 {dimension_numbers = #tpu.dot_dimension_numbers<[1], [0], [0], [1], [0, 0, 1, 1], [], []>} : vector<2x32xf32>, vector<32x1xf32>, vector<2x1xf32> -> vector<2x1xf32>
    %c0_110 = arith.constant 0 : index
    %c0_111 = arith.constant 0 : index
    %159 = vector.load %arg33[%c0_110, %c0_111] : memref<1x1xf32, #tpu.memory_space<vmem>>, vector<1x1xf32>
    %160 = vector.broadcast %159 : vector<1x1xf32> to vector<2x1xf32>
    %161 = arith.addf %158, %160 : vector<2x1xf32>
    %162 = arith.negf %161 : vector<2x1xf32>
    %163 = math.exp %162 : vector<2x1xf32>
    %cst_112 = arith.constant 1.000000e+00 : f32
    %164 = vector.broadcast %cst_112 : f32 to vector<2x1xf32>
    %165 = arith.addf %164, %163 : vector<2x1xf32>
    %166 = arith.divf %164, %165 : vector<2x1xf32>
    %cst_113 = arith.constant 8.000000e+00 : f32
    %167 = vector.broadcast %cst_113 : f32 to vector<2x1xf32>
    %168 = arith.mulf %166, %167 : vector<2x1xf32>
    %169 = tpu.iota {dimensions = array<i32: 1>} : vector<2x4xi32>
    %c0_i32 = arith.constant 0 : i32
    %170 = vector.broadcast %c0_i32 : i32 to vector<2x4xi32>
    %171 = arith.cmpi eq, %169, %170 : vector<2x4xi32>
    %c1_i32 = arith.constant 1 : i32
    %172 = vector.broadcast %c1_i32 : i32 to vector<2x4xi32>
    %173 = arith.cmpi eq, %169, %172 : vector<2x4xi32>
    %c2_i32 = arith.constant 2 : i32
    %174 = vector.broadcast %c2_i32 : i32 to vector<2x4xi32>
    %175 = arith.cmpi eq, %169, %174 : vector<2x4xi32>
    %176 = vector.shape_cast %146 : vector<2x1xf32> to vector<2x1xf32>
    %177 = vector.broadcast %176 : vector<2x1xf32> to vector<2x4xf32>
    %178 = vector.shape_cast %168 : vector<2x1xf32> to vector<2x1xf32>
    %179 = vector.broadcast %178 : vector<2x1xf32> to vector<2x4xf32>
    %180 = arith.select %175, %177, %179 : vector<2x4xi1>, vector<2x4xf32>
    %181 = vector.shape_cast %144 : vector<2x1xf32> to vector<2x1xf32>
    %182 = vector.broadcast %181 : vector<2x1xf32> to vector<2x4xf32>
    %183 = arith.select %173, %182, %180 : vector<2x4xi1>, vector<2x4xf32>
    %184 = vector.shape_cast %140 : vector<2x1xf32> to vector<2x1xf32>
    %185 = vector.broadcast %184 : vector<2x1xf32> to vector<2x4xf32>
    %186 = arith.select %171, %185, %183 : vector<2x4xi1>, vector<2x4xf32>
    %c0_114 = arith.constant 0 : index
    %c0_115 = arith.constant 0 : index
    %187 = vector.load %arg37[%c0_114, %c0_115] : memref<2x4xf32, #tpu.memory_space<vmem>>, vector<2x4xf32>
    tpu.vector_store %arg37[%c0_114, %c0_115], %186 {strides = array<i32>} : memref<2x4xf32, #tpu.memory_space<vmem>>, vector<2x4xf32>,
    %c0_116 = arith.constant 0 : index
    %c0_117 = arith.constant 0 : index
    %188 = vector.load %arg1[%c0_116, %c0_117] : memref<16x1xf32, #tpu.memory_space<vmem>>, vector<8x1xf32>
    %c0_118 = arith.constant 0 : index
    %c0_119 = arith.constant 0 : index
    %189 = vector.load %arg2[%c0_118, %c0_119] : memref<2x8xf32, #tpu.memory_space<vmem>>, vector<1x8xf32>
    %190 = vector.extract_strided_slice %140 {offsets = [0, 0], sizes = [1, 1], strides = [1, 1]} : vector<2x1xf32> to vector<1x1xf32>
    %191 = vector.extract_strided_slice %144 {offsets = [0, 0], sizes = [1, 1], strides = [1, 1]} : vector<2x1xf32> to vector<1x1xf32>
    %192 = vector.extract_strided_slice %146 {offsets = [0, 0], sizes = [1, 1], strides = [1, 1]} : vector<2x1xf32> to vector<1x1xf32>
    %193 = vector.extract_strided_slice %168 {offsets = [0, 0], sizes = [1, 1], strides = [1, 1]} : vector<2x1xf32> to vector<1x1xf32>
    %194 = vector.broadcast %190 : vector<1x1xf32> to vector<8x1xf32>
    %195 = arith.mulf %194, %188 : vector<8x1xf32>
    %196 = vector.broadcast %191 : vector<1x1xf32> to vector<8x1xf32>
    %197 = arith.addf %195, %196 : vector<8x1xf32>
    %198 = math.sin %197 : vector<8x1xf32>
    %199 = vector.broadcast %192 : vector<1x1xf32> to vector<8x1xf32>
    %200 = arith.subf %198, %199 : vector<8x1xf32>
    %cst_120 = arith.constant 2.500000e-01 : f32
    %201 = vector.broadcast %cst_120 : f32 to vector<8x1xf32>
    %202 = arith.mulf %200, %201 : vector<8x1xf32>
    %cst_121 = arith.constant 5.000000e-01 : f32
    %203 = vector.broadcast %cst_121 : f32 to vector<8x1xf32>
    %204 = arith.addf %202, %203 : vector<8x1xf32>
    %205 = vector.extract_strided_slice %79 {offsets = [0, 0], sizes = [8, 1], strides = [1, 1]} : vector<16x1xf32> to vector<8x1xf32>
    %cst_122 = arith.constant 5.000000e-01 : f32
    %206 = vector.broadcast %cst_122 : f32 to vector<8x1xf32>
    %207 = arith.cmpf ogt, %204, %206 : vector<8x1xf32>
    %cst_123 = arith.constant 5.000000e-01 : f32
    %208 = vector.broadcast %cst_123 : f32 to vector<8x1xf32>
    %209 = arith.cmpf ogt, %205, %208 : vector<8x1xf32>
    %210 = arith.andi %207, %209 : vector<8x1xi1>
    %cst_124 = arith.constant 1.000000e+00 : f32
    %cst_125 = arith.constant 0.000000e+00 : f32
    %211 = vector.broadcast %cst_124 : f32 to vector<8x1xf32>
    %212 = vector.broadcast %cst_125 : f32 to vector<8x1xf32>
    %213 = arith.select %210, %211, %212 : vector<8x1xi1>, vector<8x1xf32>
    %c0_126 = arith.constant 0 : index
    %c0_127 = arith.constant 0 : index
    %214 = vector.load %arg36[%c0_126, %c0_127] : memref<16x1xf32, #tpu.memory_space<vmem>>, vector<8x1xf32>
    tpu.vector_store %arg36[%c0_126, %c0_127], %213 {strides = array<i32>} : memref<16x1xf32, #tpu.memory_space<vmem>>, vector<8x1xf32>,
    %215 = vector.broadcast %188 : vector<8x1xf32> to vector<8x8xf32>
    %216 = vector.broadcast %189 : vector<1x8xf32> to vector<8x8xf32>
    %217 = arith.subf %215, %216 : vector<8x8xf32>
    %218 = arith.mulf %217, %217 : vector<8x8xf32>
    %cst_128 = arith.constant 0.000000e+00 : f32
    %219 = vector.broadcast %cst_128 : f32 to vector<8x8xf32>
    %220 = arith.subf %219, %218 : vector<8x8xf32>
    %cst_129 = arith.constant 9.99999971E-10 : f32
    %221 = vector.broadcast %cst_129 : f32 to vector<1x1xf32>
    %222 = arith.addf %193, %221 : vector<1x1xf32>
    %223 = vector.broadcast %222 : vector<1x1xf32> to vector<8x8xf32>
    %224 = arith.divf %220, %223 : vector<8x8xf32>
    %225 = math.exp %224 : vector<8x8xf32>
    %c0_130 = arith.constant 0 : index
    %c0_131 = arith.constant 0 : index
    %226 = vector.load %arg3[%c0_130, %c0_131] : memref<16x4xf32, #tpu.memory_space<vmem>>, vector<8x4xf32>
    %227 = vector.broadcast %213 : vector<8x1xf32> to vector<8x4xf32>
    %228 = arith.mulf %227, %226 : vector<8x4xf32>
    %cst_132 = arith.constant dense<0.000000e+00> : vector<8x4xf32>
    %229 = tpu.matmul %225, %228, %cst_132 {dimension_numbers = #tpu.dot_dimension_numbers<[1], [0], [0], [1], [0, 0, 1, 1], [], []>} : vector<8x8xf32>, vector<8x4xf32>, vector<8x4xf32> -> vector<8x4xf32>
    %cst_133 = arith.constant dense<0.000000e+00> : vector<8x1xf32>
    %230 = tpu.matmul %225, %213, %cst_133 {dimension_numbers = #tpu.dot_dimension_numbers<[1], [0], [0], [1], [0, 0, 1, 1], [], []>} : vector<8x8xf32>, vector<8x1xf32>, vector<8x1xf32> -> vector<8x1xf32>
    %cst_134 = arith.constant 9.99999971E-10 : f32
    %231 = vector.broadcast %cst_134 : f32 to vector<8x1xf32>
    %232 = arith.addf %230, %231 : vector<8x1xf32>
    %233 = vector.broadcast %232 : vector<8x1xf32> to vector<8x4xf32>
    %234 = arith.divf %229, %233 : vector<8x4xf32>
    %c0_135 = arith.constant 0 : index
    %c0_136 = arith.constant 0 : index
    %235 = vector.load %arg34[%c0_135, %c0_136] : memref<16x4xf32, #tpu.memory_space<vmem>>, vector<8x4xf32>
    tpu.vector_store %arg34[%c0_135, %c0_136], %234 {strides = array<i32>} : memref<16x4xf32, #tpu.memory_space<vmem>>, vector<8x4xf32>,
    %c8 = arith.constant 8 : index
    %c0_137 = arith.constant 0 : index
    %236 = vector.load %arg1[%c8, %c0_137] : memref<16x1xf32, #tpu.memory_space<vmem>>, vector<8x1xf32>
    %c1_138 = arith.constant 1 : index
    %c0_139 = arith.constant 0 : index
    %237 = vector.load %arg2[%c1_138, %c0_139] : memref<2x8xf32, #tpu.memory_space<vmem>>, vector<1x8xf32>
    %238 = vector.extract_strided_slice %140 {offsets = [1, 0], sizes = [1, 1], strides = [1, 1]} : vector<2x1xf32> to vector<1x1xf32>
    %239 = vector.extract_strided_slice %144 {offsets = [1, 0], sizes = [1, 1], strides = [1, 1]} : vector<2x1xf32> to vector<1x1xf32>
    %240 = vector.extract_strided_slice %146 {offsets = [1, 0], sizes = [1, 1], strides = [1, 1]} : vector<2x1xf32> to vector<1x1xf32>
    %241 = vector.extract_strided_slice %168 {offsets = [1, 0], sizes = [1, 1], strides = [1, 1]} : vector<2x1xf32> to vector<1x1xf32>
    %242 = vector.broadcast %238 : vector<1x1xf32> to vector<8x1xf32>
    %243 = arith.mulf %242, %236 : vector<8x1xf32>
    %244 = vector.broadcast %239 : vector<1x1xf32> to vector<8x1xf32>
    %245 = arith.addf %243, %244 : vector<8x1xf32>
    %246 = math.sin %245 : vector<8x1xf32>
    %247 = vector.broadcast %240 : vector<1x1xf32> to vector<8x1xf32>
    %248 = arith.subf %246, %247 : vector<8x1xf32>
    %cst_140 = arith.constant 2.500000e-01 : f32
    %249 = vector.broadcast %cst_140 : f32 to vector<8x1xf32>
    %250 = arith.mulf %248, %249 : vector<8x1xf32>
    %cst_141 = arith.constant 5.000000e-01 : f32
    %251 = vector.broadcast %cst_141 : f32 to vector<8x1xf32>
    %252 = arith.addf %250, %251 : vector<8x1xf32>
    %253 = vector.extract_strided_slice %79 {offsets = [8, 0], sizes = [8, 1], strides = [1, 1]} : vector<16x1xf32> to vector<8x1xf32>
    %cst_142 = arith.constant 5.000000e-01 : f32
    %254 = vector.broadcast %cst_142 : f32 to vector<8x1xf32>
    %255 = arith.cmpf ogt, %252, %254 : vector<8x1xf32>
    %cst_143 = arith.constant 5.000000e-01 : f32
    %256 = vector.broadcast %cst_143 : f32 to vector<8x1xf32>
    %257 = arith.cmpf ogt, %253, %256 : vector<8x1xf32>
    %258 = arith.andi %255, %257 : vector<8x1xi1>
    %cst_144 = arith.constant 1.000000e+00 : f32
    %cst_145 = arith.constant 0.000000e+00 : f32
    %259 = vector.broadcast %cst_144 : f32 to vector<8x1xf32>
    %260 = vector.broadcast %cst_145 : f32 to vector<8x1xf32>
    %261 = arith.select %258, %259, %260 : vector<8x1xi1>, vector<8x1xf32>
    %c8_146 = arith.constant 8 : index
    %c0_147 = arith.constant 0 : index
    %262 = vector.load %arg36[%c8_146, %c0_147] : memref<16x1xf32, #tpu.memory_space<vmem>>, vector<8x1xf32>
    tpu.vector_store %arg36[%c8_146, %c0_147], %261 {strides = array<i32>} : memref<16x1xf32, #tpu.memory_space<vmem>>, vector<8x1xf32>,
    %263 = vector.broadcast %236 : vector<8x1xf32> to vector<8x8xf32>
    %264 = vector.broadcast %237 : vector<1x8xf32> to vector<8x8xf32>
    %265 = arith.subf %263, %264 : vector<8x8xf32>
    %266 = arith.mulf %265, %265 : vector<8x8xf32>
    %cst_148 = arith.constant 0.000000e+00 : f32
    %267 = vector.broadcast %cst_148 : f32 to vector<8x8xf32>
    %268 = arith.subf %267, %266 : vector<8x8xf32>
    %cst_149 = arith.constant 9.99999971E-10 : f32
    %269 = vector.broadcast %cst_149 : f32 to vector<1x1xf32>
    %270 = arith.addf %241, %269 : vector<1x1xf32>
    %271 = vector.broadcast %270 : vector<1x1xf32> to vector<8x8xf32>
    %272 = arith.divf %268, %271 : vector<8x8xf32>
    %273 = math.exp %272 : vector<8x8xf32>
    %c8_150 = arith.constant 8 : index
    %c0_151 = arith.constant 0 : index
    %274 = vector.load %arg3[%c8_150, %c0_151] : memref<16x4xf32, #tpu.memory_space<vmem>>, vector<8x4xf32>
    %275 = vector.broadcast %261 : vector<8x1xf32> to vector<8x4xf32>
    %276 = arith.mulf %275, %274 : vector<8x4xf32>
    %cst_152 = arith.constant dense<0.000000e+00> : vector<8x4xf32>
    %277 = tpu.matmul %273, %276, %cst_152 {dimension_numbers = #tpu.dot_dimension_numbers<[1], [0], [0], [1], [0, 0, 1, 1], [], []>} : vector<8x8xf32>, vector<8x4xf32>, vector<8x4xf32> -> vector<8x4xf32>
    %cst_153 = arith.constant dense<0.000000e+00> : vector<8x1xf32>
    %278 = tpu.matmul %273, %261, %cst_153 {dimension_numbers = #tpu.dot_dimension_numbers<[1], [0], [0], [1], [0, 0, 1, 1], [], []>} : vector<8x8xf32>, vector<8x1xf32>, vector<8x1xf32> -> vector<8x1xf32>
    %cst_154 = arith.constant 9.99999971E-10 : f32
    %279 = vector.broadcast %cst_154 : f32 to vector<8x1xf32>
    %280 = arith.addf %278, %279 : vector<8x1xf32>
    %281 = vector.broadcast %280 : vector<8x1xf32> to vector<8x4xf32>
    %282 = arith.divf %277, %281 : vector<8x4xf32>
    %c8_155 = arith.constant 8 : index
    %c0_156 = arith.constant 0 : index
    %283 = vector.load %arg34[%c8_155, %c0_156] : memref<16x4xf32, #tpu.memory_space<vmem>>, vector<8x4xf32>
    tpu.vector_store %arg34[%c8_155, %c0_156], %282 {strides = array<i32>} : memref<16x4xf32, #tpu.memory_space<vmem>>, vector<8x4xf32>,
    return
  }
}

module attributes {stable_mosaic.version = 11 : i64} {
  func.func @_encoder_kernel(%arg0: memref<16x20xf32, #tpu.memory_space<vmem>>, %arg1: memref<2x8xf32, #tpu.memory_space<vmem>>, %arg2: memref<16x1xf32, #tpu.memory_space<vmem>>, %arg3: memref<20x60xf32, #tpu.memory_space<vmem>>, %arg4: memref<1x60xf32, #tpu.memory_space<vmem>>, %arg5: memref<20x20xf32, #tpu.memory_space<vmem>>, %arg6: memref<1x20xf32, #tpu.memory_space<vmem>>, %arg7: memref<1x20xf32, #tpu.memory_space<vmem>>, %arg8: memref<1x20xf32, #tpu.memory_space<vmem>>, %arg9: memref<20x32xf32, #tpu.memory_space<vmem>>, %arg10: memref<1x32xf32, #tpu.memory_space<vmem>>, %arg11: memref<32x20xf32, #tpu.memory_space<vmem>>, %arg12: memref<1x20xf32, #tpu.memory_space<vmem>>, %arg13: memref<1x20xf32, #tpu.memory_space<vmem>>, %arg14: memref<1x20xf32, #tpu.memory_space<vmem>>, %arg15: memref<1x20xf32, #tpu.memory_space<vmem>>, %arg16: memref<1x20xf32, #tpu.memory_space<vmem>>, %arg17: memref<20x20xf32, #tpu.memory_space<vmem>>, %arg18: memref<1x20xf32, #tpu.memory_space<vmem>>, %arg19: memref<20x2xf32, #tpu.memory_space<vmem>>, %arg20: memref<1x2xf32, #tpu.memory_space<vmem>>, %arg21: memref<16x20xf32, #tpu.memory_space<vmem>>, %arg22: memref<2x2xf32, #tpu.memory_space<vmem>>) attributes {dimension_semantics = [], scalar_prefetch = 0 : i64, scratch_operands = 0 : i64, tpu.core_type = #tpu.core_type<tc>} {
    %c0 = arith.constant 0 : index
    %c0_0 = arith.constant 0 : index
    %0 = vector.load %arg0[%c0, %c0_0] : memref<16x20xf32, #tpu.memory_space<vmem>>, vector<16x20xf32>
    %c0_1 = arith.constant 0 : index
    %c0_2 = arith.constant 0 : index
    %1 = vector.load %arg3[%c0_1, %c0_2] : memref<20x60xf32, #tpu.memory_space<vmem>>, vector<20x60xf32>
    %cst = arith.constant dense<0.000000e+00> : vector<16x60xf32>
    %2 = tpu.matmul %0, %1, %cst {dimension_numbers = #tpu.dot_dimension_numbers<[1], [0], [0], [1], [0, 0, 1, 1], [], []>} : vector<16x20xf32>, vector<20x60xf32>, vector<16x60xf32> -> vector<16x60xf32>
    %c0_3 = arith.constant 0 : index
    %c0_4 = arith.constant 0 : index
    %3 = vector.load %arg4[%c0_3, %c0_4] : memref<1x60xf32, #tpu.memory_space<vmem>>, vector<1x60xf32>
    %4 = vector.broadcast %3 : vector<1x60xf32> to vector<16x60xf32>
    %5 = arith.addf %2, %4 : vector<16x60xf32>
    %c0_5 = arith.constant 0 : index
    %c0_6 = arith.constant 0 : index
    %6 = vector.load %arg5[%c0_5, %c0_6] : memref<20x20xf32, #tpu.memory_space<vmem>>, vector<20x20xf32>
    %c0_7 = arith.constant 0 : index
    %c0_8 = arith.constant 0 : index
    %7 = vector.load %arg6[%c0_7, %c0_8] : memref<1x20xf32, #tpu.memory_space<vmem>>, vector<1x20xf32>
    %c0_9 = arith.constant 0 : index
    %c0_10 = arith.constant 0 : index
    %8 = vector.load %arg9[%c0_9, %c0_10] : memref<20x32xf32, #tpu.memory_space<vmem>>, vector<20x32xf32>
    %c0_11 = arith.constant 0 : index
    %c0_12 = arith.constant 0 : index
    %9 = vector.load %arg10[%c0_11, %c0_12] : memref<1x32xf32, #tpu.memory_space<vmem>>, vector<1x32xf32>
    %c0_13 = arith.constant 0 : index
    %c0_14 = arith.constant 0 : index
    %10 = vector.load %arg11[%c0_13, %c0_14] : memref<32x20xf32, #tpu.memory_space<vmem>>, vector<32x20xf32>
    %c0_15 = arith.constant 0 : index
    %c0_16 = arith.constant 0 : index
    %11 = vector.load %arg12[%c0_15, %c0_16] : memref<1x20xf32, #tpu.memory_space<vmem>>, vector<1x20xf32>
    %c0_17 = arith.constant 0 : index
    %c0_18 = arith.constant 0 : index
    %12 = vector.load %arg7[%c0_17, %c0_18] : memref<1x20xf32, #tpu.memory_space<vmem>>, vector<1x20xf32>
    %c0_19 = arith.constant 0 : index
    %c0_20 = arith.constant 0 : index
    %13 = vector.load %arg8[%c0_19, %c0_20] : memref<1x20xf32, #tpu.memory_space<vmem>>, vector<1x20xf32>
    %c0_21 = arith.constant 0 : index
    %c0_22 = arith.constant 0 : index
    %14 = vector.load %arg13[%c0_21, %c0_22] : memref<1x20xf32, #tpu.memory_space<vmem>>, vector<1x20xf32>
    %c0_23 = arith.constant 0 : index
    %c0_24 = arith.constant 0 : index
    %15 = vector.load %arg14[%c0_23, %c0_24] : memref<1x20xf32, #tpu.memory_space<vmem>>, vector<1x20xf32>
    %c0_25 = arith.constant 0 : index
    %c0_26 = arith.constant 0 : index
    %16 = vector.load %arg15[%c0_25, %c0_26] : memref<1x20xf32, #tpu.memory_space<vmem>>, vector<1x20xf32>
    %c0_27 = arith.constant 0 : index
    %c0_28 = arith.constant 0 : index
    %17 = vector.load %arg16[%c0_27, %c0_28] : memref<1x20xf32, #tpu.memory_space<vmem>>, vector<1x20xf32>
    %18 = vector.extract_strided_slice %0 {offsets = [0, 0], sizes = [8, 20], strides = [1, 1]} : vector<16x20xf32> to vector<8x20xf32>
    %19 = vector.extract_strided_slice %5 {offsets = [0, 0], sizes = [8, 20], strides = [1, 1]} : vector<16x60xf32> to vector<8x20xf32>
    %20 = vector.extract_strided_slice %5 {offsets = [0, 20], sizes = [8, 20], strides = [1, 1]} : vector<16x60xf32> to vector<8x20xf32>
    %21 = vector.extract_strided_slice %5 {offsets = [0, 40], sizes = [8, 20], strides = [1, 1]} : vector<16x60xf32> to vector<8x20xf32>
    %cst_29 = arith.constant dense<0.000000e+00> : vector<8x8xf32>
    %22 = tpu.matmul %19, %20, %cst_29 {dimension_numbers = #tpu.dot_dimension_numbers<[1], [1], [0], [0], [0, 0, 1, 0], [], []>} : vector<8x20xf32>, vector<8x20xf32>, vector<8x8xf32> -> vector<8x8xf32>
    %cst_30 = arith.constant 0.223606795 : f32
    %23 = vector.broadcast %cst_30 : f32 to vector<8x8xf32>
    %24 = arith.mulf %22, %23 : vector<8x8xf32>
    %c0_31 = arith.constant 0 : index
    %c0_32 = arith.constant 0 : index
    %25 = vector.load %arg1[%c0_31, %c0_32] : memref<2x8xf32, #tpu.memory_space<vmem>>, vector<1x8xf32>
    %c0_33 = arith.constant 0 : index
    %c0_34 = arith.constant 0 : index
    %26 = vector.load %arg2[%c0_33, %c0_34] : memref<16x1xf32, #tpu.memory_space<vmem>>, vector<8x1xf32>
    %cst_35 = arith.constant 5.000000e-01 : f32
    %27 = vector.broadcast %cst_35 : f32 to vector<1x8xf32>
    %28 = arith.cmpf ogt, %25, %27 : vector<1x8xf32>
    %cst_36 = arith.constant -1.000000e+09 : f32
    %29 = vector.shape_cast %28 : vector<1x8xi1> to vector<1x8xi1>
    %30 = vector.broadcast %29 : vector<1x8xi1> to vector<8x8xi1>
    %31 = vector.broadcast %cst_36 : f32 to vector<8x8xf32>
    %32 = arith.select %30, %24, %31 : vector<8x8xi1>, vector<8x8xf32>
    %cst_37 = arith.constant 5.000000e-01 : f32
    %33 = vector.broadcast %cst_37 : f32 to vector<8x1xf32>
    %34 = arith.cmpf ogt, %26, %33 : vector<8x1xf32>
    %cst_38 = arith.constant -1.000000e+09 : f32
    %35 = vector.shape_cast %34 : vector<8x1xi1> to vector<8x1xi1>
    %36 = vector.broadcast %35 : vector<8x1xi1> to vector<8x8xi1>
    %37 = vector.broadcast %cst_38 : f32 to vector<8x8xf32>
    %38 = arith.select %36, %32, %37 : vector<8x8xi1>, vector<8x8xf32>
    %cst_39 = arith.constant dense<0xFF800000> : vector<8xf32>
    %39 = vector.multi_reduction <maximumf>, %38, %cst_39 [1] : vector<8x8xf32> to vector<8xf32>
    %40 = vector.shape_cast %39 : vector<8xf32> to vector<8x1xf32>
    %41 = vector.broadcast %40 : vector<8x1xf32> to vector<8x8xf32>
    %42 = arith.subf %38, %41 : vector<8x8xf32>
    %43 = math.exp %42 : vector<8x8xf32>
    %cst_40 = arith.constant dense<0.000000e+00> : vector<8xf32>
    %44 = vector.multi_reduction <add>, %43, %cst_40 [1] : vector<8x8xf32> to vector<8xf32>
    %45 = vector.shape_cast %44 : vector<8xf32> to vector<8x1xf32>
    %46 = vector.broadcast %45 : vector<8x1xf32> to vector<8x8xf32>
    %47 = arith.divf %43, %46 : vector<8x8xf32>
    %cst_41 = arith.constant dense<0.000000e+00> : vector<8x20xf32>
    %48 = tpu.matmul %47, %21, %cst_41 {dimension_numbers = #tpu.dot_dimension_numbers<[1], [0], [0], [1], [0, 0, 1, 1], [], []>} : vector<8x8xf32>, vector<8x20xf32>, vector<8x20xf32> -> vector<8x20xf32>
    %cst_42 = arith.constant dense<0.000000e+00> : vector<8x20xf32>
    %49 = tpu.matmul %48, %6, %cst_42 {dimension_numbers = #tpu.dot_dimension_numbers<[1], [0], [0], [1], [0, 0, 1, 1], [], []>} : vector<8x20xf32>, vector<20x20xf32>, vector<8x20xf32> -> vector<8x20xf32>
    %50 = vector.broadcast %7 : vector<1x20xf32> to vector<8x20xf32>
    %51 = arith.addf %49, %50 : vector<8x20xf32>
    %52 = arith.addf %18, %51 : vector<8x20xf32>
    %cst_43 = arith.constant dense<0.000000e+00> : vector<8xf32>
    %53 = vector.multi_reduction <add>, %52, %cst_43 [1] : vector<8x20xf32> to vector<8xf32>
    %54 = vector.shape_cast %53 : vector<8xf32> to vector<8x1xf32>
    %cst_44 = arith.constant 2.000000e+01 : f32
    %55 = vector.broadcast %cst_44 : f32 to vector<8x1xf32>
    %56 = arith.divf %54, %55 : vector<8x1xf32>
    %57 = vector.broadcast %56 : vector<8x1xf32> to vector<8x20xf32>
    %58 = arith.subf %52, %57 : vector<8x20xf32>
    %59 = arith.mulf %58, %58 : vector<8x20xf32>
    %cst_45 = arith.constant dense<0.000000e+00> : vector<8xf32>
    %60 = vector.multi_reduction <add>, %59, %cst_45 [1] : vector<8x20xf32> to vector<8xf32>
    %61 = vector.shape_cast %60 : vector<8xf32> to vector<8x1xf32>
    %cst_46 = arith.constant 2.000000e+01 : f32
    %62 = vector.broadcast %cst_46 : f32 to vector<8x1xf32>
    %63 = arith.divf %61, %62 : vector<8x1xf32>
    %cst_47 = arith.constant 9.99999974E-6 : f32
    %64 = vector.broadcast %cst_47 : f32 to vector<8x1xf32>
    %65 = arith.addf %63, %64 : vector<8x1xf32>
    %66 = math.rsqrt %65 : vector<8x1xf32>
    %67 = vector.broadcast %66 : vector<8x1xf32> to vector<8x20xf32>
    %68 = arith.mulf %58, %67 : vector<8x20xf32>
    %69 = vector.broadcast %12 : vector<1x20xf32> to vector<8x20xf32>
    %70 = arith.mulf %68, %69 : vector<8x20xf32>
    %71 = vector.broadcast %13 : vector<1x20xf32> to vector<8x20xf32>
    %72 = arith.addf %70, %71 : vector<8x20xf32>
    %cst_48 = arith.constant dense<0.000000e+00> : vector<8x32xf32>
    %73 = tpu.matmul %72, %8, %cst_48 {dimension_numbers = #tpu.dot_dimension_numbers<[1], [0], [0], [1], [0, 0, 1, 1], [], []>} : vector<8x20xf32>, vector<20x32xf32>, vector<8x32xf32> -> vector<8x32xf32>
    %74 = vector.broadcast %9 : vector<1x32xf32> to vector<8x32xf32>
    %75 = arith.addf %73, %74 : vector<8x32xf32>
    %cst_49 = arith.constant 0.000000e+00 : f32
    %76 = vector.broadcast %cst_49 : f32 to vector<8x32xf32>
    %77 = arith.maximumf %75, %76 : vector<8x32xf32>
    %cst_50 = arith.constant dense<0.000000e+00> : vector<8x20xf32>
    %78 = tpu.matmul %77, %10, %cst_50 {dimension_numbers = #tpu.dot_dimension_numbers<[1], [0], [0], [1], [0, 0, 1, 1], [], []>} : vector<8x32xf32>, vector<32x20xf32>, vector<8x20xf32> -> vector<8x20xf32>
    %79 = vector.broadcast %11 : vector<1x20xf32> to vector<8x20xf32>
    %80 = arith.addf %78, %79 : vector<8x20xf32>
    %81 = arith.addf %72, %80 : vector<8x20xf32>
    %cst_51 = arith.constant dense<0.000000e+00> : vector<8xf32>
    %82 = vector.multi_reduction <add>, %81, %cst_51 [1] : vector<8x20xf32> to vector<8xf32>
    %83 = vector.shape_cast %82 : vector<8xf32> to vector<8x1xf32>
    %cst_52 = arith.constant 2.000000e+01 : f32
    %84 = vector.broadcast %cst_52 : f32 to vector<8x1xf32>
    %85 = arith.divf %83, %84 : vector<8x1xf32>
    %86 = vector.broadcast %85 : vector<8x1xf32> to vector<8x20xf32>
    %87 = arith.subf %81, %86 : vector<8x20xf32>
    %88 = arith.mulf %87, %87 : vector<8x20xf32>
    %cst_53 = arith.constant dense<0.000000e+00> : vector<8xf32>
    %89 = vector.multi_reduction <add>, %88, %cst_53 [1] : vector<8x20xf32> to vector<8xf32>
    %90 = vector.shape_cast %89 : vector<8xf32> to vector<8x1xf32>
    %cst_54 = arith.constant 2.000000e+01 : f32
    %91 = vector.broadcast %cst_54 : f32 to vector<8x1xf32>
    %92 = arith.divf %90, %91 : vector<8x1xf32>
    %cst_55 = arith.constant 9.99999974E-6 : f32
    %93 = vector.broadcast %cst_55 : f32 to vector<8x1xf32>
    %94 = arith.addf %92, %93 : vector<8x1xf32>
    %95 = math.rsqrt %94 : vector<8x1xf32>
    %96 = vector.broadcast %95 : vector<8x1xf32> to vector<8x20xf32>
    %97 = arith.mulf %87, %96 : vector<8x20xf32>
    %98 = vector.broadcast %14 : vector<1x20xf32> to vector<8x20xf32>
    %99 = arith.mulf %97, %98 : vector<8x20xf32>
    %100 = vector.broadcast %15 : vector<1x20xf32> to vector<8x20xf32>
    %101 = arith.addf %99, %100 : vector<8x20xf32>
    %cst_56 = arith.constant dense<0.000000e+00> : vector<8xf32>
    %102 = vector.multi_reduction <add>, %101, %cst_56 [1] : vector<8x20xf32> to vector<8xf32>
    %103 = vector.shape_cast %102 : vector<8xf32> to vector<8x1xf32>
    %cst_57 = arith.constant 2.000000e+01 : f32
    %104 = vector.broadcast %cst_57 : f32 to vector<8x1xf32>
    %105 = arith.divf %103, %104 : vector<8x1xf32>
    %106 = vector.broadcast %105 : vector<8x1xf32> to vector<8x20xf32>
    %107 = arith.subf %101, %106 : vector<8x20xf32>
    %108 = arith.mulf %107, %107 : vector<8x20xf32>
    %cst_58 = arith.constant dense<0.000000e+00> : vector<8xf32>
    %109 = vector.multi_reduction <add>, %108, %cst_58 [1] : vector<8x20xf32> to vector<8xf32>
    %110 = vector.shape_cast %109 : vector<8xf32> to vector<8x1xf32>
    %cst_59 = arith.constant 2.000000e+01 : f32
    %111 = vector.broadcast %cst_59 : f32 to vector<8x1xf32>
    %112 = arith.divf %110, %111 : vector<8x1xf32>
    %cst_60 = arith.constant 9.99999974E-6 : f32
    %113 = vector.broadcast %cst_60 : f32 to vector<8x1xf32>
    %114 = arith.addf %112, %113 : vector<8x1xf32>
    %115 = math.rsqrt %114 : vector<8x1xf32>
    %116 = vector.broadcast %115 : vector<8x1xf32> to vector<8x20xf32>
    %117 = arith.mulf %107, %116 : vector<8x20xf32>
    %118 = vector.broadcast %16 : vector<1x20xf32> to vector<8x20xf32>
    %119 = arith.mulf %117, %118 : vector<8x20xf32>
    %120 = vector.broadcast %17 : vector<1x20xf32> to vector<8x20xf32>
    %121 = arith.addf %119, %120 : vector<8x20xf32>
    %c0_61 = arith.constant 0 : index
    %c0_62 = arith.constant 0 : index
    %122 = vector.load %arg21[%c0_61, %c0_62] : memref<16x20xf32, #tpu.memory_space<vmem>>, vector<8x20xf32>
    tpu.vector_store %arg21[%c0_61, %c0_62], %121 {strides = array<i32>} : memref<16x20xf32, #tpu.memory_space<vmem>>, vector<8x20xf32>,
    %cst_63 = arith.constant dense<0.000000e+00> : vector<20xf32>
    %123 = vector.multi_reduction <add>, %121, %cst_63 [0] : vector<8x20xf32> to vector<20xf32>
    %124 = vector.shape_cast %123 : vector<20xf32> to vector<1x20xf32>
    %cst_64 = arith.constant 8.000000e+00 : f32
    %125 = vector.broadcast %cst_64 : f32 to vector<1x20xf32>
    %126 = arith.divf %124, %125 : vector<1x20xf32>
    %c0_65 = arith.constant 0 : index
    %c0_66 = arith.constant 0 : index
    %127 = vector.load %arg17[%c0_65, %c0_66] : memref<20x20xf32, #tpu.memory_space<vmem>>, vector<20x20xf32>
    %cst_67 = arith.constant dense<0.000000e+00> : vector<1x20xf32>
    %128 = tpu.matmul %126, %127, %cst_67 {dimension_numbers = #tpu.dot_dimension_numbers<[1], [0], [0], [1], [0, 0, 1, 1], [], []>} : vector<1x20xf32>, vector<20x20xf32>, vector<1x20xf32> -> vector<1x20xf32>
    %c0_68 = arith.constant 0 : index
    %c0_69 = arith.constant 0 : index
    %129 = vector.load %arg18[%c0_68, %c0_69] : memref<1x20xf32, #tpu.memory_space<vmem>>, vector<1x20xf32>
    %130 = arith.addf %128, %129 : vector<1x20xf32>
    %cst_70 = arith.constant 0.000000e+00 : f32
    %131 = vector.broadcast %cst_70 : f32 to vector<1x20xf32>
    %132 = arith.maximumf %130, %131 : vector<1x20xf32>
    %c0_71 = arith.constant 0 : index
    %c0_72 = arith.constant 0 : index
    %133 = vector.load %arg19[%c0_71, %c0_72] : memref<20x2xf32, #tpu.memory_space<vmem>>, vector<20x2xf32>
    %cst_73 = arith.constant dense<0.000000e+00> : vector<1x2xf32>
    %134 = tpu.matmul %132, %133, %cst_73 {dimension_numbers = #tpu.dot_dimension_numbers<[1], [0], [0], [1], [0, 0, 1, 1], [], []>} : vector<1x20xf32>, vector<20x2xf32>, vector<1x2xf32> -> vector<1x2xf32>
    %c0_74 = arith.constant 0 : index
    %c0_75 = arith.constant 0 : index
    %135 = vector.load %arg20[%c0_74, %c0_75] : memref<1x2xf32, #tpu.memory_space<vmem>>, vector<1x2xf32>
    %136 = arith.addf %134, %135 : vector<1x2xf32>
    %c0_76 = arith.constant 0 : index
    %c0_77 = arith.constant 0 : index
    %137 = vector.load %arg22[%c0_76, %c0_77] : memref<2x2xf32, #tpu.memory_space<vmem>>, vector<1x2xf32>
    tpu.vector_store %arg22[%c0_76, %c0_77], %136 {strides = array<i32>} : memref<2x2xf32, #tpu.memory_space<vmem>>, vector<1x2xf32>,
    %138 = vector.extract_strided_slice %0 {offsets = [8, 0], sizes = [8, 20], strides = [1, 1]} : vector<16x20xf32> to vector<8x20xf32>
    %139 = vector.extract_strided_slice %5 {offsets = [8, 0], sizes = [8, 20], strides = [1, 1]} : vector<16x60xf32> to vector<8x20xf32>
    %140 = vector.extract_strided_slice %5 {offsets = [8, 20], sizes = [8, 20], strides = [1, 1]} : vector<16x60xf32> to vector<8x20xf32>
    %141 = vector.extract_strided_slice %5 {offsets = [8, 40], sizes = [8, 20], strides = [1, 1]} : vector<16x60xf32> to vector<8x20xf32>
    %cst_78 = arith.constant dense<0.000000e+00> : vector<8x8xf32>
    %142 = tpu.matmul %139, %140, %cst_78 {dimension_numbers = #tpu.dot_dimension_numbers<[1], [1], [0], [0], [0, 0, 1, 0], [], []>} : vector<8x20xf32>, vector<8x20xf32>, vector<8x8xf32> -> vector<8x8xf32>
    %cst_79 = arith.constant 0.223606795 : f32
    %143 = vector.broadcast %cst_79 : f32 to vector<8x8xf32>
    %144 = arith.mulf %142, %143 : vector<8x8xf32>
    %c1 = arith.constant 1 : index
    %c0_80 = arith.constant 0 : index
    %145 = vector.load %arg1[%c1, %c0_80] : memref<2x8xf32, #tpu.memory_space<vmem>>, vector<1x8xf32>
    %c8 = arith.constant 8 : index
    %c0_81 = arith.constant 0 : index
    %146 = vector.load %arg2[%c8, %c0_81] : memref<16x1xf32, #tpu.memory_space<vmem>>, vector<8x1xf32>
    %cst_82 = arith.constant 5.000000e-01 : f32
    %147 = vector.broadcast %cst_82 : f32 to vector<1x8xf32>
    %148 = arith.cmpf ogt, %145, %147 : vector<1x8xf32>
    %cst_83 = arith.constant -1.000000e+09 : f32
    %149 = vector.shape_cast %148 : vector<1x8xi1> to vector<1x8xi1>
    %150 = vector.broadcast %149 : vector<1x8xi1> to vector<8x8xi1>
    %151 = vector.broadcast %cst_83 : f32 to vector<8x8xf32>
    %152 = arith.select %150, %144, %151 : vector<8x8xi1>, vector<8x8xf32>
    %cst_84 = arith.constant 5.000000e-01 : f32
    %153 = vector.broadcast %cst_84 : f32 to vector<8x1xf32>
    %154 = arith.cmpf ogt, %146, %153 : vector<8x1xf32>
    %cst_85 = arith.constant -1.000000e+09 : f32
    %155 = vector.shape_cast %154 : vector<8x1xi1> to vector<8x1xi1>
    %156 = vector.broadcast %155 : vector<8x1xi1> to vector<8x8xi1>
    %157 = vector.broadcast %cst_85 : f32 to vector<8x8xf32>
    %158 = arith.select %156, %152, %157 : vector<8x8xi1>, vector<8x8xf32>
    %cst_86 = arith.constant dense<0xFF800000> : vector<8xf32>
    %159 = vector.multi_reduction <maximumf>, %158, %cst_86 [1] : vector<8x8xf32> to vector<8xf32>
    %160 = vector.shape_cast %159 : vector<8xf32> to vector<8x1xf32>
    %161 = vector.broadcast %160 : vector<8x1xf32> to vector<8x8xf32>
    %162 = arith.subf %158, %161 : vector<8x8xf32>
    %163 = math.exp %162 : vector<8x8xf32>
    %cst_87 = arith.constant dense<0.000000e+00> : vector<8xf32>
    %164 = vector.multi_reduction <add>, %163, %cst_87 [1] : vector<8x8xf32> to vector<8xf32>
    %165 = vector.shape_cast %164 : vector<8xf32> to vector<8x1xf32>
    %166 = vector.broadcast %165 : vector<8x1xf32> to vector<8x8xf32>
    %167 = arith.divf %163, %166 : vector<8x8xf32>
    %cst_88 = arith.constant dense<0.000000e+00> : vector<8x20xf32>
    %168 = tpu.matmul %167, %141, %cst_88 {dimension_numbers = #tpu.dot_dimension_numbers<[1], [0], [0], [1], [0, 0, 1, 1], [], []>} : vector<8x8xf32>, vector<8x20xf32>, vector<8x20xf32> -> vector<8x20xf32>
    %cst_89 = arith.constant dense<0.000000e+00> : vector<8x20xf32>
    %169 = tpu.matmul %168, %6, %cst_89 {dimension_numbers = #tpu.dot_dimension_numbers<[1], [0], [0], [1], [0, 0, 1, 1], [], []>} : vector<8x20xf32>, vector<20x20xf32>, vector<8x20xf32> -> vector<8x20xf32>
    %170 = vector.broadcast %7 : vector<1x20xf32> to vector<8x20xf32>
    %171 = arith.addf %169, %170 : vector<8x20xf32>
    %172 = arith.addf %138, %171 : vector<8x20xf32>
    %cst_90 = arith.constant dense<0.000000e+00> : vector<8xf32>
    %173 = vector.multi_reduction <add>, %172, %cst_90 [1] : vector<8x20xf32> to vector<8xf32>
    %174 = vector.shape_cast %173 : vector<8xf32> to vector<8x1xf32>
    %cst_91 = arith.constant 2.000000e+01 : f32
    %175 = vector.broadcast %cst_91 : f32 to vector<8x1xf32>
    %176 = arith.divf %174, %175 : vector<8x1xf32>
    %177 = vector.broadcast %176 : vector<8x1xf32> to vector<8x20xf32>
    %178 = arith.subf %172, %177 : vector<8x20xf32>
    %179 = arith.mulf %178, %178 : vector<8x20xf32>
    %cst_92 = arith.constant dense<0.000000e+00> : vector<8xf32>
    %180 = vector.multi_reduction <add>, %179, %cst_92 [1] : vector<8x20xf32> to vector<8xf32>
    %181 = vector.shape_cast %180 : vector<8xf32> to vector<8x1xf32>
    %cst_93 = arith.constant 2.000000e+01 : f32
    %182 = vector.broadcast %cst_93 : f32 to vector<8x1xf32>
    %183 = arith.divf %181, %182 : vector<8x1xf32>
    %cst_94 = arith.constant 9.99999974E-6 : f32
    %184 = vector.broadcast %cst_94 : f32 to vector<8x1xf32>
    %185 = arith.addf %183, %184 : vector<8x1xf32>
    %186 = math.rsqrt %185 : vector<8x1xf32>
    %187 = vector.broadcast %186 : vector<8x1xf32> to vector<8x20xf32>
    %188 = arith.mulf %178, %187 : vector<8x20xf32>
    %189 = vector.broadcast %12 : vector<1x20xf32> to vector<8x20xf32>
    %190 = arith.mulf %188, %189 : vector<8x20xf32>
    %191 = vector.broadcast %13 : vector<1x20xf32> to vector<8x20xf32>
    %192 = arith.addf %190, %191 : vector<8x20xf32>
    %cst_95 = arith.constant dense<0.000000e+00> : vector<8x32xf32>
    %193 = tpu.matmul %192, %8, %cst_95 {dimension_numbers = #tpu.dot_dimension_numbers<[1], [0], [0], [1], [0, 0, 1, 1], [], []>} : vector<8x20xf32>, vector<20x32xf32>, vector<8x32xf32> -> vector<8x32xf32>
    %194 = vector.broadcast %9 : vector<1x32xf32> to vector<8x32xf32>
    %195 = arith.addf %193, %194 : vector<8x32xf32>
    %cst_96 = arith.constant 0.000000e+00 : f32
    %196 = vector.broadcast %cst_96 : f32 to vector<8x32xf32>
    %197 = arith.maximumf %195, %196 : vector<8x32xf32>
    %cst_97 = arith.constant dense<0.000000e+00> : vector<8x20xf32>
    %198 = tpu.matmul %197, %10, %cst_97 {dimension_numbers = #tpu.dot_dimension_numbers<[1], [0], [0], [1], [0, 0, 1, 1], [], []>} : vector<8x32xf32>, vector<32x20xf32>, vector<8x20xf32> -> vector<8x20xf32>
    %199 = vector.broadcast %11 : vector<1x20xf32> to vector<8x20xf32>
    %200 = arith.addf %198, %199 : vector<8x20xf32>
    %201 = arith.addf %192, %200 : vector<8x20xf32>
    %cst_98 = arith.constant dense<0.000000e+00> : vector<8xf32>
    %202 = vector.multi_reduction <add>, %201, %cst_98 [1] : vector<8x20xf32> to vector<8xf32>
    %203 = vector.shape_cast %202 : vector<8xf32> to vector<8x1xf32>
    %cst_99 = arith.constant 2.000000e+01 : f32
    %204 = vector.broadcast %cst_99 : f32 to vector<8x1xf32>
    %205 = arith.divf %203, %204 : vector<8x1xf32>
    %206 = vector.broadcast %205 : vector<8x1xf32> to vector<8x20xf32>
    %207 = arith.subf %201, %206 : vector<8x20xf32>
    %208 = arith.mulf %207, %207 : vector<8x20xf32>
    %cst_100 = arith.constant dense<0.000000e+00> : vector<8xf32>
    %209 = vector.multi_reduction <add>, %208, %cst_100 [1] : vector<8x20xf32> to vector<8xf32>
    %210 = vector.shape_cast %209 : vector<8xf32> to vector<8x1xf32>
    %cst_101 = arith.constant 2.000000e+01 : f32
    %211 = vector.broadcast %cst_101 : f32 to vector<8x1xf32>
    %212 = arith.divf %210, %211 : vector<8x1xf32>
    %cst_102 = arith.constant 9.99999974E-6 : f32
    %213 = vector.broadcast %cst_102 : f32 to vector<8x1xf32>
    %214 = arith.addf %212, %213 : vector<8x1xf32>
    %215 = math.rsqrt %214 : vector<8x1xf32>
    %216 = vector.broadcast %215 : vector<8x1xf32> to vector<8x20xf32>
    %217 = arith.mulf %207, %216 : vector<8x20xf32>
    %218 = vector.broadcast %14 : vector<1x20xf32> to vector<8x20xf32>
    %219 = arith.mulf %217, %218 : vector<8x20xf32>
    %220 = vector.broadcast %15 : vector<1x20xf32> to vector<8x20xf32>
    %221 = arith.addf %219, %220 : vector<8x20xf32>
    %cst_103 = arith.constant dense<0.000000e+00> : vector<8xf32>
    %222 = vector.multi_reduction <add>, %221, %cst_103 [1] : vector<8x20xf32> to vector<8xf32>
    %223 = vector.shape_cast %222 : vector<8xf32> to vector<8x1xf32>
    %cst_104 = arith.constant 2.000000e+01 : f32
    %224 = vector.broadcast %cst_104 : f32 to vector<8x1xf32>
    %225 = arith.divf %223, %224 : vector<8x1xf32>
    %226 = vector.broadcast %225 : vector<8x1xf32> to vector<8x20xf32>
    %227 = arith.subf %221, %226 : vector<8x20xf32>
    %228 = arith.mulf %227, %227 : vector<8x20xf32>
    %cst_105 = arith.constant dense<0.000000e+00> : vector<8xf32>
    %229 = vector.multi_reduction <add>, %228, %cst_105 [1] : vector<8x20xf32> to vector<8xf32>
    %230 = vector.shape_cast %229 : vector<8xf32> to vector<8x1xf32>
    %cst_106 = arith.constant 2.000000e+01 : f32
    %231 = vector.broadcast %cst_106 : f32 to vector<8x1xf32>
    %232 = arith.divf %230, %231 : vector<8x1xf32>
    %cst_107 = arith.constant 9.99999974E-6 : f32
    %233 = vector.broadcast %cst_107 : f32 to vector<8x1xf32>
    %234 = arith.addf %232, %233 : vector<8x1xf32>
    %235 = math.rsqrt %234 : vector<8x1xf32>
    %236 = vector.broadcast %235 : vector<8x1xf32> to vector<8x20xf32>
    %237 = arith.mulf %227, %236 : vector<8x20xf32>
    %238 = vector.broadcast %16 : vector<1x20xf32> to vector<8x20xf32>
    %239 = arith.mulf %237, %238 : vector<8x20xf32>
    %240 = vector.broadcast %17 : vector<1x20xf32> to vector<8x20xf32>
    %241 = arith.addf %239, %240 : vector<8x20xf32>
    %c8_108 = arith.constant 8 : index
    %c0_109 = arith.constant 0 : index
    %242 = vector.load %arg21[%c8_108, %c0_109] : memref<16x20xf32, #tpu.memory_space<vmem>>, vector<8x20xf32>
    tpu.vector_store %arg21[%c8_108, %c0_109], %241 {strides = array<i32>} : memref<16x20xf32, #tpu.memory_space<vmem>>, vector<8x20xf32>,
    %cst_110 = arith.constant dense<0.000000e+00> : vector<20xf32>
    %243 = vector.multi_reduction <add>, %241, %cst_110 [0] : vector<8x20xf32> to vector<20xf32>
    %244 = vector.shape_cast %243 : vector<20xf32> to vector<1x20xf32>
    %cst_111 = arith.constant 8.000000e+00 : f32
    %245 = vector.broadcast %cst_111 : f32 to vector<1x20xf32>
    %246 = arith.divf %244, %245 : vector<1x20xf32>
    %c0_112 = arith.constant 0 : index
    %c0_113 = arith.constant 0 : index
    %247 = vector.load %arg17[%c0_112, %c0_113] : memref<20x20xf32, #tpu.memory_space<vmem>>, vector<20x20xf32>
    %cst_114 = arith.constant dense<0.000000e+00> : vector<1x20xf32>
    %248 = tpu.matmul %246, %247, %cst_114 {dimension_numbers = #tpu.dot_dimension_numbers<[1], [0], [0], [1], [0, 0, 1, 1], [], []>} : vector<1x20xf32>, vector<20x20xf32>, vector<1x20xf32> -> vector<1x20xf32>
    %c0_115 = arith.constant 0 : index
    %c0_116 = arith.constant 0 : index
    %249 = vector.load %arg18[%c0_115, %c0_116] : memref<1x20xf32, #tpu.memory_space<vmem>>, vector<1x20xf32>
    %250 = arith.addf %248, %249 : vector<1x20xf32>
    %cst_117 = arith.constant 0.000000e+00 : f32
    %251 = vector.broadcast %cst_117 : f32 to vector<1x20xf32>
    %252 = arith.maximumf %250, %251 : vector<1x20xf32>
    %c0_118 = arith.constant 0 : index
    %c0_119 = arith.constant 0 : index
    %253 = vector.load %arg19[%c0_118, %c0_119] : memref<20x2xf32, #tpu.memory_space<vmem>>, vector<20x2xf32>
    %cst_120 = arith.constant dense<0.000000e+00> : vector<1x2xf32>
    %254 = tpu.matmul %252, %253, %cst_120 {dimension_numbers = #tpu.dot_dimension_numbers<[1], [0], [0], [1], [0, 0, 1, 1], [], []>} : vector<1x20xf32>, vector<20x2xf32>, vector<1x2xf32> -> vector<1x2xf32>
    %c0_121 = arith.constant 0 : index
    %c0_122 = arith.constant 0 : index
    %255 = vector.load %arg20[%c0_121, %c0_122] : memref<1x2xf32, #tpu.memory_space<vmem>>, vector<1x2xf32>
    %256 = arith.addf %254, %255 : vector<1x2xf32>
    %c1_123 = arith.constant 1 : index
    %c0_124 = arith.constant 0 : index
    %257 = vector.load %arg22[%c1_123, %c0_124] : memref<2x2xf32, #tpu.memory_space<vmem>>, vector<1x2xf32>
    tpu.vector_store %arg22[%c1_123, %c0_124], %256 {strides = array<i32>} : memref<2x2xf32, #tpu.memory_space<vmem>>, vector<1x2xf32>,
    return
  }
}

</mosaic_0001>

<llo_original>
// kernel: modelv2_forward.3
$region0: #{modelv2_forward.3}
  #allocation0 [shape = 'u32[]', space=smem, size = 0x4, offset = 0x4, fixed_abs, tag = 'smem constant byte address 0x4 - core index']
  #allocation1 [shape = 'u32[144,128]{1,0:T(1,128)}', space=vmem, size = 0x12000, scoped, tag = 'internal scratch']
  %s0 = inlined_call_operand.vmem [shape: f32[16,20], index: 0, kind: input, shape index: {}]
  %s1 = inlined_call_operand.vmem [shape: f32[20,60], index: 1, kind: input, shape index: {}]
  %s2 = inlined_call_operand.vmem [shape: f32[1,60], index: 2, kind: input, shape index: {}]
  %s3 = inlined_call_operand.vmem [shape: f32[20,20], index: 3, kind: input, shape index: {}]
  %s4 = inlined_call_operand.vmem [shape: f32[1,20], index: 4, kind: input, shape index: {}]
  %s5 = inlined_call_operand.vmem [shape: f32[1,20], index: 5, kind: input, shape index: {}]
  %s6 = inlined_call_operand.vmem [shape: f32[1,20], index: 6, kind: input, shape index: {}]
  %s7 = inlined_call_operand.vmem [shape: f32[20,32], index: 7, kind: input, shape index: {}]
  %s8 = inlined_call_operand.vmem [shape: f32[1,32], index: 8, kind: input, shape index: {}]
  %s9 = inlined_call_operand.vmem [shape: f32[32,20], index: 9, kind: input, shape index: {}]
  %s10 = inlined_call_operand.vmem [shape: f32[1,20], index: 10, kind: input, shape index: {}]
  %s11 = inlined_call_operand.vmem [shape: f32[1,20], index: 11, kind: input, shape index: {}]
  %s12 = inlined_call_operand.vmem [shape: f32[1,20], index: 12, kind: input, shape index: {}]
  %s13 = inlined_call_operand.vmem [shape: f32[1,20], index: 13, kind: input, shape index: {}]
  %s14 = inlined_call_operand.vmem [shape: f32[1,20], index: 14, kind: input, shape index: {}]
  %s15 = inlined_call_operand.vmem [shape: f32[16,20], index: 15, kind: output, shape index: {}]
  %s16 = sld [smem:[#allocation0]]
  $region70: #{modelv2_forward.3} parent=0
    _
  %s18 = ssub.s32 1, %s16
  %s19 = scalar_select 0, %s18, %s16
  // Predicated region
  $region2: #{modelv2_forward.3} parent=0 // pred_check
    _
  $region3: #{modelv2_forward.3} parent=0 // pred_check_branch
    %21 = sbr.rel (0) target = $region5
  $region4: #{modelv2_forward.3} parent=0 // pred_region
    _
  $region5: #{modelv2_forward.3} parent=0 // pred_fallthru
    _
  // Predicated region
  $region6: #{modelv2_forward.3} parent=0 // pred_check
    _
  $region7: #{modelv2_forward.3} parent=0 // pred_check_branch
    %23 = sbr.rel (0) target = $region9
  $region8: #{modelv2_forward.3} parent=0 // pred_region
    _
  $region9: #{modelv2_forward.3} parent=0 // pred_fallthru
    _
  // Predicated region
  $region10: #{modelv2_forward.3} parent=0 // pred_check
    _
  $region11: #{modelv2_forward.3} parent=0 // pred_check_branch
    %25 = sbr.rel (0) target = $region13
  $region12: #{modelv2_forward.3} parent=0 // pred_region
    _
  $region13: #{modelv2_forward.3} parent=0 // pred_fallthru
    _
  // Predicated region
  $region14: #{modelv2_forward.3} parent=0 // pred_check
    _
  $region15: #{modelv2_forward.3} parent=0 // pred_check_branch
    %27 = sbr.rel (0) target = $region17
  $region16: #{modelv2_forward.3} parent=0 // pred_region
    _
  $region17: #{modelv2_forward.3} parent=0 // pred_fallthru
    _
  // Predicated region
  $region18: #{modelv2_forward.3} parent=0 // pred_check
    _
  $region19: #{modelv2_forward.3} parent=0 // pred_check_branch
    %29 = sbr.rel (0) target = $region21
  $region20: #{modelv2_forward.3} parent=0 // pred_region
    _
  $region21: #{modelv2_forward.3} parent=0 // pred_fallthru
    _
  // Predicated region
  $region22: #{modelv2_forward.3} parent=0 // pred_check
    _
  $region23: #{modelv2_forward.3} parent=0 // pred_check_branch
    %31 = sbr.rel (0) target = $region25
  $region24: #{modelv2_forward.3} parent=0 // pred_region
    _
  $region25: #{modelv2_forward.3} parent=0 // pred_fallthru
    _
  // Predicated region
  $region26: #{modelv2_forward.3} parent=0 // pred_check
    _
  $region27: #{modelv2_forward.3} parent=0 // pred_check_branch
    %33 = sbr.rel (0) target = $region29
  $region28: #{modelv2_forward.3} parent=0 // pred_region
    _
  $region29: #{modelv2_forward.3} parent=0 // pred_fallthru
    _
  // Predicated region
  $region30: #{modelv2_forward.3} parent=0 // pred_check
    _
  $region31: #{modelv2_forward.3} parent=0 // pred_check_branch
    %35 = sbr.rel (0) target = $region33
  $region32: #{modelv2_forward.3} parent=0 // pred_region
    _
  $region33: #{modelv2_forward.3} parent=0 // pred_fallthru
    _
  // Predicated region
  $region34: #{modelv2_forward.3} parent=0 // pred_check
    _
  $region35: #{modelv2_forward.3} parent=0 // pred_check_branch
    %37 = sbr.rel (0) target = $region37
  $region36: #{modelv2_forward.3} parent=0 // pred_region
    _
  $region37: #{modelv2_forward.3} parent=0 // pred_fallthru
    _
  // Predicated region
  $region38: #{modelv2_forward.3} parent=0 // pred_check
    _
  $region39: #{modelv2_forward.3} parent=0 // pred_check_branch
    %39 = sbr.rel (0) target = $region41
  $region40: #{modelv2_forward.3} parent=0 // pred_region
    _
  $region41: #{modelv2_forward.3} parent=0 // pred_fallthru
    _
  // Predicated region
  $region42: #{modelv2_forward.3} parent=0 // pred_check
    _
  $region43: #{modelv2_forward.3} parent=0 // pred_check_branch
    %41 = sbr.rel (0) target = $region45
  $region44: #{modelv2_forward.3} parent=0 // pred_region
    _
  $region45: #{modelv2_forward.3} parent=0 // pred_fallthru
    _
  // Predicated region
  $region46: #{modelv2_forward.3} parent=0 // pred_check
    _
  $region47: #{modelv2_forward.3} parent=0 // pred_check_branch
    %43 = sbr.rel (0) target = $region49
  $region48: #{modelv2_forward.3} parent=0 // pred_region
    _
  $region49: #{modelv2_forward.3} parent=0 // pred_fallthru
    _
  // Predicated region
  $region50: #{modelv2_forward.3} parent=0 // pred_check
    _
  $region51: #{modelv2_forward.3} parent=0 // pred_check_branch
    %45 = sbr.rel (0) target = $region53
  $region52: #{modelv2_forward.3} parent=0 // pred_region
    _
  $region53: #{modelv2_forward.3} parent=0 // pred_fallthru
    _
  // Predicated region
  $region54: #{modelv2_forward.3} parent=0 // pred_check
    _
  $region55: #{modelv2_forward.3} parent=0 // pred_check_branch
    %47 = sbr.rel (0) target = $region57
  $region56: #{modelv2_forward.3} parent=0 // pred_region
    _
  $region57: #{modelv2_forward.3} parent=0 // pred_fallthru
    _
  // Predicated region
  $region58: #{modelv2_forward.3} parent=0 // pred_check
    _
  $region59: #{modelv2_forward.3} parent=0 // pred_check_branch
    %49 = sbr.rel (0) target = $region61
  $region60: #{modelv2_forward.3} parent=0 // pred_region
    _
  $region61: #{modelv2_forward.3} parent=0 // pred_fallthru
    _
  %v50 = vld [vmem:[%s0] sm:$0xff]
  %v51 = vld [vmem:[%s0 + $0x8] sm:$0xff]
  %v52 = vld [vmem:[%s1] sm:$0xff]
  %v53 = vld [vmem:[%s1 + $0x8] sm:$0xff]
  %v54 = vld [vmem:[%s1 + $0x10] sm:$0xf]
  %v55 = vld [vmem:[%s2] sm:$0x1]
  %v57 = vlaneseq
  %v58 = vshrl.u32 %v57, 7
  %v59 = vsub.s32 0, %v58
  %v60 = vrot.slane %v55, %v59
  %vm62 = vcmask 162816
  %v64 = vsel %vm62, %v50, 0
  %v67 = vsel %vm62, %v51, 0
  %vm69 = vcmask 1043456
  %v71 = vsel %vm69, %v54, 0
  %73 = vmatprep.subr.mxu0 0.0
  %74 = vmatpush1.msra.mxu0 %v52
  %75 = vmatprep.subr.mxu0 0.0
  %76 = vmatpush1.msra.mxu0 %v53
  %77 = vmatprep.subr.mxu0 0.0
  %78 = vmatpush1.msra.mxu0 %v71
  %79 = vmatprep.subr.mxu0 0.0
  %80 = vmatpush1.msra.mxu0 0.0
  %81 = vmatprep.subr.mxu0 0.0
  %82 = vmatpush1.msra.mxu0 0.0
  %83 = vmatprep.subr.mxu0 0.0
  %84 = vmatpush1.msra.mxu0 0.0
  %85 = vmatprep.subr.mxu0 0.0
  %86 = vmatpush1.msra.mxu0 0.0
  %87 = vmatprep.subr.mxu0 0.0
  %88 = vmatpush1.msra.mxu0 0.0
  %89 = vmatprep.subr.mxu0 0.0
  %90 = vmatpush1.msra.mxu0 0.0
  %91 = vmatprep.subr.mxu0 0.0
  %92 = vmatpush1.msra.mxu0 0.0
  %93 = vmatprep.subr.mxu0 0.0
  %94 = vmatpush1.msra.mxu0 0.0
  %95 = vmatprep.subr.mxu0 0.0
  %96 = vmatpush1.msra.mxu0 0.0
  %97 = vmatprep.subr.mxu0 0.0
  %98 = vmatpush1.msra.mxu0 0.0
  %99 = vmatprep.subr.mxu0 0.0
  %100 = vmatpush1.msra.mxu0 0.0
  %101 = vmatprep.subr.mxu0 0.0
  %102 = vmatpush1.msra.mxu0 0.0
  %103 = vmatprep.subr.mxu0 0.0
  %104 = vmatpush1.msra.mxu0 0.0
  %105 = vmatprep.subr.mxu0 0.0
  %106 = vmatpush1.msra.mxu0 0.0
  %107 = vmatprep.subr.mxu0 0.0
  %108 = vmatpush1.msra.mxu0 0.0
  %109 = vmatprep.subr.mxu0 0.0
  %110 = vmatpush1.msra.mxu0 0.0
  %111 = vmatprep.subr.mxu0 0.0
  %112 = vmatpush1.msra.mxu0 0.0
  %113 = vmatprep.subr.mxu0 0.0
  %114 = vmatpush1.msra.mxu0 0.0
  %115 = vmatprep.subr.mxu0 0.0
  %116 = vmatpush1.msra.mxu0 0.0
  %117 = vmatprep.subr.mxu0 0.0
  %118 = vmatpush1.msra.mxu0 0.0
  %119 = vmatprep.subr.mxu0 0.0
  %120 = vmatpush1.msra.mxu0 0.0
  %121 = vmatprep.subr.mxu0 0.0
  %122 = vmatpush1.msra.mxu0 0.0
  %123 = vmatprep.subr.mxu0 0.0
  %124 = vmatpush1.msra.mxu0 0.0
  %125 = vmatprep.subr.mxu0 0.0
  %126 = vmatpush1.msra.mxu0 0.0
  %127 = vmatprep.subr.mxu0 0.0
  %128 = vmatpush1.msra.mxu0 0.0
  %129 = vmatprep.subr.mxu0 0.0
  %130 = vmatpush1.msra.mxu0 0.0
  %131 = vmatprep.subr.mxu0 0.0
  %132 = vmatpush1.msra.mxu0 0.0
  %133 = vmatprep.subr.mxu0 0.0
  %134 = vmatpush1.msra.mxu0 0.0
  %135 = vmatprep.subr.mxu0 0.0
  %136 = vmatpush1.msra.mxu0 0.0
  %137 = vmatprep.mubr.f32.mxu0 0.0
  %138 = vmatmul.mubr.f32.gmra.mrb[0].mxu0 %v64
  %v139 = vpop.f32.mrb[0].mxu0
  %v140 = vadd.f32 %v60, %v139
  %v141 = vpop.f32.mrb[0].mxu0
  %142 = vmatprep.mubr.f32.mxu0 0.0
  %143 = vmatmul.mubr.f32.gmra.mrb[0].mxu0 %v67
  %v144 = vpop.f32.mrb[0].mxu0
  %v145 = vadd.f32 %v60, %v144
  %v146 = vpop.f32.mrb[0].mxu0
  %147 = vdwg.mxu0
  %v148 = vld [vmem:[%s3] sm:$0xff]
  %v149 = vld [vmem:[%s3 + $0x8] sm:$0xff]
  %v150 = vld [vmem:[%s3 + $0x10] sm:$0xf]
  %v151 = vld [vmem:[%s4] sm:$0x1]
  %v152 = vld [vmem:[%s7] sm:$0xff]
  %v153 = vld [vmem:[%s7 + $0x8] sm:$0xff]
  %v154 = vld [vmem:[%s7 + $0x10] sm:$0xf]
  %v155 = vld [vmem:[%s8] sm:$0x1]
  %v156 = vld [vmem:[%s9] sm:$0xff]
  %v157 = vld [vmem:[%s9 + $0x8] sm:$0xff]
  %v158 = vld [vmem:[%s9 + $0x10] sm:$0xff]
  %v159 = vld [vmem:[%s9 + $0x18] sm:$0xff]
  %v160 = vld [vmem:[%s10] sm:$0x1]
  %v161 = vld [vmem:[%s5] sm:$0x1]
  %v162 = vld [vmem:[%s6] sm:$0x1]
  %v163 = vld [vmem:[%s11] sm:$0x1]
  %v164 = vld [vmem:[%s12] sm:$0x1]
  %v165 = vld [vmem:[%s13] sm:$0x1]
  %v166 = vld [vmem:[%s14] sm:$0x1]
  %168 = vrot.lane.b32.xlu0 %v140, 108
  %v169 = vpop.permute.xlu0 %168
  %v170 = vsel %vm62, %v140, 0
  %v172 = vsel %vm62, %v169, 0
  %174 = vmatprep.subr.mxu0 0.0
  %175 = vmatpush1.xpose.msra.mxu0 %v172
  %176 = vmatprep.subr.mxu0 0.0
  %177 = vmatpush1.xpose.msra.mxu0 0.0
  %178 = vmatprep.subr.mxu0 0.0
  %179 = vmatpush1.xpose.msra.mxu0 0.0
  %180 = vmatprep.subr.mxu0 0.0
  %181 = vmatpush1.xpose.msra.mxu0 0.0
  %182 = vmatprep.subr.mxu0 0.0
  %183 = vmatpush1.xpose.msra.mxu0 0.0
  %184 = vmatprep.subr.mxu0 0.0
  %185 = vmatpush1.xpose.msra.mxu0 0.0
  %186 = vmatprep.subr.mxu0 0.0
  %187 = vmatpush1.xpose.msra.mxu0 0.0
  %188 = vmatprep.subr.mxu0 0.0
  %189 = vmatpush1.xpose.msra.mxu0 0.0
  %190 = vmatprep.subr.mxu0 0.0
  %191 = vmatpush1.xpose.msra.mxu0 0.0
  %192 = vmatprep.subr.mxu0 0.0
  %193 = vmatpush1.xpose.msra.mxu0 0.0
  %194 = vmatprep.subr.mxu0 0.0
  %195 = vmatpush1.xpose.msra.mxu0 0.0
  %196 = vmatprep.subr.mxu0 0.0
  %197 = vmatpush1.xpose.msra.mxu0 0.0
  %198 = vmatprep.subr.mxu0 0.0
  %199 = vmatpush1.xpose.msra.mxu0 0.0
  %200 = vmatprep.subr.mxu0 0.0
  %201 = vmatpush1.xpose.msra.mxu0 0.0
  %202 = vmatprep.subr.mxu0 0.0
  %203 = vmatpush1.xpose.msra.mxu0 0.0
  %204 = vmatprep.subr.mxu0 0.0
  %205 = vmatpush1.xpose.msra.mxu0 0.0
  %206 = vmatprep.subr.mxu0 0.0
  %207 = vmatpush1.xpose.msra.mxu0 0.0
  %208 = vmatprep.subr.mxu0 0.0
  %209 = vmatpush1.xpose.msra.mxu0 0.0
  %210 = vmatprep.subr.mxu0 0.0
  %211 = vmatpush1.xpose.msra.mxu0 0.0
  %212 = vmatprep.subr.mxu0 0.0
  %213 = vmatpush1.xpose.msra.mxu0 0.0
  %214 = vmatprep.subr.mxu0 0.0
  %215 = vmatpush1.xpose.msra.mxu0 0.0
  %216 = vmatprep.subr.mxu0 0.0
  %217 = vmatpush1.xpose.msra.mxu0 0.0
  %218 = vmatprep.subr.mxu0 0.0
  %219 = vmatpush1.xpose.msra.mxu0 0.0
  %220 = vmatprep.subr.mxu0 0.0
  %221 = vmatpush1.xpose.msra.mxu0 0.0
  %222 = vmatprep.subr.mxu0 0.0
  %223 = vmatpush1.xpose.msra.mxu0 0.0
  %224 = vmatprep.subr.mxu0 0.0
  %225 = vmatpush1.xpose.msra.mxu0 0.0
  %226 = vmatprep.subr.mxu0 0.0
  %227 = vmatpush1.xpose.msra.mxu0 0.0
  %228 = vmatprep.subr.mxu0 0.0
  %229 = vmatpush1.xpose.msra.mxu0 0.0
  %230 = vmatprep.subr.mxu0 0.0
  %231 = vmatpush1.xpose.msra.mxu0 0.0
  %232 = vmatprep.subr.mxu0 0.0
  %233 = vmatpush1.xpose.msra.mxu0 0.0
  %234 = vmatprep.subr.mxu0 0.0
  %235 = vmatpush1.xpose.msra.mxu0 0.0
  %236 = vmatprep.subr.mxu0 0.0
  %237 = vmatpush1.xpose.msra.mxu0 0.0
  %238 = vmatprep.mubr.f32.mxu0 0.0
  %239 = vmatmul.mubr.f32.gmra.mrb[0].mxu0 %v170
  %v240 = vpop.f32.mrb[0].mxu0
  %v241 = vadd.f32 0.0, %v240
  %v242 = vpop.f32.mrb[0].mxu0
  %243 = vdwg.mxu0
  %v244 = vmul.f32 %v241, 0.2236068
  %vm245 = vcmask 64512
  %v246 = vsel %vm245, %v244, -inf
  %247 = vmax.xlane.f32.xlu0 %v246
  %v248 = vpop.xlane.xlu0 %247
  %v249 = vsub.f32 %v244, %v248
  %v250 = vmul.f32 %v249, 1.442695
  %v251 = vpow.pop %v250
  %v252 = vsel %vm245, %v251, 0.0
  %253 = vadd.xlane.f32.xlu0 %v252
  %v254 = vpop.xlane.xlu0 %253
  %v255 = vrcp.pop %v254
  %v256 = vmul.f32 %v251, %v255
  %257 = vrot.lane.b32.xlu0 %v140, 88
  %v258 = vpop.permute.xlu0 %257
  %v261 = vsel %vm245, %v256, 0
  %263 = vmatprep.subr.mxu0 0.0
  %264 = vmatpush1.msra.mxu0 %v258
  %265 = vmatprep.subr.mxu0 0.0
  %266 = vmatpush1.msra.mxu0 0.0
  %267 = vmatprep.subr.mxu0 0.0
  %268 = vmatpush1.msra.mxu0 0.0
  %269 = vmatprep.subr.mxu0 0.0
  %270 = vmatpush1.msra.mxu0 0.0
  %271 = vmatprep.subr.mxu0 0.0
  %272 = vmatpush1.msra.mxu0 0.0
  %273 = vmatprep.subr.mxu0 0.0
  %274 = vmatpush1.msra.mxu0 0.0
  %275 = vmatprep.subr.mxu0 0.0
  %276 = vmatpush1.msra.mxu0 0.0
  %277 = vmatprep.subr.mxu0 0.0
  %278 = vmatpush1.msra.mxu0 0.0
  %279 = vmatprep.subr.mxu0 0.0
  %280 = vmatpush1.msra.mxu0 0.0
  %281 = vmatprep.subr.mxu0 0.0
  %282 = vmatpush1.msra.mxu0 0.0
  %283 = vmatprep.subr.mxu0 0.0
  %284 = vmatpush1.msra.mxu0 0.0
  %285 = vmatprep.subr.mxu0 0.0
  %286 = vmatpush1.msra.mxu0 0.0
  %287 = vmatprep.subr.mxu0 0.0
  %288 = vmatpush1.msra.mxu0 0.0
  %289 = vmatprep.subr.mxu0 0.0
  %290 = vmatpush1.msra.mxu0 0.0
  %291 = vmatprep.subr.mxu0 0.0
  %292 = vmatpush1.msra.mxu0 0.0
  %293 = vmatprep.subr.mxu0 0.0
  %294 = vmatpush1.msra.mxu0 0.0
  %295 = vmatprep.subr.mxu0 0.0
  %296 = vmatpush1.msra.mxu0 0.0
  %297 = vmatprep.subr.mxu0 0.0
  %298 = vmatpush1.msra.mxu0 0.0
  %299 = vmatprep.subr.mxu0 0.0
  %300 = vmatpush1.msra.mxu0 0.0
  %301 = vmatprep.subr.mxu0 0.0
  %302 = vmatpush1.msra.mxu0 0.0
  %303 = vmatprep.subr.mxu0 0.0
  %304 = vmatpush1.msra.mxu0 0.0
  %305 = vmatprep.subr.mxu0 0.0
  %306 = vmatpush1.msra.mxu0 0.0
  %307 = vmatprep.subr.mxu0 0.0
  %308 = vmatpush1.msra.mxu0 0.0
  %309 = vmatprep.subr.mxu0 0.0
  %310 = vmatpush1.msra.mxu0 0.0
  %311 = vmatprep.subr.mxu0 0.0
  %312 = vmatpush1.msra.mxu0 0.0
  %313 = vmatprep.subr.mxu0 0.0
  %314 = vmatpush1.msra.mxu0 0.0
  %315 = vmatprep.subr.mxu0 0.0
  %316 = vmatpush1.msra.mxu0 0.0
  %317 = vmatprep.subr.mxu0 0.0
  %318 = vmatpush1.msra.mxu0 0.0
  %319 = vmatprep.subr.mxu0 0.0
  %320 = vmatpush1.msra.mxu0 0.0
  %321 = vmatprep.subr.mxu0 0.0
  %322 = vmatpush1.msra.mxu0 0.0
  %323 = vmatprep.subr.mxu0 0.0
  %324 = vmatpush1.msra.mxu0 0.0
  %325 = vmatprep.subr.mxu0 0.0
  %326 = vmatpush1.msra.mxu0 0.0
  %327 = vmatprep.mubr.f32.mxu0 0.0
  %328 = vmatmul.mubr.f32.gmra.mrb[0].mxu0 %v261
  %v329 = vpop.f32.mrb[0].mxu0
  %v330 = vadd.f32 0.0, %v329
  %v331 = vpop.f32.mrb[0].mxu0
  %332 = vdwg.mxu0
  %v334 = vlaneseq
  %v335 = vshrl.u32 %v334, 7
  %v336 = vsub.s32 0, %v335
  %v337 = vrot.slane %v151, %v336
  %v340 = vsel %vm62, %v330, 0
  %v343 = vsel %vm69, %v150, 0
  %345 = vmatprep.subr.mxu0 0.0
  %346 = vmatpush1.msra.mxu0 %v148
  %347 = vmatprep.subr.mxu0 0.0
  %348 = vmatpush1.msra.mxu0 %v149
  %349 = vmatprep.subr.mxu0 0.0
  %350 = vmatpush1.msra.mxu0 %v343
  %351 = vmatprep.subr.mxu0 0.0
  %352 = vmatpush1.msra.mxu0 0.0
  %353 = vmatprep.subr.mxu0 0.0
  %354 = vmatpush1.msra.mxu0 0.0
  %355 = vmatprep.subr.mxu0 0.0
  %356 = vmatpush1.msra.mxu0 0.0
  %357 = vmatprep.subr.mxu0 0.0
  %358 = vmatpush1.msra.mxu0 0.0
  %359 = vmatprep.subr.mxu0 0.0
  %360 = vmatpush1.msra.mxu0 0.0
  %361 = vmatprep.subr.mxu0 0.0
  %362 = vmatpush1.msra.mxu0 0.0
  %363 = vmatprep.subr.mxu0 0.0
  %364 = vmatpush1.msra.mxu0 0.0
  %365 = vmatprep.subr.mxu0 0.0
  %366 = vmatpush1.msra.mxu0 0.0
  %367 = vmatprep.subr.mxu0 0.0
  %368 = vmatpush1.msra.mxu0 0.0
  %369 = vmatprep.subr.mxu0 0.0
  %370 = vmatpush1.msra.mxu0 0.0
  %371 = vmatprep.subr.mxu0 0.0
  %372 = vmatpush1.msra.mxu0 0.0
  %373 = vmatprep.subr.mxu0 0.0
  %374 = vmatpush1.msra.mxu0 0.0
  %375 = vmatprep.subr.mxu0 0.0
  %376 = vmatpush1.msra.mxu0 0.0
  %377 = vmatprep.subr.mxu0 0.0
  %378 = vmatpush1.msra.mxu0 0.0
  %379 = vmatprep.subr.mxu0 0.0
  %380 = vmatpush1.msra.mxu0 0.0
  %381 = vmatprep.subr.mxu0 0.0
  %382 = vmatpush1.msra.mxu0 0.0
  %383 = vmatprep.subr.mxu0 0.0
  %384 = vmatpush1.msra.mxu0 0.0
  %385 = vmatprep.subr.mxu0 0.0
  %386 = vmatpush1.msra.mxu0 0.0
  %387 = vmatprep.subr.mxu0 0.0
  %388 = vmatpush1.msra.mxu0 0.0
  %389 = vmatprep.subr.mxu0 0.0
  %390 = vmatpush1.msra.mxu0 0.0
  %391 = vmatprep.subr.mxu0 0.0
  %392 = vmatpush1.msra.mxu0 0.0
  %393 = vmatprep.subr.mxu0 0.0
  %394 = vmatpush1.msra.mxu0 0.0
  %395 = vmatprep.subr.mxu0 0.0
  %396 = vmatpush1.msra.mxu0 0.0
  %397 = vmatprep.subr.mxu0 0.0
  %398 = vmatpush1.msra.mxu0 0.0
  %399 = vmatprep.subr.mxu0 0.0
  %400 = vmatpush1.msra.mxu0 0.0
  %401 = vmatprep.subr.mxu0 0.0
  %402 = vmatpush1.msra.mxu0 0.0
  %403 = vmatprep.subr.mxu0 0.0
  %404 = vmatpush1.msra.mxu0 0.0
  %405 = vmatprep.subr.mxu0 0.0
  %406 = vmatpush1.msra.mxu0 0.0
  %407 = vmatprep.subr.mxu0 0.0
  %408 = vmatpush1.msra.mxu0 0.0
  %409 = vmatprep.mubr.f32.mxu0 0.0
  %410 = vmatmul.mubr.f32.gmra.mrb[0].mxu0 %v340
  %v411 = vpop.f32.mrb[0].mxu0
  %v412 = vadd.f32 %v337, %v411
  %v413 = vpop.f32.mrb[0].mxu0
  %414 = vdwg.mxu0
  %v415 = vadd.f32 %v50, %v412
  %v416 = vsel %vm62, %v415, 0.0
  %417 = vadd.xlane.f32.xlu0 %v416
  %v418 = vpop.xlane.xlu0 %417
  %v419 = vrcp.pop 20.0
  %v420 = vmul.f32 %v418, %v419
  %v421 = vsub.f32 %v415, %v420
  %v422 = vmul.f32 %v421, %v421
  %v423 = vsel %vm62, %v422, 0.0
  %424 = vadd.xlane.f32.xlu0 %v423
  %v425 = vpop.xlane.xlu0 %424
  %v426 = vmul.f32 %v425, %v419
  %v427 = vadd.f32 %v426, 1e-05
  %v428 = vrsqrt.pop %v427
  %v429 = vmul.f32 %v421, %v428
  %v431 = vlaneseq
  %v432 = vshrl.u32 %v431, 7
  %v433 = vsub.s32 0, %v432
  %v434 = vrot.slane %v161, %v433
  %v436 = vmul.f32 %v429, %v434
  %v438 = vlaneseq
  %v439 = vshrl.u32 %v438, 7
  %v440 = vsub.s32 0, %v439
  %v441 = vrot.slane %v162, %v440
  %v443 = vadd.f32 %v436, %v441
  %v445 = vlaneseq
  %v446 = vshrl.u32 %v445, 7
  %v447 = vsub.s32 0, %v446
  %v448 = vrot.slane %v155, %v447
  %v451 = vsel %vm62, %v443, 0
  %v454 = vsel %vm69, %v154, 0
  %456 = vmatprep.subr.mxu0 0.0
  %457 = vmatpush1.msra.mxu0 %v152
  %458 = vmatprep.subr.mxu0 0.0
  %459 = vmatpush1.msra.mxu0 %v153
  %460 = vmatprep.subr.mxu0 0.0
  %461 = vmatpush1.msra.mxu0 %v454
  %462 = vmatprep.subr.mxu0 0.0
  %463 = vmatpush1.msra.mxu0 0.0
  %464 = vmatprep.subr.mxu0 0.0
  %465 = vmatpush1.msra.mxu0 0.0
  %466 = vmatprep.subr.mxu0 0.0
  %467 = vmatpush1.msra.mxu0 0.0
  %468 = vmatprep.subr.mxu0 0.0
  %469 = vmatpush1.msra.mxu0 0.0
  %470 = vmatprep.subr.mxu0 0.0
  %471 = vmatpush1.msra.mxu0 0.0
  %472 = vmatprep.subr.mxu0 0.0
  %473 = vmatpush1.msra.mxu0 0.0
  %474 = vmatprep.subr.mxu0 0.0
  %475 = vmatpush1.msra.mxu0 0.0
  %476 = vmatprep.subr.mxu0 0.0
  %477 = vmatpush1.msra.mxu0 0.0
  %478 = vmatprep.subr.mxu0 0.0
  %479 = vmatpush1.msra.mxu0 0.0
  %480 = vmatprep.subr.mxu0 0.0
  %481 = vmatpush1.msra.mxu0 0.0
  %482 = vmatprep.subr.mxu0 0.0
  %483 = vmatpush1.msra.mxu0 0.0
  %484 = vmatprep.subr.mxu0 0.0
  %485 = vmatpush1.msra.mxu0 0.0
  %486 = vmatprep.subr.mxu0 0.0
  %487 = vmatpush1.msra.mxu0 0.0
  %488 = vmatprep.subr.mxu0 0.0
  %489 = vmatpush1.msra.mxu0 0.0
  %490 = vmatprep.subr.mxu0 0.0
  %491 = vmatpush1.msra.mxu0 0.0
  %492 = vmatprep.subr.mxu0 0.0
  %493 = vmatpush1.msra.mxu0 0.0
  %494 = vmatprep.subr.mxu0 0.0
  %495 = vmatpush1.msra.mxu0 0.0
  %496 = vmatprep.subr.mxu0 0.0
  %497 = vmatpush1.msra.mxu0 0.0
  %498 = vmatprep.subr.mxu0 0.0
  %499 = vmatpush1.msra.mxu0 0.0
  %500 = vmatprep.subr.mxu0 0.0
  %501 = vmatpush1.msra.mxu0 0.0
  %502 = vmatprep.subr.mxu0 0.0
  %503 = vmatpush1.msra.mxu0 0.0
  %504 = vmatprep.subr.mxu0 0.0
  %505 = vmatpush1.msra.mxu0 0.0
  %506 = vmatprep.subr.mxu0 0.0
  %507 = vmatpush1.msra.mxu0 0.0
  %508 = vmatprep.subr.mxu0 0.0
  %509 = vmatpush1.msra.mxu0 0.0
  %510 = vmatprep.subr.mxu0 0.0
  %511 = vmatpush1.msra.mxu0 0.0
  %512 = vmatprep.subr.mxu0 0.0
  %513 = vmatpush1.msra.mxu0 0.0
  %514 = vmatprep.subr.mxu0 0.0
  %515 = vmatpush1.msra.mxu0 0.0
  %516 = vmatprep.subr.mxu0 0.0
  %517 = vmatpush1.msra.mxu0 0.0
  %518 = vmatprep.subr.mxu0 0.0
  %519 = vmatpush1.msra.mxu0 0.0
  %520 = vmatprep.mubr.f32.mxu0 0.0
  %521 = vmatmul.mubr.f32.gmra.mrb[0].mxu0 %v451
  %v522 = vpop.f32.mrb[0].mxu0
  %v523 = vadd.f32 %v448, %v522
  %v524 = vpop.f32.mrb[0].mxu0
  %525 = vdwg.mxu0
  %v526 = vmax.f32 %v523, 0.0
  %v528 = vlaneseq
  %v529 = vshrl.u32 %v528, 7
  %v530 = vsub.s32 0, %v529
  %v531 = vrot.slane %v160, %v530
  %vm533 = vcmask 261120
  %v535 = vsel %vm533, %v526, 0
  %537 = vmatprep.subr.mxu0 0.0
  %538 = vmatpush1.msra.mxu0 %v156
  %539 = vmatprep.subr.mxu0 0.0
  %540 = vmatpush1.msra.mxu0 %v157
  %541 = vmatprep.subr.mxu0 0.0
  %542 = vmatpush1.msra.mxu0 %v158
  %543 = vmatprep.subr.mxu0 0.0
  %544 = vmatpush1.msra.mxu0 %v159
  %545 = vmatprep.subr.mxu0 0.0
  %546 = vmatpush1.msra.mxu0 0.0
  %547 = vmatprep.subr.mxu0 0.0
  %548 = vmatpush1.msra.mxu0 0.0
  %549 = vmatprep.subr.mxu0 0.0
  %550 = vmatpush1.msra.mxu0 0.0
  %551 = vmatprep.subr.mxu0 0.0
  %552 = vmatpush1.msra.mxu0 0.0
  %553 = vmatprep.subr.mxu0 0.0
  %554 = vmatpush1.msra.mxu0 0.0
  %555 = vmatprep.subr.mxu0 0.0
  %556 = vmatpush1.msra.mxu0 0.0
  %557 = vmatprep.subr.mxu0 0.0
  %558 = vmatpush1.msra.mxu0 0.0
  %559 = vmatprep.subr.mxu0 0.0
  %560 = vmatpush1.msra.mxu0 0.0
  %561 = vmatprep.subr.mxu0 0.0
  %562 = vmatpush1.msra.mxu0 0.0
  %563 = vmatprep.subr.mxu0 0.0
  %564 = vmatpush1.msra.mxu0 0.0
  %565 = vmatprep.subr.mxu0 0.0
  %566 = vmatpush1.msra.mxu0 0.0
  %567 = vmatprep.subr.mxu0 0.0
  %568 = vmatpush1.msra.mxu0 0.0
  %569 = vmatprep.subr.mxu0 0.0
  %570 = vmatpush1.msra.mxu0 0.0
  %571 = vmatprep.subr.mxu0 0.0
  %572 = vmatpush1.msra.mxu0 0.0
  %573 = vmatprep.subr.mxu0 0.0
  %574 = vmatpush1.msra.mxu0 0.0
  %575 = vmatprep.subr.mxu0 0.0
  %576 = vmatpush1.msra.mxu0 0.0
  %577 = vmatprep.subr.mxu0 0.0
  %578 = vmatpush1.msra.mxu0 0.0
  %579 = vmatprep.subr.mxu0 0.0
  %580 = vmatpush1.msra.mxu0 0.0
  %581 = vmatprep.subr.mxu0 0.0
  %582 = vmatpush1.msra.mxu0 0.0
  %583 = vmatprep.subr.mxu0 0.0
  %584 = vmatpush1.msra.mxu0 0.0
  %585 = vmatprep.subr.mxu0 0.0
  %586 = vmatpush1.msra.mxu0 0.0
  %587 = vmatprep.subr.mxu0 0.0
  %588 = vmatpush1.msra.mxu0 0.0
  %589 = vmatprep.subr.mxu0 0.0
  %590 = vmatpush1.msra.mxu0 0.0
  %591 = vmatprep.subr.mxu0 0.0
  %592 = vmatpush1.msra.mxu0 0.0
  %593 = vmatprep.subr.mxu0 0.0
  %594 = vmatpush1.msra.mxu0 0.0
  %595 = vmatprep.subr.mxu0 0.0
  %596 = vmatpush1.msra.mxu0 0.0
  %597 = vmatprep.subr.mxu0 0.0
  %598 = vmatpush1.msra.mxu0 0.0
  %599 = vmatprep.subr.mxu0 0.0
  %600 = vmatpush1.msra.mxu0 0.0
  %601 = vmatprep.mubr.f32.mxu0 0.0
  %602 = vmatmul.mubr.f32.gmra.mrb[0].mxu0 %v535
  %v603 = vpop.f32.mrb[0].mxu0
  %v604 = vadd.f32 %v531, %v603
  %v605 = vpop.f32.mrb[0].mxu0
  %606 = vdwg.mxu0
  %v607 = vadd.f32 %v443, %v604
  %v608 = vsel %vm62, %v607, 0.0
  %609 = vadd.xlane.f32.xlu0 %v608
  %v610 = vpop.xlane.xlu0 %609
  %v611 = vmul.f32 %v610, %v419
  %v612 = vsub.f32 %v607, %v611
  %v613 = vmul.f32 %v612, %v612
  %v614 = vsel %vm62, %v613, 0.0
  %615 = vadd.xlane.f32.xlu0 %v614
  %v616 = vpop.xlane.xlu0 %615
  %v617 = vmul.f32 %v616, %v419
  %v618 = vadd.f32 %v617, 1e-05
  %v619 = vrsqrt.pop %v618
  %v620 = vmul.f32 %v612, %v619
  %v622 = vlaneseq
  %v623 = vshrl.u32 %v622, 7
  %v624 = vsub.s32 0, %v623
  %v625 = vrot.slane %v163, %v624
  %v627 = vmul.f32 %v620, %v625
  %v629 = vlaneseq
  %v630 = vshrl.u32 %v629, 7
  %v631 = vsub.s32 0, %v630
  %v632 = vrot.slane %v164, %v631
  %v634 = vadd.f32 %v627, %v632
  %v635 = vsel %vm62, %v634, 0.0
  %636 = vadd.xlane.f32.xlu0 %v635
  %v637 = vpop.xlane.xlu0 %636
  %v638 = vmul.f32 %v637, %v419
  %v639 = vsub.f32 %v634, %v638
  %v640 = vmul.f32 %v639, %v639
  %v641 = vsel %vm62, %v640, 0.0
  %642 = vadd.xlane.f32.xlu0 %v641
  %v643 = vpop.xlane.xlu0 %642
  %v644 = vmul.f32 %v643, %v419
  %v645 = vadd.f32 %v644, 1e-05
  %v646 = vrsqrt.pop %v645
  %v647 = vmul.f32 %v639, %v646
  %v649 = vlaneseq
  %v650 = vshrl.u32 %v649, 7
  %v651 = vsub.s32 0, %v650
  %v652 = vrot.slane %v165, %v651
  %v654 = vmul.f32 %v647, %v652
  %v656 = vlaneseq
  %v657 = vshrl.u32 %v656, 7
  %v658 = vsub.s32 0, %v657
  %v659 = vrot.slane %v166, %v658
  %v661 = vadd.f32 %v654, %v659
  %662 = vst.msk [vmem:[%s15] sm:$0xff] %vm62, %v661
  %664 = vrot.lane.b32.xlu0 %v145, 108
  %v665 = vpop.permute.xlu0 %664
  %v666 = vsel %vm62, %v145, 0
  %v668 = vsel %vm62, %v665, 0
  %670 = vmatprep.subr.mxu0 0.0
  %671 = vmatpush1.xpose.msra.mxu0 %v668
  %672 = vmatprep.subr.mxu0 0.0
  %673 = vmatpush1.xpose.msra.mxu0 0.0
  %674 = vmatprep.subr.mxu0 0.0
  %675 = vmatpush1.xpose.msra.mxu0 0.0
  %676 = vmatprep.subr.mxu0 0.0
  %677 = vmatpush1.xpose.msra.mxu0 0.0
  %678 = vmatprep.subr.mxu0 0.0
  %679 = vmatpush1.xpose.msra.mxu0 0.0
  %680 = vmatprep.subr.mxu0 0.0
  %681 = vmatpush1.xpose.msra.mxu0 0.0
  %682 = vmatprep.subr.mxu0 0.0
  %683 = vmatpush1.xpose.msra.mxu0 0.0
  %684 = vmatprep.subr.mxu0 0.0
  %685 = vmatpush1.xpose.msra.mxu0 0.0
  %686 = vmatprep.subr.mxu0 0.0
  %687 = vmatpush1.xpose.msra.mxu0 0.0
  %688 = vmatprep.subr.mxu0 0.0
  %689 = vmatpush1.xpose.msra.mxu0 0.0
  %690 = vmatprep.subr.mxu0 0.0
  %691 = vmatpush1.xpose.msra.mxu0 0.0
  %692 = vmatprep.subr.mxu0 0.0
  %693 = vmatpush1.xpose.msra.mxu0 0.0
  %694 = vmatprep.subr.mxu0 0.0
  %695 = vmatpush1.xpose.msra.mxu0 0.0
  %696 = vmatprep.subr.mxu0 0.0
  %697 = vmatpush1.xpose.msra.mxu0 0.0
  %698 = vmatprep.subr.mxu0 0.0
  %699 = vmatpush1.xpose.msra.mxu0 0.0
  %700 = vmatprep.subr.mxu0 0.0
  %701 = vmatpush1.xpose.msra.mxu0 0.0
  %702 = vmatprep.subr.mxu0 0.0
  %703 = vmatpush1.xpose.msra.mxu0 0.0
  %704 = vmatprep.subr.mxu0 0.0
  %705 = vmatpush1.xpose.msra.mxu0 0.0
  %706 = vmatprep.subr.mxu0 0.0
  %707 = vmatpush1.xpose.msra.mxu0 0.0
  %708 = vmatprep.subr.mxu0 0.0
  %709 = vmatpush1.xpose.msra.mxu0 0.0
  %710 = vmatprep.subr.mxu0 0.0
  %711 = vmatpush1.xpose.msra.mxu0 0.0
  %712 = vmatprep.subr.mxu0 0.0
  %713 = vmatpush1.xpose.msra.mxu0 0.0
  %714 = vmatprep.subr.mxu0 0.0
  %715 = vmatpush1.xpose.msra.mxu0 0.0
  %716 = vmatprep.subr.mxu0 0.0
  %717 = vmatpush1.xpose.msra.mxu0 0.0
  %718 = vmatprep.subr.mxu0 0.0
  %719 = vmatpush1.xpose.msra.mxu0 0.0
  %720 = vmatprep.subr.mxu0 0.0
  %721 = vmatpush1.xpose.msra.mxu0 0.0
  %722 = vmatprep.subr.mxu0 0.0
  %723 = vmatpush1.xpose.msra.mxu0 0.0
  %724 = vmatprep.subr.mxu0 0.0
  %725 = vmatpush1.xpose.msra.mxu0 0.0
  %726 = vmatprep.subr.mxu0 0.0
  %727 = vmatpush1.xpose.msra.mxu0 0.0
  %728 = vmatprep.subr.mxu0 0.0
  %729 = vmatpush1.xpose.msra.mxu0 0.0
  %730 = vmatprep.subr.mxu0 0.0
  %731 = vmatpush1.xpose.msra.mxu0 0.0
  %732 = vmatprep.subr.mxu0 0.0
  %733 = vmatpush1.xpose.msra.mxu0 0.0
  %734 = vmatprep.mubr.f32.mxu0 0.0
  %735 = vmatmul.mubr.f32.gmra.mrb[0].mxu0 %v666
  %v736 = vpop.f32.mrb[0].mxu0
  %v737 = vadd.f32 0.0, %v736
  %v738 = vpop.f32.mrb[0].mxu0
  %739 = vdwg.mxu0
  %v740 = vmul.f32 %v737, 0.2236068
  %v741 = vsel %vm245, %v740, -inf
  %742 = vmax.xlane.f32.xlu0 %v741
  %v743 = vpop.xlane.xlu0 %742
  %v744 = vsub.f32 %v740, %v743
  %v745 = vmul.f32 %v744, 1.442695
  %v746 = vpow.pop %v745
  %v747 = vsel %vm245, %v746, 0.0
  %748 = vadd.xlane.f32.xlu0 %v747
  %v749 = vpop.xlane.xlu0 %748
  %v750 = vrcp.pop %v749
  %v751 = vmul.f32 %v746, %v750
  %752 = vrot.lane.b32.xlu0 %v145, 88
  %v753 = vpop.permute.xlu0 %752
  %v756 = vsel %vm245, %v751, 0
  %758 = vmatprep.subr.mxu0 0.0
  %759 = vmatpush1.msra.mxu0 %v753
  %760 = vmatprep.subr.mxu0 0.0
  %761 = vmatpush1.msra.mxu0 0.0
  %762 = vmatprep.subr.mxu0 0.0
  %763 = vmatpush1.msra.mxu0 0.0
  %764 = vmatprep.subr.mxu0 0.0
  %765 = vmatpush1.msra.mxu0 0.0
  %766 = vmatprep.subr.mxu0 0.0
  %767 = vmatpush1.msra.mxu0 0.0
  %768 = vmatprep.subr.mxu0 0.0
  %769 = vmatpush1.msra.mxu0 0.0
  %770 = vmatprep.subr.mxu0 0.0
  %771 = vmatpush1.msra.mxu0 0.0
  %772 = vmatprep.subr.mxu0 0.0
  %773 = vmatpush1.msra.mxu0 0.0
  %774 = vmatprep.subr.mxu0 0.0
  %775 = vmatpush1.msra.mxu0 0.0
  %776 = vmatprep.subr.mxu0 0.0
  %777 = vmatpush1.msra.mxu0 0.0
  %778 = vmatprep.subr.mxu0 0.0
  %779 = vmatpush1.msra.mxu0 0.0
  %780 = vmatprep.subr.mxu0 0.0
  %781 = vmatpush1.msra.mxu0 0.0
  %782 = vmatprep.subr.mxu0 0.0
  %783 = vmatpush1.msra.mxu0 0.0
  %784 = vmatprep.subr.mxu0 0.0
  %785 = vmatpush1.msra.mxu0 0.0
  %786 = vmatprep.subr.mxu0 0.0
  %787 = vmatpush1.msra.mxu0 0.0
  %788 = vmatprep.subr.mxu0 0.0
  %789 = vmatpush1.msra.mxu0 0.0
  %790 = vmatprep.subr.mxu0 0.0
  %791 = vmatpush1.msra.mxu0 0.0
  %792 = vmatprep.subr.mxu0 0.0
  %793 = vmatpush1.msra.mxu0 0.0
  %794 = vmatprep.subr.mxu0 0.0
  %795 = vmatpush1.msra.mxu0 0.0
  %796 = vmatprep.subr.mxu0 0.0
  %797 = vmatpush1.msra.mxu0 0.0
  %798 = vmatprep.subr.mxu0 0.0
  %799 = vmatpush1.msra.mxu0 0.0
  %800 = vmatprep.subr.mxu0 0.0
  %801 = vmatpush1.msra.mxu0 0.0
  %802 = vmatprep.subr.mxu0 0.0
  %803 = vmatpush1.msra.mxu0 0.0
  %804 = vmatprep.subr.mxu0 0.0
  %805 = vmatpush1.msra.mxu0 0.0
  %806 = vmatprep.subr.mxu0 0.0
  %807 = vmatpush1.msra.mxu0 0.0
  %808 = vmatprep.subr.mxu0 0.0
  %809 = vmatpush1.msra.mxu0 0.0
  %810 = vmatprep.subr.mxu0 0.0
  %811 = vmatpush1.msra.mxu0 0.0
  %812 = vmatprep.subr.mxu0 0.0
  %813 = vmatpush1.msra.mxu0 0.0
  %814 = vmatprep.subr.mxu0 0.0
  %815 = vmatpush1.msra.mxu0 0.0
  %816 = vmatprep.subr.mxu0 0.0
  %817 = vmatpush1.msra.mxu0 0.0
  %818 = vmatprep.subr.mxu0 0.0
  %819 = vmatpush1.msra.mxu0 0.0
  %820 = vmatprep.subr.mxu0 0.0
  %821 = vmatpush1.msra.mxu0 0.0
  %822 = vmatprep.mubr.f32.mxu0 0.0
  %823 = vmatmul.mubr.f32.gmra.mrb[0].mxu0 %v756
  %v824 = vpop.f32.mrb[0].mxu0
  %v825 = vadd.f32 0.0, %v824
  %v826 = vpop.f32.mrb[0].mxu0
  %827 = vdwg.mxu0
  %v829 = vsel %vm62, %v825, 0
  %831 = vmatprep.subr.mxu0 0.0
  %832 = vmatpush1.msra.mxu0 %v148
  %833 = vmatprep.subr.mxu0 0.0
  %834 = vmatpush1.msra.mxu0 %v149
  %835 = vmatprep.subr.mxu0 0.0
  %836 = vmatpush1.msra.mxu0 %v343
  %837 = vmatprep.subr.mxu0 0.0
  %838 = vmatpush1.msra.mxu0 0.0
  %839 = vmatprep.subr.mxu0 0.0
  %840 = vmatpush1.msra.mxu0 0.0
  %841 = vmatprep.subr.mxu0 0.0
  %842 = vmatpush1.msra.mxu0 0.0
  %843 = vmatprep.subr.mxu0 0.0
  %844 = vmatpush1.msra.mxu0 0.0
  %845 = vmatprep.subr.mxu0 0.0
  %846 = vmatpush1.msra.mxu0 0.0
  %847 = vmatprep.subr.mxu0 0.0
  %848 = vmatpush1.msra.mxu0 0.0
  %849 = vmatprep.subr.mxu0 0.0
  %850 = vmatpush1.msra.mxu0 0.0
  %851 = vmatprep.subr.mxu0 0.0
  %852 = vmatpush1.msra.mxu0 0.0
  %853 = vmatprep.subr.mxu0 0.0
  %854 = vmatpush1.msra.mxu0 0.0
  %855 = vmatprep.subr.mxu0 0.0
  %856 = vmatpush1.msra.mxu0 0.0
  %857 = vmatprep.subr.mxu0 0.0
  %858 = vmatpush1.msra.mxu0 0.0
  %859 = vmatprep.subr.mxu0 0.0
  %860 = vmatpush1.msra.mxu0 0.0
  %861 = vmatprep.subr.mxu0 0.0
  %862 = vmatpush1.msra.mxu0 0.0
  %863 = vmatprep.subr.mxu0 0.0
  %864 = vmatpush1.msra.mxu0 0.0
  %865 = vmatprep.subr.mxu0 0.0
  %866 = vmatpush1.msra.mxu0 0.0
  %867 = vmatprep.subr.mxu0 0.0
  %868 = vmatpush1.msra.mxu0 0.0
  %869 = vmatprep.subr.mxu0 0.0
  %870 = vmatpush1.msra.mxu0 0.0
  %871 = vmatprep.subr.mxu0 0.0
  %872 = vmatpush1.msra.mxu0 0.0
  %873 = vmatprep.subr.mxu0 0.0
  %874 = vmatpush1.msra.mxu0 0.0
  %875 = vmatprep.subr.mxu0 0.0
  %876 = vmatpush1.msra.mxu0 0.0
  %877 = vmatprep.subr.mxu0 0.0
  %878 = vmatpush1.msra.mxu0 0.0
  %879 = vmatprep.subr.mxu0 0.0
  %880 = vmatpush1.msra.mxu0 0.0
  %881 = vmatprep.subr.mxu0 0.0
  %882 = vmatpush1.msra.mxu0 0.0
  %883 = vmatprep.subr.mxu0 0.0
  %884 = vmatpush1.msra.mxu0 0.0
  %885 = vmatprep.subr.mxu0 0.0
  %886 = vmatpush1.msra.mxu0 0.0
  %887 = vmatprep.subr.mxu0 0.0
  %888 = vmatpush1.msra.mxu0 0.0
  %889 = vmatprep.subr.mxu0 0.0
  %890 = vmatpush1.msra.mxu0 0.0
  %891 = vmatprep.subr.mxu0 0.0
  %892 = vmatpush1.msra.mxu0 0.0
  %893 = vmatprep.subr.mxu0 0.0
  %894 = vmatpush1.msra.mxu0 0.0
  %895 = vmatprep.mubr.f32.mxu0 0.0
  %896 = vmatmul.mubr.f32.gmra.mrb[0].mxu0 %v829
  %v897 = vpop.f32.mrb[0].mxu0
  %v898 = vadd.f32 %v337, %v897
  %v899 = vpop.f32.mrb[0].mxu0
  %900 = vdwg.mxu0
  %v901 = vadd.f32 %v51, %v898
  %v902 = vsel %vm62, %v901, 0.0
  %903 = vadd.xlane.f32.xlu0 %v902
  %v904 = vpop.xlane.xlu0 %903
  %v905 = vmul.f32 %v904, %v419
  %v906 = vsub.f32 %v901, %v905
  %v907 = vmul.f32 %v906, %v906
  %v908 = vsel %vm62, %v907, 0.0
  %909 = vadd.xlane.f32.xlu0 %v908
  %v910 = vpop.xlane.xlu0 %909
  %v911 = vmul.f32 %v910, %v419
  %v912 = vadd.f32 %v911, 1e-05
  %v913 = vrsqrt.pop %v912
  %v914 = vmul.f32 %v906, %v913
  %v915 = vmul.f32 %v914, %v434
  %v916 = vadd.f32 %v915, %v441
  %v918 = vsel %vm62, %v916, 0
  %920 = vmatprep.subr.mxu0 0.0
  %921 = vmatpush1.msra.mxu0 %v152
  %922 = vmatprep.subr.mxu0 0.0
  %923 = vmatpush1.msra.mxu0 %v153
  %924 = vmatprep.subr.mxu0 0.0
  %925 = vmatpush1.msra.mxu0 %v454
  %926 = vmatprep.subr.mxu0 0.0
  %927 = vmatpush1.msra.mxu0 0.0
  %928 = vmatprep.subr.mxu0 0.0
  %929 = vmatpush1.msra.mxu0 0.0
  %930 = vmatprep.subr.mxu0 0.0
  %931 = vmatpush1.msra.mxu0 0.0
  %932 = vmatprep.subr.mxu0 0.0
  %933 = vmatpush1.msra.mxu0 0.0
  %934 = vmatprep.subr.mxu0 0.0
  %935 = vmatpush1.msra.mxu0 0.0
  %936 = vmatprep.subr.mxu0 0.0
  %937 = vmatpush1.msra.mxu0 0.0
  %938 = vmatprep.subr.mxu0 0.0
  %939 = vmatpush1.msra.mxu0 0.0
  %940 = vmatprep.subr.mxu0 0.0
  %941 = vmatpush1.msra.mxu0 0.0
  %942 = vmatprep.subr.mxu0 0.0
  %943 = vmatpush1.msra.mxu0 0.0
  %944 = vmatprep.subr.mxu0 0.0
  %945 = vmatpush1.msra.mxu0 0.0
  %946 = vmatprep.subr.mxu0 0.0
  %947 = vmatpush1.msra.mxu0 0.0
  %948 = vmatprep.subr.mxu0 0.0
  %949 = vmatpush1.msra.mxu0 0.0
  %950 = vmatprep.subr.mxu0 0.0
  %951 = vmatpush1.msra.mxu0 0.0
  %952 = vmatprep.subr.mxu0 0.0
  %953 = vmatpush1.msra.mxu0 0.0
  %954 = vmatprep.subr.mxu0 0.0
  %955 = vmatpush1.msra.mxu0 0.0
  %956 = vmatprep.subr.mxu0 0.0
  %957 = vmatpush1.msra.mxu0 0.0
  %958 = vmatprep.subr.mxu0 0.0
  %959 = vmatpush1.msra.mxu0 0.0
  %960 = vmatprep.subr.mxu0 0.0
  %961 = vmatpush1.msra.mxu0 0.0
  %962 = vmatprep.subr.mxu0 0.0
  %963 = vmatpush1.msra.mxu0 0.0
  %964 = vmatprep.subr.mxu0 0.0
  %965 = vmatpush1.msra.mxu0 0.0
  %966 = vmatprep.subr.mxu0 0.0
  %967 = vmatpush1.msra.mxu0 0.0
  %968 = vmatprep.subr.mxu0 0.0
  %969 = vmatpush1.msra.mxu0 0.0
  %970 = vmatprep.subr.mxu0 0.0
  %971 = vmatpush1.msra.mxu0 0.0
  %972 = vmatprep.subr.mxu0 0.0
  %973 = vmatpush1.msra.mxu0 0.0
  %974 = vmatprep.subr.mxu0 0.0
  %975 = vmatpush1.msra.mxu0 0.0
  %976 = vmatprep.subr.mxu0 0.0
  %977 = vmatpush1.msra.mxu0 0.0
  %978 = vmatprep.subr.mxu0 0.0
  %979 = vmatpush1.msra.mxu0 0.0
  %980 = vmatprep.subr.mxu0 0.0
  %981 = vmatpush1.msra.mxu0 0.0
  %982 = vmatprep.subr.mxu0 0.0
  %983 = vmatpush1.msra.mxu0 0.0
  %984 = vmatprep.mubr.f32.mxu0 0.0
  %985 = vmatmul.mubr.f32.gmra.mrb[0].mxu0 %v918
  %v986 = vpop.f32.mrb[0].mxu0
  %v987 = vadd.f32 %v448, %v986
  %v988 = vpop.f32.mrb[0].mxu0
  %989 = vdwg.mxu0
  %v990 = vmax.f32 %v987, 0.0
  %v992 = vsel %vm533, %v990, 0
  %994 = vmatprep.subr.mxu0 0.0
  %995 = vmatpush1.msra.mxu0 %v156
  %996 = vmatprep.subr.mxu0 0.0
  %997 = vmatpush1.msra.mxu0 %v157
  %998 = vmatprep.subr.mxu0 0.0
  %999 = vmatpush1.msra.mxu0 %v158
  %1000 = vmatprep.subr.mxu0 0.0
  %1001 = vmatpush1.msra.mxu0 %v159
  %1002 = vmatprep.subr.mxu0 0.0
  %1003 = vmatpush1.msra.mxu0 0.0
  %1004 = vmatprep.subr.mxu0 0.0
  %1005 = vmatpush1.msra.mxu0 0.0
  %1006 = vmatprep.subr.mxu0 0.0
  %1007 = vmatpush1.msra.mxu0 0.0
  %1008 = vmatprep.subr.mxu0 0.0
  %1009 = vmatpush1.msra.mxu0 0.0
  %1010 = vmatprep.subr.mxu0 0.0
  %1011 = vmatpush1.msra.mxu0 0.0
  %1012 = vmatprep.subr.mxu0 0.0
  %1013 = vmatpush1.msra.mxu0 0.0
  %1014 = vmatprep.subr.mxu0 0.0
  %1015 = vmatpush1.msra.mxu0 0.0
  %1016 = vmatprep.subr.mxu0 0.0
  %1017 = vmatpush1.msra.mxu0 0.0
  %1018 = vmatprep.subr.mxu0 0.0
  %1019 = vmatpush1.msra.mxu0 0.0
  %1020 = vmatprep.subr.mxu0 0.0
  %1021 = vmatpush1.msra.mxu0 0.0
  %1022 = vmatprep.subr.mxu0 0.0
  %1023 = vmatpush1.msra.mxu0 0.0
  %1024 = vmatprep.subr.mxu0 0.0
  %1025 = vmatpush1.msra.mxu0 0.0
  %1026 = vmatprep.subr.mxu0 0.0
  %1027 = vmatpush1.msra.mxu0 0.0
  %1028 = vmatprep.subr.mxu0 0.0
  %1029 = vmatpush1.msra.mxu0 0.0
  %1030 = vmatprep.subr.mxu0 0.0
  %1031 = vmatpush1.msra.mxu0 0.0
  %1032 = vmatprep.subr.mxu0 0.0
  %1033 = vmatpush1.msra.mxu0 0.0
  %1034 = vmatprep.subr.mxu0 0.0
  %1035 = vmatpush1.msra.mxu0 0.0
  %1036 = vmatprep.subr.mxu0 0.0
  %1037 = vmatpush1.msra.mxu0 0.0
  %1038 = vmatprep.subr.mxu0 0.0
  %1039 = vmatpush1.msra.mxu0 0.0
  %1040 = vmatprep.subr.mxu0 0.0
  %1041 = vmatpush1.msra.mxu0 0.0
  %1042 = vmatprep.subr.mxu0 0.0
  %1043 = vmatpush1.msra.mxu0 0.0
  %1044 = vmatprep.subr.mxu0 0.0
  %1045 = vmatpush1.msra.mxu0 0.0
  %1046 = vmatprep.subr.mxu0 0.0
  %1047 = vmatpush1.msra.mxu0 0.0
  %1048 = vmatprep.subr.mxu0 0.0
  %1049 = vmatpush1.msra.mxu0 0.0
  %1050 = vmatprep.subr.mxu0 0.0
  %1051 = vmatpush1.msra.mxu0 0.0
  %1052 = vmatprep.subr.mxu0 0.0
  %1053 = vmatpush1.msra.mxu0 0.0
  %1054 = vmatprep.subr.mxu0 0.0
  %1055 = vmatpush1.msra.mxu0 0.0
  %1056 = vmatprep.subr.mxu0 0.0
  %1057 = vmatpush1.msra.mxu0 0.0
  %1058 = vmatprep.mubr.f32.mxu0 0.0
  %1059 = vmatmul.mubr.f32.gmra.mrb[0].mxu0 %v992
  %v1060 = vpop.f32.mrb[0].mxu0
  %v1061 = vadd.f32 %v531, %v1060
  %v1062 = vpop.f32.mrb[0].mxu0
  %1063 = vdwg.mxu0
  %v1064 = vadd.f32 %v916, %v1061
  %v1065 = vsel %vm62, %v1064, 0.0
  %1066 = vadd.xlane.f32.xlu0 %v1065
  %v1067 = vpop.xlane.xlu0 %1066
  %v1068 = vmul.f32 %v1067, %v419
  %v1069 = vsub.f32 %v1064, %v1068
  %v1070 = vmul.f32 %v1069, %v1069
  %v1071 = vsel %vm62, %v1070, 0.0
  %1072 = vadd.xlane.f32.xlu0 %v1071
  %v1073 = vpop.xlane.xlu0 %1072
  %v1074 = vmul.f32 %v1073, %v419
  %v1075 = vadd.f32 %v1074, 1e-05
  %v1076 = vrsqrt.pop %v1075
  %v1077 = vmul.f32 %v1069, %v1076
  %v1078 = vmul.f32 %v1077, %v625
  %v1079 = vadd.f32 %v1078, %v632
  %v1080 = vsel %vm62, %v1079, 0.0
  %1081 = vadd.xlane.f32.xlu0 %v1080
  %v1082 = vpop.xlane.xlu0 %1081
  %v1083 = vmul.f32 %v1082, %v419
  %v1084 = vsub.f32 %v1079, %v1083
  %v1085 = vmul.f32 %v1084, %v1084
  %v1086 = vsel %vm62, %v1085, 0.0
  %1087 = vadd.xlane.f32.xlu0 %v1086
  %v1088 = vpop.xlane.xlu0 %1087
  %v1089 = vmul.f32 %v1088, %v419
  %v1090 = vadd.f32 %v1089, 1e-05
  %v1091 = vrsqrt.pop %v1090
  %v1092 = vmul.f32 %v1084, %v1091
  %v1093 = vmul.f32 %v1092, %v652
  %v1094 = vadd.f32 %v1093, %v659
  %1095 = vst.msk [vmem:[%s15 + $0x8] sm:$0xff] %vm62, %v1094
  // Predicated region
  $region62: #{modelv2_forward.3} parent=0 // pred_check
    _
  $region63: #{modelv2_forward.3} parent=0 // pred_check_branch
    %1097 = sbr.rel (0) target = $region65
  $region64: #{modelv2_forward.3} parent=0 // pred_region
    _
  $region65: #{modelv2_forward.3} parent=0 // pred_fallthru
    _
  // Predicated region
  $region66: #{modelv2_forward.3} parent=0 // pred_check
    _
  $region67: #{modelv2_forward.3} parent=0 // pred_check_branch
    %1099 = sbr.rel (0) target = $region69
  $region68: #{modelv2_forward.3} parent=0 // pred_region
    _
  $region69: #{modelv2_forward.3} parent=0 // pred_fallthru
    _

// kernel: modelv2_forward.5
$region0: #{modelv2_forward.5}
  #allocation0 [shape = 'u32[]', space=smem, size = 0x4, offset = 0x4, fixed_abs, tag = 'smem constant byte address 0x4 - core index']
  #allocation1 [shape = 'u32[144,128]{1,0:T(1,128)}', space=vmem, size = 0x12000, scoped, tag = 'internal scratch']
  %s0 = inlined_call_operand.vmem [shape: f32[16,20], index: 0, kind: input, shape index: {}]
  %s1 = inlined_call_operand.vmem [shape: f32[2,8], index: 1, kind: input, shape index: {}]
  %s2 = inlined_call_operand.vmem [shape: f32[16,1], index: 2, kind: input, shape index: {}]
  %s3 = inlined_call_operand.vmem [shape: f32[20,60], index: 3, kind: input, shape index: {}]
  %s4 = inlined_call_operand.vmem [shape: f32[1,60], index: 4, kind: input, shape index: {}]
  %s5 = inlined_call_operand.vmem [shape: f32[20,20], index: 5, kind: input, shape index: {}]
  %s6 = inlined_call_operand.vmem [shape: f32[1,20], index: 6, kind: input, shape index: {}]
  %s7 = inlined_call_operand.vmem [shape: f32[1,20], index: 7, kind: input, shape index: {}]
  %s8 = inlined_call_operand.vmem [shape: f32[1,20], index: 8, kind: input, shape index: {}]
  %s9 = inlined_call_operand.vmem [shape: f32[20,32], index: 9, kind: input, shape index: {}]
  %s10 = inlined_call_operand.vmem [shape: f32[1,32], index: 10, kind: input, shape index: {}]
  %s11 = inlined_call_operand.vmem [shape: f32[32,20], index: 11, kind: input, shape index: {}]
  %s12 = inlined_call_operand.vmem [shape: f32[1,20], index: 12, kind: input, shape index: {}]
  %s13 = inlined_call_operand.vmem [shape: f32[1,20], index: 13, kind: input, shape index: {}]
  %s14 = inlined_call_operand.vmem [shape: f32[1,20], index: 14, kind: input, shape index: {}]
  %s15 = inlined_call_operand.vmem [shape: f32[1,20], index: 15, kind: input, shape index: {}]
  %s16 = inlined_call_operand.vmem [shape: f32[1,20], index: 16, kind: input, shape index: {}]
  %s17 = inlined_call_operand.vmem [shape: f32[20,20], index: 17, kind: input, shape index: {}]
  %s18 = inlined_call_operand.vmem [shape: f32[1,20], index: 18, kind: input, shape index: {}]
  %s19 = inlined_call_operand.vmem [shape: f32[20,2], index: 19, kind: input, shape index: {}]
  %s20 = inlined_call_operand.vmem [shape: f32[1,2], index: 20, kind: input, shape index: {}]
  %s21 = inlined_call_operand.hbm [shape: f32[16,20], index: 21, kind: output, shape index: {0}]
  %s22 = inlined_call_operand.hbm [shape: f32[2,2], index: 22, kind: output, shape index: {1}]
  %23 = xla_tuple %s21, %s22
  %s24 = sld [smem:[#allocation0]]
  $region102: #{modelv2_forward.5} parent=0
    _
  %s26 = ssub.s32 1, %s24
  %s27 = scalar_select 0, %s26, %s24
  $region1: #{modelv2_forward.5} parent=0
    #allocation2 [shape = 'u8[8192]{0}', space=vmem, size = 0x2000, scoped, tag = 'output window, operand 0, single buffered']
    #allocation3 [shape = 's32[1]{0}', space=sflag, size = 0x4, scoped, tag = 'scoped memory for modelv2_forward.5']
    #allocation4 [shape = 'u8[1024]{0}', space=vmem, size = 0x400, scoped, tag = 'output window, operand 1, single buffered']
    #allocation5 [shape = 's32[1]{0}', space=sflag, size = 0x4, scoped, tag = 'scoped memory for modelv2_forward.5']
    %28 = vsyncpa [#allocation3], 0
    %29 = vsyncpa [#allocation5], 0
    // Predicated region
    $region2: #{modelv2_forward.5} parent=1 // pred_check
      _
    $region3: #{modelv2_forward.5} parent=1 // pred_check_branch
      %31 = sbr.rel (0) target = $region5
    $region4: #{modelv2_forward.5} parent=1 // pred_region
      _
    $region5: #{modelv2_forward.5} parent=1 // pred_fallthru
      _
    // Predicated region
    $region6: #{modelv2_forward.5} parent=1 // pred_check
      _
    $region7: #{modelv2_forward.5} parent=1 // pred_check_branch
      %33 = sbr.rel (0) target = $region9
    $region8: #{modelv2_forward.5} parent=1 // pred_region
      _
    $region9: #{modelv2_forward.5} parent=1 // pred_fallthru
      _
    // Predicated region
    $region10: #{modelv2_forward.5} parent=1 // pred_check
      _
    $region11: #{modelv2_forward.5} parent=1 // pred_check_branch
      %35 = sbr.rel (0) target = $region13
    $region12: #{modelv2_forward.5} parent=1 // pred_region
      _
    $region13: #{modelv2_forward.5} parent=1 // pred_fallthru
      _
    // Predicated region
    $region14: #{modelv2_forward.5} parent=1 // pred_check
      _
    $region15: #{modelv2_forward.5} parent=1 // pred_check_branch
      %37 = sbr.rel (0) target = $region17
    $region16: #{modelv2_forward.5} parent=1 // pred_region
      _
    $region17: #{modelv2_forward.5} parent=1 // pred_fallthru
      _
    // Predicated region
    $region18: #{modelv2_forward.5} parent=1 // pred_check
      _
    $region19: #{modelv2_forward.5} parent=1 // pred_check_branch
      %39 = sbr.rel (0) target = $region21
    $region20: #{modelv2_forward.5} parent=1 // pred_region
      _
    $region21: #{modelv2_forward.5} parent=1 // pred_fallthru
      _
    // Predicated region
    $region22: #{modelv2_forward.5} parent=1 // pred_check
      _
    $region23: #{modelv2_forward.5} parent=1 // pred_check_branch
      %41 = sbr.rel (0) target = $region25
    $region24: #{modelv2_forward.5} parent=1 // pred_region
      _
    $region25: #{modelv2_forward.5} parent=1 // pred_fallthru
      _
    // Predicated region
    $region26: #{modelv2_forward.5} parent=1 // pred_check
      _
    $region27: #{modelv2_forward.5} parent=1 // pred_check_branch
      %43 = sbr.rel (0) target = $region29
    $region28: #{modelv2_forward.5} parent=1 // pred_region
      _
    $region29: #{modelv2_forward.5} parent=1 // pred_fallthru
      _
    // Predicated region
    $region30: #{modelv2_forward.5} parent=1 // pred_check
      _
    $region31: #{modelv2_forward.5} parent=1 // pred_check_branch
      %45 = sbr.rel (0) target = $region33
    $region32: #{modelv2_forward.5} parent=1 // pred_region
      _
    $region33: #{modelv2_forward.5} parent=1 // pred_fallthru
      _
    // Predicated region
    $region34: #{modelv2_forward.5} parent=1 // pred_check
      _
    $region35: #{modelv2_forward.5} parent=1 // pred_check_branch
      %47 = sbr.rel (0) target = $region37
    $region36: #{modelv2_forward.5} parent=1 // pred_region
      _
    $region37: #{modelv2_forward.5} parent=1 // pred_fallthru
      _
    // Predicated region
    $region38: #{modelv2_forward.5} parent=1 // pred_check
      _
    $region39: #{modelv2_forward.5} parent=1 // pred_check_branch
      %49 = sbr.rel (0) target = $region41
    $region40: #{modelv2_forward.5} parent=1 // pred_region
      _
    $region41: #{modelv2_forward.5} parent=1 // pred_fallthru
      _
    // Predicated region
    $region42: #{modelv2_forward.5} parent=1 // pred_check
      _
    $region43: #{modelv2_forward.5} parent=1 // pred_check_branch
      %51 = sbr.rel (0) target = $region45
    $region44: #{modelv2_forward.5} parent=1 // pred_region
      _
    $region45: #{modelv2_forward.5} parent=1 // pred_fallthru
      _
    // Predicated region
    $region46: #{modelv2_forward.5} parent=1 // pred_check
      _
    $region47: #{modelv2_forward.5} parent=1 // pred_check_branch
      %53 = sbr.rel (0) target = $region49
    $region48: #{modelv2_forward.5} parent=1 // pred_region
      _
    $region49: #{modelv2_forward.5} parent=1 // pred_fallthru
      _
    // Predicated region
    $region50: #{modelv2_forward.5} parent=1 // pred_check
      _
    $region51: #{modelv2_forward.5} parent=1 // pred_check_branch
      %55 = sbr.rel (0) target = $region53
    $region52: #{modelv2_forward.5} parent=1 // pred_region
      _
    $region53: #{modelv2_forward.5} parent=1 // pred_fallthru
      _
    // Predicated region
    $region54: #{modelv2_forward.5} parent=1 // pred_check
      _
    $region55: #{modelv2_forward.5} parent=1 // pred_check_branch
      %57 = sbr.rel (0) target = $region57
    $region56: #{modelv2_forward.5} parent=1 // pred_region
      _
    $region57: #{modelv2_forward.5} parent=1 // pred_fallthru
      _
    // Predicated region
    $region58: #{modelv2_forward.5} parent=1 // pred_check
      _
    $region59: #{modelv2_forward.5} parent=1 // pred_check_branch
      %59 = sbr.rel (0) target = $region61
    $region60: #{modelv2_forward.5} parent=1 // pred_region
      _
    $region61: #{modelv2_forward.5} parent=1 // pred_fallthru
      _
    // Predicated region
    $region62: #{modelv2_forward.5} parent=1 // pred_check
      _
    $region63: #{modelv2_forward.5} parent=1 // pred_check_branch
      %61 = sbr.rel (0) target = $region65
    $region64: #{modelv2_forward.5} parent=1 // pred_region
      _
    $region65: #{modelv2_forward.5} parent=1 // pred_fallthru
      _
    // Predicated region
    $region66: #{modelv2_forward.5} parent=1 // pred_check
      _
    $region67: #{modelv2_forward.5} parent=1 // pred_check_branch
      %63 = sbr.rel (0) target = $region69
    $region68: #{modelv2_forward.5} parent=1 // pred_region
      _
    $region69: #{modelv2_forward.5} parent=1 // pred_fallthru
      _
    // Predicated region
    $region70: #{modelv2_forward.5} parent=1 // pred_check
      _
    $region71: #{modelv2_forward.5} parent=1 // pred_check_branch
      %65 = sbr.rel (0) target = $region73
    $region72: #{modelv2_forward.5} parent=1 // pred_region
      _
    $region73: #{modelv2_forward.5} parent=1 // pred_fallthru
      _
    // Predicated region
    $region74: #{modelv2_forward.5} parent=1 // pred_check
      _
    $region75: #{modelv2_forward.5} parent=1 // pred_check_branch
      %67 = sbr.rel (0) target = $region77
    $region76: #{modelv2_forward.5} parent=1 // pred_region
      _
    $region77: #{modelv2_forward.5} parent=1 // pred_fallthru
      _
    // Predicated region
    $region78: #{modelv2_forward.5} parent=1 // pred_check
      _
    $region79: #{modelv2_forward.5} parent=1 // pred_check_branch
      %69 = sbr.rel (0) target = $region81
    $region80: #{modelv2_forward.5} parent=1 // pred_region
      _
    $region81: #{modelv2_forward.5} parent=1 // pred_fallthru
      _
    // Predicated region
    $region82: #{modelv2_forward.5} parent=1 // pred_check
      _
    $region83: #{modelv2_forward.5} parent=1 // pred_check_branch
      %71 = sbr.rel (0) target = $region85
    $region84: #{modelv2_forward.5} parent=1 // pred_region
      _
    $region85: #{modelv2_forward.5} parent=1 // pred_fallthru
      _
    %v72 = vld [vmem:[%s0] sm:$0xff]
    %v73 = vld [vmem:[%s0 + $0x8] sm:$0xff]
    %v74 = vld [vmem:[%s3] sm:$0xff]
    %v75 = vld [vmem:[%s3 + $0x8] sm:$0xff]
    %v76 = vld [vmem:[%s3 + $0x10] sm:$0xf]
    %v77 = vld [vmem:[%s4] sm:$0x1]
    %v79 = vlaneseq
    %v80 = vshrl.u32 %v79, 7
    %v81 = vsub.s32 0, %v80
    %v82 = vrot.slane %v77, %v81
    %vm84 = vcmask 162816
    %v86 = vsel %vm84, %v72, 0
    %v89 = vsel %vm84, %v73, 0
    %vm91 = vcmask 1043456
    %v93 = vsel %vm91, %v76, 0
    %95 = vmatprep.subr.mxu0 0.0
    %96 = vmatpush1.msra.mxu0 %v74
    %97 = vmatprep.subr.mxu0 0.0
    %98 = vmatpush1.msra.mxu0 %v75
    %99 = vmatprep.subr.mxu0 0.0
    %100 = vmatpush1.msra.mxu0 %v93
    %101 = vmatprep.subr.mxu0 0.0
    %102 = vmatpush1.msra.mxu0 0.0
    %103 = vmatprep.subr.mxu0 0.0
    %104 = vmatpush1.msra.mxu0 0.0
    %105 = vmatprep.subr.mxu0 0.0
    %106 = vmatpush1.msra.mxu0 0.0
    %107 = vmatprep.subr.mxu0 0.0
    %108 = vmatpush1.msra.mxu0 0.0
    %109 = vmatprep.subr.mxu0 0.0
    %110 = vmatpush1.msra.mxu0 0.0
    %111 = vmatprep.subr.mxu0 0.0
    %112 = vmatpush1.msra.mxu0 0.0
    %113 = vmatprep.subr.mxu0 0.0
    %114 = vmatpush1.msra.mxu0 0.0
    %115 = vmatprep.subr.mxu0 0.0
    %116 = vmatpush1.msra.mxu0 0.0
    %117 = vmatprep.subr.mxu0 0.0
    %118 = vmatpush1.msra.mxu0 0.0
    %119 = vmatprep.subr.mxu0 0.0
    %120 = vmatpush1.msra.mxu0 0.0
    %121 = vmatprep.subr.mxu0 0.0
    %122 = vmatpush1.msra.mxu0 0.0
    %123 = vmatprep.subr.mxu0 0.0
    %124 = vmatpush1.msra.mxu0 0.0
    %125 = vmatprep.subr.mxu0 0.0
    %126 = vmatpush1.msra.mxu0 0.0
    %127 = vmatprep.subr.mxu0 0.0
    %128 = vmatpush1.msra.mxu0 0.0
    %129 = vmatprep.subr.mxu0 0.0
    %130 = vmatpush1.msra.mxu0 0.0
    %131 = vmatprep.subr.mxu0 0.0
    %132 = vmatpush1.msra.mxu0 0.0
    %133 = vmatprep.subr.mxu0 0.0
    %134 = vmatpush1.msra.mxu0 0.0
    %135 = vmatprep.subr.mxu0 0.0
    %136 = vmatpush1.msra.mxu0 0.0
    %137 = vmatprep.subr.mxu0 0.0
    %138 = vmatpush1.msra.mxu0 0.0
    %139 = vmatprep.subr.mxu0 0.0
    %140 = vmatpush1.msra.mxu0 0.0
    %141 = vmatprep.subr.mxu0 0.0
    %142 = vmatpush1.msra.mxu0 0.0
    %143 = vmatprep.subr.mxu0 0.0
    %144 = vmatpush1.msra.mxu0 0.0
    %145 = vmatprep.subr.mxu0 0.0
    %146 = vmatpush1.msra.mxu0 0.0
    %147 = vmatprep.subr.mxu0 0.0
    %148 = vmatpush1.msra.mxu0 0.0
    %149 = vmatprep.subr.mxu0 0.0
    %150 = vmatpush1.msra.mxu0 0.0
    %151 = vmatprep.subr.mxu0 0.0
    %152 = vmatpush1.msra.mxu0 0.0
    %153 = vmatprep.subr.mxu0 0.0
    %154 = vmatpush1.msra.mxu0 0.0
    %155 = vmatprep.subr.mxu0 0.0
    %156 = vmatpush1.msra.mxu0 0.0
    %157 = vmatprep.subr.mxu0 0.0
    %158 = vmatpush1.msra.mxu0 0.0
    %159 = vmatprep.mubr.f32.mxu0 0.0
    %160 = vmatmul.mubr.f32.gmra.mrb[0].mxu0 %v86
    %v161 = vpop.f32.mrb[0].mxu0
    %v162 = vadd.f32 %v82, %v161
    %v163 = vpop.f32.mrb[0].mxu0
    %164 = vmatprep.mubr.f32.mxu0 0.0
    %165 = vmatmul.mubr.f32.gmra.mrb[0].mxu0 %v89
    %v166 = vpop.f32.mrb[0].mxu0
    %v167 = vadd.f32 %v82, %v166
    %v168 = vpop.f32.mrb[0].mxu0
    %169 = vdwg.mxu0
    %v170 = vld [vmem:[%s5] sm:$0xff]
    %v171 = vld [vmem:[%s5 + $0x8] sm:$0xff]
    %v172 = vld [vmem:[%s5 + $0x10] sm:$0xf]
    %v173 = vld [vmem:[%s6] sm:$0x1]
    %v174 = vld [vmem:[%s9] sm:$0xff]
    %v175 = vld [vmem:[%s9 + $0x8] sm:$0xff]
    %v176 = vld [vmem:[%s9 + $0x10] sm:$0xf]
    %v177 = vld [vmem:[%s10] sm:$0x1]
    %v178 = vld [vmem:[%s11] sm:$0xff]
    %v179 = vld [vmem:[%s11 + $0x8] sm:$0xff]
    %v180 = vld [vmem:[%s11 + $0x10] sm:$0xff]
    %v181 = vld [vmem:[%s11 + $0x18] sm:$0xff]
    %v182 = vld [vmem:[%s12] sm:$0x1]
    %v183 = vld [vmem:[%s7] sm:$0x1]
    %v184 = vld [vmem:[%s8] sm:$0x1]
    %v185 = vld [vmem:[%s13] sm:$0x1]
    %v186 = vld [vmem:[%s14] sm:$0x1]
    %v187 = vld [vmem:[%s15] sm:$0x1]
    %v188 = vld [vmem:[%s16] sm:$0x1]
    %190 = vrot.lane.b32.xlu0 %v162, 108
    %v191 = vpop.permute.xlu0 %190
    %v192 = vsel %vm84, %v162, 0
    %v194 = vsel %vm84, %v191, 0
    %196 = vmatprep.subr.mxu0 0.0
    %197 = vmatpush1.xpose.msra.mxu0 %v194
    %198 = vmatprep.subr.mxu0 0.0
    %199 = vmatpush1.xpose.msra.mxu0 0.0
    %200 = vmatprep.subr.mxu0 0.0
    %201 = vmatpush1.xpose.msra.mxu0 0.0
    %202 = vmatprep.subr.mxu0 0.0
    %203 = vmatpush1.xpose.msra.mxu0 0.0
    %204 = vmatprep.subr.mxu0 0.0
    %205 = vmatpush1.xpose.msra.mxu0 0.0
    %206 = vmatprep.subr.mxu0 0.0
    %207 = vmatpush1.xpose.msra.mxu0 0.0
    %208 = vmatprep.subr.mxu0 0.0
    %209 = vmatpush1.xpose.msra.mxu0 0.0
    %210 = vmatprep.subr.mxu0 0.0
    %211 = vmatpush1.xpose.msra.mxu0 0.0
    %212 = vmatprep.subr.mxu0 0.0
    %213 = vmatpush1.xpose.msra.mxu0 0.0
    %214 = vmatprep.subr.mxu0 0.0
    %215 = vmatpush1.xpose.msra.mxu0 0.0
    %216 = vmatprep.subr.mxu0 0.0
    %217 = vmatpush1.xpose.msra.mxu0 0.0
    %218 = vmatprep.subr.mxu0 0.0
    %219 = vmatpush1.xpose.msra.mxu0 0.0
    %220 = vmatprep.subr.mxu0 0.0
    %221 = vmatpush1.xpose.msra.mxu0 0.0
    %222 = vmatprep.subr.mxu0 0.0
    %223 = vmatpush1.xpose.msra.mxu0 0.0
    %224 = vmatprep.subr.mxu0 0.0
    %225 = vmatpush1.xpose.msra.mxu0 0.0
    %226 = vmatprep.subr.mxu0 0.0
    %227 = vmatpush1.xpose.msra.mxu0 0.0
    %228 = vmatprep.subr.mxu0 0.0
    %229 = vmatpush1.xpose.msra.mxu0 0.0
    %230 = vmatprep.subr.mxu0 0.0
    %231 = vmatpush1.xpose.msra.mxu0 0.0
    %232 = vmatprep.subr.mxu0 0.0
    %233 = vmatpush1.xpose.msra.mxu0 0.0
    %234 = vmatprep.subr.mxu0 0.0
    %235 = vmatpush1.xpose.msra.mxu0 0.0
    %236 = vmatprep.subr.mxu0 0.0
    %237 = vmatpush1.xpose.msra.mxu0 0.0
    %238 = vmatprep.subr.mxu0 0.0
    %239 = vmatpush1.xpose.msra.mxu0 0.0
    %240 = vmatprep.subr.mxu0 0.0
    %241 = vmatpush1.xpose.msra.mxu0 0.0
    %242 = vmatprep.subr.mxu0 0.0
    %243 = vmatpush1.xpose.msra.mxu0 0.0
    %244 = vmatprep.subr.mxu0 0.0
    %245 = vmatpush1.xpose.msra.mxu0 0.0
    %246 = vmatprep.subr.mxu0 0.0
    %247 = vmatpush1.xpose.msra.mxu0 0.0
    %248 = vmatprep.subr.mxu0 0.0
    %249 = vmatpush1.xpose.msra.mxu0 0.0
    %250 = vmatprep.subr.mxu0 0.0
    %251 = vmatpush1.xpose.msra.mxu0 0.0
    %252 = vmatprep.subr.mxu0 0.0
    %253 = vmatpush1.xpose.msra.mxu0 0.0
    %254 = vmatprep.subr.mxu0 0.0
    %255 = vmatpush1.xpose.msra.mxu0 0.0
    %256 = vmatprep.subr.mxu0 0.0
    %257 = vmatpush1.xpose.msra.mxu0 0.0
    %258 = vmatprep.subr.mxu0 0.0
    %259 = vmatpush1.xpose.msra.mxu0 0.0
    %260 = vmatprep.mubr.f32.mxu0 0.0
    %261 = vmatmul.mubr.f32.gmra.mrb[0].mxu0 %v192
    %v262 = vpop.f32.mrb[0].mxu0
    %v263 = vadd.f32 0.0, %v262
    %v264 = vpop.f32.mrb[0].mxu0
    %265 = vdwg.mxu0
    %v266 = vmul.f32 %v263, 0.2236068
    %v267 = vld [vmem:[%s1] sm:$0x1]
    %v268 = vld [vmem:[%s2] sm:$0xff]
    %vm269 = vcmp.gt.f32.partialorder %v267, 0.5
    %v270 = vsel %vm269, 1, 0
    %v271 = vlaneseq
    %v272 = vshrl.u32 %v271, 7
    %v273 = vsub.s32 0, %v272
    %v274 = vrot.slane %v270, %v273
    %vm275 = vcmp.eq.s32.totalorder %v274, 1
    %v276 = vsel %vm275, %v266, -1e+09
    %vm277 = vcmp.gt.f32.partialorder %v268, 0.5
    %v278 = vsel %vm277, 1, 0
    %279 = vset.pattern.permute.xlu0 0
    %280 = vperm.xlu0 %279, %v278
    %v281 = vpop.permute.xlu0 %280
    %vm282 = vcmp.eq.s32.totalorder %v281, 1
    %v283 = vsel %vm282, %v276, -1e+09
    %vm284 = vcmask 64512
    %v285 = vsel %vm284, %v283, -inf
    %286 = vmax.xlane.f32.xlu0 %v285
    %v287 = vpop.xlane.xlu0 %286
    %v288 = vsub.f32 %v283, %v287
    %v289 = vmul.f32 %v288, 1.442695
    %v290 = vpow.pop %v289
    %v291 = vsel %vm284, %v290, 0.0
    %292 = vadd.xlane.f32.xlu0 %v291
    %v293 = vpop.xlane.xlu0 %292
    %v294 = vrcp.pop %v293
    %v295 = vmul.f32 %v290, %v294
    %296 = vrot.lane.b32.xlu0 %v162, 88
    %v297 = vpop.permute.xlu0 %296
    %v300 = vsel %vm284, %v295, 0
    %302 = vmatprep.subr.mxu0 0.0
    %303 = vmatpush1.msra.mxu0 %v297
    %304 = vmatprep.subr.mxu0 0.0
    %305 = vmatpush1.msra.mxu0 0.0
    %306 = vmatprep.subr.mxu0 0.0
    %307 = vmatpush1.msra.mxu0 0.0
    %308 = vmatprep.subr.mxu0 0.0
    %309 = vmatpush1.msra.mxu0 0.0
    %310 = vmatprep.subr.mxu0 0.0
    %311 = vmatpush1.msra.mxu0 0.0
    %312 = vmatprep.subr.mxu0 0.0
    %313 = vmatpush1.msra.mxu0 0.0
    %314 = vmatprep.subr.mxu0 0.0
    %315 = vmatpush1.msra.mxu0 0.0
    %316 = vmatprep.subr.mxu0 0.0
    %317 = vmatpush1.msra.mxu0 0.0
    %318 = vmatprep.subr.mxu0 0.0
    %319 = vmatpush1.msra.mxu0 0.0
    %320 = vmatprep.subr.mxu0 0.0
    %321 = vmatpush1.msra.mxu0 0.0
    %322 = vmatprep.subr.mxu0 0.0
    %323 = vmatpush1.msra.mxu0 0.0
    %324 = vmatprep.subr.mxu0 0.0
    %325 = vmatpush1.msra.mxu0 0.0
    %326 = vmatprep.subr.mxu0 0.0
    %327 = vmatpush1.msra.mxu0 0.0
    %328 = vmatprep.subr.mxu0 0.0
    %329 = vmatpush1.msra.mxu0 0.0
    %330 = vmatprep.subr.mxu0 0.0
    %331 = vmatpush1.msra.mxu0 0.0
    %332 = vmatprep.subr.mxu0 0.0
    %333 = vmatpush1.msra.mxu0 0.0
    %334 = vmatprep.subr.mxu0 0.0
    %335 = vmatpush1.msra.mxu0 0.0
    %336 = vmatprep.subr.mxu0 0.0
    %337 = vmatpush1.msra.mxu0 0.0
    %338 = vmatprep.subr.mxu0 0.0
    %339 = vmatpush1.msra.mxu0 0.0
    %340 = vmatprep.subr.mxu0 0.0
    %341 = vmatpush1.msra.mxu0 0.0
    %342 = vmatprep.subr.mxu0 0.0
    %343 = vmatpush1.msra.mxu0 0.0
    %344 = vmatprep.subr.mxu0 0.0
    %345 = vmatpush1.msra.mxu0 0.0
    %346 = vmatprep.subr.mxu0 0.0
    %347 = vmatpush1.msra.mxu0 0.0
    %348 = vmatprep.subr.mxu0 0.0
    %349 = vmatpush1.msra.mxu0 0.0
    %350 = vmatprep.subr.mxu0 0.0
    %351 = vmatpush1.msra.mxu0 0.0
    %352 = vmatprep.subr.mxu0 0.0
    %353 = vmatpush1.msra.mxu0 0.0
    %354 = vmatprep.subr.mxu0 0.0
    %355 = vmatpush1.msra.mxu0 0.0
    %356 = vmatprep.subr.mxu0 0.0
    %357 = vmatpush1.msra.mxu0 0.0
    %358 = vmatprep.subr.mxu0 0.0
    %359 = vmatpush1.msra.mxu0 0.0
    %360 = vmatprep.subr.mxu0 0.0
    %361 = vmatpush1.msra.mxu0 0.0
    %362 = vmatprep.subr.mxu0 0.0
    %363 = vmatpush1.msra.mxu0 0.0
    %364 = vmatprep.subr.mxu0 0.0
    %365 = vmatpush1.msra.mxu0 0.0
    %366 = vmatprep.mubr.f32.mxu0 0.0
    %367 = vmatmul.mubr.f32.gmra.mrb[0].mxu0 %v300
    %v368 = vpop.f32.mrb[0].mxu0
    %v369 = vadd.f32 0.0, %v368
    %v370 = vpop.f32.mrb[0].mxu0
    %371 = vdwg.mxu0
    %v373 = vlaneseq
    %v374 = vshrl.u32 %v373, 7
    %v375 = vsub.s32 0, %v374
    %v376 = vrot.slane %v173, %v375
    %v379 = vsel %vm84, %v369, 0
    %v382 = vsel %vm91, %v172, 0
    %384 = vmatprep.subr.mxu0 0.0
    %385 = vmatpush1.msra.mxu0 %v170
    %386 = vmatprep.subr.mxu0 0.0
    %387 = vmatpush1.msra.mxu0 %v171
    %388 = vmatprep.subr.mxu0 0.0
    %389 = vmatpush1.msra.mxu0 %v382
    %390 = vmatprep.subr.mxu0 0.0
    %391 = vmatpush1.msra.mxu0 0.0
    %392 = vmatprep.subr.mxu0 0.0
    %393 = vmatpush1.msra.mxu0 0.0
    %394 = vmatprep.subr.mxu0 0.0
    %395 = vmatpush1.msra.mxu0 0.0
    %396 = vmatprep.subr.mxu0 0.0
    %397 = vmatpush1.msra.mxu0 0.0
    %398 = vmatprep.subr.mxu0 0.0
    %399 = vmatpush1.msra.mxu0 0.0
    %400 = vmatprep.subr.mxu0 0.0
    %401 = vmatpush1.msra.mxu0 0.0
    %402 = vmatprep.subr.mxu0 0.0
    %403 = vmatpush1.msra.mxu0 0.0
    %404 = vmatprep.subr.mxu0 0.0
    %405 = vmatpush1.msra.mxu0 0.0
    %406 = vmatprep.subr.mxu0 0.0
    %407 = vmatpush1.msra.mxu0 0.0
    %408 = vmatprep.subr.mxu0 0.0
    %409 = vmatpush1.msra.mxu0 0.0
    %410 = vmatprep.subr.mxu0 0.0
    %411 = vmatpush1.msra.mxu0 0.0
    %412 = vmatprep.subr.mxu0 0.0
    %413 = vmatpush1.msra.mxu0 0.0
    %414 = vmatprep.subr.mxu0 0.0
    %415 = vmatpush1.msra.mxu0 0.0
    %416 = vmatprep.subr.mxu0 0.0
    %417 = vmatpush1.msra.mxu0 0.0
    %418 = vmatprep.subr.mxu0 0.0
    %419 = vmatpush1.msra.mxu0 0.0
    %420 = vmatprep.subr.mxu0 0.0
    %421 = vmatpush1.msra.mxu0 0.0
    %422 = vmatprep.subr.mxu0 0.0
    %423 = vmatpush1.msra.mxu0 0.0
    %424 = vmatprep.subr.mxu0 0.0
    %425 = vmatpush1.msra.mxu0 0.0
    %426 = vmatprep.subr.mxu0 0.0
    %427 = vmatpush1.msra.mxu0 0.0
    %428 = vmatprep.subr.mxu0 0.0
    %429 = vmatpush1.msra.mxu0 0.0
    %430 = vmatprep.subr.mxu0 0.0
    %431 = vmatpush1.msra.mxu0 0.0
    %432 = vmatprep.subr.mxu0 0.0
    %433 = vmatpush1.msra.mxu0 0.0
    %434 = vmatprep.subr.mxu0 0.0
    %435 = vmatpush1.msra.mxu0 0.0
    %436 = vmatprep.subr.mxu0 0.0
    %437 = vmatpush1.msra.mxu0 0.0
    %438 = vmatprep.subr.mxu0 0.0
    %439 = vmatpush1.msra.mxu0 0.0
    %440 = vmatprep.subr.mxu0 0.0
    %441 = vmatpush1.msra.mxu0 0.0
    %442 = vmatprep.subr.mxu0 0.0
    %443 = vmatpush1.msra.mxu0 0.0
    %444 = vmatprep.subr.mxu0 0.0
    %445 = vmatpush1.msra.mxu0 0.0
    %446 = vmatprep.subr.mxu0 0.0
    %447 = vmatpush1.msra.mxu0 0.0
    %448 = vmatprep.mubr.f32.mxu0 0.0
    %449 = vmatmul.mubr.f32.gmra.mrb[0].mxu0 %v379
    %v450 = vpop.f32.mrb[0].mxu0
    %v451 = vadd.f32 %v376, %v450
    %v452 = vpop.f32.mrb[0].mxu0
    %453 = vdwg.mxu0
    %v454 = vadd.f32 %v72, %v451
    %v455 = vsel %vm84, %v454, 0.0
    %456 = vadd.xlane.f32.xlu0 %v455
    %v457 = vpop.xlane.xlu0 %456
    %v458 = vrcp.pop 20.0
    %v459 = vmul.f32 %v457, %v458
    %v460 = vsub.f32 %v454, %v459
    %v461 = vmul.f32 %v460, %v460
    %v462 = vsel %vm84, %v461, 0.0
    %463 = vadd.xlane.f32.xlu0 %v462
    %v464 = vpop.xlane.xlu0 %463
    %v465 = vmul.f32 %v464, %v458
    %v466 = vadd.f32 %v465, 1e-05
    %v467 = vrsqrt.pop %v466
    %v468 = vmul.f32 %v460, %v467
    %v470 = vlaneseq
    %v471 = vshrl.u32 %v470, 7
    %v472 = vsub.s32 0, %v471
    %v473 = vrot.slane %v183, %v472
    %v475 = vmul.f32 %v468, %v473
    %v477 = vlaneseq
    %v478 = vshrl.u32 %v477, 7
    %v479 = vsub.s32 0, %v478
    %v480 = vrot.slane %v184, %v479
    %v482 = vadd.f32 %v475, %v480
    %v484 = vlaneseq
    %v485 = vshrl.u32 %v484, 7
    %v486 = vsub.s32 0, %v485
    %v487 = vrot.slane %v177, %v486
    %v490 = vsel %vm84, %v482, 0
    %v493 = vsel %vm91, %v176, 0
    %495 = vmatprep.subr.mxu0 0.0
    %496 = vmatpush1.msra.mxu0 %v174
    %497 = vmatprep.subr.mxu0 0.0
    %498 = vmatpush1.msra.mxu0 %v175
    %499 = vmatprep.subr.mxu0 0.0
    %500 = vmatpush1.msra.mxu0 %v493
    %501 = vmatprep.subr.mxu0 0.0
    %502 = vmatpush1.msra.mxu0 0.0
    %503 = vmatprep.subr.mxu0 0.0
    %504 = vmatpush1.msra.mxu0 0.0
    %505 = vmatprep.subr.mxu0 0.0
    %506 = vmatpush1.msra.mxu0 0.0
    %507 = vmatprep.subr.mxu0 0.0
    %508 = vmatpush1.msra.mxu0 0.0
    %509 = vmatprep.subr.mxu0 0.0
    %510 = vmatpush1.msra.mxu0 0.0
    %511 = vmatprep.subr.mxu0 0.0
    %512 = vmatpush1.msra.mxu0 0.0
    %513 = vmatprep.subr.mxu0 0.0
    %514 = vmatpush1.msra.mxu0 0.0
    %515 = vmatprep.subr.mxu0 0.0
    %516 = vmatpush1.msra.mxu0 0.0
    %517 = vmatprep.subr.mxu0 0.0
    %518 = vmatpush1.msra.mxu0 0.0
    %519 = vmatprep.subr.mxu0 0.0
    %520 = vmatpush1.msra.mxu0 0.0
    %521 = vmatprep.subr.mxu0 0.0
    %522 = vmatpush1.msra.mxu0 0.0
    %523 = vmatprep.subr.mxu0 0.0
    %524 = vmatpush1.msra.mxu0 0.0
    %525 = vmatprep.subr.mxu0 0.0
    %526 = vmatpush1.msra.mxu0 0.0
    %527 = vmatprep.subr.mxu0 0.0
    %528 = vmatpush1.msra.mxu0 0.0
    %529 = vmatprep.subr.mxu0 0.0
    %530 = vmatpush1.msra.mxu0 0.0
    %531 = vmatprep.subr.mxu0 0.0
    %532 = vmatpush1.msra.mxu0 0.0
    %533 = vmatprep.subr.mxu0 0.0
    %534 = vmatpush1.msra.mxu0 0.0
    %535 = vmatprep.subr.mxu0 0.0
    %536 = vmatpush1.msra.mxu0 0.0
    %537 = vmatprep.subr.mxu0 0.0
    %538 = vmatpush1.msra.mxu0 0.0
    %539 = vmatprep.subr.mxu0 0.0
    %540 = vmatpush1.msra.mxu0 0.0
    %541 = vmatprep.subr.mxu0 0.0
    %542 = vmatpush1.msra.mxu0 0.0
    %543 = vmatprep.subr.mxu0 0.0
    %544 = vmatpush1.msra.mxu0 0.0
    %545 = vmatprep.subr.mxu0 0.0
    %546 = vmatpush1.msra.mxu0 0.0
    %547 = vmatprep.subr.mxu0 0.0
    %548 = vmatpush1.msra.mxu0 0.0
    %549 = vmatprep.subr.mxu0 0.0
    %550 = vmatpush1.msra.mxu0 0.0
    %551 = vmatprep.subr.mxu0 0.0
    %552 = vmatpush1.msra.mxu0 0.0
    %553 = vmatprep.subr.mxu0 0.0
    %554 = vmatpush1.msra.mxu0 0.0
    %555 = vmatprep.subr.mxu0 0.0
    %556 = vmatpush1.msra.mxu0 0.0
    %557 = vmatprep.subr.mxu0 0.0
    %558 = vmatpush1.msra.mxu0 0.0
    %559 = vmatprep.mubr.f32.mxu0 0.0
    %560 = vmatmul.mubr.f32.gmra.mrb[0].mxu0 %v490
    %v561 = vpop.f32.mrb[0].mxu0
    %v562 = vadd.f32 %v487, %v561
    %v563 = vpop.f32.mrb[0].mxu0
    %564 = vdwg.mxu0
    %v565 = vmax.f32 %v562, 0.0
    %v567 = vlaneseq
    %v568 = vshrl.u32 %v567, 7
    %v569 = vsub.s32 0, %v568
    %v570 = vrot.slane %v182, %v569
    %vm572 = vcmask 261120
    %v574 = vsel %vm572, %v565, 0
    %576 = vmatprep.subr.mxu0 0.0
    %577 = vmatpush1.msra.mxu0 %v178
    %578 = vmatprep.subr.mxu0 0.0
    %579 = vmatpush1.msra.mxu0 %v179
    %580 = vmatprep.subr.mxu0 0.0
    %581 = vmatpush1.msra.mxu0 %v180
    %582 = vmatprep.subr.mxu0 0.0
    %583 = vmatpush1.msra.mxu0 %v181
    %584 = vmatprep.subr.mxu0 0.0
    %585 = vmatpush1.msra.mxu0 0.0
    %586 = vmatprep.subr.mxu0 0.0
    %587 = vmatpush1.msra.mxu0 0.0
    %588 = vmatprep.subr.mxu0 0.0
    %589 = vmatpush1.msra.mxu0 0.0
    %590 = vmatprep.subr.mxu0 0.0
    %591 = vmatpush1.msra.mxu0 0.0
    %592 = vmatprep.subr.mxu0 0.0
    %593 = vmatpush1.msra.mxu0 0.0
    %594 = vmatprep.subr.mxu0 0.0
    %595 = vmatpush1.msra.mxu0 0.0
    %596 = vmatprep.subr.mxu0 0.0
    %597 = vmatpush1.msra.mxu0 0.0
    %598 = vmatprep.subr.mxu0 0.0
    %599 = vmatpush1.msra.mxu0 0.0
    %600 = vmatprep.subr.mxu0 0.0
    %601 = vmatpush1.msra.mxu0 0.0
    %602 = vmatprep.subr.mxu0 0.0
    %603 = vmatpush1.msra.mxu0 0.0
    %604 = vmatprep.subr.mxu0 0.0
    %605 = vmatpush1.msra.mxu0 0.0
    %606 = vmatprep.subr.mxu0 0.0
    %607 = vmatpush1.msra.mxu0 0.0
    %608 = vmatprep.subr.mxu0 0.0
    %609 = vmatpush1.msra.mxu0 0.0
    %610 = vmatprep.subr.mxu0 0.0
    %611 = vmatpush1.msra.mxu0 0.0
    %612 = vmatprep.subr.mxu0 0.0
    %613 = vmatpush1.msra.mxu0 0.0
    %614 = vmatprep.subr.mxu0 0.0
    %615 = vmatpush1.msra.mxu0 0.0
    %616 = vmatprep.subr.mxu0 0.0
    %617 = vmatpush1.msra.mxu0 0.0
    %618 = vmatprep.subr.mxu0 0.0
    %619 = vmatpush1.msra.mxu0 0.0
    %620 = vmatprep.subr.mxu0 0.0
    %621 = vmatpush1.msra.mxu0 0.0
    %622 = vmatprep.subr.mxu0 0.0
    %623 = vmatpush1.msra.mxu0 0.0
    %624 = vmatprep.subr.mxu0 0.0
    %625 = vmatpush1.msra.mxu0 0.0
    %626 = vmatprep.subr.mxu0 0.0
    %627 = vmatpush1.msra.mxu0 0.0
    %628 = vmatprep.subr.mxu0 0.0
    %629 = vmatpush1.msra.mxu0 0.0
    %630 = vmatprep.subr.mxu0 0.0
    %631 = vmatpush1.msra.mxu0 0.0
    %632 = vmatprep.subr.mxu0 0.0
    %633 = vmatpush1.msra.mxu0 0.0
    %634 = vmatprep.subr.mxu0 0.0
    %635 = vmatpush1.msra.mxu0 0.0
    %636 = vmatprep.subr.mxu0 0.0
    %637 = vmatpush1.msra.mxu0 0.0
    %638 = vmatprep.subr.mxu0 0.0
    %639 = vmatpush1.msra.mxu0 0.0
    %640 = vmatprep.mubr.f32.mxu0 0.0
    %641 = vmatmul.mubr.f32.gmra.mrb[0].mxu0 %v574
    %v642 = vpop.f32.mrb[0].mxu0
    %v643 = vadd.f32 %v570, %v642
    %v644 = vpop.f32.mrb[0].mxu0
    %645 = vdwg.mxu0
    %v646 = vadd.f32 %v482, %v643
    %v647 = vsel %vm84, %v646, 0.0
    %648 = vadd.xlane.f32.xlu0 %v647
    %v649 = vpop.xlane.xlu0 %648
    %v650 = vmul.f32 %v649, %v458
    %v651 = vsub.f32 %v646, %v650
    %v652 = vmul.f32 %v651, %v651
    %v653 = vsel %vm84, %v652, 0.0
    %654 = vadd.xlane.f32.xlu0 %v653
    %v655 = vpop.xlane.xlu0 %654
    %v656 = vmul.f32 %v655, %v458
    %v657 = vadd.f32 %v656, 1e-05
    %v658 = vrsqrt.pop %v657
    %v659 = vmul.f32 %v651, %v658
    %v661 = vlaneseq
    %v662 = vshrl.u32 %v661, 7
    %v663 = vsub.s32 0, %v662
    %v664 = vrot.slane %v185, %v663
    %v666 = vmul.f32 %v659, %v664
    %v668 = vlaneseq
    %v669 = vshrl.u32 %v668, 7
    %v670 = vsub.s32 0, %v669
    %v671 = vrot.slane %v186, %v670
    %v673 = vadd.f32 %v666, %v671
    %v674 = vsel %vm84, %v673, 0.0
    %675 = vadd.xlane.f32.xlu0 %v674
    %v676 = vpop.xlane.xlu0 %675
    %v677 = vmul.f32 %v676, %v458
    %v678 = vsub.f32 %v673, %v677
    %v679 = vmul.f32 %v678, %v678
    %v680 = vsel %vm84, %v679, 0.0
    %681 = vadd.xlane.f32.xlu0 %v680
    %v682 = vpop.xlane.xlu0 %681
    %v683 = vmul.f32 %v682, %v458
    %v684 = vadd.f32 %v683, 1e-05
    %v685 = vrsqrt.pop %v684
    %v686 = vmul.f32 %v678, %v685
    %v688 = vlaneseq
    %v689 = vshrl.u32 %v688, 7
    %v690 = vsub.s32 0, %v689
    %v691 = vrot.slane %v187, %v690
    %v693 = vmul.f32 %v686, %v691
    %v695 = vlaneseq
    %v696 = vshrl.u32 %v695, 7
    %v697 = vsub.s32 0, %v696
    %v698 = vrot.slane %v188, %v697
    %v700 = vadd.f32 %v693, %v698
    %701 = vst.msk [vmem:[#allocation2] sm:$0xff] %vm84, %v700
    %v702 = vsel %vm84, %v700, 0.0
    %v703 = vrot.slane %v702, 4
    %v704 = vadd.f32 %v702, %v703
    %v705 = vrot.slane %v704, 2
    %v706 = vadd.f32 %v704, %v705
    %v707 = vrot.slane %v706, 1
    %v708 = vadd.f32 %v706, %v707
    %v709 = vrcp.pop 8.0
    %v710 = vmul.f32 %v708, %v709
    %v711 = vld [vmem:[%s17] sm:$0xff]
    %v712 = vld [vmem:[%s17 + $0x8] sm:$0xff]
    %v713 = vld [vmem:[%s17 + $0x10] sm:$0xf]
    %v714 = vld [vmem:[%s18] sm:$0x1]
    %v716 = vsel %vm84, %v710, 0
    %v719 = vsel %vm91, %v713, 0
    %721 = vmatprep.subr.mxu0 0.0
    %722 = vmatpush1.msra.mxu0 %v711
    %723 = vmatprep.subr.mxu0 0.0
    %724 = vmatpush1.msra.mxu0 %v712
    %725 = vmatprep.subr.mxu0 0.0
    %726 = vmatpush1.msra.mxu0 %v719
    %727 = vmatprep.subr.mxu0 0.0
    %728 = vmatpush1.msra.mxu0 0.0
    %729 = vmatprep.subr.mxu0 0.0
    %730 = vmatpush1.msra.mxu0 0.0
    %731 = vmatprep.subr.mxu0 0.0
    %732 = vmatpush1.msra.mxu0 0.0
    %733 = vmatprep.subr.mxu0 0.0
    %734 = vmatpush1.msra.mxu0 0.0
    %735 = vmatprep.subr.mxu0 0.0
    %736 = vmatpush1.msra.mxu0 0.0
    %737 = vmatprep.subr.mxu0 0.0
    %738 = vmatpush1.msra.mxu0 0.0
    %739 = vmatprep.subr.mxu0 0.0
    %740 = vmatpush1.msra.mxu0 0.0
    %741 = vmatprep.subr.mxu0 0.0
    %742 = vmatpush1.msra.mxu0 0.0
    %743 = vmatprep.subr.mxu0 0.0
    %744 = vmatpush1.msra.mxu0 0.0
    %745 = vmatprep.subr.mxu0 0.0
    %746 = vmatpush1.msra.mxu0 0.0
    %747 = vmatprep.subr.mxu0 0.0
    %748 = vmatpush1.msra.mxu0 0.0
    %749 = vmatprep.subr.mxu0 0.0
    %750 = vmatpush1.msra.mxu0 0.0
    %751 = vmatprep.subr.mxu0 0.0
    %752 = vmatpush1.msra.mxu0 0.0
    %753 = vmatprep.subr.mxu0 0.0
    %754 = vmatpush1.msra.mxu0 0.0
    %755 = vmatprep.subr.mxu0 0.0
    %756 = vmatpush1.msra.mxu0 0.0
    %757 = vmatprep.subr.mxu0 0.0
    %758 = vmatpush1.msra.mxu0 0.0
    %759 = vmatprep.subr.mxu0 0.0
    %760 = vmatpush1.msra.mxu0 0.0
    %761 = vmatprep.subr.mxu0 0.0
    %762 = vmatpush1.msra.mxu0 0.0
    %763 = vmatprep.subr.mxu0 0.0
    %764 = vmatpush1.msra.mxu0 0.0
    %765 = vmatprep.subr.mxu0 0.0
    %766 = vmatpush1.msra.mxu0 0.0
    %767 = vmatprep.subr.mxu0 0.0
    %768 = vmatpush1.msra.mxu0 0.0
    %769 = vmatprep.subr.mxu0 0.0
    %770 = vmatpush1.msra.mxu0 0.0
    %771 = vmatprep.subr.mxu0 0.0
    %772 = vmatpush1.msra.mxu0 0.0
    %773 = vmatprep.subr.mxu0 0.0
    %774 = vmatpush1.msra.mxu0 0.0
    %775 = vmatprep.subr.mxu0 0.0
    %776 = vmatpush1.msra.mxu0 0.0
    %777 = vmatprep.subr.mxu0 0.0
    %778 = vmatpush1.msra.mxu0 0.0
    %779 = vmatprep.subr.mxu0 0.0
    %780 = vmatpush1.msra.mxu0 0.0
    %781 = vmatprep.subr.mxu0 0.0
    %782 = vmatpush1.msra.mxu0 0.0
    %783 = vmatprep.subr.mxu0 0.0
    %784 = vmatpush1.msra.mxu0 0.0
    %785 = vmatprep.mubr.f32.mxu0 0.0
    %786 = vmatmul.mubr.f32.gmra.mrb[0].mxu0 %v716
    %v787 = vpop.f32.mrb[0].mxu0
    %v788 = vadd.f32 %v714, %v787
    %v789 = vpop.f32.mrb[0].mxu0
    %790 = vdwg.mxu0
    %v791 = vmax.f32 %v788, 0.0
    %v792 = vld [vmem:[%s19] sm:$0xff]
    %v793 = vld [vmem:[%s19 + $0x8] sm:$0xff]
    %v794 = vld [vmem:[%s19 + $0x10] sm:$0xf]
    %v795 = vld [vmem:[%s20] sm:$0x1]
    %v797 = vsel %vm84, %v791, 0
    %v800 = vsel %vm91, %v794, 0
    %802 = vmatprep.subr.mxu0 0.0
    %803 = vmatpush1.msra.mxu0 %v792
    %804 = vmatprep.subr.mxu0 0.0
    %805 = vmatpush1.msra.mxu0 %v793
    %806 = vmatprep.subr.mxu0 0.0
    %807 = vmatpush1.msra.mxu0 %v800
    %808 = vmatprep.subr.mxu0 0.0
    %809 = vmatpush1.msra.mxu0 0.0
    %810 = vmatprep.subr.mxu0 0.0
    %811 = vmatpush1.msra.mxu0 0.0
    %812 = vmatprep.subr.mxu0 0.0
    %813 = vmatpush1.msra.mxu0 0.0
    %814 = vmatprep.subr.mxu0 0.0
    %815 = vmatpush1.msra.mxu0 0.0
    %816 = vmatprep.subr.mxu0 0.0
    %817 = vmatpush1.msra.mxu0 0.0
    %818 = vmatprep.subr.mxu0 0.0
    %819 = vmatpush1.msra.mxu0 0.0
    %820 = vmatprep.subr.mxu0 0.0
    %821 = vmatpush1.msra.mxu0 0.0
    %822 = vmatprep.subr.mxu0 0.0
    %823 = vmatpush1.msra.mxu0 0.0
    %824 = vmatprep.subr.mxu0 0.0
    %825 = vmatpush1.msra.mxu0 0.0
    %826 = vmatprep.subr.mxu0 0.0
    %827 = vmatpush1.msra.mxu0 0.0
    %828 = vmatprep.subr.mxu0 0.0
    %829 = vmatpush1.msra.mxu0 0.0
    %830 = vmatprep.subr.mxu0 0.0
    %831 = vmatpush1.msra.mxu0 0.0
    %832 = vmatprep.subr.mxu0 0.0
    %833 = vmatpush1.msra.mxu0 0.0
    %834 = vmatprep.subr.mxu0 0.0
    %835 = vmatpush1.msra.mxu0 0.0
    %836 = vmatprep.subr.mxu0 0.0
    %837 = vmatpush1.msra.mxu0 0.0
    %838 = vmatprep.subr.mxu0 0.0
    %839 = vmatpush1.msra.mxu0 0.0
    %840 = vmatprep.subr.mxu0 0.0
    %841 = vmatpush1.msra.mxu0 0.0
    %842 = vmatprep.subr.mxu0 0.0
    %843 = vmatpush1.msra.mxu0 0.0
    %844 = vmatprep.subr.mxu0 0.0
    %845 = vmatpush1.msra.mxu0 0.0
    %846 = vmatprep.subr.mxu0 0.0
    %847 = vmatpush1.msra.mxu0 0.0
    %848 = vmatprep.subr.mxu0 0.0
    %849 = vmatpush1.msra.mxu0 0.0
    %850 = vmatprep.subr.mxu0 0.0
    %851 = vmatpush1.msra.mxu0 0.0
    %852 = vmatprep.subr.mxu0 0.0
    %853 = vmatpush1.msra.mxu0 0.0
    %854 = vmatprep.subr.mxu0 0.0
    %855 = vmatpush1.msra.mxu0 0.0
    %856 = vmatprep.subr.mxu0 0.0
    %857 = vmatpush1.msra.mxu0 0.0
    %858 = vmatprep.subr.mxu0 0.0
    %859 = vmatpush1.msra.mxu0 0.0
    %860 = vmatprep.subr.mxu0 0.0
    %861 = vmatpush1.msra.mxu0 0.0
    %862 = vmatprep.subr.mxu0 0.0
    %863 = vmatpush1.msra.mxu0 0.0
    %864 = vmatprep.subr.mxu0 0.0
    %865 = vmatpush1.msra.mxu0 0.0
    %866 = vmatprep.mubr.f32.mxu0 0.0
    %867 = vmatmul.mubr.f32.gmra.mrb[0].mxu0 %v797
    %v868 = vpop.f32.mrb[0].mxu0
    %v869 = vadd.f32 %v795, %v868
    %v870 = vpop.f32.mrb[0].mxu0
    %871 = vdwg.mxu0
    %vm872 = vcmask 8192
    %873 = vst.msk [vmem:[#allocation4] sm:$0x1] %vm872, %v869
    %875 = vrot.lane.b32.xlu0 %v167, 108
    %v876 = vpop.permute.xlu0 %875
    %v877 = vsel %vm84, %v167, 0
    %v879 = vsel %vm84, %v876, 0
    %881 = vmatprep.subr.mxu0 0.0
    %882 = vmatpush1.xpose.msra.mxu0 %v879
    %883 = vmatprep.subr.mxu0 0.0
    %884 = vmatpush1.xpose.msra.mxu0 0.0
    %885 = vmatprep.subr.mxu0 0.0
    %886 = vmatpush1.xpose.msra.mxu0 0.0
    %887 = vmatprep.subr.mxu0 0.0
    %888 = vmatpush1.xpose.msra.mxu0 0.0
    %889 = vmatprep.subr.mxu0 0.0
    %890 = vmatpush1.xpose.msra.mxu0 0.0
    %891 = vmatprep.subr.mxu0 0.0
    %892 = vmatpush1.xpose.msra.mxu0 0.0
    %893 = vmatprep.subr.mxu0 0.0
    %894 = vmatpush1.xpose.msra.mxu0 0.0
    %895 = vmatprep.subr.mxu0 0.0
    %896 = vmatpush1.xpose.msra.mxu0 0.0
    %897 = vmatprep.subr.mxu0 0.0
    %898 = vmatpush1.xpose.msra.mxu0 0.0
    %899 = vmatprep.subr.mxu0 0.0
    %900 = vmatpush1.xpose.msra.mxu0 0.0
    %901 = vmatprep.subr.mxu0 0.0
    %902 = vmatpush1.xpose.msra.mxu0 0.0
    %903 = vmatprep.subr.mxu0 0.0
    %904 = vmatpush1.xpose.msra.mxu0 0.0
    %905 = vmatprep.subr.mxu0 0.0
    %906 = vmatpush1.xpose.msra.mxu0 0.0
    %907 = vmatprep.subr.mxu0 0.0
    %908 = vmatpush1.xpose.msra.mxu0 0.0
    %909 = vmatprep.subr.mxu0 0.0
    %910 = vmatpush1.xpose.msra.mxu0 0.0
    %911 = vmatprep.subr.mxu0 0.0
    %912 = vmatpush1.xpose.msra.mxu0 0.0
    %913 = vmatprep.subr.mxu0 0.0
    %914 = vmatpush1.xpose.msra.mxu0 0.0
    %915 = vmatprep.subr.mxu0 0.0
    %916 = vmatpush1.xpose.msra.mxu0 0.0
    %917 = vmatprep.subr.mxu0 0.0
    %918 = vmatpush1.xpose.msra.mxu0 0.0
    %919 = vmatprep.subr.mxu0 0.0
    %920 = vmatpush1.xpose.msra.mxu0 0.0
    %921 = vmatprep.subr.mxu0 0.0
    %922 = vmatpush1.xpose.msra.mxu0 0.0
    %923 = vmatprep.subr.mxu0 0.0
    %924 = vmatpush1.xpose.msra.mxu0 0.0
    %925 = vmatprep.subr.mxu0 0.0
    %926 = vmatpush1.xpose.msra.mxu0 0.0
    %927 = vmatprep.subr.mxu0 0.0
    %928 = vmatpush1.xpose.msra.mxu0 0.0
    %929 = vmatprep.subr.mxu0 0.0
    %930 = vmatpush1.xpose.msra.mxu0 0.0
    %931 = vmatprep.subr.mxu0 0.0
    %932 = vmatpush1.xpose.msra.mxu0 0.0
    %933 = vmatprep.subr.mxu0 0.0
    %934 = vmatpush1.xpose.msra.mxu0 0.0
    %935 = vmatprep.subr.mxu0 0.0
    %936 = vmatpush1.xpose.msra.mxu0 0.0
    %937 = vmatprep.subr.mxu0 0.0
    %938 = vmatpush1.xpose.msra.mxu0 0.0
    %939 = vmatprep.subr.mxu0 0.0
    %940 = vmatpush1.xpose.msra.mxu0 0.0
    %941 = vmatprep.subr.mxu0 0.0
    %942 = vmatpush1.xpose.msra.mxu0 0.0
    %943 = vmatprep.subr.mxu0 0.0
    %944 = vmatpush1.xpose.msra.mxu0 0.0
    %945 = vmatprep.mubr.f32.mxu0 0.0
    %946 = vmatmul.mubr.f32.gmra.mrb[0].mxu0 %v877
    %v947 = vpop.f32.mrb[0].mxu0
    %v948 = vadd.f32 0.0, %v947
    %v949 = vpop.f32.mrb[0].mxu0
    %950 = vdwg.mxu0
    %v951 = vmul.f32 %v948, 0.2236068
    %v952 = vld [vmem:[%s1 + $0x1] sm:$0x1]
    %v953 = vld [vmem:[%s2 + $0x8] sm:$0xff]
    %vm954 = vcmp.gt.f32.partialorder %v952, 0.5
    %v955 = vsel %vm954, 1, 0
    %v956 = vlaneseq
    %v957 = vshrl.u32 %v956, 7
    %v958 = vsub.s32 0, %v957
    %v959 = vrot.slane %v955, %v958
    %vm960 = vcmp.eq.s32.totalorder %v959, 1
    %v961 = vsel %vm960, %v951, -1e+09
    %vm962 = vcmp.gt.f32.partialorder %v953, 0.5
    %v963 = vsel %vm962, 1, 0
    %964 = vset.pattern.permute.xlu0 0
    %965 = vperm.xlu0 %964, %v963
    %v966 = vpop.permute.xlu0 %965
    %vm967 = vcmp.eq.s32.totalorder %v966, 1
    %v968 = vsel %vm967, %v961, -1e+09
    %v969 = vsel %vm284, %v968, -inf
    %970 = vmax.xlane.f32.xlu0 %v969
    %v971 = vpop.xlane.xlu0 %970
    %v972 = vsub.f32 %v968, %v971
    %v973 = vmul.f32 %v972, 1.442695
    %v974 = vpow.pop %v973
    %v975 = vsel %vm284, %v974, 0.0
    %976 = vadd.xlane.f32.xlu0 %v975
    %v977 = vpop.xlane.xlu0 %976
    %v978 = vrcp.pop %v977
    %v979 = vmul.f32 %v974, %v978
    %980 = vrot.lane.b32.xlu0 %v167, 88
    %v981 = vpop.permute.xlu0 %980
    %v984 = vsel %vm284, %v979, 0
    %986 = vmatprep.subr.mxu0 0.0
    %987 = vmatpush1.msra.mxu0 %v981
    %988 = vmatprep.subr.mxu0 0.0
    %989 = vmatpush1.msra.mxu0 0.0
    %990 = vmatprep.subr.mxu0 0.0
    %991 = vmatpush1.msra.mxu0 0.0
    %992 = vmatprep.subr.mxu0 0.0
    %993 = vmatpush1.msra.mxu0 0.0
    %994 = vmatprep.subr.mxu0 0.0
    %995 = vmatpush1.msra.mxu0 0.0
    %996 = vmatprep.subr.mxu0 0.0
    %997 = vmatpush1.msra.mxu0 0.0
    %998 = vmatprep.subr.mxu0 0.0
    %999 = vmatpush1.msra.mxu0 0.0
    %1000 = vmatprep.subr.mxu0 0.0
    %1001 = vmatpush1.msra.mxu0 0.0
    %1002 = vmatprep.subr.mxu0 0.0
    %1003 = vmatpush1.msra.mxu0 0.0
    %1004 = vmatprep.subr.mxu0 0.0
    %1005 = vmatpush1.msra.mxu0 0.0
    %1006 = vmatprep.subr.mxu0 0.0
    %1007 = vmatpush1.msra.mxu0 0.0
    %1008 = vmatprep.subr.mxu0 0.0
    %1009 = vmatpush1.msra.mxu0 0.0
    %1010 = vmatprep.subr.mxu0 0.0
    %1011 = vmatpush1.msra.mxu0 0.0
    %1012 = vmatprep.subr.mxu0 0.0
    %1013 = vmatpush1.msra.mxu0 0.0
    %1014 = vmatprep.subr.mxu0 0.0
    %1015 = vmatpush1.msra.mxu0 0.0
    %1016 = vmatprep.subr.mxu0 0.0
    %1017 = vmatpush1.msra.mxu0 0.0
    %1018 = vmatprep.subr.mxu0 0.0
    %1019 = vmatpush1.msra.mxu0 0.0
    %1020 = vmatprep.subr.mxu0 0.0
    %1021 = vmatpush1.msra.mxu0 0.0
    %1022 = vmatprep.subr.mxu0 0.0
    %1023 = vmatpush1.msra.mxu0 0.0
    %1024 = vmatprep.subr.mxu0 0.0
    %1025 = vmatpush1.msra.mxu0 0.0
    %1026 = vmatprep.subr.mxu0 0.0
    %1027 = vmatpush1.msra.mxu0 0.0
    %1028 = vmatprep.subr.mxu0 0.0
    %1029 = vmatpush1.msra.mxu0 0.0
    %1030 = vmatprep.subr.mxu0 0.0
    %1031 = vmatpush1.msra.mxu0 0.0
    %1032 = vmatprep.subr.mxu0 0.0
    %1033 = vmatpush1.msra.mxu0 0.0
    %1034 = vmatprep.subr.mxu0 0.0
    %1035 = vmatpush1.msra.mxu0 0.0
    %1036 = vmatprep.subr.mxu0 0.0
    %1037 = vmatpush1.msra.mxu0 0.0
    %1038 = vmatprep.subr.mxu0 0.0
    %1039 = vmatpush1.msra.mxu0 0.0
    %1040 = vmatprep.subr.mxu0 0.0
    %1041 = vmatpush1.msra.mxu0 0.0
    %1042 = vmatprep.subr.mxu0 0.0
    %1043 = vmatpush1.msra.mxu0 0.0
    %1044 = vmatprep.subr.mxu0 0.0
    %1045 = vmatpush1.msra.mxu0 0.0
    %1046 = vmatprep.subr.mxu0 0.0
    %1047 = vmatpush1.msra.mxu0 0.0
    %1048 = vmatprep.subr.mxu0 0.0
    %1049 = vmatpush1.msra.mxu0 0.0
    %1050 = vmatprep.mubr.f32.mxu0 0.0
    %1051 = vmatmul.mubr.f32.gmra.mrb[0].mxu0 %v984
    %v1052 = vpop.f32.mrb[0].mxu0
    %v1053 = vadd.f32 0.0, %v1052
    %v1054 = vpop.f32.mrb[0].mxu0
    %1055 = vdwg.mxu0
    %v1057 = vsel %vm84, %v1053, 0
    %1059 = vmatprep.subr.mxu0 0.0
    %1060 = vmatpush1.msra.mxu0 %v170
    %1061 = vmatprep.subr.mxu0 0.0
    %1062 = vmatpush1.msra.mxu0 %v171
    %1063 = vmatprep.subr.mxu0 0.0
    %1064 = vmatpush1.msra.mxu0 %v382
    %1065 = vmatprep.subr.mxu0 0.0
    %1066 = vmatpush1.msra.mxu0 0.0
    %1067 = vmatprep.subr.mxu0 0.0
    %1068 = vmatpush1.msra.mxu0 0.0
    %1069 = vmatprep.subr.mxu0 0.0
    %1070 = vmatpush1.msra.mxu0 0.0
    %1071 = vmatprep.subr.mxu0 0.0
    %1072 = vmatpush1.msra.mxu0 0.0
    %1073 = vmatprep.subr.mxu0 0.0
    %1074 = vmatpush1.msra.mxu0 0.0
    %1075 = vmatprep.subr.mxu0 0.0
    %1076 = vmatpush1.msra.mxu0 0.0
    %1077 = vmatprep.subr.mxu0 0.0
    %1078 = vmatpush1.msra.mxu0 0.0
    %1079 = vmatprep.subr.mxu0 0.0
    %1080 = vmatpush1.msra.mxu0 0.0
    %1081 = vmatprep.subr.mxu0 0.0
    %1082 = vmatpush1.msra.mxu0 0.0
    %1083 = vmatprep.subr.mxu0 0.0
    %1084 = vmatpush1.msra.mxu0 0.0
    %1085 = vmatprep.subr.mxu0 0.0
    %1086 = vmatpush1.msra.mxu0 0.0
    %1087 = vmatprep.subr.mxu0 0.0
    %1088 = vmatpush1.msra.mxu0 0.0
    %1089 = vmatprep.subr.mxu0 0.0
    %1090 = vmatpush1.msra.mxu0 0.0
    %1091 = vmatprep.subr.mxu0 0.0
    %1092 = vmatpush1.msra.mxu0 0.0
    %1093 = vmatprep.subr.mxu0 0.0
    %1094 = vmatpush1.msra.mxu0 0.0
    %1095 = vmatprep.subr.mxu0 0.0
    %1096 = vmatpush1.msra.mxu0 0.0
    %1097 = vmatprep.subr.mxu0 0.0
    %1098 = vmatpush1.msra.mxu0 0.0
    %1099 = vmatprep.subr.mxu0 0.0
    %1100 = vmatpush1.msra.mxu0 0.0
    %1101 = vmatprep.subr.mxu0 0.0
    %1102 = vmatpush1.msra.mxu0 0.0
    %1103 = vmatprep.subr.mxu0 0.0
    %1104 = vmatpush1.msra.mxu0 0.0
    %1105 = vmatprep.subr.mxu0 0.0
    %1106 = vmatpush1.msra.mxu0 0.0
    %1107 = vmatprep.subr.mxu0 0.0
    %1108 = vmatpush1.msra.mxu0 0.0
    %1109 = vmatprep.subr.mxu0 0.0
    %1110 = vmatpush1.msra.mxu0 0.0
    %1111 = vmatprep.subr.mxu0 0.0
    %1112 = vmatpush1.msra.mxu0 0.0
    %1113 = vmatprep.subr.mxu0 0.0
    %1114 = vmatpush1.msra.mxu0 0.0
    %1115 = vmatprep.subr.mxu0 0.0
    %1116 = vmatpush1.msra.mxu0 0.0
    %1117 = vmatprep.subr.mxu0 0.0
    %1118 = vmatpush1.msra.mxu0 0.0
    %1119 = vmatprep.subr.mxu0 0.0
    %1120 = vmatpush1.msra.mxu0 0.0
    %1121 = vmatprep.subr.mxu0 0.0
    %1122 = vmatpush1.msra.mxu0 0.0
    %1123 = vmatprep.mubr.f32.mxu0 0.0
    %1124 = vmatmul.mubr.f32.gmra.mrb[0].mxu0 %v1057
    %v1125 = vpop.f32.mrb[0].mxu0
    %v1126 = vadd.f32 %v376, %v1125
    %v1127 = vpop.f32.mrb[0].mxu0
    %1128 = vdwg.mxu0
    %v1129 = vadd.f32 %v73, %v1126
    %v1130 = vsel %vm84, %v1129, 0.0
    %1131 = vadd.xlane.f32.xlu0 %v1130
    %v1132 = vpop.xlane.xlu0 %1131
    %v1133 = vmul.f32 %v1132, %v458
    %v1134 = vsub.f32 %v1129, %v1133
    %v1135 = vmul.f32 %v1134, %v1134
    %v1136 = vsel %vm84, %v1135, 0.0
    %1137 = vadd.xlane.f32.xlu0 %v1136
    %v1138 = vpop.xlane.xlu0 %1137
    %v1139 = vmul.f32 %v1138, %v458
    %v1140 = vadd.f32 %v1139, 1e-05
    %v1141 = vrsqrt.pop %v1140
    %v1142 = vmul.f32 %v1134, %v1141
    %v1143 = vmul.f32 %v1142, %v473
    %v1144 = vadd.f32 %v1143, %v480
    %v1146 = vsel %vm84, %v1144, 0
    %1148 = vmatprep.subr.mxu0 0.0
    %1149 = vmatpush1.msra.mxu0 %v174
    %1150 = vmatprep.subr.mxu0 0.0
    %1151 = vmatpush1.msra.mxu0 %v175
    %1152 = vmatprep.subr.mxu0 0.0
    %1153 = vmatpush1.msra.mxu0 %v493
    %1154 = vmatprep.subr.mxu0 0.0
    %1155 = vmatpush1.msra.mxu0 0.0
    %1156 = vmatprep.subr.mxu0 0.0
    %1157 = vmatpush1.msra.mxu0 0.0
    %1158 = vmatprep.subr.mxu0 0.0
    %1159 = vmatpush1.msra.mxu0 0.0
    %1160 = vmatprep.subr.mxu0 0.0
    %1161 = vmatpush1.msra.mxu0 0.0
    %1162 = vmatprep.subr.mxu0 0.0
    %1163 = vmatpush1.msra.mxu0 0.0
    %1164 = vmatprep.subr.mxu0 0.0
    %1165 = vmatpush1.msra.mxu0 0.0
    %1166 = vmatprep.subr.mxu0 0.0
    %1167 = vmatpush1.msra.mxu0 0.0
    %1168 = vmatprep.subr.mxu0 0.0
    %1169 = vmatpush1.msra.mxu0 0.0
    %1170 = vmatprep.subr.mxu0 0.0
    %1171 = vmatpush1.msra.mxu0 0.0
    %1172 = vmatprep.subr.mxu0 0.0
    %1173 = vmatpush1.msra.mxu0 0.0
    %1174 = vmatprep.subr.mxu0 0.0
    %1175 = vmatpush1.msra.mxu0 0.0
    %1176 = vmatprep.subr.mxu0 0.0
    %1177 = vmatpush1.msra.mxu0 0.0
    %1178 = vmatprep.subr.mxu0 0.0
    %1179 = vmatpush1.msra.mxu0 0.0
    %1180 = vmatprep.subr.mxu0 0.0
    %1181 = vmatpush1.msra.mxu0 0.0
    %1182 = vmatprep.subr.mxu0 0.0
    %1183 = vmatpush1.msra.mxu0 0.0
    %1184 = vmatprep.subr.mxu0 0.0
    %1185 = vmatpush1.msra.mxu0 0.0
    %1186 = vmatprep.subr.mxu0 0.0
    %1187 = vmatpush1.msra.mxu0 0.0
    %1188 = vmatprep.subr.mxu0 0.0
    %1189 = vmatpush1.msra.mxu0 0.0
    %1190 = vmatprep.subr.mxu0 0.0
    %1191 = vmatpush1.msra.mxu0 0.0
    %1192 = vmatprep.subr.mxu0 0.0
    %1193 = vmatpush1.msra.mxu0 0.0
    %1194 = vmatprep.subr.mxu0 0.0
    %1195 = vmatpush1.msra.mxu0 0.0
    %1196 = vmatprep.subr.mxu0 0.0
    %1197 = vmatpush1.msra.mxu0 0.0
    %1198 = vmatprep.subr.mxu0 0.0
    %1199 = vmatpush1.msra.mxu0 0.0
    %1200 = vmatprep.subr.mxu0 0.0
    %1201 = vmatpush1.msra.mxu0 0.0
    %1202 = vmatprep.subr.mxu0 0.0
    %1203 = vmatpush1.msra.mxu0 0.0
    %1204 = vmatprep.subr.mxu0 0.0
    %1205 = vmatpush1.msra.mxu0 0.0
    %1206 = vmatprep.subr.mxu0 0.0
    %1207 = vmatpush1.msra.mxu0 0.0
    %1208 = vmatprep.subr.mxu0 0.0
    %1209 = vmatpush1.msra.mxu0 0.0
    %1210 = vmatprep.subr.mxu0 0.0
    %1211 = vmatpush1.msra.mxu0 0.0
    %1212 = vmatprep.mubr.f32.mxu0 0.0
    %1213 = vmatmul.mubr.f32.gmra.mrb[0].mxu0 %v1146
    %v1214 = vpop.f32.mrb[0].mxu0
    %v1215 = vadd.f32 %v487, %v1214
    %v1216 = vpop.f32.mrb[0].mxu0
    %1217 = vdwg.mxu0
    %v1218 = vmax.f32 %v1215, 0.0
    %v1220 = vsel %vm572, %v1218, 0
    %1222 = vmatprep.subr.mxu0 0.0
    %1223 = vmatpush1.msra.mxu0 %v178
    %1224 = vmatprep.subr.mxu0 0.0
    %1225 = vmatpush1.msra.mxu0 %v179
    %1226 = vmatprep.subr.mxu0 0.0
    %1227 = vmatpush1.msra.mxu0 %v180
    %1228 = vmatprep.subr.mxu0 0.0
    %1229 = vmatpush1.msra.mxu0 %v181
    %1230 = vmatprep.subr.mxu0 0.0
    %1231 = vmatpush1.msra.mxu0 0.0
    %1232 = vmatprep.subr.mxu0 0.0
    %1233 = vmatpush1.msra.mxu0 0.0
    %1234 = vmatprep.subr.mxu0 0.0
    %1235 = vmatpush1.msra.mxu0 0.0
    %1236 = vmatprep.subr.mxu0 0.0
    %1237 = vmatpush1.msra.mxu0 0.0
    %1238 = vmatprep.subr.mxu0 0.0
    %1239 = vmatpush1.msra.mxu0 0.0
    %1240 = vmatprep.subr.mxu0 0.0
    %1241 = vmatpush1.msra.mxu0 0.0
    %1242 = vmatprep.subr.mxu0 0.0
    %1243 = vmatpush1.msra.mxu0 0.0
    %1244 = vmatprep.subr.mxu0 0.0
    %1245 = vmatpush1.msra.mxu0 0.0
    %1246 = vmatprep.subr.mxu0 0.0
    %1247 = vmatpush1.msra.mxu0 0.0
    %1248 = vmatprep.subr.mxu0 0.0
    %1249 = vmatpush1.msra.mxu0 0.0
    %1250 = vmatprep.subr.mxu0 0.0
    %1251 = vmatpush1.msra.mxu0 0.0
    %1252 = vmatprep.subr.mxu0 0.0
    %1253 = vmatpush1.msra.mxu0 0.0
    %1254 = vmatprep.subr.mxu0 0.0
    %1255 = vmatpush1.msra.mxu0 0.0
    %1256 = vmatprep.subr.mxu0 0.0
    %1257 = vmatpush1.msra.mxu0 0.0
    %1258 = vmatprep.subr.mxu0 0.0
    %1259 = vmatpush1.msra.mxu0 0.0
    %1260 = vmatprep.subr.mxu0 0.0
    %1261 = vmatpush1.msra.mxu0 0.0
    %1262 = vmatprep.subr.mxu0 0.0
    %1263 = vmatpush1.msra.mxu0 0.0
    %1264 = vmatprep.subr.mxu0 0.0
    %1265 = vmatpush1.msra.mxu0 0.0
    %1266 = vmatprep.subr.mxu0 0.0
    %1267 = vmatpush1.msra.mxu0 0.0
    %1268 = vmatprep.subr.mxu0 0.0
    %1269 = vmatpush1.msra.mxu0 0.0
    %1270 = vmatprep.subr.mxu0 0.0
    %1271 = vmatpush1.msra.mxu0 0.0
    %1272 = vmatprep.subr.mxu0 0.0
    %1273 = vmatpush1.msra.mxu0 0.0
    %1274 = vmatprep.subr.mxu0 0.0
    %1275 = vmatpush1.msra.mxu0 0.0
    %1276 = vmatprep.subr.mxu0 0.0
    %1277 = vmatpush1.msra.mxu0 0.0
    %1278 = vmatprep.subr.mxu0 0.0
    %1279 = vmatpush1.msra.mxu0 0.0
    %1280 = vmatprep.subr.mxu0 0.0
    %1281 = vmatpush1.msra.mxu0 0.0
    %1282 = vmatprep.subr.mxu0 0.0
    %1283 = vmatpush1.msra.mxu0 0.0
    %1284 = vmatprep.subr.mxu0 0.0
    %1285 = vmatpush1.msra.mxu0 0.0
    %1286 = vmatprep.mubr.f32.mxu0 0.0
    %1287 = vmatmul.mubr.f32.gmra.mrb[0].mxu0 %v1220
    %v1288 = vpop.f32.mrb[0].mxu0
    %v1289 = vadd.f32 %v570, %v1288
    %v1290 = vpop.f32.mrb[0].mxu0
    %1291 = vdwg.mxu0
    %v1292 = vadd.f32 %v1144, %v1289
    %v1293 = vsel %vm84, %v1292, 0.0
    %1294 = vadd.xlane.f32.xlu0 %v1293
    %v1295 = vpop.xlane.xlu0 %1294
    %v1296 = vmul.f32 %v1295, %v458
    %v1297 = vsub.f32 %v1292, %v1296
    %v1298 = vmul.f32 %v1297, %v1297
    %v1299 = vsel %vm84, %v1298, 0.0
    %1300 = vadd.xlane.f32.xlu0 %v1299
    %v1301 = vpop.xlane.xlu0 %1300
    %v1302 = vmul.f32 %v1301, %v458
    %v1303 = vadd.f32 %v1302, 1e-05
    %v1304 = vrsqrt.pop %v1303
    %v1305 = vmul.f32 %v1297, %v1304
    %v1306 = vmul.f32 %v1305, %v664
    %v1307 = vadd.f32 %v1306, %v671
    %v1308 = vsel %vm84, %v1307, 0.0
    %1309 = vadd.xlane.f32.xlu0 %v1308
    %v1310 = vpop.xlane.xlu0 %1309
    %v1311 = vmul.f32 %v1310, %v458
    %v1312 = vsub.f32 %v1307, %v1311
    %v1313 = vmul.f32 %v1312, %v1312
    %v1314 = vsel %vm84, %v1313, 0.0
    %1315 = vadd.xlane.f32.xlu0 %v1314
    %v1316 = vpop.xlane.xlu0 %1315
    %v1317 = vmul.f32 %v1316, %v458
    %v1318 = vadd.f32 %v1317, 1e-05
    %v1319 = vrsqrt.pop %v1318
    %v1320 = vmul.f32 %v1312, %v1319
    %v1321 = vmul.f32 %v1320, %v691
    %v1322 = vadd.f32 %v1321, %v698
    %1323 = vst.msk [vmem:[#allocation2 + $0x8] sm:$0xff] %vm84, %v1322
    %v1324 = vsel %vm84, %v1322, 0.0
    %v1325 = vrot.slane %v1324, 4
    %v1326 = vadd.f32 %v1324, %v1325
    %v1327 = vrot.slane %v1326, 2
    %v1328 = vadd.f32 %v1326, %v1327
    %v1329 = vrot.slane %v1328, 1
    %v1330 = vadd.f32 %v1328, %v1329
    %v1331 = vmul.f32 %v1330, %v709
    %v1332 = vld [vmem:[%s17] sm:$0xff]
    %v1333 = vld [vmem:[%s17 + $0x8] sm:$0xff]
    %v1334 = vld [vmem:[%s17 + $0x10] sm:$0xf]
    %v1335 = vld [vmem:[%s18] sm:$0x1]
    %v1337 = vsel %vm84, %v1331, 0
    %v1340 = vsel %vm91, %v1334, 0
    %1342 = vmatprep.subr.mxu0 0.0
    %1343 = vmatpush1.msra.mxu0 %v1332
    %1344 = vmatprep.subr.mxu0 0.0
    %1345 = vmatpush1.msra.mxu0 %v1333
    %1346 = vmatprep.subr.mxu0 0.0
    %1347 = vmatpush1.msra.mxu0 %v1340
    %1348 = vmatprep.subr.mxu0 0.0
    %1349 = vmatpush1.msra.mxu0 0.0
    %1350 = vmatprep.subr.mxu0 0.0
    %1351 = vmatpush1.msra.mxu0 0.0
    %1352 = vmatprep.subr.mxu0 0.0
    %1353 = vmatpush1.msra.mxu0 0.0
    %1354 = vmatprep.subr.mxu0 0.0
    %1355 = vmatpush1.msra.mxu0 0.0
    %1356 = vmatprep.subr.mxu0 0.0
    %1357 = vmatpush1.msra.mxu0 0.0
    %1358 = vmatprep.subr.mxu0 0.0
    %1359 = vmatpush1.msra.mxu0 0.0
    %1360 = vmatprep.subr.mxu0 0.0
    %1361 = vmatpush1.msra.mxu0 0.0
    %1362 = vmatprep.subr.mxu0 0.0
    %1363 = vmatpush1.msra.mxu0 0.0
    %1364 = vmatprep.subr.mxu0 0.0
    %1365 = vmatpush1.msra.mxu0 0.0
    %1366 = vmatprep.subr.mxu0 0.0
    %1367 = vmatpush1.msra.mxu0 0.0
    %1368 = vmatprep.subr.mxu0 0.0
    %1369 = vmatpush1.msra.mxu0 0.0
    %1370 = vmatprep.subr.mxu0 0.0
    %1371 = vmatpush1.msra.mxu0 0.0
    %1372 = vmatprep.subr.mxu0 0.0
    %1373 = vmatpush1.msra.mxu0 0.0
    %1374 = vmatprep.subr.mxu0 0.0
    %1375 = vmatpush1.msra.mxu0 0.0
    %1376 = vmatprep.subr.mxu0 0.0
    %1377 = vmatpush1.msra.mxu0 0.0
    %1378 = vmatprep.subr.mxu0 0.0
    %1379 = vmatpush1.msra.mxu0 0.0
    %1380 = vmatprep.subr.mxu0 0.0
    %1381 = vmatpush1.msra.mxu0 0.0
    %1382 = vmatprep.subr.mxu0 0.0
    %1383 = vmatpush1.msra.mxu0 0.0
    %1384 = vmatprep.subr.mxu0 0.0
    %1385 = vmatpush1.msra.mxu0 0.0
    %1386 = vmatprep.subr.mxu0 0.0
    %1387 = vmatpush1.msra.mxu0 0.0
    %1388 = vmatprep.subr.mxu0 0.0
    %1389 = vmatpush1.msra.mxu0 0.0
    %1390 = vmatprep.subr.mxu0 0.0
    %1391 = vmatpush1.msra.mxu0 0.0
    %1392 = vmatprep.subr.mxu0 0.0
    %1393 = vmatpush1.msra.mxu0 0.0
    %1394 = vmatprep.subr.mxu0 0.0
    %1395 = vmatpush1.msra.mxu0 0.0
    %1396 = vmatprep.subr.mxu0 0.0
    %1397 = vmatpush1.msra.mxu0 0.0
    %1398 = vmatprep.subr.mxu0 0.0
    %1399 = vmatpush1.msra.mxu0 0.0
    %1400 = vmatprep.subr.mxu0 0.0
    %1401 = vmatpush1.msra.mxu0 0.0
    %1402 = vmatprep.subr.mxu0 0.0
    %1403 = vmatpush1.msra.mxu0 0.0
    %1404 = vmatprep.subr.mxu0 0.0
    %1405 = vmatpush1.msra.mxu0 0.0
    %1406 = vmatprep.mubr.f32.mxu0 0.0
    %1407 = vmatmul.mubr.f32.gmra.mrb[0].mxu0 %v1337
    %v1408 = vpop.f32.mrb[0].mxu0
    %v1409 = vadd.f32 %v1335, %v1408
    %v1410 = vpop.f32.mrb[0].mxu0
    %1411 = vdwg.mxu0
    %v1412 = vmax.f32 %v1409, 0.0
    %v1413 = vld [vmem:[%s19] sm:$0xff]
    %v1414 = vld [vmem:[%s19 + $0x8] sm:$0xff]
    %v1415 = vld [vmem:[%s19 + $0x10] sm:$0xf]
    %v1416 = vld [vmem:[%s20] sm:$0x1]
    %v1418 = vsel %vm84, %v1412, 0
    %v1421 = vsel %vm91, %v1415, 0
    %1423 = vmatprep.subr.mxu0 0.0
    %1424 = vmatpush1.msra.mxu0 %v1413
    %1425 = vmatprep.subr.mxu0 0.0
    %1426 = vmatpush1.msra.mxu0 %v1414
    %1427 = vmatprep.subr.mxu0 0.0
    %1428 = vmatpush1.msra.mxu0 %v1421
    %1429 = vmatprep.subr.mxu0 0.0
    %1430 = vmatpush1.msra.mxu0 0.0
    %1431 = vmatprep.subr.mxu0 0.0
    %1432 = vmatpush1.msra.mxu0 0.0
    %1433 = vmatprep.subr.mxu0 0.0
    %1434 = vmatpush1.msra.mxu0 0.0
    %1435 = vmatprep.subr.mxu0 0.0
    %1436 = vmatpush1.msra.mxu0 0.0
    %1437 = vmatprep.subr.mxu0 0.0
    %1438 = vmatpush1.msra.mxu0 0.0
    %1439 = vmatprep.subr.mxu0 0.0
    %1440 = vmatpush1.msra.mxu0 0.0
    %1441 = vmatprep.subr.mxu0 0.0
    %1442 = vmatpush1.msra.mxu0 0.0
    %1443 = vmatprep.subr.mxu0 0.0
    %1444 = vmatpush1.msra.mxu0 0.0
    %1445 = vmatprep.subr.mxu0 0.0
    %1446 = vmatpush1.msra.mxu0 0.0
    %1447 = vmatprep.subr.mxu0 0.0
    %1448 = vmatpush1.msra.mxu0 0.0
    %1449 = vmatprep.subr.mxu0 0.0
    %1450 = vmatpush1.msra.mxu0 0.0
    %1451 = vmatprep.subr.mxu0 0.0
    %1452 = vmatpush1.msra.mxu0 0.0
    %1453 = vmatprep.subr.mxu0 0.0
    %1454 = vmatpush1.msra.mxu0 0.0
    %1455 = vmatprep.subr.mxu0 0.0
    %1456 = vmatpush1.msra.mxu0 0.0
    %1457 = vmatprep.subr.mxu0 0.0
    %1458 = vmatpush1.msra.mxu0 0.0
    %1459 = vmatprep.subr.mxu0 0.0
    %1460 = vmatpush1.msra.mxu0 0.0
    %1461 = vmatprep.subr.mxu0 0.0
    %1462 = vmatpush1.msra.mxu0 0.0
    %1463 = vmatprep.subr.mxu0 0.0
    %1464 = vmatpush1.msra.mxu0 0.0
    %1465 = vmatprep.subr.mxu0 0.0
    %1466 = vmatpush1.msra.mxu0 0.0
    %1467 = vmatprep.subr.mxu0 0.0
    %1468 = vmatpush1.msra.mxu0 0.0
    %1469 = vmatprep.subr.mxu0 0.0
    %1470 = vmatpush1.msra.mxu0 0.0
    %1471 = vmatprep.subr.mxu0 0.0
    %1472 = vmatpush1.msra.mxu0 0.0
    %1473 = vmatprep.subr.mxu0 0.0
    %1474 = vmatpush1.msra.mxu0 0.0
    %1475 = vmatprep.subr.mxu0 0.0
    %1476 = vmatpush1.msra.mxu0 0.0
    %1477 = vmatprep.subr.mxu0 0.0
    %1478 = vmatpush1.msra.mxu0 0.0
    %1479 = vmatprep.subr.mxu0 0.0
    %1480 = vmatpush1.msra.mxu0 0.0
    %1481 = vmatprep.subr.mxu0 0.0
    %1482 = vmatpush1.msra.mxu0 0.0
    %1483 = vmatprep.subr.mxu0 0.0
    %1484 = vmatpush1.msra.mxu0 0.0
    %1485 = vmatprep.subr.mxu0 0.0
    %1486 = vmatpush1.msra.mxu0 0.0
    %1487 = vmatprep.mubr.f32.mxu0 0.0
    %1488 = vmatmul.mubr.f32.gmra.mrb[0].mxu0 %v1418
    %v1489 = vpop.f32.mrb[0].mxu0
    %v1490 = vadd.f32 %v1416, %v1489
    %v1491 = vpop.f32.mrb[0].mxu0
    %1492 = vdwg.mxu0
    %1493 = vst.msk [vmem:[#allocation4 + $0x1] sm:$0x1] %vm872, %v1490
    // Predicated region
    $region86: #{modelv2_forward.5} parent=1 // pred_check
      _
    $region87: #{modelv2_forward.5} parent=1 // pred_check_branch
      %1495 = sbr.rel (0) target = $region89
    $region88: #{modelv2_forward.5} parent=1 // pred_region
      %s1497 = ssub.s32 256, 256
      %1498 = vsyncadd [#allocation3], %s1497
      %s1499 = sshll.u32 [#allocation2], 4
      %s1500 = int_to_ptr.vmem [resolvable:$true] %s1499
      %1505 = dma.vmem_to_hbm [thread:$0]  %s1500, 256, %s21, [#allocation3], 128, 128, 8
    $region89: #{modelv2_forward.5} parent=1 // pred_fallthru
      _
    // Predicated region
    $region90: #{modelv2_forward.5} parent=1 // pred_check
      _
    $region91: #{modelv2_forward.5} parent=1 // pred_check_branch
      %1507 = sbr.rel (0) target = $region93
    $region92: #{modelv2_forward.5} parent=1 // pred_region
      %s1509 = ssub.s32 32, 32
      %1510 = vsyncadd [#allocation5], %s1509
      %s1512 = sshll.u32 [#allocation4], 4
      %s1513 = int_to_ptr.vmem [resolvable:$true] %s1512
      %1515 = dma.vmem_to_hbm [thread:$0]  %s1513, 32, %s22, [#allocation5]
    $region93: #{modelv2_forward.5} parent=1 // pred_fallthru
      _
    // Predicated region
    $region94: #{modelv2_forward.5} parent=1 // pred_check
      _
    $region95: #{modelv2_forward.5} parent=1 // pred_check_branch
      %1517 = sbr.rel (0) target = $region97
    $region96: #{modelv2_forward.5} parent=1 // pred_region
      %1518 = dma.done [#allocation3], 256
    $region97: #{modelv2_forward.5} parent=1 // pred_fallthru
      _
    // Predicated region
    $region98: #{modelv2_forward.5} parent=1 // pred_check
      _
    $region99: #{modelv2_forward.5} parent=1 // pred_check_branch
      %1520 = sbr.rel (0) target = $region101
    $region100: #{modelv2_forward.5} parent=1 // pred_region
      %1521 = dma.done [#allocation5], 32
    $region101: #{modelv2_forward.5} parent=1 // pred_fallthru
      _
    %1522 = vsyncpa [#allocation3], 1
    %1523 = vsyncpa [#allocation5], 1

// kernel: modelv2_forward.4
$region0: #{modelv2_forward.4}
  #allocation0 [shape = 'u32[]', space=smem, size = 0x4, offset = 0x4, fixed_abs, tag = 'smem constant byte address 0x4 - core index']
  #allocation1 [shape = 'u32[144,128]{1,0:T(1,128)}', space=vmem, size = 0x12000, scoped, tag = 'internal scratch']
  #allocation2 [shape = 'f32[2,32]{1,0:T(2,128)}', space=vmem, size = 0x400, scoped, tag = 'scratch operand']
  #allocation3 [shape = 'f32[1,1]{1,0:T(1,128)S(1)}', space=vmem, size = 0x200, scoped, tag = 'scoped memory for modelv2_forward.4']
  #allocation4 [shape = 'f32[1,1]{1,0:T(1,128)S(1)}', space=vmem, size = 0x200, scoped, tag = 'scoped memory for modelv2_forward.4']
  %s0 = inlined_call_operand.smem [shape: u32[38], index: -1, kind: input, shape index: {}]
  %s1 = sld [smem:[%s0]]
  %s2 = scalar_lea.smem %s0, 1
  %s3 = sld [smem:[%s2]]
  %s4 = scalar_lea.smem %s0, 2
  %s5 = sld [smem:[%s4]]
  %s6 = scalar_lea.smem %s0, 3
  %s7 = sld [smem:[%s6]]
  %s8 = scalar_lea.smem %s0, 4
  %s9 = sld [smem:[%s8]]
  %s10 = scalar_lea.smem %s0, 5
  %s11 = sld [smem:[%s10]]
  %s12 = scalar_lea.smem %s0, 6
  %s13 = sld [smem:[%s12]]
  %s14 = scalar_lea.smem %s0, 7
  %s15 = sld [smem:[%s14]]
  %s16 = scalar_lea.smem %s0, 8
  %s17 = sld [smem:[%s16]]
  %s18 = scalar_lea.smem %s0, 9
  %s19 = sld [smem:[%s18]]
  %s20 = scalar_lea.smem %s0, 10
  %s21 = sld [smem:[%s20]]
  %s22 = scalar_lea.smem %s0, 11
  %s23 = sld [smem:[%s22]]
  %s24 = scalar_lea.smem %s0, 12
  %s25 = sld [smem:[%s24]]
  %s26 = scalar_lea.smem %s0, 13
  %s27 = sld [smem:[%s26]]
  %s28 = scalar_lea.smem %s0, 14
  %s29 = sld [smem:[%s28]]
  %s30 = scalar_lea.smem %s0, 15
  %s31 = sld [smem:[%s30]]
  %s32 = scalar_lea.smem %s0, 16
  %s33 = sld [smem:[%s32]]
  %s34 = scalar_lea.smem %s0, 17
  %s35 = sld [smem:[%s34]]
  %s36 = scalar_lea.smem %s0, 18
  %s37 = sld [smem:[%s36]]
  %s38 = scalar_lea.smem %s0, 19
  %s39 = sld [smem:[%s38]]
  %s40 = scalar_lea.smem %s0, 20
  %s41 = sld [smem:[%s40]]
  %s42 = scalar_lea.smem %s0, 21
  %s43 = sld [smem:[%s42]]
  %s44 = scalar_lea.smem %s0, 22
  %s45 = sld [smem:[%s44]]
  %s46 = scalar_lea.smem %s0, 23
  %s47 = sld [smem:[%s46]]
  %s48 = scalar_lea.smem %s0, 24
  %s49 = sld [smem:[%s48]]
  %s50 = scalar_lea.smem %s0, 25
  %s51 = sld [smem:[%s50]]
  %s52 = scalar_lea.smem %s0, 26
  %s53 = sld [smem:[%s52]]
  %s54 = scalar_lea.smem %s0, 27
  %s55 = sld [smem:[%s54]]
  %s56 = scalar_lea.smem %s0, 28
  %s57 = sld [smem:[%s56]]
  %s58 = scalar_lea.smem %s0, 29
  %s59 = sld [smem:[%s58]]
  %s60 = scalar_lea.smem %s0, 30
  %s61 = sld [smem:[%s60]]
  %s62 = scalar_lea.smem %s0, 31
  %s63 = sld [smem:[%s62]]
  %s64 = scalar_lea.smem %s0, 32
  %s65 = sld [smem:[%s64]]
  %s66 = scalar_lea.smem %s0, 33
  %s67 = sld [smem:[%s66]]
  %s68 = scalar_lea.smem %s0, 34
  %s69 = sld [smem:[%s68]]
  %s70 = scalar_lea.smem %s0, 35
  %s71 = sld [smem:[%s70]]
  %s72 = scalar_lea.smem %s0, 36
  %s73 = sld [smem:[%s72]]
  %s74 = scalar_lea.smem %s0, 37
  %s75 = sld [smem:[%s74]]
  %76 = xla_tuple %s69, %s71, %s73, %s75
  %s77 = sld [smem:[#allocation0]]
  $region182: #{modelv2_forward.4} parent=0
    _
  %s79 = ssub.s32 1, %s77
  %s80 = scalar_select 0, %s79, %s77
  %v81 = vstv %s35
  %82 = vst [vmem:[#allocation3] sm:$0x1] %v81
  %v83 = vstv %s67
  %84 = vst [vmem:[#allocation4] sm:$0x1] %v83
  $region1: #{modelv2_forward.4} parent=0
    #allocation5 [shape = 'u8[12288]{0}', space=vmem, size = 0x3000, scoped, tag = 'input window, operand 4, single buffered']
    #allocation6 [shape = 's32[1]{0}', space=sflag, size = 0x4, scoped, tag = 'scoped memory for modelv2_forward.4']
    #allocation7 [shape = 'u8[12288]{0}', space=vmem, size = 0x3000, scoped, tag = 'input window, operand 8, single buffered']
    #allocation8 [shape = 's32[1]{0}', space=sflag, size = 0x4, scoped, tag = 'scoped memory for modelv2_forward.4']
    #allocation9 [shape = 'u8[16384]{0}', space=vmem, size = 0x4000, scoped, tag = 'input window, operand 30, single buffered']
    %85 = vsyncpa [#allocation6], 0
    %86 = vsyncpa [#allocation8], 0
    // Predicated region
    $region2: #{modelv2_forward.4} parent=1 // pred_check
      _
    $region3: #{modelv2_forward.4} parent=1 // pred_check_branch
      %88 = sbr.rel (0) target = $region5
    $region4: #{modelv2_forward.4} parent=1 // pred_region
      _
    $region5: #{modelv2_forward.4} parent=1 // pred_fallthru
      _
    // Predicated region
    $region6: #{modelv2_forward.4} parent=1 // pred_check
      _
    $region7: #{modelv2_forward.4} parent=1 // pred_check_branch
      %90 = sbr.rel (0) target = $region9
    $region8: #{modelv2_forward.4} parent=1 // pred_region
      _
    $region9: #{modelv2_forward.4} parent=1 // pred_fallthru
      _
    // Predicated region
    $region10: #{modelv2_forward.4} parent=1 // pred_check
      _
    $region11: #{modelv2_forward.4} parent=1 // pred_check_branch
      %92 = sbr.rel (0) target = $region13
    $region12: #{modelv2_forward.4} parent=1 // pred_region
      _
    $region13: #{modelv2_forward.4} parent=1 // pred_fallthru
      _
    // Predicated region
    $region14: #{modelv2_forward.4} parent=1 // pred_check
      _
    $region15: #{modelv2_forward.4} parent=1 // pred_check_branch
      %94 = sbr.rel (0) target = $region17
    $region16: #{modelv2_forward.4} parent=1 // pred_region
      _
    $region17: #{modelv2_forward.4} parent=1 // pred_fallthru
      _
    // Predicated region
    $region18: #{modelv2_forward.4} parent=1 // pred_check
      _
    $region19: #{modelv2_forward.4} parent=1 // pred_check_branch
      %96 = sbr.rel (0) target = $region21
    $region20: #{modelv2_forward.4} parent=1 // pred_region
      %s98 = ssub.s32 384, 384
      %99 = vsyncadd [#allocation6], %s98
      %s100 = sshll.u32 [#allocation5], 4
      %s101 = int_to_ptr.vmem [resolvable:$true] %s100
      %106 = dma.hbm_to_vmem [thread:$0]  %s9, 384, %s101, [#allocation6], 128, 128, 8
    $region21: #{modelv2_forward.4} parent=1 // pred_fallthru
      _
    // Predicated region
    $region22: #{modelv2_forward.4} parent=1 // pred_check
      _
    $region23: #{modelv2_forward.4} parent=1 // pred_check_branch
      %108 = sbr.rel (0) target = $region25
    $region24: #{modelv2_forward.4} parent=1 // pred_region
      _
    $region25: #{modelv2_forward.4} parent=1 // pred_fallthru
      _
    // Predicated region
    $region26: #{modelv2_forward.4} parent=1 // pred_check
      _
    $region27: #{modelv2_forward.4} parent=1 // pred_check_branch
      %110 = sbr.rel (0) target = $region29
    $region28: #{modelv2_forward.4} parent=1 // pred_region
      _
    $region29: #{modelv2_forward.4} parent=1 // pred_fallthru
      _
    // Predicated region
    $region30: #{modelv2_forward.4} parent=1 // pred_check
      _
    $region31: #{modelv2_forward.4} parent=1 // pred_check_branch
      %112 = sbr.rel (0) target = $region33
    $region32: #{modelv2_forward.4} parent=1 // pred_region
      _
    $region33: #{modelv2_forward.4} parent=1 // pred_fallthru
      _
    // Predicated region
    $region34: #{modelv2_forward.4} parent=1 // pred_check
      _
    $region35: #{modelv2_forward.4} parent=1 // pred_check_branch
      %114 = sbr.rel (0) target = $region37
    $region36: #{modelv2_forward.4} parent=1 // pred_region
      %s116 = ssub.s32 384, 384
      %117 = vsyncadd [#allocation8], %s116
      %s118 = sshll.u32 [#allocation7], 4
      %s119 = int_to_ptr.vmem [resolvable:$true] %s118
      %124 = dma.hbm_to_vmem [thread:$0]  %s17, 384, %s119, [#allocation8], 128, 128, 8
    $region37: #{modelv2_forward.4} parent=1 // pred_fallthru
      _
    // Predicated region
    $region38: #{modelv2_forward.4} parent=1 // pred_check
      _
    $region39: #{modelv2_forward.4} parent=1 // pred_check_branch
      %126 = sbr.rel (0) target = $region41
    $region40: #{modelv2_forward.4} parent=1 // pred_region
      _
    $region41: #{modelv2_forward.4} parent=1 // pred_fallthru
      _
    // Predicated region
    $region42: #{modelv2_forward.4} parent=1 // pred_check
      _
    $region43: #{modelv2_forward.4} parent=1 // pred_check_branch
      %128 = sbr.rel (0) target = $region45
    $region44: #{modelv2_forward.4} parent=1 // pred_region
      _
    $region45: #{modelv2_forward.4} parent=1 // pred_fallthru
      _
    // Predicated region
    $region46: #{modelv2_forward.4} parent=1 // pred_check
      _
    $region47: #{modelv2_forward.4} parent=1 // pred_check_branch
      %130 = sbr.rel (0) target = $region49
    $region48: #{modelv2_forward.4} parent=1 // pred_region
      _
    $region49: #{modelv2_forward.4} parent=1 // pred_fallthru
      _
    // Predicated region
    $region50: #{modelv2_forward.4} parent=1 // pred_check
      _
    $region51: #{modelv2_forward.4} parent=1 // pred_check_branch
      %132 = sbr.rel (0) target = $region53
    $region52: #{modelv2_forward.4} parent=1 // pred_region
      _
    $region53: #{modelv2_forward.4} parent=1 // pred_fallthru
      _
    // Predicated region
    $region54: #{modelv2_forward.4} parent=1 // pred_check
      _
    $region55: #{modelv2_forward.4} parent=1 // pred_check_branch
      %134 = sbr.rel (0) target = $region57
    $region56: #{modelv2_forward.4} parent=1 // pred_region
      _
    $region57: #{modelv2_forward.4} parent=1 // pred_fallthru
      _
    // Predicated region
    $region58: #{modelv2_forward.4} parent=1 // pred_check
      _
    $region59: #{modelv2_forward.4} parent=1 // pred_check_branch
      %136 = sbr.rel (0) target = $region61
    $region60: #{modelv2_forward.4} parent=1 // pred_region
      _
    $region61: #{modelv2_forward.4} parent=1 // pred_fallthru
      _
    // Predicated region
    $region62: #{modelv2_forward.4} parent=1 // pred_check
      _
    $region63: #{modelv2_forward.4} parent=1 // pred_check_branch
      %138 = sbr.rel (0) target = $region65
    $region64: #{modelv2_forward.4} parent=1 // pred_region
      _
    $region65: #{modelv2_forward.4} parent=1 // pred_fallthru
      _
    // Predicated region
    $region66: #{modelv2_forward.4} parent=1 // pred_check
      _
    $region67: #{modelv2_forward.4} parent=1 // pred_check_branch
      %140 = sbr.rel (0) target = $region69
    $region68: #{modelv2_forward.4} parent=1 // pred_region
      _
    $region69: #{modelv2_forward.4} parent=1 // pred_fallthru
      _
    // Predicated region
    $region70: #{modelv2_forward.4} parent=1 // pred_check
      _
    $region71: #{modelv2_forward.4} parent=1 // pred_check_branch
      %142 = sbr.rel (0) target = $region73
    $region72: #{modelv2_forward.4} parent=1 // pred_region
      _
    $region73: #{modelv2_forward.4} parent=1 // pred_fallthru
      _
    // Predicated region
    $region74: #{modelv2_forward.4} parent=1 // pred_check
      _
    $region75: #{modelv2_forward.4} parent=1 // pred_check_branch
      %144 = sbr.rel (0) target = $region77
    $region76: #{modelv2_forward.4} parent=1 // pred_region
      _
    $region77: #{modelv2_forward.4} parent=1 // pred_fallthru
      _
    // Predicated region
    $region78: #{modelv2_forward.4} parent=1 // pred_check
      _
    $region79: #{modelv2_forward.4} parent=1 // pred_check_branch
      %146 = sbr.rel (0) target = $region81
    $region80: #{modelv2_forward.4} parent=1 // pred_region
      _
    $region81: #{modelv2_forward.4} parent=1 // pred_fallthru
      _
    // Predicated region
    $region82: #{modelv2_forward.4} parent=1 // pred_check
      _
    $region83: #{modelv2_forward.4} parent=1 // pred_check_branch
      %148 = sbr.rel (0) target = $region85
    $region84: #{modelv2_forward.4} parent=1 // pred_region
      _
    $region85: #{modelv2_forward.4} parent=1 // pred_fallthru
      _
    // Predicated region
    $region86: #{modelv2_forward.4} parent=1 // pred_check
      _
    $region87: #{modelv2_forward.4} parent=1 // pred_check_branch
      %150 = sbr.rel (0) target = $region89
    $region88: #{modelv2_forward.4} parent=1 // pred_region
      _
    $region89: #{modelv2_forward.4} parent=1 // pred_fallthru
      _
    // Predicated region
    $region90: #{modelv2_forward.4} parent=1 // pred_check
      _
    $region91: #{modelv2_forward.4} parent=1 // pred_check_branch
      %152 = sbr.rel (0) target = $region93
    $region92: #{modelv2_forward.4} parent=1 // pred_region
      _
    $region93: #{modelv2_forward.4} parent=1 // pred_fallthru
      _
    // Predicated region
    $region94: #{modelv2_forward.4} parent=1 // pred_check
      _
    $region95: #{modelv2_forward.4} parent=1 // pred_check_branch
      %154 = sbr.rel (0) target = $region97
    $region96: #{modelv2_forward.4} parent=1 // pred_region
      _
    $region97: #{modelv2_forward.4} parent=1 // pred_fallthru
      _
    // Predicated region
    $region98: #{modelv2_forward.4} parent=1 // pred_check
      _
    $region99: #{modelv2_forward.4} parent=1 // pred_check_branch
      %156 = sbr.rel (0) target = $region101
    $region100: #{modelv2_forward.4} parent=1 // pred_region
      _
    $region101: #{modelv2_forward.4} parent=1 // pred_fallthru
      _
    // Predicated region
    $region102: #{modelv2_forward.4} parent=1 // pred_check
      _
    $region103: #{modelv2_forward.4} parent=1 // pred_check_branch
      %158 = sbr.rel (0) target = $region105
    $region104: #{modelv2_forward.4} parent=1 // pred_region
      _
    $region105: #{modelv2_forward.4} parent=1 // pred_fallthru
      _
    // Predicated region
    $region106: #{modelv2_forward.4} parent=1 // pred_check
      _
    $region107: #{modelv2_forward.4} parent=1 // pred_check_branch
      %160 = sbr.rel (0) target = $region109
    $region108: #{modelv2_forward.4} parent=1 // pred_region
      _
    $region109: #{modelv2_forward.4} parent=1 // pred_fallthru
      _
    // Predicated region
    $region110: #{modelv2_forward.4} parent=1 // pred_check
      _
    $region111: #{modelv2_forward.4} parent=1 // pred_check_branch
      %162 = sbr.rel (0) target = $region113
    $region112: #{modelv2_forward.4} parent=1 // pred_region
      _
    $region113: #{modelv2_forward.4} parent=1 // pred_fallthru
      _
    // Predicated region
    $region114: #{modelv2_forward.4} parent=1 // pred_check
      _
    $region115: #{modelv2_forward.4} parent=1 // pred_check_branch
      %164 = sbr.rel (0) target = $region117
    $region116: #{modelv2_forward.4} parent=1 // pred_region
      _
    $region117: #{modelv2_forward.4} parent=1 // pred_fallthru
      _
    // Predicated region
    $region118: #{modelv2_forward.4} parent=1 // pred_check
      _
    $region119: #{modelv2_forward.4} parent=1 // pred_check_branch
      %166 = sbr.rel (0) target = $region121
    $region120: #{modelv2_forward.4} parent=1 // pred_region
      _
    $region121: #{modelv2_forward.4} parent=1 // pred_fallthru
      _
    // Predicated region
    $region122: #{modelv2_forward.4} parent=1 // pred_check
      _
    $region123: #{modelv2_forward.4} parent=1 // pred_check_branch
      %168 = sbr.rel (0) target = $region125
    $region124: #{modelv2_forward.4} parent=1 // pred_region
      %s170 = ssub.s32 512, 512
      %171 = vsyncadd [#allocation8], %s170
      %s172 = sshll.u32 [#allocation9], 4
      %s173 = int_to_ptr.vmem [resolvable:$true] %s172
      %178 = dma.hbm_to_vmem [thread:$0]  %s61, 512, %s173, [#allocation8], 128, 128, 8
    $region125: #{modelv2_forward.4} parent=1 // pred_fallthru
      _
    // Predicated region
    $region126: #{modelv2_forward.4} parent=1 // pred_check
      _
    $region127: #{modelv2_forward.4} parent=1 // pred_check_branch
      %180 = sbr.rel (0) target = $region129
    $region128: #{modelv2_forward.4} parent=1 // pred_region
      _
    $region129: #{modelv2_forward.4} parent=1 // pred_fallthru
      _
    // Predicated region
    $region130: #{modelv2_forward.4} parent=1 // pred_check
      _
    $region131: #{modelv2_forward.4} parent=1 // pred_check_branch
      %182 = sbr.rel (0) target = $region133
    $region132: #{modelv2_forward.4} parent=1 // pred_region
      _
    $region133: #{modelv2_forward.4} parent=1 // pred_fallthru
      _
    // Predicated region
    $region134: #{modelv2_forward.4} parent=1 // pred_check
      _
    $region135: #{modelv2_forward.4} parent=1 // pred_check_branch
      %184 = sbr.rel (0) target = $region137
    $region136: #{modelv2_forward.4} parent=1 // pred_region
      _
    $region137: #{modelv2_forward.4} parent=1 // pred_fallthru
      _
    // Predicated region
    $region138: #{modelv2_forward.4} parent=1 // pred_check
      _
    $region139: #{modelv2_forward.4} parent=1 // pred_check_branch
      %186 = sbr.rel (0) target = $region141
    $region140: #{modelv2_forward.4} parent=1 // pred_region
      %187 = dma.done [#allocation6], 384
    $region141: #{modelv2_forward.4} parent=1 // pred_fallthru
      _
    // Predicated region
    $region142: #{modelv2_forward.4} parent=1 // pred_check
      _
    $region143: #{modelv2_forward.4} parent=1 // pred_check_branch
      %189 = sbr.rel (0) target = $region145
    $region144: #{modelv2_forward.4} parent=1 // pred_region
      %190 = dma.done [#allocation8], 384
    $region145: #{modelv2_forward.4} parent=1 // pred_fallthru
      _
    // Predicated region
    $region146: #{modelv2_forward.4} parent=1 // pred_check
      _
    $region147: #{modelv2_forward.4} parent=1 // pred_check_branch
      %192 = sbr.rel (0) target = $region149
    $region148: #{modelv2_forward.4} parent=1 // pred_region
      %193 = dma.done [#allocation8], 512
    $region149: #{modelv2_forward.4} parent=1 // pred_fallthru
      _
    %v194 = vld [vmem:[%s1] sm:$0xff]
    %v195 = vld [vmem:[%s1 + $0x8] sm:$0xff]
    %v196 = vld [vmem:[#allocation5] sm:$0xff]
    %v197 = vld [vmem:[#allocation5 + $0x8] sm:$0xff]
    %v198 = vld [vmem:[#allocation5 + $0x10] sm:$0xf]
    %v199 = vld [vmem:[%s11] sm:$0x1]
    %v201 = vlaneseq
    %v202 = vshrl.u32 %v201, 7
    %v203 = vsub.s32 0, %v202
    %v204 = vrot.slane %v199, %v203
    %vm206 = vcmask 162816
    %v208 = vsel %vm206, %v194, 0
    %v211 = vsel %vm206, %v195, 0
    %vm213 = vcmask 1043456
    %v215 = vsel %vm213, %v198, 0
    %217 = vmatprep.subr.mxu0 0.0
    %218 = vmatpush1.msra.mxu0 %v196
    %219 = vmatprep.subr.mxu0 0.0
    %220 = vmatpush1.msra.mxu0 %v197
    %221 = vmatprep.subr.mxu0 0.0
    %222 = vmatpush1.msra.mxu0 %v215
    %223 = vmatprep.subr.mxu0 0.0
    %224 = vmatpush1.msra.mxu0 0.0
    %225 = vmatprep.subr.mxu0 0.0
    %226 = vmatpush1.msra.mxu0 0.0
    %227 = vmatprep.subr.mxu0 0.0
    %228 = vmatpush1.msra.mxu0 0.0
    %229 = vmatprep.subr.mxu0 0.0
    %230 = vmatpush1.msra.mxu0 0.0
    %231 = vmatprep.subr.mxu0 0.0
    %232 = vmatpush1.msra.mxu0 0.0
    %233 = vmatprep.subr.mxu0 0.0
    %234 = vmatpush1.msra.mxu0 0.0
    %235 = vmatprep.subr.mxu0 0.0
    %236 = vmatpush1.msra.mxu0 0.0
    %237 = vmatprep.subr.mxu0 0.0
    %238 = vmatpush1.msra.mxu0 0.0
    %239 = vmatprep.subr.mxu0 0.0
    %240 = vmatpush1.msra.mxu0 0.0
    %241 = vmatprep.subr.mxu0 0.0
    %242 = vmatpush1.msra.mxu0 0.0
    %243 = vmatprep.subr.mxu0 0.0
    %244 = vmatpush1.msra.mxu0 0.0
    %245 = vmatprep.subr.mxu0 0.0
    %246 = vmatpush1.msra.mxu0 0.0
    %247 = vmatprep.subr.mxu0 0.0
    %248 = vmatpush1.msra.mxu0 0.0
    %249 = vmatprep.subr.mxu0 0.0
    %250 = vmatpush1.msra.mxu0 0.0
    %251 = vmatprep.subr.mxu0 0.0
    %252 = vmatpush1.msra.mxu0 0.0
    %253 = vmatprep.subr.mxu0 0.0
    %254 = vmatpush1.msra.mxu0 0.0
    %255 = vmatprep.subr.mxu0 0.0
    %256 = vmatpush1.msra.mxu0 0.0
    %257 = vmatprep.subr.mxu0 0.0
    %258 = vmatpush1.msra.mxu0 0.0
    %259 = vmatprep.subr.mxu0 0.0
    %260 = vmatpush1.msra.mxu0 0.0
    %261 = vmatprep.subr.mxu0 0.0
    %262 = vmatpush1.msra.mxu0 0.0
    %263 = vmatprep.subr.mxu0 0.0
    %264 = vmatpush1.msra.mxu0 0.0
    %265 = vmatprep.subr.mxu0 0.0
    %266 = vmatpush1.msra.mxu0 0.0
    %267 = vmatprep.subr.mxu0 0.0
    %268 = vmatpush1.msra.mxu0 0.0
    %269 = vmatprep.subr.mxu0 0.0
    %270 = vmatpush1.msra.mxu0 0.0
    %271 = vmatprep.subr.mxu0 0.0
    %272 = vmatpush1.msra.mxu0 0.0
    %273 = vmatprep.subr.mxu0 0.0
    %274 = vmatpush1.msra.mxu0 0.0
    %275 = vmatprep.subr.mxu0 0.0
    %276 = vmatpush1.msra.mxu0 0.0
    %277 = vmatprep.subr.mxu0 0.0
    %278 = vmatpush1.msra.mxu0 0.0
    %279 = vmatprep.subr.mxu0 0.0
    %280 = vmatpush1.msra.mxu0 0.0
    %281 = vmatprep.mubr.f32.mxu0 0.0
    %282 = vmatmul.mubr.f32.gmra.mrb[0].mxu0 %v208
    %v283 = vpop.f32.mrb[0].mxu0
    %v284 = vadd.f32 %v204, %v283
    %v285 = vpop.f32.mrb[0].mxu0
    %286 = vmatprep.mubr.f32.mxu0 0.0
    %287 = vmatmul.mubr.f32.gmra.mrb[0].mxu0 %v211
    %v288 = vpop.f32.mrb[0].mxu0
    %v289 = vadd.f32 %v204, %v288
    %v290 = vpop.f32.mrb[0].mxu0
    %291 = vdwg.mxu0
    %vm292 = vcmp.ge.f32.partialorder %v284, 0.0
    %vm293 = vcmp.ge.f32.partialorder %v289, 0.0
    %v294 = vmul.f32 %v284, 0.25
    %v295 = vmul.f32 %v289, 0.25
    %v296 = vsel %vm292, %v284, %v294
    %v297 = vsel %vm293, %v289, %v295
    %v298 = vld [vmem:[%s13] sm:$0xff]
    %v299 = vld [vmem:[%s13 + $0x8] sm:$0xff]
    %v300 = vld [vmem:[%s13 + $0x10] sm:$0xff]
    %v301 = vld [vmem:[%s13 + $0x18] sm:$0xff]
    %v302 = vld [vmem:[%s15] sm:$0x1]
    %v304 = vlaneseq
    %v305 = vshrl.u32 %v304, 7
    %v306 = vsub.s32 0, %v305
    %v307 = vrot.slane %v302, %v306
    %vm309 = vcmask 261120
    %v311 = vsel %vm309, %v296, 0
    %v314 = vsel %vm309, %v297, 0
    %316 = vmatprep.subr.mxu0 0.0
    %317 = vmatpush1.msra.mxu0 %v298
    %318 = vmatprep.subr.mxu0 0.0
    %319 = vmatpush1.msra.mxu0 %v299
    %320 = vmatprep.subr.mxu0 0.0
    %321 = vmatpush1.msra.mxu0 %v300
    %322 = vmatprep.subr.mxu0 0.0
    %323 = vmatpush1.msra.mxu0 %v301
    %324 = vmatprep.subr.mxu0 0.0
    %325 = vmatpush1.msra.mxu0 0.0
    %326 = vmatprep.subr.mxu0 0.0
    %327 = vmatpush1.msra.mxu0 0.0
    %328 = vmatprep.subr.mxu0 0.0
    %329 = vmatpush1.msra.mxu0 0.0
    %330 = vmatprep.subr.mxu0 0.0
    %331 = vmatpush1.msra.mxu0 0.0
    %332 = vmatprep.subr.mxu0 0.0
    %333 = vmatpush1.msra.mxu0 0.0
    %334 = vmatprep.subr.mxu0 0.0
    %335 = vmatpush1.msra.mxu0 0.0
    %336 = vmatprep.subr.mxu0 0.0
    %337 = vmatpush1.msra.mxu0 0.0
    %338 = vmatprep.subr.mxu0 0.0
    %339 = vmatpush1.msra.mxu0 0.0
    %340 = vmatprep.subr.mxu0 0.0
    %341 = vmatpush1.msra.mxu0 0.0
    %342 = vmatprep.subr.mxu0 0.0
    %343 = vmatpush1.msra.mxu0 0.0
    %344 = vmatprep.subr.mxu0 0.0
    %345 = vmatpush1.msra.mxu0 0.0
    %346 = vmatprep.subr.mxu0 0.0
    %347 = vmatpush1.msra.mxu0 0.0
    %348 = vmatprep.subr.mxu0 0.0
    %349 = vmatpush1.msra.mxu0 0.0
    %350 = vmatprep.subr.mxu0 0.0
    %351 = vmatpush1.msra.mxu0 0.0
    %352 = vmatprep.subr.mxu0 0.0
    %353 = vmatpush1.msra.mxu0 0.0
    %354 = vmatprep.subr.mxu0 0.0
    %355 = vmatpush1.msra.mxu0 0.0
    %356 = vmatprep.subr.mxu0 0.0
    %357 = vmatpush1.msra.mxu0 0.0
    %358 = vmatprep.subr.mxu0 0.0
    %359 = vmatpush1.msra.mxu0 0.0
    %360 = vmatprep.subr.mxu0 0.0
    %361 = vmatpush1.msra.mxu0 0.0
    %362 = vmatprep.subr.mxu0 0.0
    %363 = vmatpush1.msra.mxu0 0.0
    %364 = vmatprep.subr.mxu0 0.0
    %365 = vmatpush1.msra.mxu0 0.0
    %366 = vmatprep.subr.mxu0 0.0
    %367 = vmatpush1.msra.mxu0 0.0
    %368 = vmatprep.subr.mxu0 0.0
    %369 = vmatpush1.msra.mxu0 0.0
    %370 = vmatprep.subr.mxu0 0.0
    %371 = vmatpush1.msra.mxu0 0.0
    %372 = vmatprep.subr.mxu0 0.0
    %373 = vmatpush1.msra.mxu0 0.0
    %374 = vmatprep.subr.mxu0 0.0
    %375 = vmatpush1.msra.mxu0 0.0
    %376 = vmatprep.subr.mxu0 0.0
    %377 = vmatpush1.msra.mxu0 0.0
    %378 = vmatprep.subr.mxu0 0.0
    %379 = vmatpush1.msra.mxu0 0.0
    %380 = vmatprep.mubr.f32.mxu0 0.0
    %381 = vmatmul.mubr.f32.gmra.mrb[0].mxu0 %v311
    %v382 = vpop.f32.mrb[0].mxu0
    %v383 = vadd.f32 %v307, %v382
    %v384 = vpop.f32.mrb[0].mxu0
    %385 = vmatprep.mubr.f32.mxu0 0.0
    %386 = vmatmul.mubr.f32.gmra.mrb[0].mxu0 %v314
    %v387 = vpop.f32.mrb[0].mxu0
    %v388 = vadd.f32 %v307, %v387
    %v389 = vpop.f32.mrb[0].mxu0
    %390 = vdwg.mxu0
    %vm391 = vcmp.ge.f32.partialorder %v383, 0.0
    %vm392 = vcmp.ge.f32.partialorder %v388, 0.0
    %v393 = vmul.f32 %v383, 0.25
    %v394 = vmul.f32 %v388, 0.25
    %v395 = vsel %vm391, %v383, %v393
    %v396 = vsel %vm392, %v388, %v394
    %v397 = vsel %vm309, %v395, -inf
    %v398 = vrot.slane %v397, 4
    %v399 = vmax.f32 %v397, %v398
    %v400 = vrot.slane %v399, 2
    %v401 = vmax.f32 %v399, %v400
    %v402 = vrot.slane %v401, 1
    %v403 = vmax.f32 %v401, %v402
    %vm404 = vcmask 253952
    %405 = vst.msk [vmem:[#allocation2] sm:$0x1] %vm404, %v403
    %v406 = vsel %vm309, %v396, -inf
    %v407 = vrot.slane %v406, 4
    %v408 = vmax.f32 %v406, %v407
    %v409 = vrot.slane %v408, 2
    %v410 = vmax.f32 %v408, %v409
    %v411 = vrot.slane %v410, 1
    %v412 = vmax.f32 %v410, %v411
    %413 = vst.msk [vmem:[#allocation2 + $0x1] sm:$0x1] %vm404, %v412
    %v414 = vld [vmem:[#allocation2] sm:$0x3]
    %v415 = vld [vmem:[#allocation7] sm:$0xff]
    %v416 = vld [vmem:[#allocation7 + $0x8] sm:$0xff]
    %v417 = vld [vmem:[#allocation7 + $0x10] sm:$0xf]
    %v418 = vld [vmem:[%s19] sm:$0x1]
    %v420 = vlaneseq
    %v421 = vshrl.u32 %v420, 7
    %v422 = vsub.s32 0, %v421
    %v423 = vrot.slane %v418, %v422
    %v426 = vsel %vm213, %v417, 0
    %428 = vmatprep.subr.mxu0 0.0
    %429 = vmatpush1.msra.mxu0 %v415
    %430 = vmatprep.subr.mxu0 0.0
    %431 = vmatpush1.msra.mxu0 %v416
    %432 = vmatprep.subr.mxu0 0.0
    %433 = vmatpush1.msra.mxu0 %v426
    %434 = vmatprep.subr.mxu0 0.0
    %435 = vmatpush1.msra.mxu0 0.0
    %436 = vmatprep.subr.mxu0 0.0
    %437 = vmatpush1.msra.mxu0 0.0
    %438 = vmatprep.subr.mxu0 0.0
    %439 = vmatpush1.msra.mxu0 0.0
    %440 = vmatprep.subr.mxu0 0.0
    %441 = vmatpush1.msra.mxu0 0.0
    %442 = vmatprep.subr.mxu0 0.0
    %443 = vmatpush1.msra.mxu0 0.0
    %444 = vmatprep.subr.mxu0 0.0
    %445 = vmatpush1.msra.mxu0 0.0
    %446 = vmatprep.subr.mxu0 0.0
    %447 = vmatpush1.msra.mxu0 0.0
    %448 = vmatprep.subr.mxu0 0.0
    %449 = vmatpush1.msra.mxu0 0.0
    %450 = vmatprep.subr.mxu0 0.0
    %451 = vmatpush1.msra.mxu0 0.0
    %452 = vmatprep.subr.mxu0 0.0
    %453 = vmatpush1.msra.mxu0 0.0
    %454 = vmatprep.subr.mxu0 0.0
    %455 = vmatpush1.msra.mxu0 0.0
    %456 = vmatprep.subr.mxu0 0.0
    %457 = vmatpush1.msra.mxu0 0.0
    %458 = vmatprep.subr.mxu0 0.0
    %459 = vmatpush1.msra.mxu0 0.0
    %460 = vmatprep.subr.mxu0 0.0
    %461 = vmatpush1.msra.mxu0 0.0
    %462 = vmatprep.subr.mxu0 0.0
    %463 = vmatpush1.msra.mxu0 0.0
    %464 = vmatprep.subr.mxu0 0.0
    %465 = vmatpush1.msra.mxu0 0.0
    %466 = vmatprep.subr.mxu0 0.0
    %467 = vmatpush1.msra.mxu0 0.0
    %468 = vmatprep.subr.mxu0 0.0
    %469 = vmatpush1.msra.mxu0 0.0
    %470 = vmatprep.subr.mxu0 0.0
    %471 = vmatpush1.msra.mxu0 0.0
    %472 = vmatprep.subr.mxu0 0.0
    %473 = vmatpush1.msra.mxu0 0.0
    %474 = vmatprep.subr.mxu0 0.0
    %475 = vmatpush1.msra.mxu0 0.0
    %476 = vmatprep.subr.mxu0 0.0
    %477 = vmatpush1.msra.mxu0 0.0
    %478 = vmatprep.subr.mxu0 0.0
    %479 = vmatpush1.msra.mxu0 0.0
    %480 = vmatprep.subr.mxu0 0.0
    %481 = vmatpush1.msra.mxu0 0.0
    %482 = vmatprep.subr.mxu0 0.0
    %483 = vmatpush1.msra.mxu0 0.0
    %484 = vmatprep.subr.mxu0 0.0
    %485 = vmatpush1.msra.mxu0 0.0
    %486 = vmatprep.subr.mxu0 0.0
    %487 = vmatpush1.msra.mxu0 0.0
    %488 = vmatprep.subr.mxu0 0.0
    %489 = vmatpush1.msra.mxu0 0.0
    %490 = vmatprep.subr.mxu0 0.0
    %491 = vmatpush1.msra.mxu0 0.0
    %492 = vmatprep.mubr.f32.mxu0 0.0
    %493 = vmatmul.mubr.f32.gmra.mrb[0].mxu0 %v208
    %v494 = vpop.f32.mrb[0].mxu0
    %v495 = vadd.f32 %v423, %v494
    %v496 = vpop.f32.mrb[0].mxu0
    %497 = vmatprep.mubr.f32.mxu0 0.0
    %498 = vmatmul.mubr.f32.gmra.mrb[0].mxu0 %v211
    %v499 = vpop.f32.mrb[0].mxu0
    %v500 = vadd.f32 %v423, %v499
    %v501 = vpop.f32.mrb[0].mxu0
    %502 = vdwg.mxu0
    %vm503 = vcmp.ge.f32.partialorder %v495, 0.0
    %vm504 = vcmp.ge.f32.partialorder %v500, 0.0
    %v505 = vmul.f32 %v495, 0.25
    %v506 = vmul.f32 %v500, 0.25
    %v507 = vsel %vm503, %v495, %v505
    %v508 = vsel %vm504, %v500, %v506
    %v509 = vld [vmem:[%s21] sm:$0xff]
    %v510 = vld [vmem:[%s21 + $0x8] sm:$0xff]
    %v511 = vld [vmem:[%s21 + $0x10] sm:$0xff]
    %v512 = vld [vmem:[%s21 + $0x18] sm:$0xff]
    %v513 = vld [vmem:[%s21 + $0x20] sm:$0xff]
    %v514 = vld [vmem:[%s21 + $0x28] sm:$0xff]
    %v515 = vld [vmem:[%s21 + $0x30] sm:$0xff]
    %v516 = vld [vmem:[%s21 + $0x38] sm:$0xff]
    %v517 = vld [vmem:[%s23] sm:$0x1]
    %v519 = vlaneseq
    %v520 = vshrl.u32 %v519, 7
    %v521 = vsub.s32 0, %v520
    %v522 = vrot.slane %v517, %v521
    %vm524 = vcmask 523264
    %v526 = vsel %vm524, %v507, 0
    %v529 = vsel %vm524, %v508, 0
    %531 = vmatprep.subr.mxu0 0.0
    %532 = vmatpush1.msra.mxu0 %v509
    %533 = vmatprep.subr.mxu0 0.0
    %534 = vmatpush1.msra.mxu0 %v510
    %535 = vmatprep.subr.mxu0 0.0
    %536 = vmatpush1.msra.mxu0 %v511
    %537 = vmatprep.subr.mxu0 0.0
    %538 = vmatpush1.msra.mxu0 %v512
    %539 = vmatprep.subr.mxu0 0.0
    %540 = vmatpush1.msra.mxu0 %v513
    %541 = vmatprep.subr.mxu0 0.0
    %542 = vmatpush1.msra.mxu0 %v514
    %543 = vmatprep.subr.mxu0 0.0
    %544 = vmatpush1.msra.mxu0 %v515
    %545 = vmatprep.subr.mxu0 0.0
    %546 = vmatpush1.msra.mxu0 %v516
    %547 = vmatprep.subr.mxu0 0.0
    %548 = vmatpush1.msra.mxu0 0.0
    %549 = vmatprep.subr.mxu0 0.0
    %550 = vmatpush1.msra.mxu0 0.0
    %551 = vmatprep.subr.mxu0 0.0
    %552 = vmatpush1.msra.mxu0 0.0
    %553 = vmatprep.subr.mxu0 0.0
    %554 = vmatpush1.msra.mxu0 0.0
    %555 = vmatprep.subr.mxu0 0.0
    %556 = vmatpush1.msra.mxu0 0.0
    %557 = vmatprep.subr.mxu0 0.0
    %558 = vmatpush1.msra.mxu0 0.0
    %559 = vmatprep.subr.mxu0 0.0
    %560 = vmatpush1.msra.mxu0 0.0
    %561 = vmatprep.subr.mxu0 0.0
    %562 = vmatpush1.msra.mxu0 0.0
    %563 = vmatprep.subr.mxu0 0.0
    %564 = vmatpush1.msra.mxu0 0.0
    %565 = vmatprep.subr.mxu0 0.0
    %566 = vmatpush1.msra.mxu0 0.0
    %567 = vmatprep.subr.mxu0 0.0
    %568 = vmatpush1.msra.mxu0 0.0
    %569 = vmatprep.subr.mxu0 0.0
    %570 = vmatpush1.msra.mxu0 0.0
    %571 = vmatprep.subr.mxu0 0.0
    %572 = vmatpush1.msra.mxu0 0.0
    %573 = vmatprep.subr.mxu0 0.0
    %574 = vmatpush1.msra.mxu0 0.0
    %575 = vmatprep.subr.mxu0 0.0
    %576 = vmatpush1.msra.mxu0 0.0
    %577 = vmatprep.subr.mxu0 0.0
    %578 = vmatpush1.msra.mxu0 0.0
    %579 = vmatprep.subr.mxu0 0.0
    %580 = vmatpush1.msra.mxu0 0.0
    %581 = vmatprep.subr.mxu0 0.0
    %582 = vmatpush1.msra.mxu0 0.0
    %583 = vmatprep.subr.mxu0 0.0
    %584 = vmatpush1.msra.mxu0 0.0
    %585 = vmatprep.subr.mxu0 0.0
    %586 = vmatpush1.msra.mxu0 0.0
    %587 = vmatprep.subr.mxu0 0.0
    %588 = vmatpush1.msra.mxu0 0.0
    %589 = vmatprep.subr.mxu0 0.0
    %590 = vmatpush1.msra.mxu0 0.0
    %591 = vmatprep.subr.mxu0 0.0
    %592 = vmatpush1.msra.mxu0 0.0
    %593 = vmatprep.subr.mxu0 0.0
    %594 = vmatpush1.msra.mxu0 0.0
    %595 = vmatprep.mubr.f32.mxu0 0.0
    %596 = vmatmul.mubr.f32.gmra.mrb[0].mxu0 %v526
    %v597 = vpop.f32.mrb[0].mxu0
    %v598 = vadd.f32 %v522, %v597
    %v599 = vpop.f32.mrb[0].mxu0
    %600 = vmatprep.mubr.f32.mxu0 0.0
    %601 = vmatmul.mubr.f32.gmra.mrb[0].mxu0 %v529
    %v602 = vpop.f32.mrb[0].mxu0
    %v603 = vadd.f32 %v522, %v602
    %v604 = vpop.f32.mrb[0].mxu0
    %605 = vdwg.mxu0
    %vm606 = vcmp.ge.f32.partialorder %v598, 0.0
    %vm607 = vcmp.ge.f32.partialorder %v603, 0.0
    %v608 = vmul.f32 %v598, 0.25
    %v609 = vmul.f32 %v603, 0.25
    %v610 = vsel %vm606, %v598, %v608
    %v611 = vsel %vm607, %v603, %v609
    %v612 = vld [vmem:[%s25] sm:$0xff]
    %v613 = vld [vmem:[%s25 + $0x8] sm:$0xff]
    %v614 = vld [vmem:[%s25 + $0x10] sm:$0xff]
    %v615 = vld [vmem:[%s25 + $0x18] sm:$0xff]
    %v616 = vld [vmem:[%s25 + $0x20] sm:$0xff]
    %v617 = vld [vmem:[%s25 + $0x28] sm:$0xff]
    %v618 = vld [vmem:[%s25 + $0x30] sm:$0xff]
    %v619 = vld [vmem:[%s25 + $0x38] sm:$0xff]
    %v620 = vld [vmem:[%s27] sm:$0x1]
    %v622 = vlaneseq
    %v623 = vshrl.u32 %v622, 7
    %v624 = vsub.s32 0, %v623
    %v625 = vrot.slane %v620, %v624
    %v628 = vsel %vm524, %v610, 0
    %v631 = vsel %vm524, %v611, 0
    %633 = vmatprep.subr.mxu0 0.0
    %634 = vmatpush1.msra.mxu0 %v612
    %635 = vmatprep.subr.mxu0 0.0
    %636 = vmatpush1.msra.mxu0 %v613
    %637 = vmatprep.subr.mxu0 0.0
    %638 = vmatpush1.msra.mxu0 %v614
    %639 = vmatprep.subr.mxu0 0.0
    %640 = vmatpush1.msra.mxu0 %v615
    %641 = vmatprep.subr.mxu0 0.0
    %642 = vmatpush1.msra.mxu0 %v616
    %643 = vmatprep.subr.mxu0 0.0
    %644 = vmatpush1.msra.mxu0 %v617
    %645 = vmatprep.subr.mxu0 0.0
    %646 = vmatpush1.msra.mxu0 %v618
    %647 = vmatprep.subr.mxu0 0.0
    %648 = vmatpush1.msra.mxu0 %v619
    %649 = vmatprep.subr.mxu0 0.0
    %650 = vmatpush1.msra.mxu0 0.0
    %651 = vmatprep.subr.mxu0 0.0
    %652 = vmatpush1.msra.mxu0 0.0
    %653 = vmatprep.subr.mxu0 0.0
    %654 = vmatpush1.msra.mxu0 0.0
    %655 = vmatprep.subr.mxu0 0.0
    %656 = vmatpush1.msra.mxu0 0.0
    %657 = vmatprep.subr.mxu0 0.0
    %658 = vmatpush1.msra.mxu0 0.0
    %659 = vmatprep.subr.mxu0 0.0
    %660 = vmatpush1.msra.mxu0 0.0
    %661 = vmatprep.subr.mxu0 0.0
    %662 = vmatpush1.msra.mxu0 0.0
    %663 = vmatprep.subr.mxu0 0.0
    %664 = vmatpush1.msra.mxu0 0.0
    %665 = vmatprep.subr.mxu0 0.0
    %666 = vmatpush1.msra.mxu0 0.0
    %667 = vmatprep.subr.mxu0 0.0
    %668 = vmatpush1.msra.mxu0 0.0
    %669 = vmatprep.subr.mxu0 0.0
    %670 = vmatpush1.msra.mxu0 0.0
    %671 = vmatprep.subr.mxu0 0.0
    %672 = vmatpush1.msra.mxu0 0.0
    %673 = vmatprep.subr.mxu0 0.0
    %674 = vmatpush1.msra.mxu0 0.0
    %675 = vmatprep.subr.mxu0 0.0
    %676 = vmatpush1.msra.mxu0 0.0
    %677 = vmatprep.subr.mxu0 0.0
    %678 = vmatpush1.msra.mxu0 0.0
    %679 = vmatprep.subr.mxu0 0.0
    %680 = vmatpush1.msra.mxu0 0.0
    %681 = vmatprep.subr.mxu0 0.0
    %682 = vmatpush1.msra.mxu0 0.0
    %683 = vmatprep.subr.mxu0 0.0
    %684 = vmatpush1.msra.mxu0 0.0
    %685 = vmatprep.subr.mxu0 0.0
    %686 = vmatpush1.msra.mxu0 0.0
    %687 = vmatprep.subr.mxu0 0.0
    %688 = vmatpush1.msra.mxu0 0.0
    %689 = vmatprep.subr.mxu0 0.0
    %690 = vmatpush1.msra.mxu0 0.0
    %691 = vmatprep.subr.mxu0 0.0
    %692 = vmatpush1.msra.mxu0 0.0
    %693 = vmatprep.subr.mxu0 0.0
    %694 = vmatpush1.msra.mxu0 0.0
    %695 = vmatprep.subr.mxu0 0.0
    %696 = vmatpush1.msra.mxu0 0.0
    %697 = vmatprep.mubr.f32.mxu0 0.0
    %698 = vmatmul.mubr.f32.gmra.mrb[0].mxu0 %v628
    %v699 = vpop.f32.mrb[0].mxu0
    %v700 = vadd.f32 %v625, %v699
    %v701 = vpop.f32.mrb[0].mxu0
    %702 = vmatprep.mubr.f32.mxu0 0.0
    %703 = vmatmul.mubr.f32.gmra.mrb[0].mxu0 %v631
    %v704 = vpop.f32.mrb[0].mxu0
    %v705 = vadd.f32 %v625, %v704
    %v706 = vpop.f32.mrb[0].mxu0
    %707 = vdwg.mxu0
    %vm708 = vcmp.ge.f32.partialorder %v700, 0.0
    %vm709 = vcmp.ge.f32.partialorder %v705, 0.0
    %v710 = vmul.f32 %v700, 0.25
    %v711 = vmul.f32 %v705, 0.25
    %v712 = vsel %vm708, %v700, %v710
    %v713 = vsel %vm709, %v705, %v711
    %v714 = vld [vmem:[%s29] sm:$0xff]
    %v715 = vld [vmem:[%s29 + $0x8] sm:$0xff]
    %v716 = vld [vmem:[%s29 + $0x10] sm:$0xff]
    %v717 = vld [vmem:[%s29 + $0x18] sm:$0xff]
    %v718 = vld [vmem:[%s29 + $0x20] sm:$0xff]
    %v719 = vld [vmem:[%s29 + $0x28] sm:$0xff]
    %v720 = vld [vmem:[%s29 + $0x30] sm:$0xff]
    %v721 = vld [vmem:[%s29 + $0x38] sm:$0xff]
    %v722 = vld [vmem:[%s31] sm:$0x1]
    %v724 = vlaneseq
    %v725 = vshrl.u32 %v724, 7
    %v726 = vsub.s32 0, %v725
    %v727 = vrot.slane %v722, %v726
    %v730 = vsel %vm524, %v712, 0
    %v733 = vsel %vm524, %v713, 0
    %735 = vmatprep.subr.mxu0 0.0
    %736 = vmatpush1.msra.mxu0 %v714
    %737 = vmatprep.subr.mxu0 0.0
    %738 = vmatpush1.msra.mxu0 %v715
    %739 = vmatprep.subr.mxu0 0.0
    %740 = vmatpush1.msra.mxu0 %v716
    %741 = vmatprep.subr.mxu0 0.0
    %742 = vmatpush1.msra.mxu0 %v717
    %743 = vmatprep.subr.mxu0 0.0
    %744 = vmatpush1.msra.mxu0 %v718
    %745 = vmatprep.subr.mxu0 0.0
    %746 = vmatpush1.msra.mxu0 %v719
    %747 = vmatprep.subr.mxu0 0.0
    %748 = vmatpush1.msra.mxu0 %v720
    %749 = vmatprep.subr.mxu0 0.0
    %750 = vmatpush1.msra.mxu0 %v721
    %751 = vmatprep.subr.mxu0 0.0
    %752 = vmatpush1.msra.mxu0 0.0
    %753 = vmatprep.subr.mxu0 0.0
    %754 = vmatpush1.msra.mxu0 0.0
    %755 = vmatprep.subr.mxu0 0.0
    %756 = vmatpush1.msra.mxu0 0.0
    %757 = vmatprep.subr.mxu0 0.0
    %758 = vmatpush1.msra.mxu0 0.0
    %759 = vmatprep.subr.mxu0 0.0
    %760 = vmatpush1.msra.mxu0 0.0
    %761 = vmatprep.subr.mxu0 0.0
    %762 = vmatpush1.msra.mxu0 0.0
    %763 = vmatprep.subr.mxu0 0.0
    %764 = vmatpush1.msra.mxu0 0.0
    %765 = vmatprep.subr.mxu0 0.0
    %766 = vmatpush1.msra.mxu0 0.0
    %767 = vmatprep.subr.mxu0 0.0
    %768 = vmatpush1.msra.mxu0 0.0
    %769 = vmatprep.subr.mxu0 0.0
    %770 = vmatpush1.msra.mxu0 0.0
    %771 = vmatprep.subr.mxu0 0.0
    %772 = vmatpush1.msra.mxu0 0.0
    %773 = vmatprep.subr.mxu0 0.0
    %774 = vmatpush1.msra.mxu0 0.0
    %775 = vmatprep.subr.mxu0 0.0
    %776 = vmatpush1.msra.mxu0 0.0
    %777 = vmatprep.subr.mxu0 0.0
    %778 = vmatpush1.msra.mxu0 0.0
    %779 = vmatprep.subr.mxu0 0.0
    %780 = vmatpush1.msra.mxu0 0.0
    %781 = vmatprep.subr.mxu0 0.0
    %782 = vmatpush1.msra.mxu0 0.0
    %783 = vmatprep.subr.mxu0 0.0
    %784 = vmatpush1.msra.mxu0 0.0
    %785 = vmatprep.subr.mxu0 0.0
    %786 = vmatpush1.msra.mxu0 0.0
    %787 = vmatprep.subr.mxu0 0.0
    %788 = vmatpush1.msra.mxu0 0.0
    %789 = vmatprep.subr.mxu0 0.0
    %790 = vmatpush1.msra.mxu0 0.0
    %791 = vmatprep.subr.mxu0 0.0
    %792 = vmatpush1.msra.mxu0 0.0
    %793 = vmatprep.subr.mxu0 0.0
    %794 = vmatpush1.msra.mxu0 0.0
    %795 = vmatprep.subr.mxu0 0.0
    %796 = vmatpush1.msra.mxu0 0.0
    %797 = vmatprep.subr.mxu0 0.0
    %798 = vmatpush1.msra.mxu0 0.0
    %799 = vmatprep.mubr.f32.mxu0 0.0
    %800 = vmatmul.mubr.f32.gmra.mrb[0].mxu0 %v730
    %v801 = vpop.f32.mrb[0].mxu0
    %v802 = vadd.f32 %v727, %v801
    %v803 = vpop.f32.mrb[0].mxu0
    %804 = vmatprep.mubr.f32.mxu0 0.0
    %805 = vmatmul.mubr.f32.gmra.mrb[0].mxu0 %v733
    %v806 = vpop.f32.mrb[0].mxu0
    %v807 = vadd.f32 %v727, %v806
    %v808 = vpop.f32.mrb[0].mxu0
    %809 = vdwg.mxu0
    %vm810 = vcmp.ge.f32.partialorder %v802, 0.0
    %vm811 = vcmp.ge.f32.partialorder %v807, 0.0
    %v812 = vmul.f32 %v802, 0.25
    %v813 = vmul.f32 %v807, 0.25
    %v814 = vsel %vm810, %v802, %v812
    %v815 = vsel %vm811, %v807, %v813
    %v816 = vld [vmem:[%s33] sm:$0xff]
    %v817 = vld [vmem:[%s33 + $0x8] sm:$0xff]
    %v818 = vld [vmem:[%s33 + $0x10] sm:$0xff]
    %v819 = vld [vmem:[%s33 + $0x18] sm:$0xff]
    %v820 = vld [vmem:[%s33 + $0x20] sm:$0xff]
    %v821 = vld [vmem:[%s33 + $0x28] sm:$0xff]
    %v822 = vld [vmem:[%s33 + $0x30] sm:$0xff]
    %v823 = vld [vmem:[%s33 + $0x38] sm:$0xff]
    %v824 = vld [vmem:[#allocation3] sm:$0x1]
    %v826 = vlaneseq
    %v827 = vshrl.u32 %v826, 7
    %v828 = vsub.s32 0, %v827
    %v829 = vrot.slane %v824, %v828
    %v832 = vsel %vm524, %v814, 0
    %v835 = vsel %vm524, %v815, 0
    %837 = vmatprep.subr.mxu0 0.0
    %838 = vmatpush1.msra.mxu0 %v816
    %839 = vmatprep.subr.mxu0 0.0
    %840 = vmatpush1.msra.mxu0 %v817
    %841 = vmatprep.subr.mxu0 0.0
    %842 = vmatpush1.msra.mxu0 %v818
    %843 = vmatprep.subr.mxu0 0.0
    %844 = vmatpush1.msra.mxu0 %v819
    %845 = vmatprep.subr.mxu0 0.0
    %846 = vmatpush1.msra.mxu0 %v820
    %847 = vmatprep.subr.mxu0 0.0
    %848 = vmatpush1.msra.mxu0 %v821
    %849 = vmatprep.subr.mxu0 0.0
    %850 = vmatpush1.msra.mxu0 %v822
    %851 = vmatprep.subr.mxu0 0.0
    %852 = vmatpush1.msra.mxu0 %v823
    %853 = vmatprep.subr.mxu0 0.0
    %854 = vmatpush1.msra.mxu0 0.0
    %855 = vmatprep.subr.mxu0 0.0
    %856 = vmatpush1.msra.mxu0 0.0
    %857 = vmatprep.subr.mxu0 0.0
    %858 = vmatpush1.msra.mxu0 0.0
    %859 = vmatprep.subr.mxu0 0.0
    %860 = vmatpush1.msra.mxu0 0.0
    %861 = vmatprep.subr.mxu0 0.0
    %862 = vmatpush1.msra.mxu0 0.0
    %863 = vmatprep.subr.mxu0 0.0
    %864 = vmatpush1.msra.mxu0 0.0
    %865 = vmatprep.subr.mxu0 0.0
    %866 = vmatpush1.msra.mxu0 0.0
    %867 = vmatprep.subr.mxu0 0.0
    %868 = vmatpush1.msra.mxu0 0.0
    %869 = vmatprep.subr.mxu0 0.0
    %870 = vmatpush1.msra.mxu0 0.0
    %871 = vmatprep.subr.mxu0 0.0
    %872 = vmatpush1.msra.mxu0 0.0
    %873 = vmatprep.subr.mxu0 0.0
    %874 = vmatpush1.msra.mxu0 0.0
    %875 = vmatprep.subr.mxu0 0.0
    %876 = vmatpush1.msra.mxu0 0.0
    %877 = vmatprep.subr.mxu0 0.0
    %878 = vmatpush1.msra.mxu0 0.0
    %879 = vmatprep.subr.mxu0 0.0
    %880 = vmatpush1.msra.mxu0 0.0
    %881 = vmatprep.subr.mxu0 0.0
    %882 = vmatpush1.msra.mxu0 0.0
    %883 = vmatprep.subr.mxu0 0.0
    %884 = vmatpush1.msra.mxu0 0.0
    %885 = vmatprep.subr.mxu0 0.0
    %886 = vmatpush1.msra.mxu0 0.0
    %887 = vmatprep.subr.mxu0 0.0
    %888 = vmatpush1.msra.mxu0 0.0
    %889 = vmatprep.subr.mxu0 0.0
    %890 = vmatpush1.msra.mxu0 0.0
    %891 = vmatprep.subr.mxu0 0.0
    %892 = vmatpush1.msra.mxu0 0.0
    %893 = vmatprep.subr.mxu0 0.0
    %894 = vmatpush1.msra.mxu0 0.0
    %895 = vmatprep.subr.mxu0 0.0
    %896 = vmatpush1.msra.mxu0 0.0
    %897 = vmatprep.subr.mxu0 0.0
    %898 = vmatpush1.msra.mxu0 0.0
    %899 = vmatprep.subr.mxu0 0.0
    %900 = vmatpush1.msra.mxu0 0.0
    %901 = vmatprep.mubr.f32.mxu0 0.0
    %902 = vmatmul.mubr.f32.gmra.mrb[0].mxu0 %v832
    %v903 = vpop.f32.mrb[0].mxu0
    %v904 = vadd.f32 %v829, %v903
    %v905 = vpop.f32.mrb[0].mxu0
    %906 = vmatprep.mubr.f32.mxu0 0.0
    %907 = vmatmul.mubr.f32.gmra.mrb[0].mxu0 %v835
    %v908 = vpop.f32.mrb[0].mxu0
    %v909 = vadd.f32 %v829, %v908
    %v910 = vpop.f32.mrb[0].mxu0
    %911 = vdwg.mxu0
    %v912 = vxor.u32 %v904, 2147483648
    %v913 = vxor.u32 %v909, 2147483648
    %v914 = vmul.f32 %v912, 1.442695
    %v915 = vpow.pop %v914
    %v916 = vmul.f32 %v913, 1.442695
    %v917 = vpow.pop %v916
    %v918 = vadd.f32 %v915, 1.0
    %v919 = vadd.f32 %v917, 1.0
    %v920 = vrcp.pop %v918
    %v921 = vmul.f32 1.0, %v920
    %v922 = vrcp.pop %v919
    %v923 = vmul.f32 1.0, %v922
    %vm924 = vcmask 7168
    %925 = vst.msk [vmem:[%s71] sm:$0xff] %vm924, %v921
    %926 = vst.msk [vmem:[%s71 + $0x8] sm:$0xff] %vm924, %v923
    %v927 = vld [vmem:[%s37] sm:$0xff]
    %v928 = vld [vmem:[%s37 + $0x8] sm:$0xff]
    %v929 = vld [vmem:[%s37 + $0x10] sm:$0xff]
    %v930 = vld [vmem:[%s37 + $0x18] sm:$0xff]
    %v931 = vld [vmem:[%s39] sm:$0x1]
    %v933 = vlaneseq
    %v934 = vshrl.u32 %v933, 7
    %v935 = vsub.s32 0, %v934
    %v936 = vrot.slane %v931, %v935
    %v939 = vsel %vm309, %v414, 0
    %941 = vmatprep.subr.mxu0 0.0
    %942 = vmatpush1.msra.mxu0 %v927
    %943 = vmatprep.subr.mxu0 0.0
    %944 = vmatpush1.msra.mxu0 %v928
    %945 = vmatprep.subr.mxu0 0.0
    %946 = vmatpush1.msra.mxu0 %v929
    %947 = vmatprep.subr.mxu0 0.0
    %948 = vmatpush1.msra.mxu0 %v930
    %949 = vmatprep.subr.mxu0 0.0
    %950 = vmatpush1.msra.mxu0 0.0
    %951 = vmatprep.subr.mxu0 0.0
    %952 = vmatpush1.msra.mxu0 0.0
    %953 = vmatprep.subr.mxu0 0.0
    %954 = vmatpush1.msra.mxu0 0.0
    %955 = vmatprep.subr.mxu0 0.0
    %956 = vmatpush1.msra.mxu0 0.0
    %957 = vmatprep.subr.mxu0 0.0
    %958 = vmatpush1.msra.mxu0 0.0
    %959 = vmatprep.subr.mxu0 0.0
    %960 = vmatpush1.msra.mxu0 0.0
    %961 = vmatprep.subr.mxu0 0.0
    %962 = vmatpush1.msra.mxu0 0.0
    %963 = vmatprep.subr.mxu0 0.0
    %964 = vmatpush1.msra.mxu0 0.0
    %965 = vmatprep.subr.mxu0 0.0
    %966 = vmatpush1.msra.mxu0 0.0
    %967 = vmatprep.subr.mxu0 0.0
    %968 = vmatpush1.msra.mxu0 0.0
    %969 = vmatprep.subr.mxu0 0.0
    %970 = vmatpush1.msra.mxu0 0.0
    %971 = vmatprep.subr.mxu0 0.0
    %972 = vmatpush1.msra.mxu0 0.0
    %973 = vmatprep.subr.mxu0 0.0
    %974 = vmatpush1.msra.mxu0 0.0
    %975 = vmatprep.subr.mxu0 0.0
    %976 = vmatpush1.msra.mxu0 0.0
    %977 = vmatprep.subr.mxu0 0.0
    %978 = vmatpush1.msra.mxu0 0.0
    %979 = vmatprep.subr.mxu0 0.0
    %980 = vmatpush1.msra.mxu0 0.0
    %981 = vmatprep.subr.mxu0 0.0
    %982 = vmatpush1.msra.mxu0 0.0
    %983 = vmatprep.subr.mxu0 0.0
    %984 = vmatpush1.msra.mxu0 0.0
    %985 = vmatprep.subr.mxu0 0.0
    %986 = vmatpush1.msra.mxu0 0.0
    %987 = vmatprep.subr.mxu0 0.0
    %988 = vmatpush1.msra.mxu0 0.0
    %989 = vmatprep.subr.mxu0 0.0
    %990 = vmatpush1.msra.mxu0 0.0
    %991 = vmatprep.subr.mxu0 0.0
    %992 = vmatpush1.msra.mxu0 0.0
    %993 = vmatprep.subr.mxu0 0.0
    %994 = vmatpush1.msra.mxu0 0.0
    %995 = vmatprep.subr.mxu0 0.0
    %996 = vmatpush1.msra.mxu0 0.0
    %997 = vmatprep.subr.mxu0 0.0
    %998 = vmatpush1.msra.mxu0 0.0
    %999 = vmatprep.subr.mxu0 0.0
    %1000 = vmatpush1.msra.mxu0 0.0
    %1001 = vmatprep.subr.mxu0 0.0
    %1002 = vmatpush1.msra.mxu0 0.0
    %1003 = vmatprep.subr.mxu0 0.0
    %1004 = vmatpush1.msra.mxu0 0.0
    %1005 = vmatprep.mubr.f32.mxu0 0.0
    %1006 = vmatmul.mubr.f32.gmra.mrb[0].mxu0 %v939
    %v1007 = vpop.f32.mrb[0].mxu0
    %v1008 = vadd.f32 %v936, %v1007
    %v1009 = vpop.f32.mrb[0].mxu0
    %1010 = vdwg.mxu0
    %vm1011 = vcmp.ge.f32.partialorder %v1008, 0.0
    %v1012 = vmul.f32 %v1008, 0.25
    %v1013 = vsel %vm1011, %v1008, %v1012
    %v1014 = vld [vmem:[%s41] sm:$0xff]
    %v1015 = vld [vmem:[%s41 + $0x8] sm:$0xff]
    %v1016 = vld [vmem:[%s41 + $0x10] sm:$0xff]
    %v1017 = vld [vmem:[%s41 + $0x18] sm:$0xff]
    %v1018 = vld [vmem:[%s41 + $0x20] sm:$0xff]
    %v1019 = vld [vmem:[%s41 + $0x28] sm:$0xff]
    %v1020 = vld [vmem:[%s41 + $0x30] sm:$0xff]
    %v1021 = vld [vmem:[%s41 + $0x38] sm:$0xff]
    %v1022 = vld [vmem:[%s43] sm:$0x1]
    %v1024 = vlaneseq
    %v1025 = vshrl.u32 %v1024, 7
    %v1026 = vsub.s32 0, %v1025
    %v1027 = vrot.slane %v1022, %v1026
    %v1030 = vsel %vm524, %v1013, 0
    %1032 = vmatprep.subr.mxu0 0.0
    %1033 = vmatpush1.msra.mxu0 %v1014
    %1034 = vmatprep.subr.mxu0 0.0
    %1035 = vmatpush1.msra.mxu0 %v1015
    %1036 = vmatprep.subr.mxu0 0.0
    %1037 = vmatpush1.msra.mxu0 %v1016
    %1038 = vmatprep.subr.mxu0 0.0
    %1039 = vmatpush1.msra.mxu0 %v1017
    %1040 = vmatprep.subr.mxu0 0.0
    %1041 = vmatpush1.msra.mxu0 %v1018
    %1042 = vmatprep.subr.mxu0 0.0
    %1043 = vmatpush1.msra.mxu0 %v1019
    %1044 = vmatprep.subr.mxu0 0.0
    %1045 = vmatpush1.msra.mxu0 %v1020
    %1046 = vmatprep.subr.mxu0 0.0
    %1047 = vmatpush1.msra.mxu0 %v1021
    %1048 = vmatprep.subr.mxu0 0.0
    %1049 = vmatpush1.msra.mxu0 0.0
    %1050 = vmatprep.subr.mxu0 0.0
    %1051 = vmatpush1.msra.mxu0 0.0
    %1052 = vmatprep.subr.mxu0 0.0
    %1053 = vmatpush1.msra.mxu0 0.0
    %1054 = vmatprep.subr.mxu0 0.0
    %1055 = vmatpush1.msra.mxu0 0.0
    %1056 = vmatprep.subr.mxu0 0.0
    %1057 = vmatpush1.msra.mxu0 0.0
    %1058 = vmatprep.subr.mxu0 0.0
    %1059 = vmatpush1.msra.mxu0 0.0
    %1060 = vmatprep.subr.mxu0 0.0
    %1061 = vmatpush1.msra.mxu0 0.0
    %1062 = vmatprep.subr.mxu0 0.0
    %1063 = vmatpush1.msra.mxu0 0.0
    %1064 = vmatprep.subr.mxu0 0.0
    %1065 = vmatpush1.msra.mxu0 0.0
    %1066 = vmatprep.subr.mxu0 0.0
    %1067 = vmatpush1.msra.mxu0 0.0
    %1068 = vmatprep.subr.mxu0 0.0
    %1069 = vmatpush1.msra.mxu0 0.0
    %1070 = vmatprep.subr.mxu0 0.0
    %1071 = vmatpush1.msra.mxu0 0.0
    %1072 = vmatprep.subr.mxu0 0.0
    %1073 = vmatpush1.msra.mxu0 0.0
    %1074 = vmatprep.subr.mxu0 0.0
    %1075 = vmatpush1.msra.mxu0 0.0
    %1076 = vmatprep.subr.mxu0 0.0
    %1077 = vmatpush1.msra.mxu0 0.0
    %1078 = vmatprep.subr.mxu0 0.0
    %1079 = vmatpush1.msra.mxu0 0.0
    %1080 = vmatprep.subr.mxu0 0.0
    %1081 = vmatpush1.msra.mxu0 0.0
    %1082 = vmatprep.subr.mxu0 0.0
    %1083 = vmatpush1.msra.mxu0 0.0
    %1084 = vmatprep.subr.mxu0 0.0
    %1085 = vmatpush1.msra.mxu0 0.0
    %1086 = vmatprep.subr.mxu0 0.0
    %1087 = vmatpush1.msra.mxu0 0.0
    %1088 = vmatprep.subr.mxu0 0.0
    %1089 = vmatpush1.msra.mxu0 0.0
    %1090 = vmatprep.subr.mxu0 0.0
    %1091 = vmatpush1.msra.mxu0 0.0
    %1092 = vmatprep.subr.mxu0 0.0
    %1093 = vmatpush1.msra.mxu0 0.0
    %1094 = vmatprep.subr.mxu0 0.0
    %1095 = vmatpush1.msra.mxu0 0.0
    %1096 = vmatprep.mubr.f32.mxu0 0.0
    %1097 = vmatmul.mubr.f32.gmra.mrb[0].mxu0 %v1030
    %v1098 = vpop.f32.mrb[0].mxu0
    %v1099 = vadd.f32 %v1027, %v1098
    %v1100 = vpop.f32.mrb[0].mxu0
    %1101 = vdwg.mxu0
    %vm1102 = vcmp.ge.f32.partialorder %v1099, 0.0
    %v1103 = vmul.f32 %v1099, 0.25
    %v1104 = vsel %vm1102, %v1099, %v1103
    %v1105 = vld [vmem:[%s45] sm:$0xff]
    %v1106 = vld [vmem:[%s45 + $0x8] sm:$0xff]
    %v1107 = vld [vmem:[%s45 + $0x10] sm:$0xff]
    %v1108 = vld [vmem:[%s45 + $0x18] sm:$0xff]
    %v1109 = vld [vmem:[%s45 + $0x20] sm:$0xff]
    %v1110 = vld [vmem:[%s45 + $0x28] sm:$0xff]
    %v1111 = vld [vmem:[%s45 + $0x30] sm:$0xff]
    %v1112 = vld [vmem:[%s45 + $0x38] sm:$0xff]
    %v1113 = vld [vmem:[%s47] sm:$0x1]
    %v1115 = vlaneseq
    %v1116 = vshrl.u32 %v1115, 7
    %v1117 = vsub.s32 0, %v1116
    %v1118 = vrot.slane %v1113, %v1117
    %v1121 = vsel %vm524, %v1104, 0
    %1123 = vmatprep.subr.mxu0 0.0
    %1124 = vmatpush1.msra.mxu0 %v1105
    %1125 = vmatprep.subr.mxu0 0.0
    %1126 = vmatpush1.msra.mxu0 %v1106
    %1127 = vmatprep.subr.mxu0 0.0
    %1128 = vmatpush1.msra.mxu0 %v1107
    %1129 = vmatprep.subr.mxu0 0.0
    %1130 = vmatpush1.msra.mxu0 %v1108
    %1131 = vmatprep.subr.mxu0 0.0
    %1132 = vmatpush1.msra.mxu0 %v1109
    %1133 = vmatprep.subr.mxu0 0.0
    %1134 = vmatpush1.msra.mxu0 %v1110
    %1135 = vmatprep.subr.mxu0 0.0
    %1136 = vmatpush1.msra.mxu0 %v1111
    %1137 = vmatprep.subr.mxu0 0.0
    %1138 = vmatpush1.msra.mxu0 %v1112
    %1139 = vmatprep.subr.mxu0 0.0
    %1140 = vmatpush1.msra.mxu0 0.0
    %1141 = vmatprep.subr.mxu0 0.0
    %1142 = vmatpush1.msra.mxu0 0.0
    %1143 = vmatprep.subr.mxu0 0.0
    %1144 = vmatpush1.msra.mxu0 0.0
    %1145 = vmatprep.subr.mxu0 0.0
    %1146 = vmatpush1.msra.mxu0 0.0
    %1147 = vmatprep.subr.mxu0 0.0
    %1148 = vmatpush1.msra.mxu0 0.0
    %1149 = vmatprep.subr.mxu0 0.0
    %1150 = vmatpush1.msra.mxu0 0.0
    %1151 = vmatprep.subr.mxu0 0.0
    %1152 = vmatpush1.msra.mxu0 0.0
    %1153 = vmatprep.subr.mxu0 0.0
    %1154 = vmatpush1.msra.mxu0 0.0
    %1155 = vmatprep.subr.mxu0 0.0
    %1156 = vmatpush1.msra.mxu0 0.0
    %1157 = vmatprep.subr.mxu0 0.0
    %1158 = vmatpush1.msra.mxu0 0.0
    %1159 = vmatprep.subr.mxu0 0.0
    %1160 = vmatpush1.msra.mxu0 0.0
    %1161 = vmatprep.subr.mxu0 0.0
    %1162 = vmatpush1.msra.mxu0 0.0
    %1163 = vmatprep.subr.mxu0 0.0
    %1164 = vmatpush1.msra.mxu0 0.0
    %1165 = vmatprep.subr.mxu0 0.0
    %1166 = vmatpush1.msra.mxu0 0.0
    %1167 = vmatprep.subr.mxu0 0.0
    %1168 = vmatpush1.msra.mxu0 0.0
    %1169 = vmatprep.subr.mxu0 0.0
    %1170 = vmatpush1.msra.mxu0 0.0
    %1171 = vmatprep.subr.mxu0 0.0
    %1172 = vmatpush1.msra.mxu0 0.0
    %1173 = vmatprep.subr.mxu0 0.0
    %1174 = vmatpush1.msra.mxu0 0.0
    %1175 = vmatprep.subr.mxu0 0.0
    %1176 = vmatpush1.msra.mxu0 0.0
    %1177 = vmatprep.subr.mxu0 0.0
    %1178 = vmatpush1.msra.mxu0 0.0
    %1179 = vmatprep.subr.mxu0 0.0
    %1180 = vmatpush1.msra.mxu0 0.0
    %1181 = vmatprep.subr.mxu0 0.0
    %1182 = vmatpush1.msra.mxu0 0.0
    %1183 = vmatprep.subr.mxu0 0.0
    %1184 = vmatpush1.msra.mxu0 0.0
    %1185 = vmatprep.subr.mxu0 0.0
    %1186 = vmatpush1.msra.mxu0 0.0
    %1187 = vmatprep.mubr.f32.mxu0 0.0
    %1188 = vmatmul.mubr.f32.gmra.mrb[0].mxu0 %v1121
    %v1189 = vpop.f32.mrb[0].mxu0
    %v1190 = vadd.f32 %v1118, %v1189
    %v1191 = vpop.f32.mrb[0].mxu0
    %1192 = vdwg.mxu0
    %vm1193 = vcmp.ge.f32.partialorder %v1190, 0.0
    %v1194 = vmul.f32 %v1190, 0.25
    %v1195 = vsel %vm1193, %v1190, %v1194
    %v1196 = vld [vmem:[%s49] sm:$0xff]
    %v1197 = vld [vmem:[%s49 + $0x8] sm:$0xff]
    %v1198 = vld [vmem:[%s49 + $0x10] sm:$0xff]
    %v1199 = vld [vmem:[%s49 + $0x18] sm:$0xff]
    %v1200 = vld [vmem:[%s49 + $0x20] sm:$0xff]
    %v1201 = vld [vmem:[%s49 + $0x28] sm:$0xff]
    %v1202 = vld [vmem:[%s49 + $0x30] sm:$0xff]
    %v1203 = vld [vmem:[%s49 + $0x38] sm:$0xff]
    %v1204 = vld [vmem:[%s51] sm:$0x1]
    %v1206 = vlaneseq
    %v1207 = vshrl.u32 %v1206, 7
    %v1208 = vsub.s32 0, %v1207
    %v1209 = vrot.slane %v1204, %v1208
    %v1212 = vsel %vm524, %v1195, 0
    %1214 = vmatprep.subr.mxu0 0.0
    %1215 = vmatpush1.msra.mxu0 %v1196
    %1216 = vmatprep.subr.mxu0 0.0
    %1217 = vmatpush1.msra.mxu0 %v1197
    %1218 = vmatprep.subr.mxu0 0.0
    %1219 = vmatpush1.msra.mxu0 %v1198
    %1220 = vmatprep.subr.mxu0 0.0
    %1221 = vmatpush1.msra.mxu0 %v1199
    %1222 = vmatprep.subr.mxu0 0.0
    %1223 = vmatpush1.msra.mxu0 %v1200
    %1224 = vmatprep.subr.mxu0 0.0
    %1225 = vmatpush1.msra.mxu0 %v1201
    %1226 = vmatprep.subr.mxu0 0.0
    %1227 = vmatpush1.msra.mxu0 %v1202
    %1228 = vmatprep.subr.mxu0 0.0
    %1229 = vmatpush1.msra.mxu0 %v1203
    %1230 = vmatprep.subr.mxu0 0.0
    %1231 = vmatpush1.msra.mxu0 0.0
    %1232 = vmatprep.subr.mxu0 0.0
    %1233 = vmatpush1.msra.mxu0 0.0
    %1234 = vmatprep.subr.mxu0 0.0
    %1235 = vmatpush1.msra.mxu0 0.0
    %1236 = vmatprep.subr.mxu0 0.0
    %1237 = vmatpush1.msra.mxu0 0.0
    %1238 = vmatprep.subr.mxu0 0.0
    %1239 = vmatpush1.msra.mxu0 0.0
    %1240 = vmatprep.subr.mxu0 0.0
    %1241 = vmatpush1.msra.mxu0 0.0
    %1242 = vmatprep.subr.mxu0 0.0
    %1243 = vmatpush1.msra.mxu0 0.0
    %1244 = vmatprep.subr.mxu0 0.0
    %1245 = vmatpush1.msra.mxu0 0.0
    %1246 = vmatprep.subr.mxu0 0.0
    %1247 = vmatpush1.msra.mxu0 0.0
    %1248 = vmatprep.subr.mxu0 0.0
    %1249 = vmatpush1.msra.mxu0 0.0
    %1250 = vmatprep.subr.mxu0 0.0
    %1251 = vmatpush1.msra.mxu0 0.0
    %1252 = vmatprep.subr.mxu0 0.0
    %1253 = vmatpush1.msra.mxu0 0.0
    %1254 = vmatprep.subr.mxu0 0.0
    %1255 = vmatpush1.msra.mxu0 0.0
    %1256 = vmatprep.subr.mxu0 0.0
    %1257 = vmatpush1.msra.mxu0 0.0
    %1258 = vmatprep.subr.mxu0 0.0
    %1259 = vmatpush1.msra.mxu0 0.0
    %1260 = vmatprep.subr.mxu0 0.0
    %1261 = vmatpush1.msra.mxu0 0.0
    %1262 = vmatprep.subr.mxu0 0.0
    %1263 = vmatpush1.msra.mxu0 0.0
    %1264 = vmatprep.subr.mxu0 0.0
    %1265 = vmatpush1.msra.mxu0 0.0
    %1266 = vmatprep.subr.mxu0 0.0
    %1267 = vmatpush1.msra.mxu0 0.0
    %1268 = vmatprep.subr.mxu0 0.0
    %1269 = vmatpush1.msra.mxu0 0.0
    %1270 = vmatprep.subr.mxu0 0.0
    %1271 = vmatpush1.msra.mxu0 0.0
    %1272 = vmatprep.subr.mxu0 0.0
    %1273 = vmatpush1.msra.mxu0 0.0
    %1274 = vmatprep.subr.mxu0 0.0
    %1275 = vmatpush1.msra.mxu0 0.0
    %1276 = vmatprep.subr.mxu0 0.0
    %1277 = vmatpush1.msra.mxu0 0.0
    %1278 = vmatprep.mubr.f32.mxu0 0.0
    %1279 = vmatmul.mubr.f32.gmra.mrb[0].mxu0 %v1212
    %v1280 = vpop.f32.mrb[0].mxu0
    %v1281 = vadd.f32 %v1209, %v1280
    %v1282 = vpop.f32.mrb[0].mxu0
    %1283 = vdwg.mxu0
    %vm1284 = vcmp.ge.f32.partialorder %v1281, 0.0
    %v1285 = vmul.f32 %v1281, 0.25
    %v1286 = vsel %vm1284, %v1281, %v1285
    %v1287 = vld [vmem:[%s53] sm:$0xff]
    %v1288 = vld [vmem:[%s53 + $0x8] sm:$0xff]
    %v1289 = vld [vmem:[%s53 + $0x10] sm:$0xff]
    %v1290 = vld [vmem:[%s53 + $0x18] sm:$0xff]
    %v1291 = vld [vmem:[%s53 + $0x20] sm:$0xff]
    %v1292 = vld [vmem:[%s53 + $0x28] sm:$0xff]
    %v1293 = vld [vmem:[%s53 + $0x30] sm:$0xff]
    %v1294 = vld [vmem:[%s53 + $0x38] sm:$0xff]
    %v1295 = vld [vmem:[%s55] sm:$0x1]
    %v1297 = vlaneseq
    %v1298 = vshrl.u32 %v1297, 7
    %v1299 = vsub.s32 0, %v1298
    %v1300 = vrot.slane %v1295, %v1299
    %v1303 = vsel %vm524, %v1286, 0
    %1305 = vmatprep.subr.mxu0 0.0
    %1306 = vmatpush1.msra.mxu0 %v1287
    %1307 = vmatprep.subr.mxu0 0.0
    %1308 = vmatpush1.msra.mxu0 %v1288
    %1309 = vmatprep.subr.mxu0 0.0
    %1310 = vmatpush1.msra.mxu0 %v1289
    %1311 = vmatprep.subr.mxu0 0.0
    %1312 = vmatpush1.msra.mxu0 %v1290
    %1313 = vmatprep.subr.mxu0 0.0
    %1314 = vmatpush1.msra.mxu0 %v1291
    %1315 = vmatprep.subr.mxu0 0.0
    %1316 = vmatpush1.msra.mxu0 %v1292
    %1317 = vmatprep.subr.mxu0 0.0
    %1318 = vmatpush1.msra.mxu0 %v1293
    %1319 = vmatprep.subr.mxu0 0.0
    %1320 = vmatpush1.msra.mxu0 %v1294
    %1321 = vmatprep.subr.mxu0 0.0
    %1322 = vmatpush1.msra.mxu0 0.0
    %1323 = vmatprep.subr.mxu0 0.0
    %1324 = vmatpush1.msra.mxu0 0.0
    %1325 = vmatprep.subr.mxu0 0.0
    %1326 = vmatpush1.msra.mxu0 0.0
    %1327 = vmatprep.subr.mxu0 0.0
    %1328 = vmatpush1.msra.mxu0 0.0
    %1329 = vmatprep.subr.mxu0 0.0
    %1330 = vmatpush1.msra.mxu0 0.0
    %1331 = vmatprep.subr.mxu0 0.0
    %1332 = vmatpush1.msra.mxu0 0.0
    %1333 = vmatprep.subr.mxu0 0.0
    %1334 = vmatpush1.msra.mxu0 0.0
    %1335 = vmatprep.subr.mxu0 0.0
    %1336 = vmatpush1.msra.mxu0 0.0
    %1337 = vmatprep.subr.mxu0 0.0
    %1338 = vmatpush1.msra.mxu0 0.0
    %1339 = vmatprep.subr.mxu0 0.0
    %1340 = vmatpush1.msra.mxu0 0.0
    %1341 = vmatprep.subr.mxu0 0.0
    %1342 = vmatpush1.msra.mxu0 0.0
    %1343 = vmatprep.subr.mxu0 0.0
    %1344 = vmatpush1.msra.mxu0 0.0
    %1345 = vmatprep.subr.mxu0 0.0
    %1346 = vmatpush1.msra.mxu0 0.0
    %1347 = vmatprep.subr.mxu0 0.0
    %1348 = vmatpush1.msra.mxu0 0.0
    %1349 = vmatprep.subr.mxu0 0.0
    %1350 = vmatpush1.msra.mxu0 0.0
    %1351 = vmatprep.subr.mxu0 0.0
    %1352 = vmatpush1.msra.mxu0 0.0
    %1353 = vmatprep.subr.mxu0 0.0
    %1354 = vmatpush1.msra.mxu0 0.0
    %1355 = vmatprep.subr.mxu0 0.0
    %1356 = vmatpush1.msra.mxu0 0.0
    %1357 = vmatprep.subr.mxu0 0.0
    %1358 = vmatpush1.msra.mxu0 0.0
    %1359 = vmatprep.subr.mxu0 0.0
    %1360 = vmatpush1.msra.mxu0 0.0
    %1361 = vmatprep.subr.mxu0 0.0
    %1362 = vmatpush1.msra.mxu0 0.0
    %1363 = vmatprep.subr.mxu0 0.0
    %1364 = vmatpush1.msra.mxu0 0.0
    %1365 = vmatprep.subr.mxu0 0.0
    %1366 = vmatpush1.msra.mxu0 0.0
    %1367 = vmatprep.subr.mxu0 0.0
    %1368 = vmatpush1.msra.mxu0 0.0
    %1369 = vmatprep.mubr.f32.mxu0 0.0
    %1370 = vmatmul.mubr.f32.gmra.mrb[0].mxu0 %v1303
    %v1371 = vpop.f32.mrb[0].mxu0
    %v1372 = vadd.f32 %v1300, %v1371
    %v1373 = vpop.f32.mrb[0].mxu0
    %1374 = vdwg.mxu0
    %vm1375 = vcmp.ge.f32.partialorder %v1372, 0.0
    %v1376 = vmul.f32 %v1372, 0.25
    %v1377 = vsel %vm1375, %v1372, %v1376
    %v1378 = vld [vmem:[%s57] sm:$0xff]
    %v1379 = vld [vmem:[%s57 + $0x8] sm:$0xff]
    %v1380 = vld [vmem:[%s57 + $0x10] sm:$0xff]
    %v1381 = vld [vmem:[%s57 + $0x18] sm:$0xff]
    %v1382 = vld [vmem:[%s57 + $0x20] sm:$0xff]
    %v1383 = vld [vmem:[%s57 + $0x28] sm:$0xff]
    %v1384 = vld [vmem:[%s57 + $0x30] sm:$0xff]
    %v1385 = vld [vmem:[%s57 + $0x38] sm:$0xff]
    %v1386 = vld [vmem:[%s59] sm:$0x1]
    %v1388 = vlaneseq
    %v1389 = vshrl.u32 %v1388, 7
    %v1390 = vsub.s32 0, %v1389
    %v1391 = vrot.slane %v1386, %v1390
    %v1394 = vsel %vm524, %v1377, 0
    %1396 = vmatprep.subr.mxu0 0.0
    %1397 = vmatpush1.msra.mxu0 %v1378
    %1398 = vmatprep.subr.mxu0 0.0
    %1399 = vmatpush1.msra.mxu0 %v1379
    %1400 = vmatprep.subr.mxu0 0.0
    %1401 = vmatpush1.msra.mxu0 %v1380
    %1402 = vmatprep.subr.mxu0 0.0
    %1403 = vmatpush1.msra.mxu0 %v1381
    %1404 = vmatprep.subr.mxu0 0.0
    %1405 = vmatpush1.msra.mxu0 %v1382
    %1406 = vmatprep.subr.mxu0 0.0
    %1407 = vmatpush1.msra.mxu0 %v1383
    %1408 = vmatprep.subr.mxu0 0.0
    %1409 = vmatpush1.msra.mxu0 %v1384
    %1410 = vmatprep.subr.mxu0 0.0
    %1411 = vmatpush1.msra.mxu0 %v1385
    %1412 = vmatprep.subr.mxu0 0.0
    %1413 = vmatpush1.msra.mxu0 0.0
    %1414 = vmatprep.subr.mxu0 0.0
    %1415 = vmatpush1.msra.mxu0 0.0
    %1416 = vmatprep.subr.mxu0 0.0
    %1417 = vmatpush1.msra.mxu0 0.0
    %1418 = vmatprep.subr.mxu0 0.0
    %1419 = vmatpush1.msra.mxu0 0.0
    %1420 = vmatprep.subr.mxu0 0.0
    %1421 = vmatpush1.msra.mxu0 0.0
    %1422 = vmatprep.subr.mxu0 0.0
    %1423 = vmatpush1.msra.mxu0 0.0
    %1424 = vmatprep.subr.mxu0 0.0
    %1425 = vmatpush1.msra.mxu0 0.0
    %1426 = vmatprep.subr.mxu0 0.0
    %1427 = vmatpush1.msra.mxu0 0.0
    %1428 = vmatprep.subr.mxu0 0.0
    %1429 = vmatpush1.msra.mxu0 0.0
    %1430 = vmatprep.subr.mxu0 0.0
    %1431 = vmatpush1.msra.mxu0 0.0
    %1432 = vmatprep.subr.mxu0 0.0
    %1433 = vmatpush1.msra.mxu0 0.0
    %1434 = vmatprep.subr.mxu0 0.0
    %1435 = vmatpush1.msra.mxu0 0.0
    %1436 = vmatprep.subr.mxu0 0.0
    %1437 = vmatpush1.msra.mxu0 0.0
    %1438 = vmatprep.subr.mxu0 0.0
    %1439 = vmatpush1.msra.mxu0 0.0
    %1440 = vmatprep.subr.mxu0 0.0
    %1441 = vmatpush1.msra.mxu0 0.0
    %1442 = vmatprep.subr.mxu0 0.0
    %1443 = vmatpush1.msra.mxu0 0.0
    %1444 = vmatprep.subr.mxu0 0.0
    %1445 = vmatpush1.msra.mxu0 0.0
    %1446 = vmatprep.subr.mxu0 0.0
    %1447 = vmatpush1.msra.mxu0 0.0
    %1448 = vmatprep.subr.mxu0 0.0
    %1449 = vmatpush1.msra.mxu0 0.0
    %1450 = vmatprep.subr.mxu0 0.0
    %1451 = vmatpush1.msra.mxu0 0.0
    %1452 = vmatprep.subr.mxu0 0.0
    %1453 = vmatpush1.msra.mxu0 0.0
    %1454 = vmatprep.subr.mxu0 0.0
    %1455 = vmatpush1.msra.mxu0 0.0
    %1456 = vmatprep.subr.mxu0 0.0
    %1457 = vmatpush1.msra.mxu0 0.0
    %1458 = vmatprep.subr.mxu0 0.0
    %1459 = vmatpush1.msra.mxu0 0.0
    %1460 = vmatprep.mubr.f32.mxu0 0.0
    %1461 = vmatmul.mubr.f32.gmra.mrb[0].mxu0 %v1394
    %v1462 = vpop.f32.mrb[0].mxu0
    %v1463 = vadd.f32 %v1391, %v1462
    %v1464 = vpop.f32.mrb[0].mxu0
    %1465 = vdwg.mxu0
    %v1466 = vmax.f32 %v1463, 0.0
    %v1467 = vadd.f32 %v1466, 0.7853982
    %v1468 = vtanh.pop %v1463
    %v1469 = vmul.f32 %v1468, 3.1415927
    %v1470 = vld [vmem:[#allocation9] sm:$0xff]
    %v1471 = vld [vmem:[#allocation9 + $0x8] sm:$0xff]
    %v1472 = vld [vmem:[#allocation9 + $0x10] sm:$0xff]
    %v1473 = vld [vmem:[#allocation9 + $0x18] sm:$0xff]
    %v1474 = vld [vmem:[%s63] sm:$0x1]
    %v1476 = vlaneseq
    %v1477 = vshrl.u32 %v1476, 7
    %v1478 = vsub.s32 0, %v1477
    %v1479 = vrot.slane %v1474, %v1478
    %1481 = vmatprep.subr.mxu0 0.0
    %1482 = vmatpush1.msra.mxu0 %v1470
    %1483 = vmatprep.subr.mxu0 0.0
    %1484 = vmatpush1.msra.mxu0 %v1471
    %1485 = vmatprep.subr.mxu0 0.0
    %1486 = vmatpush1.msra.mxu0 %v1472
    %1487 = vmatprep.subr.mxu0 0.0
    %1488 = vmatpush1.msra.mxu0 %v1473
    %1489 = vmatprep.subr.mxu0 0.0
    %1490 = vmatpush1.msra.mxu0 0.0
    %1491 = vmatprep.subr.mxu0 0.0
    %1492 = vmatpush1.msra.mxu0 0.0
    %1493 = vmatprep.subr.mxu0 0.0
    %1494 = vmatpush1.msra.mxu0 0.0
    %1495 = vmatprep.subr.mxu0 0.0
    %1496 = vmatpush1.msra.mxu0 0.0
    %1497 = vmatprep.subr.mxu0 0.0
    %1498 = vmatpush1.msra.mxu0 0.0
    %1499 = vmatprep.subr.mxu0 0.0
    %1500 = vmatpush1.msra.mxu0 0.0
    %1501 = vmatprep.subr.mxu0 0.0
    %1502 = vmatpush1.msra.mxu0 0.0
    %1503 = vmatprep.subr.mxu0 0.0
    %1504 = vmatpush1.msra.mxu0 0.0
    %1505 = vmatprep.subr.mxu0 0.0
    %1506 = vmatpush1.msra.mxu0 0.0
    %1507 = vmatprep.subr.mxu0 0.0
    %1508 = vmatpush1.msra.mxu0 0.0
    %1509 = vmatprep.subr.mxu0 0.0
    %1510 = vmatpush1.msra.mxu0 0.0
    %1511 = vmatprep.subr.mxu0 0.0
    %1512 = vmatpush1.msra.mxu0 0.0
    %1513 = vmatprep.subr.mxu0 0.0
    %1514 = vmatpush1.msra.mxu0 0.0
    %1515 = vmatprep.subr.mxu0 0.0
    %1516 = vmatpush1.msra.mxu0 0.0
    %1517 = vmatprep.subr.mxu0 0.0
    %1518 = vmatpush1.msra.mxu0 0.0
    %1519 = vmatprep.subr.mxu0 0.0
    %1520 = vmatpush1.msra.mxu0 0.0
    %1521 = vmatprep.subr.mxu0 0.0
    %1522 = vmatpush1.msra.mxu0 0.0
    %1523 = vmatprep.subr.mxu0 0.0
    %1524 = vmatpush1.msra.mxu0 0.0
    %1525 = vmatprep.subr.mxu0 0.0
    %1526 = vmatpush1.msra.mxu0 0.0
    %1527 = vmatprep.subr.mxu0 0.0
    %1528 = vmatpush1.msra.mxu0 0.0
    %1529 = vmatprep.subr.mxu0 0.0
    %1530 = vmatpush1.msra.mxu0 0.0
    %1531 = vmatprep.subr.mxu0 0.0
    %1532 = vmatpush1.msra.mxu0 0.0
    %1533 = vmatprep.subr.mxu0 0.0
    %1534 = vmatpush1.msra.mxu0 0.0
    %1535 = vmatprep.subr.mxu0 0.0
    %1536 = vmatpush1.msra.mxu0 0.0
    %1537 = vmatprep.subr.mxu0 0.0
    %1538 = vmatpush1.msra.mxu0 0.0
    %1539 = vmatprep.subr.mxu0 0.0
    %1540 = vmatpush1.msra.mxu0 0.0
    %1541 = vmatprep.subr.mxu0 0.0
    %1542 = vmatpush1.msra.mxu0 0.0
    %1543 = vmatprep.subr.mxu0 0.0
    %1544 = vmatpush1.msra.mxu0 0.0
    %1545 = vmatprep.mubr.f32.mxu0 0.0
    %1546 = vmatmul.mubr.f32.gmra.mrb[0].mxu0 %v939
    %v1547 = vpop.f32.mrb[0].mxu0
    %v1548 = vadd.f32 %v1479, %v1547
    %v1549 = vpop.f32.mrb[0].mxu0
    %1550 = vdwg.mxu0
    %vm1551 = vcmp.ge.f32.partialorder %v1548, 0.0
    %v1552 = vmul.f32 %v1548, 0.25
    %v1553 = vsel %vm1551, %v1548, %v1552
    %v1554 = vld [vmem:[%s65] sm:$0xff]
    %v1555 = vld [vmem:[%s65 + $0x8] sm:$0xff]
    %v1556 = vld [vmem:[%s65 + $0x10] sm:$0xff]
    %v1557 = vld [vmem:[%s65 + $0x18] sm:$0xff]
    %v1558 = vld [vmem:[#allocation4] sm:$0x1]
    %v1560 = vlaneseq
    %v1561 = vshrl.u32 %v1560, 7
    %v1562 = vsub.s32 0, %v1561
    %v1563 = vrot.slane %v1558, %v1562
    %v1566 = vsel %vm309, %v1553, 0
    %1568 = vmatprep.subr.mxu0 0.0
    %1569 = vmatpush1.msra.mxu0 %v1554
    %1570 = vmatprep.subr.mxu0 0.0
    %1571 = vmatpush1.msra.mxu0 %v1555
    %1572 = vmatprep.subr.mxu0 0.0
    %1573 = vmatpush1.msra.mxu0 %v1556
    %1574 = vmatprep.subr.mxu0 0.0
    %1575 = vmatpush1.msra.mxu0 %v1557
    %1576 = vmatprep.subr.mxu0 0.0
    %1577 = vmatpush1.msra.mxu0 0.0
    %1578 = vmatprep.subr.mxu0 0.0
    %1579 = vmatpush1.msra.mxu0 0.0
    %1580 = vmatprep.subr.mxu0 0.0
    %1581 = vmatpush1.msra.mxu0 0.0
    %1582 = vmatprep.subr.mxu0 0.0
    %1583 = vmatpush1.msra.mxu0 0.0
    %1584 = vmatprep.subr.mxu0 0.0
    %1585 = vmatpush1.msra.mxu0 0.0
    %1586 = vmatprep.subr.mxu0 0.0
    %1587 = vmatpush1.msra.mxu0 0.0
    %1588 = vmatprep.subr.mxu0 0.0
    %1589 = vmatpush1.msra.mxu0 0.0
    %1590 = vmatprep.subr.mxu0 0.0
    %1591 = vmatpush1.msra.mxu0 0.0
    %1592 = vmatprep.subr.mxu0 0.0
    %1593 = vmatpush1.msra.mxu0 0.0
    %1594 = vmatprep.subr.mxu0 0.0
    %1595 = vmatpush1.msra.mxu0 0.0
    %1596 = vmatprep.subr.mxu0 0.0
    %1597 = vmatpush1.msra.mxu0 0.0
    %1598 = vmatprep.subr.mxu0 0.0
    %1599 = vmatpush1.msra.mxu0 0.0
    %1600 = vmatprep.subr.mxu0 0.0
    %1601 = vmatpush1.msra.mxu0 0.0
    %1602 = vmatprep.subr.mxu0 0.0
    %1603 = vmatpush1.msra.mxu0 0.0
    %1604 = vmatprep.subr.mxu0 0.0
    %1605 = vmatpush1.msra.mxu0 0.0
    %1606 = vmatprep.subr.mxu0 0.0
    %1607 = vmatpush1.msra.mxu0 0.0
    %1608 = vmatprep.subr.mxu0 0.0
    %1609 = vmatpush1.msra.mxu0 0.0
    %1610 = vmatprep.subr.mxu0 0.0
    %1611 = vmatpush1.msra.mxu0 0.0
    %1612 = vmatprep.subr.mxu0 0.0
    %1613 = vmatpush1.msra.mxu0 0.0
    %1614 = vmatprep.subr.mxu0 0.0
    %1615 = vmatpush1.msra.mxu0 0.0
    %1616 = vmatprep.subr.mxu0 0.0
    %1617 = vmatpush1.msra.mxu0 0.0
    %1618 = vmatprep.subr.mxu0 0.0
    %1619 = vmatpush1.msra.mxu0 0.0
    %1620 = vmatprep.subr.mxu0 0.0
    %1621 = vmatpush1.msra.mxu0 0.0
    %1622 = vmatprep.subr.mxu0 0.0
    %1623 = vmatpush1.msra.mxu0 0.0
    %1624 = vmatprep.subr.mxu0 0.0
    %1625 = vmatpush1.msra.mxu0 0.0
    %1626 = vmatprep.subr.mxu0 0.0
    %1627 = vmatpush1.msra.mxu0 0.0
    %1628 = vmatprep.subr.mxu0 0.0
    %1629 = vmatpush1.msra.mxu0 0.0
    %1630 = vmatprep.subr.mxu0 0.0
    %1631 = vmatpush1.msra.mxu0 0.0
    %1632 = vmatprep.mubr.f32.mxu0 0.0
    %1633 = vmatmul.mubr.f32.gmra.mrb[0].mxu0 %v1566
    %v1634 = vpop.f32.mrb[0].mxu0
    %v1635 = vadd.f32 %v1563, %v1634
    %v1636 = vpop.f32.mrb[0].mxu0
    %1637 = vdwg.mxu0
    %v1638 = vxor.u32 %v1635, 2147483648
    %v1639 = vmul.f32 %v1638, 1.442695
    %v1640 = vpow.pop %v1639
    %v1641 = vadd.f32 %v1640, 1.0
    %v1642 = vrcp.pop %v1641
    %v1643 = vmul.f32 1.0, %v1642
    %v1644 = vmul.f32 %v1643, 8.0
    %v1645 = vlaneseq
    %v1646 = vand.u32 %v1645, 127
    %vm1647 = vcmp.eq.s32.totalorder %v1646, 0
    %vm1648 = vcmp.eq.s32.totalorder %v1646, 1
    %vm1649 = vcmp.eq.s32.totalorder %v1646, 2
    %1651 = vset.pattern.permute.xlu0 2
    %1652 = vperm.xlu0 %1651, %v1468
    %v1653 = vpop.permute.xlu0 %1652
    %1656 = vset.pattern.permute.xlu0 0
    %1657 = vperm.xlu0 %1656, %v1644
    %v1658 = vpop.permute.xlu0 %1657
    %v1660 = vsel %vm1649, %v1653, %v1658
    %1662 = vset.pattern.permute.xlu0 1
    %1663 = vperm.xlu0 %1662, %v1469
    %v1664 = vpop.permute.xlu0 %1663
    %v1666 = vsel %vm1648, %v1664, %v1660
    %1668 = vset.pattern.permute.xlu0 0
    %1669 = vperm.xlu0 %1668, %v1467
    %v1670 = vpop.permute.xlu0 %1669
    %v1672 = vsel %vm1647, %v1670, %v1666
    %vm1673 = vcmask 25600
    %1674 = vst.msk [vmem:[%s75] sm:$0x3] %vm1673, %v1672
    %v1675 = vld [vmem:[%s3] sm:$0xff]
    %v1676 = vld [vmem:[%s5] sm:$0x1]
    %v1677 = vlaneseq
    %v1678 = vshrl.u32 %v1677, 7
    %v1679 = vsub.s32 0, %v1678
    %v1680 = vrot.slane %v1467, %v1679
    %v1681 = vmul.f32 %v1680, %v1675
    %v1682 = vlaneseq
    %v1683 = vshrl.u32 %v1682, 7
    %v1684 = vsub.s32 0, %v1683
    %v1685 = vrot.slane %v1469, %v1684
    %1687 = vrot.lane.b32.xlu0 %v1685, 127
    %v1688 = vpop.permute.xlu0 %1687
    %v1690 = vadd.f32 %v1681, %v1688
    %v1691 = vand.u32 2147483647, %v1690
    %vm1692 = vcmp.le.f32.partialorder %v1691, 0.7853982
    %vm1693 = vcmp.lt.s32.totalorder %v1690, 0
    %v1694 = vand.u32 %v1690, 2139095040
    %v1695 = vshrl.u32 %v1694, 23
    %v1696 = vsub.s32 %v1695, 127
    %v1697 = vand.u32 2147483647, %v1690
    %v1698 = vand.u32 %v1697, 8388607
    %v1699 = vor.u32 %v1698, 8388608
    %v1700 = vsub.s32 0, %v1699
    %v1701 = vadd.s32 %v1696, 1
    %vm1702 = vcmp.gt.s32.totalorder %v1701, 0
    %v1703 = vsel %vm1702, %v1701, 0
    %v1704 = vshrl.u32 %v1703, 5
    %v1705 = vand.u32 %v1703, 31
    %v1706 = vsub.s32 32, %v1705
    %v1707 = vshrl.u32 683565275, %v1706
    %v1708 = vshll.u32 683565275, %v1705
    %v1709 = vshrl.u32 2475754826, %v1706
    %v1710 = vor.u32 %v1708, %v1709
    %v1711 = vshll.u32 2475754826, %v1705
    %v1712 = vshrl.u32 2131351028, %v1706
    %v1713 = vor.u32 %v1711, %v1712
    %v1714 = vshll.u32 2131351028, %v1705
    %v1715 = vshrl.u32 2102212464, %v1706
    %v1716 = vor.u32 %v1714, %v1715
    %v1717 = vshll.u32 2102212464, %v1705
    %v1718 = vshrl.u32 920167782, %v1706
    %v1719 = vor.u32 %v1717, %v1718
    %v1720 = vshll.u32 920167782, %v1705
    %v1721 = vshrl.u32 1326507024, %v1706
    %v1722 = vor.u32 %v1720, %v1721
    %vm1723 = vcmp.lt.s32.totalorder %v1704, 1
    %vm1724 = vcmp.lt.s32.totalorder %v1704, 2
    %vm1725 = vcmp.lt.s32.totalorder %v1704, 3
    %vm1726 = vcmp.lt.s32.totalorder %v1704, 4
    %v1727 = vsel %vm1723, %v1707, %v1710
    %v1728 = vsel %vm1726, %v1716, 2102212464
    %v1729 = vsel %vm1725, %v1713, %v1728
    %v1730 = vsel %vm1724, %v1727, %v1729
    %v1731 = vsel %vm1723, %v1710, %v1713
    %v1732 = vsel %vm1726, %v1719, 920167782
    %v1733 = vsel %vm1725, %v1716, %v1732
    %v1734 = vsel %vm1724, %v1731, %v1733
    %v1735 = vsel %vm1723, %v1713, %v1716
    %v1736 = vsel %vm1726, %v1722, 1326507024
    %v1737 = vsel %vm1725, %v1719, %v1736
    %v1738 = vsel %vm1724, %v1735, %v1737
    %v1739 = vshll.u32 %v1699, 8
    %v1740 = vmul.u32.u64.compose %v1739, %v1738
    %v1741 = vextract.low.u32 %v1740
    %v1742 = vextract.high.u32 %v1740
    %v1743 = vmul.u32.u64.compose %v1739, %v1734
    %v1744 = vextract.low.u32 %v1743
    %v1745 = vextract.high.u32 %v1743
    %v1746 = vmul.u32 %v1739, %v1730
    %v1747 = vadd.s32 %v1742, %v1744
    %vm1748 = vc.u32 %v1742, %v1744
    %v1749 = vadd.s32 %v1745, 1
    %v1750 = vsel %vm1748, %v1749, %v1745
    %v1751 = vadd.s32 %v1746, %v1750
    %v1752 = vadd.s32 %v1751, 536870912
    %v1753 = vshrl.u32 %v1752, 30
    %v1754 = vshll.u32 %v1753, 30
    %v1755 = vsub.s32 %v1751, %v1754
    %vm1756 = vcmp.lt.s32.totalorder %v1755, 0
    %v1757 = vsub.s32 0, %v1755
    %v1758 = vsel %vm1756, %v1757, %v1755
    %v1759 = vclz %v1758
    %v1760 = vsub.s32 %v1759, 2
    %vm1761 = vcmp.gt.s32.totalorder 0, %v1760
    %v1762 = vsel %vm1761, 0, %v1760
    %v1763 = vsub.s32 32, %v1762
    %v1764 = vshll.u32 %v1755, %v1762
    %v1765 = vshrl.u32 %v1747, %v1763
    %v1766 = vor.u32 %v1764, %v1765
    %v1767 = vsub.s32 4294967266, %v1762
    %v1768 = vadd.s32 %v1767, 127
    %v1769 = vshll.u32 %v1768, 23
    %v1770 = vor.u32 4788187, %v1769
    %v1771 = vand.u32 2147483647, %v1770
    %v1773 = vcvt.s32.f32 %v1766
    %v1774 = vmul.f32 %v1773, %v1771
    %v1775 = vxor.u32 %v1774, 2147483648
    %v1776 = vsel %vm1693, %v1775, %v1774
    %v1777 = vsub.s32 4, %v1753
    %v1778 = vsel %vm1693, %v1777, %v1753
    %v1779 = vsel %vm1692, %v1690, %v1776
    %v1780 = vsel %vm1692, 0, %v1778
    %v1781 = vcosq.f32.pop %v1779
    %v1782 = vsinq.f32.pop %v1779
    %vm1783 = vweird.f32 %v1690
    %v1784 = vadd.s32 %v1780, 3
    %v1785 = vand.u32 %v1784, 3
    %vm1786 = vcmp.lt.s32.totalorder %v1785, 2
    %vm1787 = vcmp.eq.s32.totalorder %v1785, 0
    %v1788 = vxor.u32 %v1782, 2147483648
    %v1789 = vsel %vm1787, %v1781, %v1788
    %vm1790 = vcmp.eq.s32.totalorder %v1785, 2
    %v1791 = vxor.u32 %v1781, 2147483648
    %v1792 = vsel %vm1790, %v1791, %v1782
    %v1793 = vsel %vm1786, %v1789, %v1792
    %v1794 = vsel %vm1783, nan, %v1793
    %v1795 = vlaneseq
    %v1796 = vshrl.u32 %v1795, 7
    %v1797 = vsub.s32 0, %v1796
    %v1798 = vrot.slane %v1468, %v1797
    %1800 = vrot.lane.b32.xlu0 %v1798, 126
    %v1801 = vpop.permute.xlu0 %1800
    %v1803 = vsub.f32 %v1794, %v1801
    %v1804 = vmul.f32 %v1803, 0.25
    %v1805 = vadd.f32 %v1804, 0.5
    %vm1806 = vcmp.gt.f32.partialorder %v1805, 0.5
    %vm1807 = vcmp.gt.f32.partialorder %v921, 0.5
    %vm1808 = vmand %vm1806, %vm1807
    %v1809 = vsel %vm1808, 1.0, 0.0
    %1810 = vst.msk [vmem:[%s73] sm:$0xff] %vm924, %v1809
    %1812 = vset.pattern.permute.xlu0 0
    %1813 = vperm.xlu0 %1812, %v1675
    %v1814 = vpop.permute.xlu0 %1813
    %v1816 = vlaneseq
    %v1817 = vshrl.u32 %v1816, 7
    %v1818 = vsub.s32 0, %v1817
    %v1819 = vrot.slane %v1676, %v1818
    %v1820 = vsub.f32 %v1814, %v1819
    %v1821 = vmul.f32 %v1820, %v1820
    %v1822 = vsub.f32 0.0, %v1821
    %v1823 = vadd.f32 %v1644, 1e-09
    %s1825 = vtos %v1823
    %v1826 = vstv %s1825
    %v1828 = vrcp.pop %v1826
    %v1829 = vmul.f32 %v1822, %v1828
    %v1830 = vmul.f32 %v1829, 1.442695
    %v1831 = vpow.pop %v1830
    %v1832 = vld [vmem:[%s7] sm:$0xff]
    %1834 = vset.pattern.permute.xlu0 0
    %1835 = vperm.xlu0 %1834, %v1809
    %v1836 = vpop.permute.xlu0 %1835
    %v1838 = vmul.f32 %v1836, %v1832
    %vm1839 = vcmask 64512
    %v1841 = vsel %vm1839, %v1831, 0
    %1843 = vmatprep.subr.mxu0 0.0
    %1844 = vmatpush1.msra.mxu0 %v1838
    %1845 = vmatprep.subr.mxu0 0.0
    %1846 = vmatpush1.msra.mxu0 0.0
    %1847 = vmatprep.subr.mxu0 0.0
    %1848 = vmatpush1.msra.mxu0 0.0
    %1849 = vmatprep.subr.mxu0 0.0
    %1850 = vmatpush1.msra.mxu0 0.0
    %1851 = vmatprep.subr.mxu0 0.0
    %1852 = vmatpush1.msra.mxu0 0.0
    %1853 = vmatprep.subr.mxu0 0.0
    %1854 = vmatpush1.msra.mxu0 0.0
    %1855 = vmatprep.subr.mxu0 0.0
    %1856 = vmatpush1.msra.mxu0 0.0
    %1857 = vmatprep.subr.mxu0 0.0
    %1858 = vmatpush1.msra.mxu0 0.0
    %1859 = vmatprep.subr.mxu0 0.0
    %1860 = vmatpush1.msra.mxu0 0.0
    %1861 = vmatprep.subr.mxu0 0.0
    %1862 = vmatpush1.msra.mxu0 0.0
    %1863 = vmatprep.subr.mxu0 0.0
    %1864 = vmatpush1.msra.mxu0 0.0
    %1865 = vmatprep.subr.mxu0 0.0
    %1866 = vmatpush1.msra.mxu0 0.0
    %1867 = vmatprep.subr.mxu0 0.0
    %1868 = vmatpush1.msra.mxu0 0.0
    %1869 = vmatprep.subr.mxu0 0.0
    %1870 = vmatpush1.msra.mxu0 0.0
    %1871 = vmatprep.subr.mxu0 0.0
    %1872 = vmatpush1.msra.mxu0 0.0
    %1873 = vmatprep.subr.mxu0 0.0
    %1874 = vmatpush1.msra.mxu0 0.0
    %1875 = vmatprep.subr.mxu0 0.0
    %1876 = vmatpush1.msra.mxu0 0.0
    %1877 = vmatprep.subr.mxu0 0.0
    %1878 = vmatpush1.msra.mxu0 0.0
    %1879 = vmatprep.subr.mxu0 0.0
    %1880 = vmatpush1.msra.mxu0 0.0
    %1881 = vmatprep.subr.mxu0 0.0
    %1882 = vmatpush1.msra.mxu0 0.0
    %1883 = vmatprep.subr.mxu0 0.0
    %1884 = vmatpush1.msra.mxu0 0.0
    %1885 = vmatprep.subr.mxu0 0.0
    %1886 = vmatpush1.msra.mxu0 0.0
    %1887 = vmatprep.subr.mxu0 0.0
    %1888 = vmatpush1.msra.mxu0 0.0
    %1889 = vmatprep.subr.mxu0 0.0
    %1890 = vmatpush1.msra.mxu0 0.0
    %1891 = vmatprep.subr.mxu0 0.0
    %1892 = vmatpush1.msra.mxu0 0.0
    %1893 = vmatprep.subr.mxu0 0.0
    %1894 = vmatpush1.msra.mxu0 0.0
    %1895 = vmatprep.subr.mxu0 0.0
    %1896 = vmatpush1.msra.mxu0 0.0
    %1897 = vmatprep.subr.mxu0 0.0
    %1898 = vmatpush1.msra.mxu0 0.0
    %1899 = vmatprep.subr.mxu0 0.0
    %1900 = vmatpush1.msra.mxu0 0.0
    %1901 = vmatprep.subr.mxu0 0.0
    %1902 = vmatpush1.msra.mxu0 0.0
    %1903 = vmatprep.subr.mxu0 0.0
    %1904 = vmatpush1.msra.mxu0 0.0
    %1905 = vmatprep.subr.mxu0 0.0
    %1906 = vmatpush1.msra.mxu0 0.0
    %1907 = vmatprep.mubr.f32.mxu0 0.0
    %1908 = vmatmul.mubr.f32.gmra.mrb[0].mxu0 %v1841
    %v1909 = vpop.f32.mrb[0].mxu0
    %v1910 = vadd.f32 0.0, %v1909
    %v1911 = vpop.f32.mrb[0].mxu0
    %1912 = vdwg.mxu0
    %1913 = vmatprep.subr.mxu0 0.0
    %1914 = vmatpush1.msra.mxu0 %v1809
    %1915 = vmatprep.subr.mxu0 0.0
    %1916 = vmatpush1.msra.mxu0 0.0
    %1917 = vmatprep.subr.mxu0 0.0
    %1918 = vmatpush1.msra.mxu0 0.0
    %1919 = vmatprep.subr.mxu0 0.0
    %1920 = vmatpush1.msra.mxu0 0.0
    %1921 = vmatprep.subr.mxu0 0.0
    %1922 = vmatpush1.msra.mxu0 0.0
    %1923 = vmatprep.subr.mxu0 0.0
    %1924 = vmatpush1.msra.mxu0 0.0
    %1925 = vmatprep.subr.mxu0 0.0
    %1926 = vmatpush1.msra.mxu0 0.0
    %1927 = vmatprep.subr.mxu0 0.0
    %1928 = vmatpush1.msra.mxu0 0.0
    %1929 = vmatprep.subr.mxu0 0.0
    %1930 = vmatpush1.msra.mxu0 0.0
    %1931 = vmatprep.subr.mxu0 0.0
    %1932 = vmatpush1.msra.mxu0 0.0
    %1933 = vmatprep.subr.mxu0 0.0
    %1934 = vmatpush1.msra.mxu0 0.0
    %1935 = vmatprep.subr.mxu0 0.0
    %1936 = vmatpush1.msra.mxu0 0.0
    %1937 = vmatprep.subr.mxu0 0.0
    %1938 = vmatpush1.msra.mxu0 0.0
    %1939 = vmatprep.subr.mxu0 0.0
    %1940 = vmatpush1.msra.mxu0 0.0
    %1941 = vmatprep.subr.mxu0 0.0
    %1942 = vmatpush1.msra.mxu0 0.0
    %1943 = vmatprep.subr.mxu0 0.0
    %1944 = vmatpush1.msra.mxu0 0.0
    %1945 = vmatprep.subr.mxu0 0.0
    %1946 = vmatpush1.msra.mxu0 0.0
    %1947 = vmatprep.subr.mxu0 0.0
    %1948 = vmatpush1.msra.mxu0 0.0
    %1949 = vmatprep.subr.mxu0 0.0
    %1950 = vmatpush1.msra.mxu0 0.0
    %1951 = vmatprep.subr.mxu0 0.0
    %1952 = vmatpush1.msra.mxu0 0.0
    %1953 = vmatprep.subr.mxu0 0.0
    %1954 = vmatpush1.msra.mxu0 0.0
    %1955 = vmatprep.subr.mxu0 0.0
    %1956 = vmatpush1.msra.mxu0 0.0
    %1957 = vmatprep.subr.mxu0 0.0
    %1958 = vmatpush1.msra.mxu0 0.0
    %1959 = vmatprep.subr.mxu0 0.0
    %1960 = vmatpush1.msra.mxu0 0.0
    %1961 = vmatprep.subr.mxu0 0.0
    %1962 = vmatpush1.msra.mxu0 0.0
    %1963 = vmatprep.subr.mxu0 0.0
    %1964 = vmatpush1.msra.mxu0 0.0
    %1965 = vmatprep.subr.mxu0 0.0
    %1966 = vmatpush1.msra.mxu0 0.0
    %1967 = vmatprep.subr.mxu0 0.0
    %1968 = vmatpush1.msra.mxu0 0.0
    %1969 = vmatprep.subr.mxu0 0.0
    %1970 = vmatpush1.msra.mxu0 0.0
    %1971 = vmatprep.subr.mxu0 0.0
    %1972 = vmatpush1.msra.mxu0 0.0
    %1973 = vmatprep.subr.mxu0 0.0
    %1974 = vmatpush1.msra.mxu0 0.0
    %1975 = vmatprep.subr.mxu0 0.0
    %1976 = vmatpush1.msra.mxu0 0.0
    %1977 = vmatprep.mubr.f32.mxu0 0.0
    %1978 = vmatmul.mubr.f32.gmra.mrb[0].mxu0 %v1841
    %v1979 = vpop.f32.mrb[0].mxu0
    %v1980 = vadd.f32 1e-09, %v1979
    %v1981 = vpop.f32.mrb[0].mxu0
    %1982 = vdwg.mxu0
    %1984 = vset.pattern.permute.xlu0 0
    %1985 = vperm.xlu0 %1984, %v1980
    %v1986 = vpop.permute.xlu0 %1985
    %v1988 = vrcp.pop %v1986
    %v1989 = vmul.f32 %v1910, %v1988
    %vm1990 = vcmask 31744
    %1991 = vst.msk [vmem:[%s69] sm:$0xff] %vm1990, %v1989
    %v1992 = vld [vmem:[%s3 + $0x8] sm:$0xff]
    %v1993 = vld [vmem:[%s5 + $0x1] sm:$0x1]
    %v1994 = vlaneseq
    %v1995 = vshrl.u32 %v1994, 7
    %v1996 = vsub.s32 1, %v1995
    %v1997 = vrot.slane %v1467, %v1996
    %v1998 = vmul.f32 %v1997, %v1992
    %v1999 = vlaneseq
    %v2000 = vshrl.u32 %v1999, 7
    %v2001 = vsub.s32 1, %v2000
    %v2002 = vrot.slane %v1469, %v2001
    %2004 = vrot.lane.b32.xlu0 %v2002, 127
    %v2005 = vpop.permute.xlu0 %2004
    %v2007 = vadd.f32 %v1998, %v2005
    %v2008 = vand.u32 2147483647, %v2007
    %vm2009 = vcmp.le.f32.partialorder %v2008, 0.7853982
    %vm2010 = vcmp.lt.s32.totalorder %v2007, 0
    %v2011 = vand.u32 %v2007, 2139095040
    %v2012 = vshrl.u32 %v2011, 23
    %v2013 = vsub.s32 %v2012, 127
    %v2014 = vand.u32 2147483647, %v2007
    %v2015 = vand.u32 %v2014, 8388607
    %v2016 = vor.u32 %v2015, 8388608
    %v2017 = vsub.s32 0, %v2016
    %v2018 = vadd.s32 %v2013, 1
    %vm2019 = vcmp.gt.s32.totalorder %v2018, 0
    %v2020 = vsel %vm2019, %v2018, 0
    %v2021 = vshrl.u32 %v2020, 5
    %v2022 = vand.u32 %v2020, 31
    %v2023 = vsub.s32 32, %v2022
    %v2024 = vshrl.u32 683565275, %v2023
    %v2025 = vshll.u32 683565275, %v2022
    %v2026 = vshrl.u32 2475754826, %v2023
    %v2027 = vor.u32 %v2025, %v2026
    %v2028 = vshll.u32 2475754826, %v2022
    %v2029 = vshrl.u32 2131351028, %v2023
    %v2030 = vor.u32 %v2028, %v2029
    %v2031 = vshll.u32 2131351028, %v2022
    %v2032 = vshrl.u32 2102212464, %v2023
    %v2033 = vor.u32 %v2031, %v2032
    %v2034 = vshll.u32 2102212464, %v2022
    %v2035 = vshrl.u32 920167782, %v2023
    %v2036 = vor.u32 %v2034, %v2035
    %v2037 = vshll.u32 920167782, %v2022
    %v2038 = vshrl.u32 1326507024, %v2023
    %v2039 = vor.u32 %v2037, %v2038
    %vm2040 = vcmp.lt.s32.totalorder %v2021, 1
    %vm2041 = vcmp.lt.s32.totalorder %v2021, 2
    %vm2042 = vcmp.lt.s32.totalorder %v2021, 3
    %vm2043 = vcmp.lt.s32.totalorder %v2021, 4
    %v2044 = vsel %vm2040, %v2024, %v2027
    %v2045 = vsel %vm2043, %v2033, 2102212464
    %v2046 = vsel %vm2042, %v2030, %v2045
    %v2047 = vsel %vm2041, %v2044, %v2046
    %v2048 = vsel %vm2040, %v2027, %v2030
    %v2049 = vsel %vm2043, %v2036, 920167782
    %v2050 = vsel %vm2042, %v2033, %v2049
    %v2051 = vsel %vm2041, %v2048, %v2050
    %v2052 = vsel %vm2040, %v2030, %v2033
    %v2053 = vsel %vm2043, %v2039, 1326507024
    %v2054 = vsel %vm2042, %v2036, %v2053
    %v2055 = vsel %vm2041, %v2052, %v2054
    %v2056 = vshll.u32 %v2016, 8
    %v2057 = vmul.u32.u64.compose %v2056, %v2055
    %v2058 = vextract.low.u32 %v2057
    %v2059 = vextract.high.u32 %v2057
    %v2060 = vmul.u32.u64.compose %v2056, %v2051
    %v2061 = vextract.low.u32 %v2060
    %v2062 = vextract.high.u32 %v2060
    %v2063 = vmul.u32 %v2056, %v2047
    %v2064 = vadd.s32 %v2059, %v2061
    %vm2065 = vc.u32 %v2059, %v2061
    %v2066 = vadd.s32 %v2062, 1
    %v2067 = vsel %vm2065, %v2066, %v2062
    %v2068 = vadd.s32 %v2063, %v2067
    %v2069 = vadd.s32 %v2068, 536870912
    %v2070 = vshrl.u32 %v2069, 30
    %v2071 = vshll.u32 %v2070, 30
    %v2072 = vsub.s32 %v2068, %v2071
    %vm2073 = vcmp.lt.s32.totalorder %v2072, 0
    %v2074 = vsub.s32 0, %v2072
    %v2075 = vsel %vm2073, %v2074, %v2072
    %v2076 = vclz %v2075
    %v2077 = vsub.s32 %v2076, 2
    %vm2078 = vcmp.gt.s32.totalorder 0, %v2077
    %v2079 = vsel %vm2078, 0, %v2077
    %v2080 = vsub.s32 32, %v2079
    %v2081 = vshll.u32 %v2072, %v2079
    %v2082 = vshrl.u32 %v2064, %v2080
    %v2083 = vor.u32 %v2081, %v2082
    %v2084 = vsub.s32 4294967266, %v2079
    %v2085 = vadd.s32 %v2084, 127
    %v2086 = vshll.u32 %v2085, 23
    %v2087 = vor.u32 4788187, %v2086
    %v2088 = vand.u32 2147483647, %v2087
    %v2090 = vcvt.s32.f32 %v2083
    %v2091 = vmul.f32 %v2090, %v2088
    %v2092 = vxor.u32 %v2091, 2147483648
    %v2093 = vsel %vm2010, %v2092, %v2091
    %v2094 = vsub.s32 4, %v2070
    %v2095 = vsel %vm2010, %v2094, %v2070
    %v2096 = vsel %vm2009, %v2007, %v2093
    %v2097 = vsel %vm2009, 0, %v2095
    %v2098 = vcosq.f32.pop %v2096
    %v2099 = vsinq.f32.pop %v2096
    %vm2100 = vweird.f32 %v2007
    %v2101 = vadd.s32 %v2097, 3
    %v2102 = vand.u32 %v2101, 3
    %vm2103 = vcmp.lt.s32.totalorder %v2102, 2
    %vm2104 = vcmp.eq.s32.totalorder %v2102, 0
    %v2105 = vxor.u32 %v2099, 2147483648
    %v2106 = vsel %vm2104, %v2098, %v2105
    %vm2107 = vcmp.eq.s32.totalorder %v2102, 2
    %v2108 = vxor.u32 %v2098, 2147483648
    %v2109 = vsel %vm2107, %v2108, %v2099
    %v2110 = vsel %vm2103, %v2106, %v2109
    %v2111 = vsel %vm2100, nan, %v2110
    %v2112 = vlaneseq
    %v2113 = vshrl.u32 %v2112, 7
    %v2114 = vsub.s32 1, %v2113
    %v2115 = vrot.slane %v1468, %v2114
    %2117 = vrot.lane.b32.xlu0 %v2115, 126
    %v2118 = vpop.permute.xlu0 %2117
    %v2120 = vsub.f32 %v2111, %v2118
    %v2121 = vmul.f32 %v2120, 0.25
    %v2122 = vadd.f32 %v2121, 0.5
    %vm2123 = vcmp.gt.f32.partialorder %v2122, 0.5
    %vm2124 = vcmp.gt.f32.partialorder %v923, 0.5
    %vm2125 = vmand %vm2123, %vm2124
    %v2126 = vsel %vm2125, 1.0, 0.0
    %2127 = vst.msk [vmem:[%s73 + $0x8] sm:$0xff] %vm924, %v2126
    %2129 = vset.pattern.permute.xlu0 0
    %2130 = vperm.xlu0 %2129, %v1992
    %v2131 = vpop.permute.xlu0 %2130
    %v2133 = vlaneseq
    %v2134 = vshrl.u32 %v2133, 7
    %v2135 = vsub.s32 0, %v2134
    %v2136 = vrot.slane %v1993, %v2135
    %v2137 = vsub.f32 %v2131, %v2136
    %v2138 = vmul.f32 %v2137, %v2137
    %v2139 = vsub.f32 0.0, %v2138
    %v2140 = vrot.slane %v1823, 1
    %s2141 = vtos %v2140
    %v2142 = vstv %s2141
    %v2144 = vrcp.pop %v2142
    %v2145 = vmul.f32 %v2139, %v2144
    %v2146 = vmul.f32 %v2145, 1.442695
    %v2147 = vpow.pop %v2146
    %v2148 = vld [vmem:[%s7 + $0x8] sm:$0xff]
    %2150 = vset.pattern.permute.xlu0 0
    %2151 = vperm.xlu0 %2150, %v2126
    %v2152 = vpop.permute.xlu0 %2151
    %v2154 = vmul.f32 %v2152, %v2148
    %v2156 = vsel %vm1839, %v2147, 0
    %2158 = vmatprep.subr.mxu0 0.0
    %2159 = vmatpush1.msra.mxu0 %v2154
    %2160 = vmatprep.subr.mxu0 0.0
    %2161 = vmatpush1.msra.mxu0 0.0
    %2162 = vmatprep.subr.mxu0 0.0
    %2163 = vmatpush1.msra.mxu0 0.0
    %2164 = vmatprep.subr.mxu0 0.0
    %2165 = vmatpush1.msra.mxu0 0.0
    %2166 = vmatprep.subr.mxu0 0.0
    %2167 = vmatpush1.msra.mxu0 0.0
    %2168 = vmatprep.subr.mxu0 0.0
    %2169 = vmatpush1.msra.mxu0 0.0
    %2170 = vmatprep.subr.mxu0 0.0
    %2171 = vmatpush1.msra.mxu0 0.0
    %2172 = vmatprep.subr.mxu0 0.0
    %2173 = vmatpush1.msra.mxu0 0.0
    %2174 = vmatprep.subr.mxu0 0.0
    %2175 = vmatpush1.msra.mxu0 0.0
    %2176 = vmatprep.subr.mxu0 0.0
    %2177 = vmatpush1.msra.mxu0 0.0
    %2178 = vmatprep.subr.mxu0 0.0
    %2179 = vmatpush1.msra.mxu0 0.0
    %2180 = vmatprep.subr.mxu0 0.0
    %2181 = vmatpush1.msra.mxu0 0.0
    %2182 = vmatprep.subr.mxu0 0.0
    %2183 = vmatpush1.msra.mxu0 0.0
    %2184 = vmatprep.subr.mxu0 0.0
    %2185 = vmatpush1.msra.mxu0 0.0
    %2186 = vmatprep.subr.mxu0 0.0
    %2187 = vmatpush1.msra.mxu0 0.0
    %2188 = vmatprep.subr.mxu0 0.0
    %2189 = vmatpush1.msra.mxu0 0.0
    %2190 = vmatprep.subr.mxu0 0.0
    %2191 = vmatpush1.msra.mxu0 0.0
    %2192 = vmatprep.subr.mxu0 0.0
    %2193 = vmatpush1.msra.mxu0 0.0
    %2194 = vmatprep.subr.mxu0 0.0
    %2195 = vmatpush1.msra.mxu0 0.0
    %2196 = vmatprep.subr.mxu0 0.0
    %2197 = vmatpush1.msra.mxu0 0.0
    %2198 = vmatprep.subr.mxu0 0.0
    %2199 = vmatpush1.msra.mxu0 0.0
    %2200 = vmatprep.subr.mxu0 0.0
    %2201 = vmatpush1.msra.mxu0 0.0
    %2202 = vmatprep.subr.mxu0 0.0
    %2203 = vmatpush1.msra.mxu0 0.0
    %2204 = vmatprep.subr.mxu0 0.0
    %2205 = vmatpush1.msra.mxu0 0.0
    %2206 = vmatprep.subr.mxu0 0.0
    %2207 = vmatpush1.msra.mxu0 0.0
    %2208 = vmatprep.subr.mxu0 0.0
    %2209 = vmatpush1.msra.mxu0 0.0
    %2210 = vmatprep.subr.mxu0 0.0
    %2211 = vmatpush1.msra.mxu0 0.0
    %2212 = vmatprep.subr.mxu0 0.0
    %2213 = vmatpush1.msra.mxu0 0.0
    %2214 = vmatprep.subr.mxu0 0.0
    %2215 = vmatpush1.msra.mxu0 0.0
    %2216 = vmatprep.subr.mxu0 0.0
    %2217 = vmatpush1.msra.mxu0 0.0
    %2218 = vmatprep.subr.mxu0 0.0
    %2219 = vmatpush1.msra.mxu0 0.0
    %2220 = vmatprep.subr.mxu0 0.0
    %2221 = vmatpush1.msra.mxu0 0.0
    %2222 = vmatprep.mubr.f32.mxu0 0.0
    %2223 = vmatmul.mubr.f32.gmra.mrb[0].mxu0 %v2156
    %v2224 = vpop.f32.mrb[0].mxu0
    %v2225 = vadd.f32 0.0, %v2224
    %v2226 = vpop.f32.mrb[0].mxu0
    %2227 = vdwg.mxu0
    %2228 = vmatprep.subr.mxu0 0.0
    %2229 = vmatpush1.msra.mxu0 %v2126
    %2230 = vmatprep.subr.mxu0 0.0
    %2231 = vmatpush1.msra.mxu0 0.0
    %2232 = vmatprep.subr.mxu0 0.0
    %2233 = vmatpush1.msra.mxu0 0.0
    %2234 = vmatprep.subr.mxu0 0.0
    %2235 = vmatpush1.msra.mxu0 0.0
    %2236 = vmatprep.subr.mxu0 0.0
    %2237 = vmatpush1.msra.mxu0 0.0
    %2238 = vmatprep.subr.mxu0 0.0
    %2239 = vmatpush1.msra.mxu0 0.0
    %2240 = vmatprep.subr.mxu0 0.0
    %2241 = vmatpush1.msra.mxu0 0.0
    %2242 = vmatprep.subr.mxu0 0.0
    %2243 = vmatpush1.msra.mxu0 0.0
    %2244 = vmatprep.subr.mxu0 0.0
    %2245 = vmatpush1.msra.mxu0 0.0
    %2246 = vmatprep.subr.mxu0 0.0
    %2247 = vmatpush1.msra.mxu0 0.0
    %2248 = vmatprep.subr.mxu0 0.0
    %2249 = vmatpush1.msra.mxu0 0.0
    %2250 = vmatprep.subr.mxu0 0.0
    %2251 = vmatpush1.msra.mxu0 0.0
    %2252 = vmatprep.subr.mxu0 0.0
    %2253 = vmatpush1.msra.mxu0 0.0
    %2254 = vmatprep.subr.mxu0 0.0
    %2255 = vmatpush1.msra.mxu0 0.0
    %2256 = vmatprep.subr.mxu0 0.0
    %2257 = vmatpush1.msra.mxu0 0.0
    %2258 = vmatprep.subr.mxu0 0.0
    %2259 = vmatpush1.msra.mxu0 0.0
    %2260 = vmatprep.subr.mxu0 0.0
    %2261 = vmatpush1.msra.mxu0 0.0
    %2262 = vmatprep.subr.mxu0 0.0
    %2263 = vmatpush1.msra.mxu0 0.0
    %2264 = vmatprep.subr.mxu0 0.0
    %2265 = vmatpush1.msra.mxu0 0.0
    %2266 = vmatprep.subr.mxu0 0.0
    %2267 = vmatpush1.msra.mxu0 0.0
    %2268 = vmatprep.subr.mxu0 0.0
    %2269 = vmatpush1.msra.mxu0 0.0
    %2270 = vmatprep.subr.mxu0 0.0
    %2271 = vmatpush1.msra.mxu0 0.0
    %2272 = vmatprep.subr.mxu0 0.0
    %2273 = vmatpush1.msra.mxu0 0.0
    %2274 = vmatprep.subr.mxu0 0.0
    %2275 = vmatpush1.msra.mxu0 0.0
    %2276 = vmatprep.subr.mxu0 0.0
    %2277 = vmatpush1.msra.mxu0 0.0
    %2278 = vmatprep.subr.mxu0 0.0
    %2279 = vmatpush1.msra.mxu0 0.0
    %2280 = vmatprep.subr.mxu0 0.0
    %2281 = vmatpush1.msra.mxu0 0.0
    %2282 = vmatprep.subr.mxu0 0.0
    %2283 = vmatpush1.msra.mxu0 0.0
    %2284 = vmatprep.subr.mxu0 0.0
    %2285 = vmatpush1.msra.mxu0 0.0
    %2286 = vmatprep.subr.mxu0 0.0
    %2287 = vmatpush1.msra.mxu0 0.0
    %2288 = vmatprep.subr.mxu0 0.0
    %2289 = vmatpush1.msra.mxu0 0.0
    %2290 = vmatprep.subr.mxu0 0.0
    %2291 = vmatpush1.msra.mxu0 0.0
    %2292 = vmatprep.mubr.f32.mxu0 0.0
    %2293 = vmatmul.mubr.f32.gmra.mrb[0].mxu0 %v2156
    %v2294 = vpop.f32.mrb[0].mxu0
    %v2295 = vadd.f32 1e-09, %v2294
    %v2296 = vpop.f32.mrb[0].mxu0
    %2297 = vdwg.mxu0
    %2299 = vset.pattern.permute.xlu0 0
    %2300 = vperm.xlu0 %2299, %v2295
    %v2301 = vpop.permute.xlu0 %2300
    %v2303 = vrcp.pop %v2301
    %v2304 = vmul.f32 %v2225, %v2303
    %2305 = vst.msk [vmem:[%s69 + $0x8] sm:$0xff] %vm1990, %v2304
    // Predicated region
    $region150: #{modelv2_forward.4} parent=1 // pred_check
      _
    $region151: #{modelv2_forward.4} parent=1 // pred_check_branch
      %2307 = sbr.rel (0) target = $region153
    $region152: #{modelv2_forward.4} parent=1 // pred_region
      _
    $region153: #{modelv2_forward.4} parent=1 // pred_fallthru
      _
    // Predicated region
    $region154: #{modelv2_forward.4} parent=1 // pred_check
      _
    $region155: #{modelv2_forward.4} parent=1 // pred_check_branch
      %2309 = sbr.rel (0) target = $region157
    $region156: #{modelv2_forward.4} parent=1 // pred_region
      _
    $region157: #{modelv2_forward.4} parent=1 // pred_fallthru
      _
    // Predicated region
    $region158: #{modelv2_forward.4} parent=1 // pred_check
      _
    $region159: #{modelv2_forward.4} parent=1 // pred_check_branch
      %2311 = sbr.rel (0) target = $region161
    $region160: #{modelv2_forward.4} parent=1 // pred_region
      _
    $region161: #{modelv2_forward.4} parent=1 // pred_fallthru
      _
    // Predicated region
    $region162: #{modelv2_forward.4} parent=1 // pred_check
      _
    $region163: #{modelv2_forward.4} parent=1 // pred_check_branch
      %2313 = sbr.rel (0) target = $region165
    $region164: #{modelv2_forward.4} parent=1 // pred_region
      _
    $region165: #{modelv2_forward.4} parent=1 // pred_fallthru
      _
    // Predicated region
    $region166: #{modelv2_forward.4} parent=1 // pred_check
      _
    $region167: #{modelv2_forward.4} parent=1 // pred_check_branch
      %2315 = sbr.rel (0) target = $region169
    $region168: #{modelv2_forward.4} parent=1 // pred_region
      _
    $region169: #{modelv2_forward.4} parent=1 // pred_fallthru
      _
    // Predicated region
    $region170: #{modelv2_forward.4} parent=1 // pred_check
      _
    $region171: #{modelv2_forward.4} parent=1 // pred_check_branch
      %2317 = sbr.rel (0) target = $region173
    $region172: #{modelv2_forward.4} parent=1 // pred_region
      _
    $region173: #{modelv2_forward.4} parent=1 // pred_fallthru
      _
    // Predicated region
    $region174: #{modelv2_forward.4} parent=1 // pred_check
      _
    $region175: #{modelv2_forward.4} parent=1 // pred_check_branch
      %2319 = sbr.rel (0) target = $region177
    $region176: #{modelv2_forward.4} parent=1 // pred_region
      _
    $region177: #{modelv2_forward.4} parent=1 // pred_fallthru
      _
    // Predicated region
    $region178: #{modelv2_forward.4} parent=1 // pred_check
      _
    $region179: #{modelv2_forward.4} parent=1 // pred_check_branch
      %2321 = sbr.rel (0) target = $region181
    $region180: #{modelv2_forward.4} parent=1 // pred_region
      _
    $region181: #{modelv2_forward.4} parent=1 // pred_fallthru
      _
    %2322 = vsyncpa [#allocation6], 1
    %2323 = vsyncpa [#allocation8], 1

</llo_original>
